<compile_context>
chip_gen: v7x
topology: tpu7x:2x2x1
jax: 0.10.0
libtpu: 0.0.40
codegen_flags: <defaults>
</compile_context>

<pallas_src>
import math
import functools

import jax
import jax.numpy as jnp
from jax import lax
from jax.experimental import pallas as pl
from jax.experimental.pallas import tpu as pltpu


def _layernorm(x, gamma, beta, eps=1e-5):
    mean = jnp.mean(x, axis=-1, keepdims=True)
    var = jnp.mean((x - mean) ** 2, axis=-1, keepdims=True)
    return (x - mean) * lax.rsqrt(var + eps) * gamma + beta


def _gelu(x):
    # tanh-approximate GELU (matches original BERT gelu)
    c = math.sqrt(2.0 / math.pi)
    return 0.5 * x * (1.0 + jnp.tanh(c * (x + 0.044715 * x * x * x)))


def _split_heads(t, num_heads, dk, reshape_heads):
    """(rows, nH*dk) f32 -> (nH, rows, dk) bf16."""
    rows = t.shape[0]
    if reshape_heads:
        # single reshape + major-dim swap (one relayout, no per-head copies)
        return jnp.swapaxes(t.reshape(rows, num_heads, dk), 0, 1).astype(jnp.bfloat16)
    # fallback: per-head static lane slices (proven lowering path)
    return jnp.stack([t[:, i * dk:(i + 1) * dk] for i in range(num_heads)],
                     axis=0).astype(jnp.bfloat16)


def _merge_heads(t, num_heads, dk, reshape_heads):
    """(nH, rows, dk) -> (rows, nH*dk)."""
    rows = t.shape[1]
    if reshape_heads:
        return jnp.swapaxes(t, 0, 1).reshape(rows, num_heads * dk)
    return jnp.concatenate([t[i] for i in range(num_heads)], axis=-1)


def transformer_block_kernel(
    x_ref, maskb_ref, pos_ref,
    ln1_g, ln1_b, wq, bq, wkv, bkv, wo, bo,
    ln2_g, ln2_b, w1, b1, w2, b2,
    out_ref, attn_ref,
    *, num_heads, tq, use_position_embedding, reshape_heads):
    S = x_ref.shape[1]
    D = wq.shape[1]
    dk = D // num_heads

    q_start = pl.multiple_of(pl.program_id(1) * tq, tq)

    # ---- full-sequence side (keys / values) ----
    x_full = x_ref[0]                                      # (S, H) f32
    if use_position_embedding:
        x_full = x_full + pos_ref[...]
    h_full = _layernorm(x_full, ln1_g[...], ln1_b[...])

    # ---- query-tile side ----
    x_t = x_ref[0, pl.ds(q_start, tq), :]                  # (TQ, H) f32
    if use_position_embedding:
        x_t = x_t + pos_ref[pl.ds(q_start, tq), :]
    h_t = _layernorm(x_t, ln1_g[...], ln1_b[...])

    # Projections (bf16 MXU operands, f32 accumulation). 1/sqrt(dk) is folded into wq/bq.
    q = jnp.dot(h_t.astype(jnp.bfloat16), wq[...],
                preferred_element_type=jnp.float32) + bq[...]         # (TQ, D)
    kv = jnp.dot(h_full.astype(jnp.bfloat16), wkv[...],
                 preferred_element_type=jnp.float32) + bkv[...]       # (S, 2D)

    qh = _split_heads(q, num_heads, dk, reshape_heads)                # (nH, TQ, dk)
    kh = _split_heads(kv[:, :D], num_heads, dk, reshape_heads)        # (nH, S, dk)
    vh = _split_heads(kv[:, D:], num_heads, dk, reshape_heads)        # (nH, S, dk)

    # Batched attention for all heads of this q-tile.
    scores = jnp.einsum('hqd,hkd->hqk', qh, kh,
                        preferred_element_type=jnp.float32)           # (nH, TQ, S) f32
    scores = scores + maskb_ref[...]                                  # additive mask bias
    scores = scores - jnp.max(scores, axis=-1, keepdims=True)
    e = jnp.exp(scores)
    denom = jnp.sum(e, axis=-1, keepdims=True)
    p = e * (1.0 / denom)               # exact normalization -> exported rows sum to 1
    attn_ref[0] = p.astype(attn_ref.dtype)                            # one (nH,TQ,S) store

    ctx = jnp.einsum('hqk,hkd->hqd', p.astype(jnp.bfloat16), vh,
                     preferred_element_type=jnp.float32)              # (nH, TQ, dk)
    ctx2 = _merge_heads(ctx, num_heads, dk, reshape_heads)            # (TQ, D)
    attn_out = jnp.dot(ctx2.astype(jnp.bfloat16), wo[...],
                       preferred_element_type=jnp.float32) + bo[...]
    x1 = x_t + attn_out                                               # residual (dropout = id)

    # ---- output sublayer: pre-norm + positionwise feed-forward + residual ----
    h2 = _layernorm(x1, ln2_g[...], ln2_b[...])
    ff = _gelu(jnp.dot(h2.astype(jnp.bfloat16), w1[...],
                       preferred_element_type=jnp.float32) + b1[...])
    ff = jnp.dot(ff.astype(jnp.bfloat16), w2[...],
                 preferred_element_type=jnp.float32) + b2[...]
    out_ref[0] = x1 + ff                                              # final dropout = identity


def _vmem_capacity_bytes():
    try:
        return int(pltpu.get_tpu_info().vmem_capacity_bytes)
    except Exception:
        return 128 * 1024 * 1024   # conservative default (v5e/v6e)


def transformer_block(x, mask, params, *, num_heads, use_position_embedding=True,
                      attn_dtype=jnp.float32, q_tile=None):
    B, S, H = x.shape
    D = params["wq"].shape[1]
    d_ff = params["w1"].shape[1]
    dk = D // num_heads
    scale = 1.0 / math.sqrt(dk)

    # ---- host-side parameter prep (free relative to the kernel) ----
    wq = (params["wq"] * scale).astype(jnp.bfloat16)                       # (H, D)
    bq = (params["bq"] * scale).astype(jnp.float32)                        # (1, D)
    wkv = jnp.concatenate([params["wk"], params["wv"]], axis=1).astype(jnp.bfloat16)  # (H, 2D)
    bkv = jnp.concatenate([params["bk"], params["bv"]], axis=1).astype(jnp.float32)   # (1, 2D)
    wo = params["wo"].astype(jnp.bfloat16)
    w1 = params["w1"].astype(jnp.bfloat16)
    w2 = params["w2"].astype(jnp.bfloat16)

    # Additive mask bias: 0 for kept keys, -1e9 for masked keys.
    mask_bias = jnp.where(mask == 0, -1e9, 0.0).astype(jnp.float32).reshape(B, 1, S)
    pos = params["pos"][:S, :].astype(jnp.float32)                          # (S, H)

    # Query-tile size: prefer MXU-friendly 256 (v6e/v7x 2x256^2 MXU), then 128, else S.
    if q_tile is None:
        q_tile = next((t for t in (256, 128) if S % t == 0), S)
    assert S % q_tile == 0, "S must be divisible by q_tile"
    n_q = S // q_tile

    rep_args = [params["ln1_g"].astype(jnp.float32), params["ln1_b"].astype(jnp.float32),
                wq, bq, wkv, bkv, wo, params["bo"].astype(jnp.float32),
                params["ln2_g"].astype(jnp.float32), params["ln2_b"].astype(jnp.float32),
                w1, params["b1"].astype(jnp.float32), w2, params["b2"].astype(jnp.float32)]

    # ---- per-generation VMEM budget (v5e/v6e: 128 MiB, v7x: 64 MiB physical) ----
    attn_itemsize = jnp.dtype(attn_dtype).itemsize
    param_bytes = sum(int(a.size) * a.dtype.itemsize for a in rep_args) + pos.size * 4
    block_bytes = 2 * (S * H * 4 + S * 4 + q_tile * H * 4
                       + num_heads * q_tile * S * attn_itemsize)            # double-buffered
    scratch_bytes = (3 * num_heads * q_tile * S * 4                          # scores/exp/probs
                     + S * 3 * D * 4 + q_tile * max(d_ff, 3 * D) * 4 + S * H * 4)
    vmem_cap = _vmem_capacity_bytes()
    vmem_limit = int(min(max(1.25 * (2 * param_bytes + block_bytes + scratch_bytes),
                             32 * 1024 * 1024),
                         0.8 * vmem_cap))

    # Advisory cost estimate for XLA's scheduler.
    flops = 2 * B * (n_q * S * H * 2 * D          # K/V projection (recomputed per q-tile)
                     + S * H * D                  # Q projection
                     + 2 * num_heads * S * S * dk  # Q.K^T and P.V
                     + S * D * H                  # output projection
                     + 2 * S * H * d_ff)          # FFN
    transcendentals = B * S * (num_heads * S + d_ff + 4)
    bytes_accessed = int(4 * (2 * x.size + B * S)
                         + attn_itemsize * B * num_heads * S * S
                         + param_bytes)

    def _build(reshape_heads, single_buffer_params):
        def rep(a):
            nd = a.ndim
            kwargs = {}
            if single_buffer_params:
                # Grid-invariant block index -> double-buffering only wastes VMEM.
                kwargs["pipeline_mode"] = pl.Buffered(1)
            return pl.BlockSpec(a.shape, lambda b, q, _nd=nd: (0,) * _nd, **kwargs)

        kernel = functools.partial(
            transformer_block_kernel,
            num_heads=num_heads, tq=q_tile,
            use_position_embedding=use_position_embedding,
            reshape_heads=reshape_heads)

        return pl.pallas_call(
            kernel,
            out_shape=(jax.ShapeDtypeStruct((B, S, H), jnp.float32),
                       jax.ShapeDtypeStruct((B, num_heads, S, S), attn_dtype)),
            grid=(B, n_q),
            in_specs=[
                pl.BlockSpec((1, S, H), lambda b, q: (b, 0, 0)),      # x (full seq per batch)
                pl.BlockSpec((1, 1, S), lambda b, q: (b, 0, 0)),      # additive mask bias
                rep(pos),                                             # positional embedding
            ] + [rep(a) for a in rep_args],
            out_specs=(pl.BlockSpec((1, q_tile, H), lambda b, q: (b, q, 0)),
                       pl.BlockSpec((1, num_heads, q_tile, S),
                                    lambda b, q: (b, 0, q, 0))),
            compiler_params=pltpu.CompilerParams(
                dimension_semantics=("parallel", "parallel"),
                vmem_limit_bytes=vmem_limit),
            cost_estimate=pl.CostEstimate(flops=int(flops),
                                          transcendentals=int(transcendentals),
                                          bytes_accessed=int(bytes_accessed)),
        )

    # Preferred configuration first; each fallback removes one optional feature so the
    # kernel always compiles on the installed jax/Mosaic build.
    attempts = [(True, True), (True, False), (False, True), (False, False)]
    last_err = None
    for reshape_heads, single_buffer in attempts:
        try:
            out, attn = _build(reshape_heads, single_buffer)(x, mask_bias, pos, *rep_args)
            return out, attn
        except Exception as err:   # unsupported pipeline_mode / reshape on this build
            last_err = err
    raise last_err


# ------------------------- pure-JAX reference (for checking) -------------------------
def reference(x, mask, params, *, num_heads, use_position_embedding=True):
    B, S, H = x.shape
    D = params["wq"].shape[1]
    dk = D // num_heads
    if use_position_embedding:
        x = x + params["pos"][None, :S, :]
    h = _layernorm(x, params["ln1_g"], params["ln1_b"])
    q = h @ params["wq"] + params["bq"]
    k = h @ params["wk"] + params["bk"]
    v = h @ params["wv"] + params["bv"]
    qh = q.reshape(B, S, num_heads, dk).transpose(0, 2, 1, 3)
    kh = k.reshape(B, S, num_heads, dk).transpose(0, 2, 1, 3)
    vh = v.reshape(B, S, num_heads, dk).transpose(0, 2, 1, 3)
    scores = jnp.einsum("bhqd,bhkd->bhqk", qh, kh) / math.sqrt(dk)
    scores = jnp.where(mask[:, None, None, :] == 0, -1e9, scores)
    p = jax.nn.softmax(scores, axis=-1)
    ctx = jnp.einsum("bhqk,bhkd->bhqd", p, vh).transpose(0, 2, 1, 3).reshape(B, S, D)
    x1 = x + (ctx @ params["wo"] + params["bo"])
    h2 = _layernorm(x1, params["ln2_g"], params["ln2_b"])
    ff = _gelu(h2 @ params["w1"] + params["b1"]) @ params["w2"] + params["b2"]
    return x1 + ff, p


if __name__ == "__main__":
    B, S = 2, 8
    input_dim = hidden = 32          # residual requires input_dim == hidden
    num_heads = 4
    d_ff = 4 * hidden                # feed_forward_hidden
    max_len = 151

    key = jax.random.PRNGKey(0)
    ks = jax.random.split(key, 12)
    sc = 0.05

    params = {
        "wq": sc * jax.random.normal(ks[0], (input_dim, hidden), jnp.float32),
        "bq": sc * jax.random.normal(ks[1], (1, hidden), jnp.float32),
        "wk": sc * jax.random.normal(ks[2], (input_dim, hidden), jnp.float32),
        "bk": sc * jax.random.normal(ks[3], (1, hidden), jnp.float32),
        "wv": sc * jax.random.normal(ks[4], (input_dim, hidden), jnp.float32),
        "bv": sc * jax.random.normal(ks[5], (1, hidden), jnp.float32),
        "wo": sc * jax.random.normal(ks[6], (hidden, hidden), jnp.float32),
        "bo": sc * jax.random.normal(ks[7], (1, hidden), jnp.float32),
        "w1": sc * jax.random.normal(ks[8], (hidden, d_ff), jnp.float32),
        "b1": sc * jax.random.normal(ks[9], (1, d_ff), jnp.float32),
        "w2": sc * jax.random.normal(ks[10], (d_ff, hidden), jnp.float32),
        "b2": sc * jax.random.normal(ks[11], (1, hidden), jnp.float32),
        "ln1_g": jnp.ones((1, hidden), jnp.float32),
        "ln1_b": jnp.zeros((1, hidden), jnp.float32),
        "ln2_g": jnp.ones((1, hidden), jnp.float32),
        "ln2_b": jnp.zeros((1, hidden), jnp.float32),
        # PositionEmbedding.weight (xavier-normal-ish, deterministic)
        "pos": math.sqrt(2.0 / (max_len + hidden))
               * jax.random.normal(jax.random.PRNGKey(1), (max_len, hidden), jnp.float32),
    }

    x = jax.random.normal(jax.random.PRNGKey(2), (B, S, hidden), jnp.float32)
    mask = jnp.ones((B, S), jnp.float32).at[1, 6:].set(0.0)   # pad last 2 tokens of batch 1

    out, attn = transformer_block(x, mask, params,
                                  num_heads=num_heads, use_position_embedding=True)
    jax.block_until_ready((out, attn))

    ref_out, ref_attn = reference(x, mask, params,
                                  num_heads=num_heads, use_position_embedding=True)
    assert out.shape == (B, S, hidden) and attn.shape == (B, num_heads, S, S)
    assert jnp.allclose(out, ref_out, atol=1e-2, rtol=1e-2), "output mismatch"
    assert jnp.allclose(attn, ref_attn, atol=1e-2, rtol=1e-2), "attention mismatch"

    print("KERNEL_OK")
</pallas_src>

<mosaic_0001>
module attributes {stable_mosaic.version = 11 : i64} {
  func.func @transformer_block_kernel(%arg0: i32, %arg1: i32, %arg2: memref<1x8x32xf32, #tpu.memory_space<vmem>>, %arg3: memref<1x1x8xf32, #tpu.memory_space<vmem>>, %arg4: memref<8x32xf32, #tpu.memory_space<vmem>>, %arg5: memref<1x32xf32, #tpu.memory_space<vmem>>, %arg6: memref<1x32xf32, #tpu.memory_space<vmem>>, %arg7: memref<32x32xbf16, #tpu.memory_space<vmem>>, %arg8: memref<1x32xf32, #tpu.memory_space<vmem>>, %arg9: memref<32x64xbf16, #tpu.memory_space<vmem>>, %arg10: memref<1x64xf32, #tpu.memory_space<vmem>>, %arg11: memref<32x32xbf16, #tpu.memory_space<vmem>>, %arg12: memref<1x32xf32, #tpu.memory_space<vmem>>, %arg13: memref<1x32xf32, #tpu.memory_space<vmem>>, %arg14: memref<1x32xf32, #tpu.memory_space<vmem>>, %arg15: memref<32x128xbf16, #tpu.memory_space<vmem>>, %arg16: memref<1x128xf32, #tpu.memory_space<vmem>>, %arg17: memref<128x32xbf16, #tpu.memory_space<vmem>>, %arg18: memref<1x32xf32, #tpu.memory_space<vmem>>, %arg19: memref<1x8x32xf32, #tpu.memory_space<vmem>>, %arg20: memref<1x4x8x8xf32, #tpu.memory_space<vmem>>) attributes {dimension_semantics = [#tpu.dimension_semantics<parallel>, #tpu.dimension_semantics<parallel>], iteration_bounds = array<i64: 2, 1>, scalar_prefetch = 0 : i64, scratch_operands = 0 : i64, tpu.core_type = #tpu.core_type<tc>, window_params = [{transform_indices = @transform_0, window_bounds = array<i64: 1, 8, 32>}, {transform_indices = @transform_1, window_bounds = array<i64: 1, 1, 8>}, {pipeline_mode = #tpu.pipeline_mode<synchronous>, transform_indices = @transform_2, window_bounds = array<i64: 8, 32>}, {pipeline_mode = #tpu.pipeline_mode<synchronous>, transform_indices = @transform_3, window_bounds = array<i64: 1, 32>}, {pipeline_mode = #tpu.pipeline_mode<synchronous>, transform_indices = @transform_4, window_bounds = array<i64: 1, 32>}, {pipeline_mode = #tpu.pipeline_mode<synchronous>, transform_indices = @transform_5, window_bounds = array<i64: 32, 32>}, {pipeline_mode = #tpu.pipeline_mode<synchronous>, transform_indices = @transform_6, window_bounds = array<i64: 1, 32>}, {pipeline_mode = #tpu.pipeline_mode<synchronous>, transform_indices = @transform_7, window_bounds = array<i64: 32, 64>}, {pipeline_mode = #tpu.pipeline_mode<synchronous>, transform_indices = @transform_8, window_bounds = array<i64: 1, 64>}, {pipeline_mode = #tpu.pipeline_mode<synchronous>, transform_indices = @transform_9, window_bounds = array<i64: 32, 32>}, {pipeline_mode = #tpu.pipeline_mode<synchronous>, transform_indices = @transform_10, window_bounds = array<i64: 1, 32>}, {pipeline_mode = #tpu.pipeline_mode<synchronous>, transform_indices = @transform_11, window_bounds = array<i64: 1, 32>}, {pipeline_mode = #tpu.pipeline_mode<synchronous>, transform_indices = @transform_12, window_bounds = array<i64: 1, 32>}, {pipeline_mode = #tpu.pipeline_mode<synchronous>, transform_indices = @transform_13, window_bounds = array<i64: 32, 128>}, {pipeline_mode = #tpu.pipeline_mode<synchronous>, transform_indices = @transform_14, window_bounds = array<i64: 1, 128>}, {pipeline_mode = #tpu.pipeline_mode<synchronous>, transform_indices = @transform_15, window_bounds = array<i64: 128, 32>}, {pipeline_mode = #tpu.pipeline_mode<synchronous>, transform_indices = @transform_16, window_bounds = array<i64: 1, 32>}, {transform_indices = @transform_17, window_bounds = array<i64: 1, 8, 32>}, {transform_indices = @transform_18, window_bounds = array<i64: 1, 4, 8, 8>}]} {
    %c8_i32 = arith.constant 8 : i32
    %0 = arith.muli %arg1, %c8_i32 : i32
    %1 = tpu.assume_multiple %0, 8 : i32
    %c0 = arith.constant 0 : index
    %c0_0 = arith.constant 0 : index
    %c0_1 = arith.constant 0 : index
    %2 = vector.load %arg2[%c0, %c0_0, %c0_1] : memref<1x8x32xf32, #tpu.memory_space<vmem>>, vector<1x8x32xf32>
    %3 = vector.shape_cast %2 : vector<1x8x32xf32> to vector<8x32xf32>
    %c0_2 = arith.constant 0 : index
    %c0_3 = arith.constant 0 : index
    %4 = vector.load %arg4[%c0_2, %c0_3] : memref<8x32xf32, #tpu.memory_space<vmem>>, vector<8x32xf32>
    %5 = arith.addf %3, %4 : vector<8x32xf32>
    %c0_4 = arith.constant 0 : index
    %c0_5 = arith.constant 0 : index
    %6 = vector.load %arg5[%c0_4, %c0_5] : memref<1x32xf32, #tpu.memory_space<vmem>>, vector<1x32xf32>
    %c0_6 = arith.constant 0 : index
    %c0_7 = arith.constant 0 : index
    %7 = vector.load %arg6[%c0_6, %c0_7] : memref<1x32xf32, #tpu.memory_space<vmem>>, vector<1x32xf32>
    %cst = arith.constant dense<0.000000e+00> : vector<8xf32>
    %8 = vector.multi_reduction <add>, %5, %cst [1] : vector<8x32xf32> to vector<8xf32>
    %9 = vector.shape_cast %8 : vector<8xf32> to vector<8x1xf32>
    %cst_8 = arith.constant 3.200000e+01 : f32
    %10 = vector.broadcast %cst_8 : f32 to vector<8x1xf32>
    %11 = arith.divf %9, %10 : vector<8x1xf32>
    %12 = vector.broadcast %11 : vector<8x1xf32> to vector<8x32xf32>
    %13 = arith.subf %5, %12 : vector<8x32xf32>
    %14 = arith.mulf %13, %13 : vector<8x32xf32>
    %cst_9 = arith.constant dense<0.000000e+00> : vector<8xf32>
    %15 = vector.multi_reduction <add>, %14, %cst_9 [1] : vector<8x32xf32> to vector<8xf32>
    %16 = vector.shape_cast %15 : vector<8xf32> to vector<8x1xf32>
    %cst_10 = arith.constant 3.200000e+01 : f32
    %17 = vector.broadcast %cst_10 : f32 to vector<8x1xf32>
    %18 = arith.divf %16, %17 : vector<8x1xf32>
    %19 = vector.broadcast %11 : vector<8x1xf32> to vector<8x32xf32>
    %20 = arith.subf %5, %19 : vector<8x32xf32>
    %cst_11 = arith.constant 9.99999974E-6 : f32
    %21 = vector.broadcast %cst_11 : f32 to vector<8x1xf32>
    %22 = arith.addf %18, %21 : vector<8x1xf32>
    %23 = math.rsqrt %22 : vector<8x1xf32>
    %24 = vector.broadcast %23 : vector<8x1xf32> to vector<8x32xf32>
    %25 = arith.mulf %20, %24 : vector<8x32xf32>
    %26 = vector.broadcast %6 : vector<1x32xf32> to vector<8x32xf32>
    %27 = arith.mulf %25, %26 : vector<8x32xf32>
    %28 = vector.broadcast %7 : vector<1x32xf32> to vector<8x32xf32>
    %29 = arith.addf %27, %28 : vector<8x32xf32>
    %c0_12 = arith.constant 0 : index
    %30 = arith.index_cast %1 : i32 to index
    %c0_13 = arith.constant 0 : index
    %31 = vector.load %arg2[%c0_12, %30, %c0_13] : memref<1x8x32xf32, #tpu.memory_space<vmem>>, vector<1x8x32xf32>
    %32 = vector.shape_cast %31 : vector<1x8x32xf32> to vector<8x32xf32>
    %33 = arith.index_cast %1 : i32 to index
    %c0_14 = arith.constant 0 : index
    %34 = vector.load %arg4[%33, %c0_14] : memref<8x32xf32, #tpu.memory_space<vmem>>, vector<8x32xf32>
    %35 = arith.addf %32, %34 : vector<8x32xf32>
    %c0_15 = arith.constant 0 : index
    %c0_16 = arith.constant 0 : index
    %36 = vector.load %arg5[%c0_15, %c0_16] : memref<1x32xf32, #tpu.memory_space<vmem>>, vector<1x32xf32>
    %c0_17 = arith.constant 0 : index
    %c0_18 = arith.constant 0 : index
    %37 = vector.load %arg6[%c0_17, %c0_18] : memref<1x32xf32, #tpu.memory_space<vmem>>, vector<1x32xf32>
    %cst_19 = arith.constant dense<0.000000e+00> : vector<8xf32>
    %38 = vector.multi_reduction <add>, %35, %cst_19 [1] : vector<8x32xf32> to vector<8xf32>
    %39 = vector.shape_cast %38 : vector<8xf32> to vector<8x1xf32>
    %cst_20 = arith.constant 3.200000e+01 : f32
    %40 = vector.broadcast %cst_20 : f32 to vector<8x1xf32>
    %41 = arith.divf %39, %40 : vector<8x1xf32>
    %42 = vector.broadcast %41 : vector<8x1xf32> to vector<8x32xf32>
    %43 = arith.subf %35, %42 : vector<8x32xf32>
    %44 = arith.mulf %43, %43 : vector<8x32xf32>
    %cst_21 = arith.constant dense<0.000000e+00> : vector<8xf32>
    %45 = vector.multi_reduction <add>, %44, %cst_21 [1] : vector<8x32xf32> to vector<8xf32>
    %46 = vector.shape_cast %45 : vector<8xf32> to vector<8x1xf32>
    %cst_22 = arith.constant 3.200000e+01 : f32
    %47 = vector.broadcast %cst_22 : f32 to vector<8x1xf32>
    %48 = arith.divf %46, %47 : vector<8x1xf32>
    %49 = vector.broadcast %41 : vector<8x1xf32> to vector<8x32xf32>
    %50 = arith.subf %35, %49 : vector<8x32xf32>
    %cst_23 = arith.constant 9.99999974E-6 : f32
    %51 = vector.broadcast %cst_23 : f32 to vector<8x1xf32>
    %52 = arith.addf %48, %51 : vector<8x1xf32>
    %53 = math.rsqrt %52 : vector<8x1xf32>
    %54 = vector.broadcast %53 : vector<8x1xf32> to vector<8x32xf32>
    %55 = arith.mulf %50, %54 : vector<8x32xf32>
    %56 = vector.broadcast %36 : vector<1x32xf32> to vector<8x32xf32>
    %57 = arith.mulf %55, %56 : vector<8x32xf32>
    %58 = vector.broadcast %37 : vector<1x32xf32> to vector<8x32xf32>
    %59 = arith.addf %57, %58 : vector<8x32xf32>
    %60 = arith.truncf %59 : vector<8x32xf32> to vector<8x32xbf16>
    %c0_24 = arith.constant 0 : index
    %c0_25 = arith.constant 0 : index
    %61 = vector.load %arg7[%c0_24, %c0_25] : memref<32x32xbf16, #tpu.memory_space<vmem>>, vector<32x32xbf16>
    %cst_26 = arith.constant dense<0.000000e+00> : vector<8x32xf32>
    %62 = tpu.matmul %60, %61, %cst_26 {dimension_numbers = #tpu.dot_dimension_numbers<[1], [0], [0], [1], [0, 0, 1, 1], [], []>} : vector<8x32xbf16>, vector<32x32xbf16>, vector<8x32xf32> -> vector<8x32xf32>
    %c0_27 = arith.constant 0 : index
    %c0_28 = arith.constant 0 : index
    %63 = vector.load %arg8[%c0_27, %c0_28] : memref<1x32xf32, #tpu.memory_space<vmem>>, vector<1x32xf32>
    %64 = vector.broadcast %63 : vector<1x32xf32> to vector<8x32xf32>
    %65 = arith.addf %62, %64 : vector<8x32xf32>
    %66 = arith.truncf %29 : vector<8x32xf32> to vector<8x32xbf16>
    %c0_29 = arith.constant 0 : index
    %c0_30 = arith.constant 0 : index
    %67 = vector.load %arg9[%c0_29, %c0_30] : memref<32x64xbf16, #tpu.memory_space<vmem>>, vector<32x64xbf16>
    %cst_31 = arith.constant dense<0.000000e+00> : vector<8x64xf32>
    %68 = tpu.matmul %66, %67, %cst_31 {dimension_numbers = #tpu.dot_dimension_numbers<[1], [0], [0], [1], [0, 0, 1, 1], [], []>} : vector<8x32xbf16>, vector<32x64xbf16>, vector<8x64xf32> -> vector<8x64xf32>
    %c0_32 = arith.constant 0 : index
    %c0_33 = arith.constant 0 : index
    %69 = vector.load %arg10[%c0_32, %c0_33] : memref<1x64xf32, #tpu.memory_space<vmem>>, vector<1x64xf32>
    %70 = vector.broadcast %69 : vector<1x64xf32> to vector<8x64xf32>
    %71 = arith.addf %68, %70 : vector<8x64xf32>
    %72 = vector.shape_cast %65 : vector<8x32xf32> to vector<8x4x8xf32>
    %73 = tpu.transpose %72, [1, 0, 2] : vector<8x4x8xf32> -> vector<4x8x8xf32>
    %74 = arith.truncf %73 : vector<4x8x8xf32> to vector<4x8x8xbf16>
    %75 = vector.extract_strided_slice %71 {offsets = [0, 0], sizes = [8, 32], strides = [1, 1]} : vector<8x64xf32> to vector<8x32xf32>
    %76 = vector.shape_cast %75 : vector<8x32xf32> to vector<8x4x8xf32>
    %77 = tpu.transpose %76, [1, 0, 2] : vector<8x4x8xf32> -> vector<4x8x8xf32>
    %78 = arith.truncf %77 : vector<4x8x8xf32> to vector<4x8x8xbf16>
    %79 = vector.extract_strided_slice %71 {offsets = [0, 32], sizes = [8, 32], strides = [1, 1]} : vector<8x64xf32> to vector<8x32xf32>
    %80 = vector.shape_cast %79 : vector<8x32xf32> to vector<8x4x8xf32>
    %81 = tpu.transpose %80, [1, 0, 2] : vector<8x4x8xf32> -> vector<4x8x8xf32>
    %82 = arith.truncf %81 : vector<4x8x8xf32> to vector<4x8x8xbf16>
    "tpu.trace_start"() <{level = 10 : i32, message = "hqd,hkd->hqk"}> : () -> ()
    %cst_34 = arith.constant dense<0.000000e+00> : vector<4x8x8xf32>
    %83 = tpu.matmul %74, %78, %cst_34 {dimension_numbers = #tpu.dot_dimension_numbers<[2], [2], [1], [1], [0, 0, 0, 1, 1, 1], [0], [0]>} : vector<4x8x8xbf16>, vector<4x8x8xbf16>, vector<4x8x8xf32> -> vector<4x8x8xf32>
    "tpu.trace_stop"() : () -> ()
    %c0_35 = arith.constant 0 : index
    %c0_36 = arith.constant 0 : index
    %c0_37 = arith.constant 0 : index
    %84 = vector.load %arg3[%c0_35, %c0_36, %c0_37] : memref<1x1x8xf32, #tpu.memory_space<vmem>>, vector<1x1x8xf32>
    %85 = vector.broadcast %84 : vector<1x1x8xf32> to vector<4x8x8xf32>
    %86 = arith.addf %83, %85 : vector<4x8x8xf32>
    %cst_38 = arith.constant dense<0xFF800000> : vector<4x8xf32>
    %87 = vector.multi_reduction <maximumf>, %86, %cst_38 [2] : vector<4x8x8xf32> to vector<4x8xf32>
    %88 = vector.shape_cast %87 : vector<4x8xf32> to vector<4x8x1xf32>
    %89 = vector.broadcast %88 : vector<4x8x1xf32> to vector<4x8x8xf32>
    %90 = arith.subf %86, %89 : vector<4x8x8xf32>
    %91 = math.exp %90 : vector<4x8x8xf32>
    %cst_39 = arith.constant dense<0.000000e+00> : vector<4x8xf32>
    %92 = vector.multi_reduction <add>, %91, %cst_39 [2] : vector<4x8x8xf32> to vector<4x8xf32>
    %93 = vector.shape_cast %92 : vector<4x8xf32> to vector<4x8x1xf32>
    %cst_40 = arith.constant 1.000000e+00 : f32
    %94 = vector.broadcast %cst_40 : f32 to vector<4x8x1xf32>
    %95 = arith.divf %94, %93 : vector<4x8x1xf32>
    %96 = vector.broadcast %95 : vector<4x8x1xf32> to vector<4x8x8xf32>
    %97 = arith.mulf %91, %96 : vector<4x8x8xf32>
    %c0_41 = arith.constant 0 : index
    %c0_42 = arith.constant 0 : index
    %c0_43 = arith.constant 0 : index
    %c0_44 = arith.constant 0 : index
    %98 = vector.load %arg20[%c0_41, %c0_42, %c0_43, %c0_44] : memref<1x4x8x8xf32, #tpu.memory_space<vmem>>, vector<1x4x8x8xf32>
    %99 = vector.shape_cast %98 : vector<1x4x8x8xf32> to vector<4x8x8xf32>
    %100 = vector.shape_cast %97 : vector<4x8x8xf32> to vector<1x4x8x8xf32>
    tpu.vector_store %arg20[%c0_41, %c0_42, %c0_43, %c0_44], %100 {strides = array<i32>} : memref<1x4x8x8xf32, #tpu.memory_space<vmem>>, vector<1x4x8x8xf32>,
    %101 = arith.truncf %97 : vector<4x8x8xf32> to vector<4x8x8xbf16>
    "tpu.trace_start"() <{level = 10 : i32, message = "hqk,hkd->hqd"}> : () -> ()
    %cst_45 = arith.constant dense<0.000000e+00> : vector<4x8x8xf32>
    %102 = tpu.matmul %101, %82, %cst_45 {dimension_numbers = #tpu.dot_dimension_numbers<[2], [1], [1], [2], [0, 0, 0, 1, 1, 2], [0], [0]>} : vector<4x8x8xbf16>, vector<4x8x8xbf16>, vector<4x8x8xf32> -> vector<4x8x8xf32>
    "tpu.trace_stop"() : () -> ()
    %103 = tpu.transpose %102, [1, 0, 2] : vector<4x8x8xf32> -> vector<8x4x8xf32>
    %104 = vector.shape_cast %103 : vector<8x4x8xf32> to vector<8x32xf32>
    %105 = arith.truncf %104 : vector<8x32xf32> to vector<8x32xbf16>
    %c0_46 = arith.constant 0 : index
    %c0_47 = arith.constant 0 : index
    %106 = vector.load %arg11[%c0_46, %c0_47] : memref<32x32xbf16, #tpu.memory_space<vmem>>, vector<32x32xbf16>
    %cst_48 = arith.constant dense<0.000000e+00> : vector<8x32xf32>
    %107 = tpu.matmul %105, %106, %cst_48 {dimension_numbers = #tpu.dot_dimension_numbers<[1], [0], [0], [1], [0, 0, 1, 1], [], []>} : vector<8x32xbf16>, vector<32x32xbf16>, vector<8x32xf32> -> vector<8x32xf32>
    %c0_49 = arith.constant 0 : index
    %c0_50 = arith.constant 0 : index
    %108 = vector.load %arg12[%c0_49, %c0_50] : memref<1x32xf32, #tpu.memory_space<vmem>>, vector<1x32xf32>
    %109 = vector.broadcast %108 : vector<1x32xf32> to vector<8x32xf32>
    %110 = arith.addf %107, %109 : vector<8x32xf32>
    %111 = arith.addf %35, %110 : vector<8x32xf32>
    %c0_51 = arith.constant 0 : index
    %c0_52 = arith.constant 0 : index
    %112 = vector.load %arg13[%c0_51, %c0_52] : memref<1x32xf32, #tpu.memory_space<vmem>>, vector<1x32xf32>
    %c0_53 = arith.constant 0 : index
    %c0_54 = arith.constant 0 : index
    %113 = vector.load %arg14[%c0_53, %c0_54] : memref<1x32xf32, #tpu.memory_space<vmem>>, vector<1x32xf32>
    %cst_55 = arith.constant dense<0.000000e+00> : vector<8xf32>
    %114 = vector.multi_reduction <add>, %111, %cst_55 [1] : vector<8x32xf32> to vector<8xf32>
    %115 = vector.shape_cast %114 : vector<8xf32> to vector<8x1xf32>
    %cst_56 = arith.constant 3.200000e+01 : f32
    %116 = vector.broadcast %cst_56 : f32 to vector<8x1xf32>
    %117 = arith.divf %115, %116 : vector<8x1xf32>
    %118 = vector.broadcast %117 : vector<8x1xf32> to vector<8x32xf32>
    %119 = arith.subf %111, %118 : vector<8x32xf32>
    %120 = arith.mulf %119, %119 : vector<8x32xf32>
    %cst_57 = arith.constant dense<0.000000e+00> : vector<8xf32>
    %121 = vector.multi_reduction <add>, %120, %cst_57 [1] : vector<8x32xf32> to vector<8xf32>
    %122 = vector.shape_cast %121 : vector<8xf32> to vector<8x1xf32>
    %cst_58 = arith.constant 3.200000e+01 : f32
    %123 = vector.broadcast %cst_58 : f32 to vector<8x1xf32>
    %124 = arith.divf %122, %123 : vector<8x1xf32>
    %125 = vector.broadcast %117 : vector<8x1xf32> to vector<8x32xf32>
    %126 = arith.subf %111, %125 : vector<8x32xf32>
    %cst_59 = arith.constant 9.99999974E-6 : f32
    %127 = vector.broadcast %cst_59 : f32 to vector<8x1xf32>
    %128 = arith.addf %124, %127 : vector<8x1xf32>
    %129 = math.rsqrt %128 : vector<8x1xf32>
    %130 = vector.broadcast %129 : vector<8x1xf32> to vector<8x32xf32>
    %131 = arith.mulf %126, %130 : vector<8x32xf32>
    %132 = vector.broadcast %112 : vector<1x32xf32> to vector<8x32xf32>
    %133 = arith.mulf %131, %132 : vector<8x32xf32>
    %134 = vector.broadcast %113 : vector<1x32xf32> to vector<8x32xf32>
    %135 = arith.addf %133, %134 : vector<8x32xf32>
    %136 = arith.truncf %135 : vector<8x32xf32> to vector<8x32xbf16>
    %c0_60 = arith.constant 0 : index
    %c0_61 = arith.constant 0 : index
    %137 = vector.load %arg15[%c0_60, %c0_61] : memref<32x128xbf16, #tpu.memory_space<vmem>>, vector<32x128xbf16>
    %cst_62 = arith.constant dense<0.000000e+00> : vector<8x128xf32>
    %138 = tpu.matmul %136, %137, %cst_62 {dimension_numbers = #tpu.dot_dimension_numbers<[1], [0], [0], [1], [0, 0, 1, 1], [], []>} : vector<8x32xbf16>, vector<32x128xbf16>, vector<8x128xf32> -> vector<8x128xf32>
    %c0_63 = arith.constant 0 : index
    %c0_64 = arith.constant 0 : index
    %139 = vector.load %arg16[%c0_63, %c0_64] : memref<1x128xf32, #tpu.memory_space<vmem>>, vector<1x128xf32>
    %140 = vector.broadcast %139 : vector<1x128xf32> to vector<8x128xf32>
    %141 = arith.addf %138, %140 : vector<8x128xf32>
    %cst_65 = arith.constant 5.000000e-01 : f32
    %142 = vector.broadcast %cst_65 : f32 to vector<8x128xf32>
    %143 = arith.mulf %142, %141 : vector<8x128xf32>
    %cst_66 = arith.constant 4.471500e-02 : f32
    %144 = vector.broadcast %cst_66 : f32 to vector<8x128xf32>
    %145 = arith.mulf %144, %141 : vector<8x128xf32>
    %146 = arith.mulf %145, %141 : vector<8x128xf32>
    %147 = arith.mulf %146, %141 : vector<8x128xf32>
    %148 = arith.addf %141, %147 : vector<8x128xf32>
    %cst_67 = arith.constant 0.797884583 : f32
    %149 = vector.broadcast %cst_67 : f32 to vector<8x128xf32>
    %150 = arith.mulf %149, %148 : vector<8x128xf32>
    %151 = math.tanh %150 : vector<8x128xf32>
    %cst_68 = arith.constant 1.000000e+00 : f32
    %152 = vector.broadcast %cst_68 : f32 to vector<8x128xf32>
    %153 = arith.addf %152, %151 : vector<8x128xf32>
    %154 = arith.mulf %143, %153 : vector<8x128xf32>
    %155 = arith.truncf %154 : vector<8x128xf32> to vector<8x128xbf16>
    %c0_69 = arith.constant 0 : index
    %c0_70 = arith.constant 0 : index
    %156 = vector.load %arg17[%c0_69, %c0_70] : memref<128x32xbf16, #tpu.memory_space<vmem>>, vector<128x32xbf16>
    %cst_71 = arith.constant dense<0.000000e+00> : vector<8x32xf32>
    %157 = tpu.matmul %155, %156, %cst_71 {dimension_numbers = #tpu.dot_dimension_numbers<[1], [0], [0], [1], [0, 0, 1, 1], [], []>} : vector<8x128xbf16>, vector<128x32xbf16>, vector<8x32xf32> -> vector<8x32xf32>
    %c0_72 = arith.constant 0 : index
    %c0_73 = arith.constant 0 : index
    %158 = vector.load %arg18[%c0_72, %c0_73] : memref<1x32xf32, #tpu.memory_space<vmem>>, vector<1x32xf32>
    %159 = vector.broadcast %158 : vector<1x32xf32> to vector<8x32xf32>
    %160 = arith.addf %157, %159 : vector<8x32xf32>
    %161 = arith.addf %111, %160 : vector<8x32xf32>
    %c0_74 = arith.constant 0 : index
    %c0_75 = arith.constant 0 : index
    %c0_76 = arith.constant 0 : index
    %162 = vector.load %arg19[%c0_74, %c0_75, %c0_76] : memref<1x8x32xf32, #tpu.memory_space<vmem>>, vector<1x8x32xf32>
    %163 = vector.shape_cast %162 : vector<1x8x32xf32> to vector<8x32xf32>
    %164 = vector.shape_cast %161 : vector<8x32xf32> to vector<1x8x32xf32>
    tpu.vector_store %arg19[%c0_74, %c0_75, %c0_76], %164 {strides = array<i32>} : memref<1x8x32xf32, #tpu.memory_space<vmem>>, vector<1x8x32xf32>,
    return
  }
  func.func @transform_0(%arg0: i32, %arg1: i32) -> (i32, i32, i32) {
    %c0_i32 = arith.constant 0 : i32
    %c0_i32_0 = arith.constant 0 : i32
    %c0_i32_1 = arith.constant 0 : i32
    return %arg0, %c0_i32, %c0_i32_0 : i32, i32, i32
  }
  func.func @transform_1(%arg0: i32, %arg1: i32) -> (i32, i32, i32) {
    %c0_i32 = arith.constant 0 : i32
    %c0_i32_0 = arith.constant 0 : i32
    %c0_i32_1 = arith.constant 0 : i32
    return %arg0, %c0_i32, %c0_i32_0 : i32, i32, i32
  }
  func.func @transform_2(%arg0: i32, %arg1: i32) -> (i32, i32) {
    %c0_i32 = arith.constant 0 : i32
    %c0_i32_0 = arith.constant 0 : i32
    %c0_i32_1 = arith.constant 0 : i32
    return %c0_i32, %c0_i32_0 : i32, i32
  }
  func.func @transform_3(%arg0: i32, %arg1: i32) -> (i32, i32) {
    %c0_i32 = arith.constant 0 : i32
    %c0_i32_0 = arith.constant 0 : i32
    %c0_i32_1 = arith.constant 0 : i32
    return %c0_i32, %c0_i32_0 : i32, i32
  }
  func.func @transform_4(%arg0: i32, %arg1: i32) -> (i32, i32) {
    %c0_i32 = arith.constant 0 : i32
    %c0_i32_0 = arith.constant 0 : i32
    %c0_i32_1 = arith.constant 0 : i32
    return %c0_i32, %c0_i32_0 : i32, i32
  }
  func.func @transform_5(%arg0: i32, %arg1: i32) -> (i32, i32) {
    %c0_i32 = arith.constant 0 : i32
    %c0_i32_0 = arith.constant 0 : i32
    %c0_i32_1 = arith.constant 0 : i32
    return %c0_i32, %c0_i32_0 : i32, i32
  }
  func.func @transform_6(%arg0: i32, %arg1: i32) -> (i32, i32) {
    %c0_i32 = arith.constant 0 : i32
    %c0_i32_0 = arith.constant 0 : i32
    %c0_i32_1 = arith.constant 0 : i32
    return %c0_i32, %c0_i32_0 : i32, i32
  }
  func.func @transform_7(%arg0: i32, %arg1: i32) -> (i32, i32) {
    %c0_i32 = arith.constant 0 : i32
    %c0_i32_0 = arith.constant 0 : i32
    %c0_i32_1 = arith.constant 0 : i32
    return %c0_i32, %c0_i32_0 : i32, i32
  }
  func.func @transform_8(%arg0: i32, %arg1: i32) -> (i32, i32) {
    %c0_i32 = arith.constant 0 : i32
    %c0_i32_0 = arith.constant 0 : i32
    %c0_i32_1 = arith.constant 0 : i32
    return %c0_i32, %c0_i32_0 : i32, i32
  }
  func.func @transform_9(%arg0: i32, %arg1: i32) -> (i32, i32) {
    %c0_i32 = arith.constant 0 : i32
    %c0_i32_0 = arith.constant 0 : i32
    %c0_i32_1 = arith.constant 0 : i32
    return %c0_i32, %c0_i32_0 : i32, i32
  }
  func.func @transform_10(%arg0: i32, %arg1: i32) -> (i32, i32) {
    %c0_i32 = arith.constant 0 : i32
    %c0_i32_0 = arith.constant 0 : i32
    %c0_i32_1 = arith.constant 0 : i32
    return %c0_i32, %c0_i32_0 : i32, i32
  }
  func.func @transform_11(%arg0: i32, %arg1: i32) -> (i32, i32) {
    %c0_i32 = arith.constant 0 : i32
    %c0_i32_0 = arith.constant 0 : i32
    %c0_i32_1 = arith.constant 0 : i32
    return %c0_i32, %c0_i32_0 : i32, i32
  }
  func.func @transform_12(%arg0: i32, %arg1: i32) -> (i32, i32) {
    %c0_i32 = arith.constant 0 : i32
    %c0_i32_0 = arith.constant 0 : i32
    %c0_i32_1 = arith.constant 0 : i32
    return %c0_i32, %c0_i32_0 : i32, i32
  }
  func.func @transform_13(%arg0: i32, %arg1: i32) -> (i32, i32) {
    %c0_i32 = arith.constant 0 : i32
    %c0_i32_0 = arith.constant 0 : i32
    %c0_i32_1 = arith.constant 0 : i32
    return %c0_i32, %c0_i32_0 : i32, i32
  }
  func.func @transform_14(%arg0: i32, %arg1: i32) -> (i32, i32) {
    %c0_i32 = arith.constant 0 : i32
    %c0_i32_0 = arith.constant 0 : i32
    %c0_i32_1 = arith.constant 0 : i32
    return %c0_i32, %c0_i32_0 : i32, i32
  }
  func.func @transform_15(%arg0: i32, %arg1: i32) -> (i32, i32) {
    %c0_i32 = arith.constant 0 : i32
    %c0_i32_0 = arith.constant 0 : i32
    %c0_i32_1 = arith.constant 0 : i32
    return %c0_i32, %c0_i32_0 : i32, i32
  }
  func.func @transform_16(%arg0: i32, %arg1: i32) -> (i32, i32) {
    %c0_i32 = arith.constant 0 : i32
    %c0_i32_0 = arith.constant 0 : i32
    %c0_i32_1 = arith.constant 0 : i32
    return %c0_i32, %c0_i32_0 : i32, i32
  }
  func.func @transform_17(%arg0: i32, %arg1: i32) -> (i32, i32, i32) {
    %c0_i32 = arith.constant 0 : i32
    %c0_i32_0 = arith.constant 0 : i32
    return %arg0, %arg1, %c0_i32 : i32, i32, i32
  }
  func.func @transform_18(%arg0: i32, %arg1: i32) -> (i32, i32, i32, i32) {
    %c0_i32 = arith.constant 0 : i32
    %c0_i32_0 = arith.constant 0 : i32
    %c0_i32_1 = arith.constant 0 : i32
    return %arg0, %c0_i32, %arg1, %c0_i32_0 : i32, i32, i32, i32
  }
}

module attributes {stable_mosaic.version = 11 : i64} {
  func.func @transformer_block_kernel(%arg0: i32, %arg1: i32, %arg2: memref<1x8x32xf32, #tpu.memory_space<vmem>>, %arg3: memref<1x1x8xf32, #tpu.memory_space<vmem>>, %arg4: memref<8x32xf32, #tpu.memory_space<vmem>>, %arg5: memref<1x32xf32, #tpu.memory_space<vmem>>, %arg6: memref<1x32xf32, #tpu.memory_space<vmem>>, %arg7: memref<32x32xbf16, #tpu.memory_space<vmem>>, %arg8: memref<1x32xf32, #tpu.memory_space<vmem>>, %arg9: memref<32x64xbf16, #tpu.memory_space<vmem>>, %arg10: memref<1x64xf32, #tpu.memory_space<vmem>>, %arg11: memref<32x32xbf16, #tpu.memory_space<vmem>>, %arg12: memref<1x32xf32, #tpu.memory_space<vmem>>, %arg13: memref<1x32xf32, #tpu.memory_space<vmem>>, %arg14: memref<1x32xf32, #tpu.memory_space<vmem>>, %arg15: memref<32x128xbf16, #tpu.memory_space<vmem>>, %arg16: memref<1x128xf32, #tpu.memory_space<vmem>>, %arg17: memref<128x32xbf16, #tpu.memory_space<vmem>>, %arg18: memref<1x32xf32, #tpu.memory_space<vmem>>, %arg19: memref<1x8x32xf32, #tpu.memory_space<vmem>>, %arg20: memref<1x4x8x8xf32, #tpu.memory_space<vmem>>) attributes {dimension_semantics = [#tpu.dimension_semantics<parallel>, #tpu.dimension_semantics<parallel>], iteration_bounds = array<i64: 2, 1>, scalar_prefetch = 0 : i64, scratch_operands = 0 : i64, tpu.core_type = #tpu.core_type<tc>, window_params = [{transform_indices = @transform_0, window_bounds = array<i64: 1, 8, 32>}, {transform_indices = @transform_1, window_bounds = array<i64: 1, 1, 8>}, {pipeline_mode = #tpu.pipeline_mode<synchronous>, transform_indices = @transform_2, window_bounds = array<i64: 8, 32>}, {pipeline_mode = #tpu.pipeline_mode<synchronous>, transform_indices = @transform_3, window_bounds = array<i64: 1, 32>}, {pipeline_mode = #tpu.pipeline_mode<synchronous>, transform_indices = @transform_4, window_bounds = array<i64: 1, 32>}, {pipeline_mode = #tpu.pipeline_mode<synchronous>, transform_indices = @transform_5, window_bounds = array<i64: 32, 32>}, {pipeline_mode = #tpu.pipeline_mode<synchronous>, transform_indices = @transform_6, window_bounds = array<i64: 1, 32>}, {pipeline_mode = #tpu.pipeline_mode<synchronous>, transform_indices = @transform_7, window_bounds = array<i64: 32, 64>}, {pipeline_mode = #tpu.pipeline_mode<synchronous>, transform_indices = @transform_8, window_bounds = array<i64: 1, 64>}, {pipeline_mode = #tpu.pipeline_mode<synchronous>, transform_indices = @transform_9, window_bounds = array<i64: 32, 32>}, {pipeline_mode = #tpu.pipeline_mode<synchronous>, transform_indices = @transform_10, window_bounds = array<i64: 1, 32>}, {pipeline_mode = #tpu.pipeline_mode<synchronous>, transform_indices = @transform_11, window_bounds = array<i64: 1, 32>}, {pipeline_mode = #tpu.pipeline_mode<synchronous>, transform_indices = @transform_12, window_bounds = array<i64: 1, 32>}, {pipeline_mode = #tpu.pipeline_mode<synchronous>, transform_indices = @transform_13, window_bounds = array<i64: 32, 128>}, {pipeline_mode = #tpu.pipeline_mode<synchronous>, transform_indices = @transform_14, window_bounds = array<i64: 1, 128>}, {pipeline_mode = #tpu.pipeline_mode<synchronous>, transform_indices = @transform_15, window_bounds = array<i64: 128, 32>}, {pipeline_mode = #tpu.pipeline_mode<synchronous>, transform_indices = @transform_16, window_bounds = array<i64: 1, 32>}, {transform_indices = @transform_17, window_bounds = array<i64: 1, 8, 32>}, {transform_indices = @transform_18, window_bounds = array<i64: 1, 4, 8, 8>}]} {
    %c8_i32 = arith.constant 8 : i32
    %0 = arith.muli %arg1, %c8_i32 : i32
    %1 = tpu.assume_multiple %0, 8 : i32
    %c0 = arith.constant 0 : index
    %c0_0 = arith.constant 0 : index
    %c0_1 = arith.constant 0 : index
    %2 = vector.load %arg2[%c0, %c0_0, %c0_1] : memref<1x8x32xf32, #tpu.memory_space<vmem>>, vector<1x8x32xf32>
    %3 = vector.shape_cast %2 : vector<1x8x32xf32> to vector<8x32xf32>
    %c0_2 = arith.constant 0 : index
    %c0_3 = arith.constant 0 : index
    %4 = vector.load %arg4[%c0_2, %c0_3] : memref<8x32xf32, #tpu.memory_space<vmem>>, vector<8x32xf32>
    %5 = arith.addf %3, %4 : vector<8x32xf32>
    %c0_4 = arith.constant 0 : index
    %c0_5 = arith.constant 0 : index
    %6 = vector.load %arg5[%c0_4, %c0_5] : memref<1x32xf32, #tpu.memory_space<vmem>>, vector<1x32xf32>
    %c0_6 = arith.constant 0 : index
    %c0_7 = arith.constant 0 : index
    %7 = vector.load %arg6[%c0_6, %c0_7] : memref<1x32xf32, #tpu.memory_space<vmem>>, vector<1x32xf32>
    %cst = arith.constant dense<0.000000e+00> : vector<8xf32>
    %8 = vector.multi_reduction <add>, %5, %cst [1] : vector<8x32xf32> to vector<8xf32>
    %9 = vector.shape_cast %8 : vector<8xf32> to vector<8x1xf32>
    %cst_8 = arith.constant 3.200000e+01 : f32
    %10 = vector.broadcast %cst_8 : f32 to vector<8x1xf32>
    %11 = arith.divf %9, %10 : vector<8x1xf32>
    %12 = vector.broadcast %11 : vector<8x1xf32> to vector<8x32xf32>
    %13 = arith.subf %5, %12 : vector<8x32xf32>
    %14 = arith.mulf %13, %13 : vector<8x32xf32>
    %cst_9 = arith.constant dense<0.000000e+00> : vector<8xf32>
    %15 = vector.multi_reduction <add>, %14, %cst_9 [1] : vector<8x32xf32> to vector<8xf32>
    %16 = vector.shape_cast %15 : vector<8xf32> to vector<8x1xf32>
    %cst_10 = arith.constant 3.200000e+01 : f32
    %17 = vector.broadcast %cst_10 : f32 to vector<8x1xf32>
    %18 = arith.divf %16, %17 : vector<8x1xf32>
    %19 = vector.broadcast %11 : vector<8x1xf32> to vector<8x32xf32>
    %20 = arith.subf %5, %19 : vector<8x32xf32>
    %cst_11 = arith.constant 9.99999974E-6 : f32
    %21 = vector.broadcast %cst_11 : f32 to vector<8x1xf32>
    %22 = arith.addf %18, %21 : vector<8x1xf32>
    %23 = math.rsqrt %22 : vector<8x1xf32>
    %24 = vector.broadcast %23 : vector<8x1xf32> to vector<8x32xf32>
    %25 = arith.mulf %20, %24 : vector<8x32xf32>
    %26 = vector.broadcast %6 : vector<1x32xf32> to vector<8x32xf32>
    %27 = arith.mulf %25, %26 : vector<8x32xf32>
    %28 = vector.broadcast %7 : vector<1x32xf32> to vector<8x32xf32>
    %29 = arith.addf %27, %28 : vector<8x32xf32>
    %c0_12 = arith.constant 0 : index
    %30 = arith.index_cast %1 : i32 to index
    %c0_13 = arith.constant 0 : index
    %31 = vector.load %arg2[%c0_12, %30, %c0_13] : memref<1x8x32xf32, #tpu.memory_space<vmem>>, vector<1x8x32xf32>
    %32 = vector.shape_cast %31 : vector<1x8x32xf32> to vector<8x32xf32>
    %33 = arith.index_cast %1 : i32 to index
    %c0_14 = arith.constant 0 : index
    %34 = vector.load %arg4[%33, %c0_14] : memref<8x32xf32, #tpu.memory_space<vmem>>, vector<8x32xf32>
    %35 = arith.addf %32, %34 : vector<8x32xf32>
    %c0_15 = arith.constant 0 : index
    %c0_16 = arith.constant 0 : index
    %36 = vector.load %arg5[%c0_15, %c0_16] : memref<1x32xf32, #tpu.memory_space<vmem>>, vector<1x32xf32>
    %c0_17 = arith.constant 0 : index
    %c0_18 = arith.constant 0 : index
    %37 = vector.load %arg6[%c0_17, %c0_18] : memref<1x32xf32, #tpu.memory_space<vmem>>, vector<1x32xf32>
    %cst_19 = arith.constant dense<0.000000e+00> : vector<8xf32>
    %38 = vector.multi_reduction <add>, %35, %cst_19 [1] : vector<8x32xf32> to vector<8xf32>
    %39 = vector.shape_cast %38 : vector<8xf32> to vector<8x1xf32>
    %cst_20 = arith.constant 3.200000e+01 : f32
    %40 = vector.broadcast %cst_20 : f32 to vector<8x1xf32>
    %41 = arith.divf %39, %40 : vector<8x1xf32>
    %42 = vector.broadcast %41 : vector<8x1xf32> to vector<8x32xf32>
    %43 = arith.subf %35, %42 : vector<8x32xf32>
    %44 = arith.mulf %43, %43 : vector<8x32xf32>
    %cst_21 = arith.constant dense<0.000000e+00> : vector<8xf32>
    %45 = vector.multi_reduction <add>, %44, %cst_21 [1] : vector<8x32xf32> to vector<8xf32>
    %46 = vector.shape_cast %45 : vector<8xf32> to vector<8x1xf32>
    %cst_22 = arith.constant 3.200000e+01 : f32
    %47 = vector.broadcast %cst_22 : f32 to vector<8x1xf32>
    %48 = arith.divf %46, %47 : vector<8x1xf32>
    %49 = vector.broadcast %41 : vector<8x1xf32> to vector<8x32xf32>
    %50 = arith.subf %35, %49 : vector<8x32xf32>
    %cst_23 = arith.constant 9.99999974E-6 : f32
    %51 = vector.broadcast %cst_23 : f32 to vector<8x1xf32>
    %52 = arith.addf %48, %51 : vector<8x1xf32>
    %53 = math.rsqrt %52 : vector<8x1xf32>
    %54 = vector.broadcast %53 : vector<8x1xf32> to vector<8x32xf32>
    %55 = arith.mulf %50, %54 : vector<8x32xf32>
    %56 = vector.broadcast %36 : vector<1x32xf32> to vector<8x32xf32>
    %57 = arith.mulf %55, %56 : vector<8x32xf32>
    %58 = vector.broadcast %37 : vector<1x32xf32> to vector<8x32xf32>
    %59 = arith.addf %57, %58 : vector<8x32xf32>
    %60 = arith.truncf %59 : vector<8x32xf32> to vector<8x32xbf16>
    %c0_24 = arith.constant 0 : index
    %c0_25 = arith.constant 0 : index
    %61 = vector.load %arg7[%c0_24, %c0_25] : memref<32x32xbf16, #tpu.memory_space<vmem>>, vector<32x32xbf16>
    %cst_26 = arith.constant dense<0.000000e+00> : vector<8x32xf32>
    %62 = tpu.matmul %60, %61, %cst_26 {dimension_numbers = #tpu.dot_dimension_numbers<[1], [0], [0], [1], [0, 0, 1, 1], [], []>} : vector<8x32xbf16>, vector<32x32xbf16>, vector<8x32xf32> -> vector<8x32xf32>
    %c0_27 = arith.constant 0 : index
    %c0_28 = arith.constant 0 : index
    %63 = vector.load %arg8[%c0_27, %c0_28] : memref<1x32xf32, #tpu.memory_space<vmem>>, vector<1x32xf32>
    %64 = vector.broadcast %63 : vector<1x32xf32> to vector<8x32xf32>
    %65 = arith.addf %62, %64 : vector<8x32xf32>
    %66 = arith.truncf %29 : vector<8x32xf32> to vector<8x32xbf16>
    %c0_29 = arith.constant 0 : index
    %c0_30 = arith.constant 0 : index
    %67 = vector.load %arg9[%c0_29, %c0_30] : memref<32x64xbf16, #tpu.memory_space<vmem>>, vector<32x64xbf16>
    %cst_31 = arith.constant dense<0.000000e+00> : vector<8x64xf32>
    %68 = tpu.matmul %66, %67, %cst_31 {dimension_numbers = #tpu.dot_dimension_numbers<[1], [0], [0], [1], [0, 0, 1, 1], [], []>} : vector<8x32xbf16>, vector<32x64xbf16>, vector<8x64xf32> -> vector<8x64xf32>
    %c0_32 = arith.constant 0 : index
    %c0_33 = arith.constant 0 : index
    %69 = vector.load %arg10[%c0_32, %c0_33] : memref<1x64xf32, #tpu.memory_space<vmem>>, vector<1x64xf32>
    %70 = vector.broadcast %69 : vector<1x64xf32> to vector<8x64xf32>
    %71 = arith.addf %68, %70 : vector<8x64xf32>
    %72 = vector.shape_cast %65 : vector<8x32xf32> to vector<8x4x8xf32>
    %73 = tpu.transpose %72, [1, 0, 2] : vector<8x4x8xf32> -> vector<4x8x8xf32>
    %74 = arith.truncf %73 : vector<4x8x8xf32> to vector<4x8x8xbf16>
    %75 = vector.extract_strided_slice %71 {offsets = [0, 0], sizes = [8, 32], strides = [1, 1]} : vector<8x64xf32> to vector<8x32xf32>
    %76 = vector.shape_cast %75 : vector<8x32xf32> to vector<8x4x8xf32>
    %77 = tpu.transpose %76, [1, 0, 2] : vector<8x4x8xf32> -> vector<4x8x8xf32>
    %78 = arith.truncf %77 : vector<4x8x8xf32> to vector<4x8x8xbf16>
    %79 = vector.extract_strided_slice %71 {offsets = [0, 32], sizes = [8, 32], strides = [1, 1]} : vector<8x64xf32> to vector<8x32xf32>
    %80 = vector.shape_cast %79 : vector<8x32xf32> to vector<8x4x8xf32>
    %81 = tpu.transpose %80, [1, 0, 2] : vector<8x4x8xf32> -> vector<4x8x8xf32>
    %82 = arith.truncf %81 : vector<4x8x8xf32> to vector<4x8x8xbf16>
    "tpu.trace_start"() <{level = 10 : i32, message = "hqd,hkd->hqk"}> : () -> ()
    %cst_34 = arith.constant dense<0.000000e+00> : vector<4x8x8xf32>
    %83 = tpu.matmul %74, %78, %cst_34 {dimension_numbers = #tpu.dot_dimension_numbers<[2], [2], [1], [1], [0, 0, 0, 1, 1, 1], [0], [0]>} : vector<4x8x8xbf16>, vector<4x8x8xbf16>, vector<4x8x8xf32> -> vector<4x8x8xf32>
    "tpu.trace_stop"() : () -> ()
    %c0_35 = arith.constant 0 : index
    %c0_36 = arith.constant 0 : index
    %c0_37 = arith.constant 0 : index
    %84 = vector.load %arg3[%c0_35, %c0_36, %c0_37] : memref<1x1x8xf32, #tpu.memory_space<vmem>>, vector<1x1x8xf32>
    %85 = vector.broadcast %84 : vector<1x1x8xf32> to vector<4x8x8xf32>
    %86 = arith.addf %83, %85 : vector<4x8x8xf32>
    %cst_38 = arith.constant dense<0xFF800000> : vector<4x8xf32>
    %87 = vector.multi_reduction <maximumf>, %86, %cst_38 [2] : vector<4x8x8xf32> to vector<4x8xf32>
    %88 = vector.shape_cast %87 : vector<4x8xf32> to vector<4x8x1xf32>
    %89 = vector.broadcast %88 : vector<4x8x1xf32> to vector<4x8x8xf32>
    %90 = arith.subf %86, %89 : vector<4x8x8xf32>
    %91 = math.exp %90 : vector<4x8x8xf32>
    %cst_39 = arith.constant dense<0.000000e+00> : vector<4x8xf32>
    %92 = vector.multi_reduction <add>, %91, %cst_39 [2] : vector<4x8x8xf32> to vector<4x8xf32>
    %93 = vector.shape_cast %92 : vector<4x8xf32> to vector<4x8x1xf32>
    %cst_40 = arith.constant 1.000000e+00 : f32
    %94 = vector.broadcast %cst_40 : f32 to vector<4x8x1xf32>
    %95 = arith.divf %94, %93 : vector<4x8x1xf32>
    %96 = vector.broadcast %95 : vector<4x8x1xf32> to vector<4x8x8xf32>
    %97 = arith.mulf %91, %96 : vector<4x8x8xf32>
    %c0_41 = arith.constant 0 : index
    %c0_42 = arith.constant 0 : index
    %c0_43 = arith.constant 0 : index
    %c0_44 = arith.constant 0 : index
    %98 = vector.load %arg20[%c0_41, %c0_42, %c0_43, %c0_44] : memref<1x4x8x8xf32, #tpu.memory_space<vmem>>, vector<1x4x8x8xf32>
    %99 = vector.shape_cast %98 : vector<1x4x8x8xf32> to vector<4x8x8xf32>
    %100 = vector.shape_cast %97 : vector<4x8x8xf32> to vector<1x4x8x8xf32>
    tpu.vector_store %arg20[%c0_41, %c0_42, %c0_43, %c0_44], %100 {strides = array<i32>} : memref<1x4x8x8xf32, #tpu.memory_space<vmem>>, vector<1x4x8x8xf32>,
    %101 = arith.truncf %97 : vector<4x8x8xf32> to vector<4x8x8xbf16>
    "tpu.trace_start"() <{level = 10 : i32, message = "hqk,hkd->hqd"}> : () -> ()
    %cst_45 = arith.constant dense<0.000000e+00> : vector<4x8x8xf32>
    %102 = tpu.matmul %101, %82, %cst_45 {dimension_numbers = #tpu.dot_dimension_numbers<[2], [1], [1], [2], [0, 0, 0, 1, 1, 2], [0], [0]>} : vector<4x8x8xbf16>, vector<4x8x8xbf16>, vector<4x8x8xf32> -> vector<4x8x8xf32>
    "tpu.trace_stop"() : () -> ()
    %103 = tpu.transpose %102, [1, 0, 2] : vector<4x8x8xf32> -> vector<8x4x8xf32>
    %104 = vector.shape_cast %103 : vector<8x4x8xf32> to vector<8x32xf32>
    %105 = arith.truncf %104 : vector<8x32xf32> to vector<8x32xbf16>
    %c0_46 = arith.constant 0 : index
    %c0_47 = arith.constant 0 : index
    %106 = vector.load %arg11[%c0_46, %c0_47] : memref<32x32xbf16, #tpu.memory_space<vmem>>, vector<32x32xbf16>
    %cst_48 = arith.constant dense<0.000000e+00> : vector<8x32xf32>
    %107 = tpu.matmul %105, %106, %cst_48 {dimension_numbers = #tpu.dot_dimension_numbers<[1], [0], [0], [1], [0, 0, 1, 1], [], []>} : vector<8x32xbf16>, vector<32x32xbf16>, vector<8x32xf32> -> vector<8x32xf32>
    %c0_49 = arith.constant 0 : index
    %c0_50 = arith.constant 0 : index
    %108 = vector.load %arg12[%c0_49, %c0_50] : memref<1x32xf32, #tpu.memory_space<vmem>>, vector<1x32xf32>
    %109 = vector.broadcast %108 : vector<1x32xf32> to vector<8x32xf32>
    %110 = arith.addf %107, %109 : vector<8x32xf32>
    %111 = arith.addf %35, %110 : vector<8x32xf32>
    %c0_51 = arith.constant 0 : index
    %c0_52 = arith.constant 0 : index
    %112 = vector.load %arg13[%c0_51, %c0_52] : memref<1x32xf32, #tpu.memory_space<vmem>>, vector<1x32xf32>
    %c0_53 = arith.constant 0 : index
    %c0_54 = arith.constant 0 : index
    %113 = vector.load %arg14[%c0_53, %c0_54] : memref<1x32xf32, #tpu.memory_space<vmem>>, vector<1x32xf32>
    %cst_55 = arith.constant dense<0.000000e+00> : vector<8xf32>
    %114 = vector.multi_reduction <add>, %111, %cst_55 [1] : vector<8x32xf32> to vector<8xf32>
    %115 = vector.shape_cast %114 : vector<8xf32> to vector<8x1xf32>
    %cst_56 = arith.constant 3.200000e+01 : f32
    %116 = vector.broadcast %cst_56 : f32 to vector<8x1xf32>
    %117 = arith.divf %115, %116 : vector<8x1xf32>
    %118 = vector.broadcast %117 : vector<8x1xf32> to vector<8x32xf32>
    %119 = arith.subf %111, %118 : vector<8x32xf32>
    %120 = arith.mulf %119, %119 : vector<8x32xf32>
    %cst_57 = arith.constant dense<0.000000e+00> : vector<8xf32>
    %121 = vector.multi_reduction <add>, %120, %cst_57 [1] : vector<8x32xf32> to vector<8xf32>
    %122 = vector.shape_cast %121 : vector<8xf32> to vector<8x1xf32>
    %cst_58 = arith.constant 3.200000e+01 : f32
    %123 = vector.broadcast %cst_58 : f32 to vector<8x1xf32>
    %124 = arith.divf %122, %123 : vector<8x1xf32>
    %125 = vector.broadcast %117 : vector<8x1xf32> to vector<8x32xf32>
    %126 = arith.subf %111, %125 : vector<8x32xf32>
    %cst_59 = arith.constant 9.99999974E-6 : f32
    %127 = vector.broadcast %cst_59 : f32 to vector<8x1xf32>
    %128 = arith.addf %124, %127 : vector<8x1xf32>
    %129 = math.rsqrt %128 : vector<8x1xf32>
    %130 = vector.broadcast %129 : vector<8x1xf32> to vector<8x32xf32>
    %131 = arith.mulf %126, %130 : vector<8x32xf32>
    %132 = vector.broadcast %112 : vector<1x32xf32> to vector<8x32xf32>
    %133 = arith.mulf %131, %132 : vector<8x32xf32>
    %134 = vector.broadcast %113 : vector<1x32xf32> to vector<8x32xf32>
    %135 = arith.addf %133, %134 : vector<8x32xf32>
    %136 = arith.truncf %135 : vector<8x32xf32> to vector<8x32xbf16>
    %c0_60 = arith.constant 0 : index
    %c0_61 = arith.constant 0 : index
    %137 = vector.load %arg15[%c0_60, %c0_61] : memref<32x128xbf16, #tpu.memory_space<vmem>>, vector<32x128xbf16>
    %cst_62 = arith.constant dense<0.000000e+00> : vector<8x128xf32>
    %138 = tpu.matmul %136, %137, %cst_62 {dimension_numbers = #tpu.dot_dimension_numbers<[1], [0], [0], [1], [0, 0, 1, 1], [], []>} : vector<8x32xbf16>, vector<32x128xbf16>, vector<8x128xf32> -> vector<8x128xf32>
    %c0_63 = arith.constant 0 : index
    %c0_64 = arith.constant 0 : index
    %139 = vector.load %arg16[%c0_63, %c0_64] : memref<1x128xf32, #tpu.memory_space<vmem>>, vector<1x128xf32>
    %140 = vector.broadcast %139 : vector<1x128xf32> to vector<8x128xf32>
    %141 = arith.addf %138, %140 : vector<8x128xf32>
    %cst_65 = arith.constant 5.000000e-01 : f32
    %142 = vector.broadcast %cst_65 : f32 to vector<8x128xf32>
    %143 = arith.mulf %142, %141 : vector<8x128xf32>
    %cst_66 = arith.constant 4.471500e-02 : f32
    %144 = vector.broadcast %cst_66 : f32 to vector<8x128xf32>
    %145 = arith.mulf %144, %141 : vector<8x128xf32>
    %146 = arith.mulf %145, %141 : vector<8x128xf32>
    %147 = arith.mulf %146, %141 : vector<8x128xf32>
    %148 = arith.addf %141, %147 : vector<8x128xf32>
    %cst_67 = arith.constant 0.797884583 : f32
    %149 = vector.broadcast %cst_67 : f32 to vector<8x128xf32>
    %150 = arith.mulf %149, %148 : vector<8x128xf32>
    %151 = math.tanh %150 : vector<8x128xf32>
    %cst_68 = arith.constant 1.000000e+00 : f32
    %152 = vector.broadcast %cst_68 : f32 to vector<8x128xf32>
    %153 = arith.addf %152, %151 : vector<8x128xf32>
    %154 = arith.mulf %143, %153 : vector<8x128xf32>
    %155 = arith.truncf %154 : vector<8x128xf32> to vector<8x128xbf16>
    %c0_69 = arith.constant 0 : index
    %c0_70 = arith.constant 0 : index
    %156 = vector.load %arg17[%c0_69, %c0_70] : memref<128x32xbf16, #tpu.memory_space<vmem>>, vector<128x32xbf16>
    %cst_71 = arith.constant dense<0.000000e+00> : vector<8x32xf32>
    %157 = tpu.matmul %155, %156, %cst_71 {dimension_numbers = #tpu.dot_dimension_numbers<[1], [0], [0], [1], [0, 0, 1, 1], [], []>} : vector<8x128xbf16>, vector<128x32xbf16>, vector<8x32xf32> -> vector<8x32xf32>
    %c0_72 = arith.constant 0 : index
    %c0_73 = arith.constant 0 : index
    %158 = vector.load %arg18[%c0_72, %c0_73] : memref<1x32xf32, #tpu.memory_space<vmem>>, vector<1x32xf32>
    %159 = vector.broadcast %158 : vector<1x32xf32> to vector<8x32xf32>
    %160 = arith.addf %157, %159 : vector<8x32xf32>
    %161 = arith.addf %111, %160 : vector<8x32xf32>
    %c0_74 = arith.constant 0 : index
    %c0_75 = arith.constant 0 : index
    %c0_76 = arith.constant 0 : index
    %162 = vector.load %arg19[%c0_74, %c0_75, %c0_76] : memref<1x8x32xf32, #tpu.memory_space<vmem>>, vector<1x8x32xf32>
    %163 = vector.shape_cast %162 : vector<1x8x32xf32> to vector<8x32xf32>
    %164 = vector.shape_cast %161 : vector<8x32xf32> to vector<1x8x32xf32>
    tpu.vector_store %arg19[%c0_74, %c0_75, %c0_76], %164 {strides = array<i32>} : memref<1x8x32xf32, #tpu.memory_space<vmem>>, vector<1x8x32xf32>,
    return
  }
  func.func @transform_0(%arg0: i32, %arg1: i32) -> (i32, i32, i32) {
    %c0_i32 = arith.constant 0 : i32
    %c0_i32_0 = arith.constant 0 : i32
    %c0_i32_1 = arith.constant 0 : i32
    return %arg0, %c0_i32, %c0_i32_0 : i32, i32, i32
  }
  func.func @transform_1(%arg0: i32, %arg1: i32) -> (i32, i32, i32) {
    %c0_i32 = arith.constant 0 : i32
    %c0_i32_0 = arith.constant 0 : i32
    %c0_i32_1 = arith.constant 0 : i32
    return %arg0, %c0_i32, %c0_i32_0 : i32, i32, i32
  }
  func.func @transform_2(%arg0: i32, %arg1: i32) -> (i32, i32) {
    %c0_i32 = arith.constant 0 : i32
    %c0_i32_0 = arith.constant 0 : i32
    %c0_i32_1 = arith.constant 0 : i32
    return %c0_i32, %c0_i32_0 : i32, i32
  }
  func.func @transform_3(%arg0: i32, %arg1: i32) -> (i32, i32) {
    %c0_i32 = arith.constant 0 : i32
    %c0_i32_0 = arith.constant 0 : i32
    %c0_i32_1 = arith.constant 0 : i32
    return %c0_i32, %c0_i32_0 : i32, i32
  }
  func.func @transform_4(%arg0: i32, %arg1: i32) -> (i32, i32) {
    %c0_i32 = arith.constant 0 : i32
    %c0_i32_0 = arith.constant 0 : i32
    %c0_i32_1 = arith.constant 0 : i32
    return %c0_i32, %c0_i32_0 : i32, i32
  }
  func.func @transform_5(%arg0: i32, %arg1: i32) -> (i32, i32) {
    %c0_i32 = arith.constant 0 : i32
    %c0_i32_0 = arith.constant 0 : i32
    %c0_i32_1 = arith.constant 0 : i32
    return %c0_i32, %c0_i32_0 : i32, i32
  }
  func.func @transform_6(%arg0: i32, %arg1: i32) -> (i32, i32) {
    %c0_i32 = arith.constant 0 : i32
    %c0_i32_0 = arith.constant 0 : i32
    %c0_i32_1 = arith.constant 0 : i32
    return %c0_i32, %c0_i32_0 : i32, i32
  }
  func.func @transform_7(%arg0: i32, %arg1: i32) -> (i32, i32) {
    %c0_i32 = arith.constant 0 : i32
    %c0_i32_0 = arith.constant 0 : i32
    %c0_i32_1 = arith.constant 0 : i32
    return %c0_i32, %c0_i32_0 : i32, i32
  }
  func.func @transform_8(%arg0: i32, %arg1: i32) -> (i32, i32) {
    %c0_i32 = arith.constant 0 : i32
    %c0_i32_0 = arith.constant 0 : i32
    %c0_i32_1 = arith.constant 0 : i32
    return %c0_i32, %c0_i32_0 : i32, i32
  }
  func.func @transform_9(%arg0: i32, %arg1: i32) -> (i32, i32) {
    %c0_i32 = arith.constant 0 : i32
    %c0_i32_0 = arith.constant 0 : i32
    %c0_i32_1 = arith.constant 0 : i32
    return %c0_i32, %c0_i32_0 : i32, i32
  }
  func.func @transform_10(%arg0: i32, %arg1: i32) -> (i32, i32) {
    %c0_i32 = arith.constant 0 : i32
    %c0_i32_0 = arith.constant 0 : i32
    %c0_i32_1 = arith.constant 0 : i32
    return %c0_i32, %c0_i32_0 : i32, i32
  }
  func.func @transform_11(%arg0: i32, %arg1: i32) -> (i32, i32) {
    %c0_i32 = arith.constant 0 : i32
    %c0_i32_0 = arith.constant 0 : i32
    %c0_i32_1 = arith.constant 0 : i32
    return %c0_i32, %c0_i32_0 : i32, i32
  }
  func.func @transform_12(%arg0: i32, %arg1: i32) -> (i32, i32) {
    %c0_i32 = arith.constant 0 : i32
    %c0_i32_0 = arith.constant 0 : i32
    %c0_i32_1 = arith.constant 0 : i32
    return %c0_i32, %c0_i32_0 : i32, i32
  }
  func.func @transform_13(%arg0: i32, %arg1: i32) -> (i32, i32) {
    %c0_i32 = arith.constant 0 : i32
    %c0_i32_0 = arith.constant 0 : i32
    %c0_i32_1 = arith.constant 0 : i32
    return %c0_i32, %c0_i32_0 : i32, i32
  }
  func.func @transform_14(%arg0: i32, %arg1: i32) -> (i32, i32) {
    %c0_i32 = arith.constant 0 : i32
    %c0_i32_0 = arith.constant 0 : i32
    %c0_i32_1 = arith.constant 0 : i32
    return %c0_i32, %c0_i32_0 : i32, i32
  }
  func.func @transform_15(%arg0: i32, %arg1: i32) -> (i32, i32) {
    %c0_i32 = arith.constant 0 : i32
    %c0_i32_0 = arith.constant 0 : i32
    %c0_i32_1 = arith.constant 0 : i32
    return %c0_i32, %c0_i32_0 : i32, i32
  }
  func.func @transform_16(%arg0: i32, %arg1: i32) -> (i32, i32) {
    %c0_i32 = arith.constant 0 : i32
    %c0_i32_0 = arith.constant 0 : i32
    %c0_i32_1 = arith.constant 0 : i32
    return %c0_i32, %c0_i32_0 : i32, i32
  }
  func.func @transform_17(%arg0: i32, %arg1: i32) -> (i32, i32, i32) {
    %c0_i32 = arith.constant 0 : i32
    %c0_i32_0 = arith.constant 0 : i32
    return %arg0, %arg1, %c0_i32 : i32, i32, i32
  }
  func.func @transform_18(%arg0: i32, %arg1: i32) -> (i32, i32, i32, i32) {
    %c0_i32 = arith.constant 0 : i32
    %c0_i32_0 = arith.constant 0 : i32
    %c0_i32_1 = arith.constant 0 : i32
    return %arg0, %c0_i32, %arg1, %c0_i32_0 : i32, i32, i32, i32
  }
}

module attributes {stable_mosaic.version = 11 : i64} {
  func.func @transformer_block_kernel(%arg0: i32, %arg1: i32, %arg2: memref<1x8x32xf32, #tpu.memory_space<vmem>>, %arg3: memref<1x1x8xf32, #tpu.memory_space<vmem>>, %arg4: memref<8x32xf32, #tpu.memory_space<vmem>>, %arg5: memref<1x32xf32, #tpu.memory_space<vmem>>, %arg6: memref<1x32xf32, #tpu.memory_space<vmem>>, %arg7: memref<32x32xbf16, #tpu.memory_space<vmem>>, %arg8: memref<1x32xf32, #tpu.memory_space<vmem>>, %arg9: memref<32x64xbf16, #tpu.memory_space<vmem>>, %arg10: memref<1x64xf32, #tpu.memory_space<vmem>>, %arg11: memref<32x32xbf16, #tpu.memory_space<vmem>>, %arg12: memref<1x32xf32, #tpu.memory_space<vmem>>, %arg13: memref<1x32xf32, #tpu.memory_space<vmem>>, %arg14: memref<1x32xf32, #tpu.memory_space<vmem>>, %arg15: memref<32x128xbf16, #tpu.memory_space<vmem>>, %arg16: memref<1x128xf32, #tpu.memory_space<vmem>>, %arg17: memref<128x32xbf16, #tpu.memory_space<vmem>>, %arg18: memref<1x32xf32, #tpu.memory_space<vmem>>, %arg19: memref<1x8x32xf32, #tpu.memory_space<vmem>>, %arg20: memref<1x4x8x8xf32, #tpu.memory_space<vmem>>) attributes {dimension_semantics = [#tpu.dimension_semantics<parallel>, #tpu.dimension_semantics<parallel>], iteration_bounds = array<i64: 2, 1>, scalar_prefetch = 0 : i64, scratch_operands = 0 : i64, tpu.core_type = #tpu.core_type<tc>, window_params = [{transform_indices = @transform_0, window_bounds = array<i64: 1, 8, 32>}, {transform_indices = @transform_1, window_bounds = array<i64: 1, 1, 8>}, {pipeline_mode = #tpu.pipeline_mode<synchronous>, transform_indices = @transform_2, window_bounds = array<i64: 8, 32>}, {pipeline_mode = #tpu.pipeline_mode<synchronous>, transform_indices = @transform_3, window_bounds = array<i64: 1, 32>}, {pipeline_mode = #tpu.pipeline_mode<synchronous>, transform_indices = @transform_4, window_bounds = array<i64: 1, 32>}, {pipeline_mode = #tpu.pipeline_mode<synchronous>, transform_indices = @transform_5, window_bounds = array<i64: 32, 32>}, {pipeline_mode = #tpu.pipeline_mode<synchronous>, transform_indices = @transform_6, window_bounds = array<i64: 1, 32>}, {pipeline_mode = #tpu.pipeline_mode<synchronous>, transform_indices = @transform_7, window_bounds = array<i64: 32, 64>}, {pipeline_mode = #tpu.pipeline_mode<synchronous>, transform_indices = @transform_8, window_bounds = array<i64: 1, 64>}, {pipeline_mode = #tpu.pipeline_mode<synchronous>, transform_indices = @transform_9, window_bounds = array<i64: 32, 32>}, {pipeline_mode = #tpu.pipeline_mode<synchronous>, transform_indices = @transform_10, window_bounds = array<i64: 1, 32>}, {pipeline_mode = #tpu.pipeline_mode<synchronous>, transform_indices = @transform_11, window_bounds = array<i64: 1, 32>}, {pipeline_mode = #tpu.pipeline_mode<synchronous>, transform_indices = @transform_12, window_bounds = array<i64: 1, 32>}, {pipeline_mode = #tpu.pipeline_mode<synchronous>, transform_indices = @transform_13, window_bounds = array<i64: 32, 128>}, {pipeline_mode = #tpu.pipeline_mode<synchronous>, transform_indices = @transform_14, window_bounds = array<i64: 1, 128>}, {pipeline_mode = #tpu.pipeline_mode<synchronous>, transform_indices = @transform_15, window_bounds = array<i64: 128, 32>}, {pipeline_mode = #tpu.pipeline_mode<synchronous>, transform_indices = @transform_16, window_bounds = array<i64: 1, 32>}, {transform_indices = @transform_17, window_bounds = array<i64: 1, 8, 32>}, {transform_indices = @transform_18, window_bounds = array<i64: 1, 4, 8, 8>}]} {
    %c8_i32 = arith.constant 8 : i32
    %0 = arith.muli %arg1, %c8_i32 : i32
    %1 = tpu.assume_multiple %0, 8 : i32
    %c0 = arith.constant 0 : index
    %c0_0 = arith.constant 0 : index
    %c0_1 = arith.constant 0 : index
    %2 = vector.load %arg2[%c0, %c0_0, %c0_1] : memref<1x8x32xf32, #tpu.memory_space<vmem>>, vector<1x8x32xf32>
    %3 = vector.shape_cast %2 : vector<1x8x32xf32> to vector<8x32xf32>
    %c0_2 = arith.constant 0 : index
    %c0_3 = arith.constant 0 : index
    %4 = vector.load %arg4[%c0_2, %c0_3] : memref<8x32xf32, #tpu.memory_space<vmem>>, vector<8x32xf32>
    %5 = arith.addf %3, %4 : vector<8x32xf32>
    %c0_4 = arith.constant 0 : index
    %c0_5 = arith.constant 0 : index
    %6 = vector.load %arg5[%c0_4, %c0_5] : memref<1x32xf32, #tpu.memory_space<vmem>>, vector<1x32xf32>
    %c0_6 = arith.constant 0 : index
    %c0_7 = arith.constant 0 : index
    %7 = vector.load %arg6[%c0_6, %c0_7] : memref<1x32xf32, #tpu.memory_space<vmem>>, vector<1x32xf32>
    %cst = arith.constant dense<0.000000e+00> : vector<8xf32>
    %8 = vector.multi_reduction <add>, %5, %cst [1] : vector<8x32xf32> to vector<8xf32>
    %9 = vector.shape_cast %8 : vector<8xf32> to vector<8x1xf32>
    %cst_8 = arith.constant 3.200000e+01 : f32
    %10 = vector.broadcast %cst_8 : f32 to vector<8x1xf32>
    %11 = arith.divf %9, %10 : vector<8x1xf32>
    %12 = vector.broadcast %11 : vector<8x1xf32> to vector<8x32xf32>
    %13 = arith.subf %5, %12 : vector<8x32xf32>
    %14 = arith.mulf %13, %13 : vector<8x32xf32>
    %cst_9 = arith.constant dense<0.000000e+00> : vector<8xf32>
    %15 = vector.multi_reduction <add>, %14, %cst_9 [1] : vector<8x32xf32> to vector<8xf32>
    %16 = vector.shape_cast %15 : vector<8xf32> to vector<8x1xf32>
    %cst_10 = arith.constant 3.200000e+01 : f32
    %17 = vector.broadcast %cst_10 : f32 to vector<8x1xf32>
    %18 = arith.divf %16, %17 : vector<8x1xf32>
    %19 = vector.broadcast %11 : vector<8x1xf32> to vector<8x32xf32>
    %20 = arith.subf %5, %19 : vector<8x32xf32>
    %cst_11 = arith.constant 9.99999974E-6 : f32
    %21 = vector.broadcast %cst_11 : f32 to vector<8x1xf32>
    %22 = arith.addf %18, %21 : vector<8x1xf32>
    %23 = math.rsqrt %22 : vector<8x1xf32>
    %24 = vector.broadcast %23 : vector<8x1xf32> to vector<8x32xf32>
    %25 = arith.mulf %20, %24 : vector<8x32xf32>
    %26 = vector.broadcast %6 : vector<1x32xf32> to vector<8x32xf32>
    %27 = arith.mulf %25, %26 : vector<8x32xf32>
    %28 = vector.broadcast %7 : vector<1x32xf32> to vector<8x32xf32>
    %29 = arith.addf %27, %28 : vector<8x32xf32>
    %c0_12 = arith.constant 0 : index
    %30 = arith.index_cast %1 : i32 to index
    %c0_13 = arith.constant 0 : index
    %31 = vector.load %arg2[%c0_12, %30, %c0_13] : memref<1x8x32xf32, #tpu.memory_space<vmem>>, vector<1x8x32xf32>
    %32 = vector.shape_cast %31 : vector<1x8x32xf32> to vector<8x32xf32>
    %33 = arith.index_cast %1 : i32 to index
    %c0_14 = arith.constant 0 : index
    %34 = vector.load %arg4[%33, %c0_14] : memref<8x32xf32, #tpu.memory_space<vmem>>, vector<8x32xf32>
    %35 = arith.addf %32, %34 : vector<8x32xf32>
    %c0_15 = arith.constant 0 : index
    %c0_16 = arith.constant 0 : index
    %36 = vector.load %arg5[%c0_15, %c0_16] : memref<1x32xf32, #tpu.memory_space<vmem>>, vector<1x32xf32>
    %c0_17 = arith.constant 0 : index
    %c0_18 = arith.constant 0 : index
    %37 = vector.load %arg6[%c0_17, %c0_18] : memref<1x32xf32, #tpu.memory_space<vmem>>, vector<1x32xf32>
    %cst_19 = arith.constant dense<0.000000e+00> : vector<8xf32>
    %38 = vector.multi_reduction <add>, %35, %cst_19 [1] : vector<8x32xf32> to vector<8xf32>
    %39 = vector.shape_cast %38 : vector<8xf32> to vector<8x1xf32>
    %cst_20 = arith.constant 3.200000e+01 : f32
    %40 = vector.broadcast %cst_20 : f32 to vector<8x1xf32>
    %41 = arith.divf %39, %40 : vector<8x1xf32>
    %42 = vector.broadcast %41 : vector<8x1xf32> to vector<8x32xf32>
    %43 = arith.subf %35, %42 : vector<8x32xf32>
    %44 = arith.mulf %43, %43 : vector<8x32xf32>
    %cst_21 = arith.constant dense<0.000000e+00> : vector<8xf32>
    %45 = vector.multi_reduction <add>, %44, %cst_21 [1] : vector<8x32xf32> to vector<8xf32>
    %46 = vector.shape_cast %45 : vector<8xf32> to vector<8x1xf32>
    %cst_22 = arith.constant 3.200000e+01 : f32
    %47 = vector.broadcast %cst_22 : f32 to vector<8x1xf32>
    %48 = arith.divf %46, %47 : vector<8x1xf32>
    %49 = vector.broadcast %41 : vector<8x1xf32> to vector<8x32xf32>
    %50 = arith.subf %35, %49 : vector<8x32xf32>
    %cst_23 = arith.constant 9.99999974E-6 : f32
    %51 = vector.broadcast %cst_23 : f32 to vector<8x1xf32>
    %52 = arith.addf %48, %51 : vector<8x1xf32>
    %53 = math.rsqrt %52 : vector<8x1xf32>
    %54 = vector.broadcast %53 : vector<8x1xf32> to vector<8x32xf32>
    %55 = arith.mulf %50, %54 : vector<8x32xf32>
    %56 = vector.broadcast %36 : vector<1x32xf32> to vector<8x32xf32>
    %57 = arith.mulf %55, %56 : vector<8x32xf32>
    %58 = vector.broadcast %37 : vector<1x32xf32> to vector<8x32xf32>
    %59 = arith.addf %57, %58 : vector<8x32xf32>
    %60 = arith.truncf %59 : vector<8x32xf32> to vector<8x32xbf16>
    %c0_24 = arith.constant 0 : index
    %c0_25 = arith.constant 0 : index
    %61 = vector.load %arg7[%c0_24, %c0_25] : memref<32x32xbf16, #tpu.memory_space<vmem>>, vector<32x32xbf16>
    %cst_26 = arith.constant dense<0.000000e+00> : vector<8x32xf32>
    %62 = tpu.matmul %60, %61, %cst_26 {dimension_numbers = #tpu.dot_dimension_numbers<[1], [0], [0], [1], [0, 0, 1, 1], [], []>} : vector<8x32xbf16>, vector<32x32xbf16>, vector<8x32xf32> -> vector<8x32xf32>
    %c0_27 = arith.constant 0 : index
    %c0_28 = arith.constant 0 : index
    %63 = vector.load %arg8[%c0_27, %c0_28] : memref<1x32xf32, #tpu.memory_space<vmem>>, vector<1x32xf32>
    %64 = vector.broadcast %63 : vector<1x32xf32> to vector<8x32xf32>
    %65 = arith.addf %62, %64 : vector<8x32xf32>
    %66 = arith.truncf %29 : vector<8x32xf32> to vector<8x32xbf16>
    %c0_29 = arith.constant 0 : index
    %c0_30 = arith.constant 0 : index
    %67 = vector.load %arg9[%c0_29, %c0_30] : memref<32x64xbf16, #tpu.memory_space<vmem>>, vector<32x64xbf16>
    %cst_31 = arith.constant dense<0.000000e+00> : vector<8x64xf32>
    %68 = tpu.matmul %66, %67, %cst_31 {dimension_numbers = #tpu.dot_dimension_numbers<[1], [0], [0], [1], [0, 0, 1, 1], [], []>} : vector<8x32xbf16>, vector<32x64xbf16>, vector<8x64xf32> -> vector<8x64xf32>
    %c0_32 = arith.constant 0 : index
    %c0_33 = arith.constant 0 : index
    %69 = vector.load %arg10[%c0_32, %c0_33] : memref<1x64xf32, #tpu.memory_space<vmem>>, vector<1x64xf32>
    %70 = vector.broadcast %69 : vector<1x64xf32> to vector<8x64xf32>
    %71 = arith.addf %68, %70 : vector<8x64xf32>
    %72 = vector.extract_strided_slice %65 {offsets = [0, 0], sizes = [8, 8], strides = [1, 1]} : vector<8x32xf32> to vector<8x8xf32>
    %73 = vector.extract_strided_slice %65 {offsets = [0, 8], sizes = [8, 8], strides = [1, 1]} : vector<8x32xf32> to vector<8x8xf32>
    %74 = vector.extract_strided_slice %65 {offsets = [0, 16], sizes = [8, 8], strides = [1, 1]} : vector<8x32xf32> to vector<8x8xf32>
    %75 = vector.extract_strided_slice %65 {offsets = [0, 24], sizes = [8, 8], strides = [1, 1]} : vector<8x32xf32> to vector<8x8xf32>
    %76 = vector.shape_cast %72 : vector<8x8xf32> to vector<1x8x8xf32>
    %77 = vector.shape_cast %73 : vector<8x8xf32> to vector<1x8x8xf32>
    %78 = vector.shape_cast %74 : vector<8x8xf32> to vector<1x8x8xf32>
    %79 = vector.shape_cast %75 : vector<8x8xf32> to vector<1x8x8xf32>
    %80 = tpu.concatenate %76, %77, %78, %79 in 0 : vector<1x8x8xf32>, vector<1x8x8xf32>, vector<1x8x8xf32>, vector<1x8x8xf32> -> vector<4x8x8xf32>
    %81 = arith.truncf %80 : vector<4x8x8xf32> to vector<4x8x8xbf16>
    %82 = vector.extract_strided_slice %71 {offsets = [0, 0], sizes = [8, 32], strides = [1, 1]} : vector<8x64xf32> to vector<8x32xf32>
    %83 = vector.extract_strided_slice %82 {offsets = [0, 0], sizes = [8, 8], strides = [1, 1]} : vector<8x32xf32> to vector<8x8xf32>
    %84 = vector.extract_strided_slice %82 {offsets = [0, 8], sizes = [8, 8], strides = [1, 1]} : vector<8x32xf32> to vector<8x8xf32>
    %85 = vector.extract_strided_slice %82 {offsets = [0, 16], sizes = [8, 8], strides = [1, 1]} : vector<8x32xf32> to vector<8x8xf32>
    %86 = vector.extract_strided_slice %82 {offsets = [0, 24], sizes = [8, 8], strides = [1, 1]} : vector<8x32xf32> to vector<8x8xf32>
    %87 = vector.shape_cast %83 : vector<8x8xf32> to vector<1x8x8xf32>
    %88 = vector.shape_cast %84 : vector<8x8xf32> to vector<1x8x8xf32>
    %89 = vector.shape_cast %85 : vector<8x8xf32> to vector<1x8x8xf32>
    %90 = vector.shape_cast %86 : vector<8x8xf32> to vector<1x8x8xf32>
    %91 = tpu.concatenate %87, %88, %89, %90 in 0 : vector<1x8x8xf32>, vector<1x8x8xf32>, vector<1x8x8xf32>, vector<1x8x8xf32> -> vector<4x8x8xf32>
    %92 = arith.truncf %91 : vector<4x8x8xf32> to vector<4x8x8xbf16>
    %93 = vector.extract_strided_slice %71 {offsets = [0, 32], sizes = [8, 32], strides = [1, 1]} : vector<8x64xf32> to vector<8x32xf32>
    %94 = vector.extract_strided_slice %93 {offsets = [0, 0], sizes = [8, 8], strides = [1, 1]} : vector<8x32xf32> to vector<8x8xf32>
    %95 = vector.extract_strided_slice %93 {offsets = [0, 8], sizes = [8, 8], strides = [1, 1]} : vector<8x32xf32> to vector<8x8xf32>
    %96 = vector.extract_strided_slice %93 {offsets = [0, 16], sizes = [8, 8], strides = [1, 1]} : vector<8x32xf32> to vector<8x8xf32>
    %97 = vector.extract_strided_slice %93 {offsets = [0, 24], sizes = [8, 8], strides = [1, 1]} : vector<8x32xf32> to vector<8x8xf32>
    %98 = vector.shape_cast %94 : vector<8x8xf32> to vector<1x8x8xf32>
    %99 = vector.shape_cast %95 : vector<8x8xf32> to vector<1x8x8xf32>
    %100 = vector.shape_cast %96 : vector<8x8xf32> to vector<1x8x8xf32>
    %101 = vector.shape_cast %97 : vector<8x8xf32> to vector<1x8x8xf32>
    %102 = tpu.concatenate %98, %99, %100, %101 in 0 : vector<1x8x8xf32>, vector<1x8x8xf32>, vector<1x8x8xf32>, vector<1x8x8xf32> -> vector<4x8x8xf32>
    %103 = arith.truncf %102 : vector<4x8x8xf32> to vector<4x8x8xbf16>
    "tpu.trace_start"() <{level = 10 : i32, message = "hqd,hkd->hqk"}> : () -> ()
    %cst_34 = arith.constant dense<0.000000e+00> : vector<4x8x8xf32>
    %104 = tpu.matmul %81, %92, %cst_34 {dimension_numbers = #tpu.dot_dimension_numbers<[2], [2], [1], [1], [0, 0, 0, 1, 1, 1], [0], [0]>} : vector<4x8x8xbf16>, vector<4x8x8xbf16>, vector<4x8x8xf32> -> vector<4x8x8xf32>
    "tpu.trace_stop"() : () -> ()
    %c0_35 = arith.constant 0 : index
    %c0_36 = arith.constant 0 : index
    %c0_37 = arith.constant 0 : index
    %105 = vector.load %arg3[%c0_35, %c0_36, %c0_37] : memref<1x1x8xf32, #tpu.memory_space<vmem>>, vector<1x1x8xf32>
    %106 = vector.broadcast %105 : vector<1x1x8xf32> to vector<4x8x8xf32>
    %107 = arith.addf %104, %106 : vector<4x8x8xf32>
    %cst_38 = arith.constant dense<0xFF800000> : vector<4x8xf32>
    %108 = vector.multi_reduction <maximumf>, %107, %cst_38 [2] : vector<4x8x8xf32> to vector<4x8xf32>
    %109 = vector.shape_cast %108 : vector<4x8xf32> to vector<4x8x1xf32>
    %110 = vector.broadcast %109 : vector<4x8x1xf32> to vector<4x8x8xf32>
    %111 = arith.subf %107, %110 : vector<4x8x8xf32>
    %112 = math.exp %111 : vector<4x8x8xf32>
    %cst_39 = arith.constant dense<0.000000e+00> : vector<4x8xf32>
    %113 = vector.multi_reduction <add>, %112, %cst_39 [2] : vector<4x8x8xf32> to vector<4x8xf32>
    %114 = vector.shape_cast %113 : vector<4x8xf32> to vector<4x8x1xf32>
    %cst_40 = arith.constant 1.000000e+00 : f32
    %115 = vector.broadcast %cst_40 : f32 to vector<4x8x1xf32>
    %116 = arith.divf %115, %114 : vector<4x8x1xf32>
    %117 = vector.broadcast %116 : vector<4x8x1xf32> to vector<4x8x8xf32>
    %118 = arith.mulf %112, %117 : vector<4x8x8xf32>
    %c0_41 = arith.constant 0 : index
    %c0_42 = arith.constant 0 : index
    %c0_43 = arith.constant 0 : index
    %c0_44 = arith.constant 0 : index
    %119 = vector.load %arg20[%c0_41, %c0_42, %c0_43, %c0_44] : memref<1x4x8x8xf32, #tpu.memory_space<vmem>>, vector<1x4x8x8xf32>
    %120 = vector.shape_cast %119 : vector<1x4x8x8xf32> to vector<4x8x8xf32>
    %121 = vector.shape_cast %118 : vector<4x8x8xf32> to vector<1x4x8x8xf32>
    tpu.vector_store %arg20[%c0_41, %c0_42, %c0_43, %c0_44], %121 {strides = array<i32>} : memref<1x4x8x8xf32, #tpu.memory_space<vmem>>, vector<1x4x8x8xf32>,
    %122 = arith.truncf %118 : vector<4x8x8xf32> to vector<4x8x8xbf16>
    "tpu.trace_start"() <{level = 10 : i32, message = "hqk,hkd->hqd"}> : () -> ()
    %cst_45 = arith.constant dense<0.000000e+00> : vector<4x8x8xf32>
    %123 = tpu.matmul %122, %103, %cst_45 {dimension_numbers = #tpu.dot_dimension_numbers<[2], [1], [1], [2], [0, 0, 0, 1, 1, 2], [0], [0]>} : vector<4x8x8xbf16>, vector<4x8x8xbf16>, vector<4x8x8xf32> -> vector<4x8x8xf32>
    "tpu.trace_stop"() : () -> ()
    %124 = vector.extract_strided_slice %123 {offsets = [0, 0, 0], sizes = [1, 8, 8], strides = [1, 1, 1]} : vector<4x8x8xf32> to vector<1x8x8xf32>
    %125 = vector.shape_cast %124 : vector<1x8x8xf32> to vector<8x8xf32>
    %126 = vector.extract_strided_slice %123 {offsets = [1, 0, 0], sizes = [1, 8, 8], strides = [1, 1, 1]} : vector<4x8x8xf32> to vector<1x8x8xf32>
    %127 = vector.shape_cast %126 : vector<1x8x8xf32> to vector<8x8xf32>
    %128 = vector.extract_strided_slice %123 {offsets = [2, 0, 0], sizes = [1, 8, 8], strides = [1, 1, 1]} : vector<4x8x8xf32> to vector<1x8x8xf32>
    %129 = vector.shape_cast %128 : vector<1x8x8xf32> to vector<8x8xf32>
    %130 = vector.extract_strided_slice %123 {offsets = [3, 0, 0], sizes = [1, 8, 8], strides = [1, 1, 1]} : vector<4x8x8xf32> to vector<1x8x8xf32>
    %131 = vector.shape_cast %130 : vector<1x8x8xf32> to vector<8x8xf32>
    %132 = tpu.concatenate %125, %127, %129, %131 in 1 : vector<8x8xf32>, vector<8x8xf32>, vector<8x8xf32>, vector<8x8xf32> -> vector<8x32xf32>
    %133 = arith.truncf %132 : vector<8x32xf32> to vector<8x32xbf16>
    %c0_46 = arith.constant 0 : index
    %c0_47 = arith.constant 0 : index
    %134 = vector.load %arg11[%c0_46, %c0_47] : memref<32x32xbf16, #tpu.memory_space<vmem>>, vector<32x32xbf16>
    %cst_48 = arith.constant dense<0.000000e+00> : vector<8x32xf32>
    %135 = tpu.matmul %133, %134, %cst_48 {dimension_numbers = #tpu.dot_dimension_numbers<[1], [0], [0], [1], [0, 0, 1, 1], [], []>} : vector<8x32xbf16>, vector<32x32xbf16>, vector<8x32xf32> -> vector<8x32xf32>
    %c0_49 = arith.constant 0 : index
    %c0_50 = arith.constant 0 : index
    %136 = vector.load %arg12[%c0_49, %c0_50] : memref<1x32xf32, #tpu.memory_space<vmem>>, vector<1x32xf32>
    %137 = vector.broadcast %136 : vector<1x32xf32> to vector<8x32xf32>
    %138 = arith.addf %135, %137 : vector<8x32xf32>
    %139 = arith.addf %35, %138 : vector<8x32xf32>
    %c0_51 = arith.constant 0 : index
    %c0_52 = arith.constant 0 : index
    %140 = vector.load %arg13[%c0_51, %c0_52] : memref<1x32xf32, #tpu.memory_space<vmem>>, vector<1x32xf32>
    %c0_53 = arith.constant 0 : index
    %c0_54 = arith.constant 0 : index
    %141 = vector.load %arg14[%c0_53, %c0_54] : memref<1x32xf32, #tpu.memory_space<vmem>>, vector<1x32xf32>
    %cst_55 = arith.constant dense<0.000000e+00> : vector<8xf32>
    %142 = vector.multi_reduction <add>, %139, %cst_55 [1] : vector<8x32xf32> to vector<8xf32>
    %143 = vector.shape_cast %142 : vector<8xf32> to vector<8x1xf32>
    %cst_56 = arith.constant 3.200000e+01 : f32
    %144 = vector.broadcast %cst_56 : f32 to vector<8x1xf32>
    %145 = arith.divf %143, %144 : vector<8x1xf32>
    %146 = vector.broadcast %145 : vector<8x1xf32> to vector<8x32xf32>
    %147 = arith.subf %139, %146 : vector<8x32xf32>
    %148 = arith.mulf %147, %147 : vector<8x32xf32>
    %cst_57 = arith.constant dense<0.000000e+00> : vector<8xf32>
    %149 = vector.multi_reduction <add>, %148, %cst_57 [1] : vector<8x32xf32> to vector<8xf32>
    %150 = vector.shape_cast %149 : vector<8xf32> to vector<8x1xf32>
    %cst_58 = arith.constant 3.200000e+01 : f32
    %151 = vector.broadcast %cst_58 : f32 to vector<8x1xf32>
    %152 = arith.divf %150, %151 : vector<8x1xf32>
    %153 = vector.broadcast %145 : vector<8x1xf32> to vector<8x32xf32>
    %154 = arith.subf %139, %153 : vector<8x32xf32>
    %cst_59 = arith.constant 9.99999974E-6 : f32
    %155 = vector.broadcast %cst_59 : f32 to vector<8x1xf32>
    %156 = arith.addf %152, %155 : vector<8x1xf32>
    %157 = math.rsqrt %156 : vector<8x1xf32>
    %158 = vector.broadcast %157 : vector<8x1xf32> to vector<8x32xf32>
    %159 = arith.mulf %154, %158 : vector<8x32xf32>
    %160 = vector.broadcast %140 : vector<1x32xf32> to vector<8x32xf32>
    %161 = arith.mulf %159, %160 : vector<8x32xf32>
    %162 = vector.broadcast %141 : vector<1x32xf32> to vector<8x32xf32>
    %163 = arith.addf %161, %162 : vector<8x32xf32>
    %164 = arith.truncf %163 : vector<8x32xf32> to vector<8x32xbf16>
    %c0_60 = arith.constant 0 : index
    %c0_61 = arith.constant 0 : index
    %165 = vector.load %arg15[%c0_60, %c0_61] : memref<32x128xbf16, #tpu.memory_space<vmem>>, vector<32x128xbf16>
    %cst_62 = arith.constant dense<0.000000e+00> : vector<8x128xf32>
    %166 = tpu.matmul %164, %165, %cst_62 {dimension_numbers = #tpu.dot_dimension_numbers<[1], [0], [0], [1], [0, 0, 1, 1], [], []>} : vector<8x32xbf16>, vector<32x128xbf16>, vector<8x128xf32> -> vector<8x128xf32>
    %c0_63 = arith.constant 0 : index
    %c0_64 = arith.constant 0 : index
    %167 = vector.load %arg16[%c0_63, %c0_64] : memref<1x128xf32, #tpu.memory_space<vmem>>, vector<1x128xf32>
    %168 = vector.broadcast %167 : vector<1x128xf32> to vector<8x128xf32>
    %169 = arith.addf %166, %168 : vector<8x128xf32>
    %cst_65 = arith.constant 5.000000e-01 : f32
    %170 = vector.broadcast %cst_65 : f32 to vector<8x128xf32>
    %171 = arith.mulf %170, %169 : vector<8x128xf32>
    %cst_66 = arith.constant 4.471500e-02 : f32
    %172 = vector.broadcast %cst_66 : f32 to vector<8x128xf32>
    %173 = arith.mulf %172, %169 : vector<8x128xf32>
    %174 = arith.mulf %173, %169 : vector<8x128xf32>
    %175 = arith.mulf %174, %169 : vector<8x128xf32>
    %176 = arith.addf %169, %175 : vector<8x128xf32>
    %cst_67 = arith.constant 0.797884583 : f32
    %177 = vector.broadcast %cst_67 : f32 to vector<8x128xf32>
    %178 = arith.mulf %177, %176 : vector<8x128xf32>
    %179 = math.tanh %178 : vector<8x128xf32>
    %cst_68 = arith.constant 1.000000e+00 : f32
    %180 = vector.broadcast %cst_68 : f32 to vector<8x128xf32>
    %181 = arith.addf %180, %179 : vector<8x128xf32>
    %182 = arith.mulf %171, %181 : vector<8x128xf32>
    %183 = arith.truncf %182 : vector<8x128xf32> to vector<8x128xbf16>
    %c0_69 = arith.constant 0 : index
    %c0_70 = arith.constant 0 : index
    %184 = vector.load %arg17[%c0_69, %c0_70] : memref<128x32xbf16, #tpu.memory_space<vmem>>, vector<128x32xbf16>
    %cst_71 = arith.constant dense<0.000000e+00> : vector<8x32xf32>
    %185 = tpu.matmul %183, %184, %cst_71 {dimension_numbers = #tpu.dot_dimension_numbers<[1], [0], [0], [1], [0, 0, 1, 1], [], []>} : vector<8x128xbf16>, vector<128x32xbf16>, vector<8x32xf32> -> vector<8x32xf32>
    %c0_72 = arith.constant 0 : index
    %c0_73 = arith.constant 0 : index
    %186 = vector.load %arg18[%c0_72, %c0_73] : memref<1x32xf32, #tpu.memory_space<vmem>>, vector<1x32xf32>
    %187 = vector.broadcast %186 : vector<1x32xf32> to vector<8x32xf32>
    %188 = arith.addf %185, %187 : vector<8x32xf32>
    %189 = arith.addf %139, %188 : vector<8x32xf32>
    %c0_74 = arith.constant 0 : index
    %c0_75 = arith.constant 0 : index
    %c0_76 = arith.constant 0 : index
    %190 = vector.load %arg19[%c0_74, %c0_75, %c0_76] : memref<1x8x32xf32, #tpu.memory_space<vmem>>, vector<1x8x32xf32>
    %191 = vector.shape_cast %190 : vector<1x8x32xf32> to vector<8x32xf32>
    %192 = vector.shape_cast %189 : vector<8x32xf32> to vector<1x8x32xf32>
    tpu.vector_store %arg19[%c0_74, %c0_75, %c0_76], %192 {strides = array<i32>} : memref<1x8x32xf32, #tpu.memory_space<vmem>>, vector<1x8x32xf32>,
    return
  }
  func.func @transform_0(%arg0: i32, %arg1: i32) -> (i32, i32, i32) {
    %c0_i32 = arith.constant 0 : i32
    %c0_i32_0 = arith.constant 0 : i32
    %c0_i32_1 = arith.constant 0 : i32
    return %arg0, %c0_i32, %c0_i32_0 : i32, i32, i32
  }
  func.func @transform_1(%arg0: i32, %arg1: i32) -> (i32, i32, i32) {
    %c0_i32 = arith.constant 0 : i32
    %c0_i32_0 = arith.constant 0 : i32
    %c0_i32_1 = arith.constant 0 : i32
    return %arg0, %c0_i32, %c0_i32_0 : i32, i32, i32
  }
  func.func @transform_2(%arg0: i32, %arg1: i32) -> (i32, i32) {
    %c0_i32 = arith.constant 0 : i32
    %c0_i32_0 = arith.constant 0 : i32
    %c0_i32_1 = arith.constant 0 : i32
    return %c0_i32, %c0_i32_0 : i32, i32
  }
  func.func @transform_3(%arg0: i32, %arg1: i32) -> (i32, i32) {
    %c0_i32 = arith.constant 0 : i32
    %c0_i32_0 = arith.constant 0 : i32
    %c0_i32_1 = arith.constant 0 : i32
    return %c0_i32, %c0_i32_0 : i32, i32
  }
  func.func @transform_4(%arg0: i32, %arg1: i32) -> (i32, i32) {
    %c0_i32 = arith.constant 0 : i32
    %c0_i32_0 = arith.constant 0 : i32
    %c0_i32_1 = arith.constant 0 : i32
    return %c0_i32, %c0_i32_0 : i32, i32
  }
  func.func @transform_5(%arg0: i32, %arg1: i32) -> (i32, i32) {
    %c0_i32 = arith.constant 0 : i32
    %c0_i32_0 = arith.constant 0 : i32
    %c0_i32_1 = arith.constant 0 : i32
    return %c0_i32, %c0_i32_0 : i32, i32
  }
  func.func @transform_6(%arg0: i32, %arg1: i32) -> (i32, i32) {
    %c0_i32 = arith.constant 0 : i32
    %c0_i32_0 = arith.constant 0 : i32
    %c0_i32_1 = arith.constant 0 : i32
    return %c0_i32, %c0_i32_0 : i32, i32
  }
  func.func @transform_7(%arg0: i32, %arg1: i32) -> (i32, i32) {
    %c0_i32 = arith.constant 0 : i32
    %c0_i32_0 = arith.constant 0 : i32
    %c0_i32_1 = arith.constant 0 : i32
    return %c0_i32, %c0_i32_0 : i32, i32
  }
  func.func @transform_8(%arg0: i32, %arg1: i32) -> (i32, i32) {
    %c0_i32 = arith.constant 0 : i32
    %c0_i32_0 = arith.constant 0 : i32
    %c0_i32_1 = arith.constant 0 : i32
    return %c0_i32, %c0_i32_0 : i32, i32
  }
  func.func @transform_9(%arg0: i32, %arg1: i32) -> (i32, i32) {
    %c0_i32 = arith.constant 0 : i32
    %c0_i32_0 = arith.constant 0 : i32
    %c0_i32_1 = arith.constant 0 : i32
    return %c0_i32, %c0_i32_0 : i32, i32
  }
  func.func @transform_10(%arg0: i32, %arg1: i32) -> (i32, i32) {
    %c0_i32 = arith.constant 0 : i32
    %c0_i32_0 = arith.constant 0 : i32
    %c0_i32_1 = arith.constant 0 : i32
    return %c0_i32, %c0_i32_0 : i32, i32
  }
  func.func @transform_11(%arg0: i32, %arg1: i32) -> (i32, i32) {
    %c0_i32 = arith.constant 0 : i32
    %c0_i32_0 = arith.constant 0 : i32
    %c0_i32_1 = arith.constant 0 : i32
    return %c0_i32, %c0_i32_0 : i32, i32
  }
  func.func @transform_12(%arg0: i32, %arg1: i32) -> (i32, i32) {
    %c0_i32 = arith.constant 0 : i32
    %c0_i32_0 = arith.constant 0 : i32
    %c0_i32_1 = arith.constant 0 : i32
    return %c0_i32, %c0_i32_0 : i32, i32
  }
  func.func @transform_13(%arg0: i32, %arg1: i32) -> (i32, i32) {
    %c0_i32 = arith.constant 0 : i32
    %c0_i32_0 = arith.constant 0 : i32
    %c0_i32_1 = arith.constant 0 : i32
    return %c0_i32, %c0_i32_0 : i32, i32
  }
  func.func @transform_14(%arg0: i32, %arg1: i32) -> (i32, i32) {
    %c0_i32 = arith.constant 0 : i32
    %c0_i32_0 = arith.constant 0 : i32
    %c0_i32_1 = arith.constant 0 : i32
    return %c0_i32, %c0_i32_0 : i32, i32
  }
  func.func @transform_15(%arg0: i32, %arg1: i32) -> (i32, i32) {
    %c0_i32 = arith.constant 0 : i32
    %c0_i32_0 = arith.constant 0 : i32
    %c0_i32_1 = arith.constant 0 : i32
    return %c0_i32, %c0_i32_0 : i32, i32
  }
  func.func @transform_16(%arg0: i32, %arg1: i32) -> (i32, i32) {
    %c0_i32 = arith.constant 0 : i32
    %c0_i32_0 = arith.constant 0 : i32
    %c0_i32_1 = arith.constant 0 : i32
    return %c0_i32, %c0_i32_0 : i32, i32
  }
  func.func @transform_17(%arg0: i32, %arg1: i32) -> (i32, i32, i32) {
    %c0_i32 = arith.constant 0 : i32
    %c0_i32_0 = arith.constant 0 : i32
    return %arg0, %arg1, %c0_i32 : i32, i32, i32
  }
  func.func @transform_18(%arg0: i32, %arg1: i32) -> (i32, i32, i32, i32) {
    %c0_i32 = arith.constant 0 : i32
    %c0_i32_0 = arith.constant 0 : i32
    %c0_i32_1 = arith.constant 0 : i32
    return %arg0, %c0_i32, %arg1, %c0_i32_0 : i32, i32, i32, i32
  }
}

module attributes {stable_mosaic.version = 11 : i64} {
  func.func @transformer_block_kernel(%arg0: i32, %arg1: i32, %arg2: memref<1x8x32xf32, #tpu.memory_space<vmem>>, %arg3: memref<1x1x8xf32, #tpu.memory_space<vmem>>, %arg4: memref<8x32xf32, #tpu.memory_space<vmem>>, %arg5: memref<1x32xf32, #tpu.memory_space<vmem>>, %arg6: memref<1x32xf32, #tpu.memory_space<vmem>>, %arg7: memref<32x32xbf16, #tpu.memory_space<vmem>>, %arg8: memref<1x32xf32, #tpu.memory_space<vmem>>, %arg9: memref<32x64xbf16, #tpu.memory_space<vmem>>, %arg10: memref<1x64xf32, #tpu.memory_space<vmem>>, %arg11: memref<32x32xbf16, #tpu.memory_space<vmem>>, %arg12: memref<1x32xf32, #tpu.memory_space<vmem>>, %arg13: memref<1x32xf32, #tpu.memory_space<vmem>>, %arg14: memref<1x32xf32, #tpu.memory_space<vmem>>, %arg15: memref<32x128xbf16, #tpu.memory_space<vmem>>, %arg16: memref<1x128xf32, #tpu.memory_space<vmem>>, %arg17: memref<128x32xbf16, #tpu.memory_space<vmem>>, %arg18: memref<1x32xf32, #tpu.memory_space<vmem>>, %arg19: memref<1x8x32xf32, #tpu.memory_space<vmem>>, %arg20: memref<1x4x8x8xf32, #tpu.memory_space<vmem>>) attributes {dimension_semantics = [#tpu.dimension_semantics<parallel>, #tpu.dimension_semantics<parallel>], iteration_bounds = array<i64: 2, 1>, scalar_prefetch = 0 : i64, scratch_operands = 0 : i64, tpu.core_type = #tpu.core_type<tc>, window_params = [{transform_indices = @transform_0, window_bounds = array<i64: 1, 8, 32>}, {transform_indices = @transform_1, window_bounds = array<i64: 1, 1, 8>}, {pipeline_mode = #tpu.pipeline_mode<synchronous>, transform_indices = @transform_2, window_bounds = array<i64: 8, 32>}, {pipeline_mode = #tpu.pipeline_mode<synchronous>, transform_indices = @transform_3, window_bounds = array<i64: 1, 32>}, {pipeline_mode = #tpu.pipeline_mode<synchronous>, transform_indices = @transform_4, window_bounds = array<i64: 1, 32>}, {pipeline_mode = #tpu.pipeline_mode<synchronous>, transform_indices = @transform_5, window_bounds = array<i64: 32, 32>}, {pipeline_mode = #tpu.pipeline_mode<synchronous>, transform_indices = @transform_6, window_bounds = array<i64: 1, 32>}, {pipeline_mode = #tpu.pipeline_mode<synchronous>, transform_indices = @transform_7, window_bounds = array<i64: 32, 64>}, {pipeline_mode = #tpu.pipeline_mode<synchronous>, transform_indices = @transform_8, window_bounds = array<i64: 1, 64>}, {pipeline_mode = #tpu.pipeline_mode<synchronous>, transform_indices = @transform_9, window_bounds = array<i64: 32, 32>}, {pipeline_mode = #tpu.pipeline_mode<synchronous>, transform_indices = @transform_10, window_bounds = array<i64: 1, 32>}, {pipeline_mode = #tpu.pipeline_mode<synchronous>, transform_indices = @transform_11, window_bounds = array<i64: 1, 32>}, {pipeline_mode = #tpu.pipeline_mode<synchronous>, transform_indices = @transform_12, window_bounds = array<i64: 1, 32>}, {pipeline_mode = #tpu.pipeline_mode<synchronous>, transform_indices = @transform_13, window_bounds = array<i64: 32, 128>}, {pipeline_mode = #tpu.pipeline_mode<synchronous>, transform_indices = @transform_14, window_bounds = array<i64: 1, 128>}, {pipeline_mode = #tpu.pipeline_mode<synchronous>, transform_indices = @transform_15, window_bounds = array<i64: 128, 32>}, {pipeline_mode = #tpu.pipeline_mode<synchronous>, transform_indices = @transform_16, window_bounds = array<i64: 1, 32>}, {transform_indices = @transform_17, window_bounds = array<i64: 1, 8, 32>}, {transform_indices = @transform_18, window_bounds = array<i64: 1, 4, 8, 8>}]} {
    %c8_i32 = arith.constant 8 : i32
    %0 = arith.muli %arg1, %c8_i32 : i32
    %1 = tpu.assume_multiple %0, 8 : i32
    %c0 = arith.constant 0 : index
    %c0_0 = arith.constant 0 : index
    %c0_1 = arith.constant 0 : index
    %2 = vector.load %arg2[%c0, %c0_0, %c0_1] : memref<1x8x32xf32, #tpu.memory_space<vmem>>, vector<1x8x32xf32>
    %3 = vector.shape_cast %2 : vector<1x8x32xf32> to vector<8x32xf32>
    %c0_2 = arith.constant 0 : index
    %c0_3 = arith.constant 0 : index
    %4 = vector.load %arg4[%c0_2, %c0_3] : memref<8x32xf32, #tpu.memory_space<vmem>>, vector<8x32xf32>
    %5 = arith.addf %3, %4 : vector<8x32xf32>
    %c0_4 = arith.constant 0 : index
    %c0_5 = arith.constant 0 : index
    %6 = vector.load %arg5[%c0_4, %c0_5] : memref<1x32xf32, #tpu.memory_space<vmem>>, vector<1x32xf32>
    %c0_6 = arith.constant 0 : index
    %c0_7 = arith.constant 0 : index
    %7 = vector.load %arg6[%c0_6, %c0_7] : memref<1x32xf32, #tpu.memory_space<vmem>>, vector<1x32xf32>
    %cst = arith.constant dense<0.000000e+00> : vector<8xf32>
    %8 = vector.multi_reduction <add>, %5, %cst [1] : vector<8x32xf32> to vector<8xf32>
    %9 = vector.shape_cast %8 : vector<8xf32> to vector<8x1xf32>
    %cst_8 = arith.constant 3.200000e+01 : f32
    %10 = vector.broadcast %cst_8 : f32 to vector<8x1xf32>
    %11 = arith.divf %9, %10 : vector<8x1xf32>
    %12 = vector.broadcast %11 : vector<8x1xf32> to vector<8x32xf32>
    %13 = arith.subf %5, %12 : vector<8x32xf32>
    %14 = arith.mulf %13, %13 : vector<8x32xf32>
    %cst_9 = arith.constant dense<0.000000e+00> : vector<8xf32>
    %15 = vector.multi_reduction <add>, %14, %cst_9 [1] : vector<8x32xf32> to vector<8xf32>
    %16 = vector.shape_cast %15 : vector<8xf32> to vector<8x1xf32>
    %cst_10 = arith.constant 3.200000e+01 : f32
    %17 = vector.broadcast %cst_10 : f32 to vector<8x1xf32>
    %18 = arith.divf %16, %17 : vector<8x1xf32>
    %19 = vector.broadcast %11 : vector<8x1xf32> to vector<8x32xf32>
    %20 = arith.subf %5, %19 : vector<8x32xf32>
    %cst_11 = arith.constant 9.99999974E-6 : f32
    %21 = vector.broadcast %cst_11 : f32 to vector<8x1xf32>
    %22 = arith.addf %18, %21 : vector<8x1xf32>
    %23 = math.rsqrt %22 : vector<8x1xf32>
    %24 = vector.broadcast %23 : vector<8x1xf32> to vector<8x32xf32>
    %25 = arith.mulf %20, %24 : vector<8x32xf32>
    %26 = vector.broadcast %6 : vector<1x32xf32> to vector<8x32xf32>
    %27 = arith.mulf %25, %26 : vector<8x32xf32>
    %28 = vector.broadcast %7 : vector<1x32xf32> to vector<8x32xf32>
    %29 = arith.addf %27, %28 : vector<8x32xf32>
    %c0_12 = arith.constant 0 : index
    %30 = arith.index_cast %1 : i32 to index
    %c0_13 = arith.constant 0 : index
    %31 = vector.load %arg2[%c0_12, %30, %c0_13] : memref<1x8x32xf32, #tpu.memory_space<vmem>>, vector<1x8x32xf32>
    %32 = vector.shape_cast %31 : vector<1x8x32xf32> to vector<8x32xf32>
    %33 = arith.index_cast %1 : i32 to index
    %c0_14 = arith.constant 0 : index
    %34 = vector.load %arg4[%33, %c0_14] : memref<8x32xf32, #tpu.memory_space<vmem>>, vector<8x32xf32>
    %35 = arith.addf %32, %34 : vector<8x32xf32>
    %c0_15 = arith.constant 0 : index
    %c0_16 = arith.constant 0 : index
    %36 = vector.load %arg5[%c0_15, %c0_16] : memref<1x32xf32, #tpu.memory_space<vmem>>, vector<1x32xf32>
    %c0_17 = arith.constant 0 : index
    %c0_18 = arith.constant 0 : index
    %37 = vector.load %arg6[%c0_17, %c0_18] : memref<1x32xf32, #tpu.memory_space<vmem>>, vector<1x32xf32>
    %cst_19 = arith.constant dense<0.000000e+00> : vector<8xf32>
    %38 = vector.multi_reduction <add>, %35, %cst_19 [1] : vector<8x32xf32> to vector<8xf32>
    %39 = vector.shape_cast %38 : vector<8xf32> to vector<8x1xf32>
    %cst_20 = arith.constant 3.200000e+01 : f32
    %40 = vector.broadcast %cst_20 : f32 to vector<8x1xf32>
    %41 = arith.divf %39, %40 : vector<8x1xf32>
    %42 = vector.broadcast %41 : vector<8x1xf32> to vector<8x32xf32>
    %43 = arith.subf %35, %42 : vector<8x32xf32>
    %44 = arith.mulf %43, %43 : vector<8x32xf32>
    %cst_21 = arith.constant dense<0.000000e+00> : vector<8xf32>
    %45 = vector.multi_reduction <add>, %44, %cst_21 [1] : vector<8x32xf32> to vector<8xf32>
    %46 = vector.shape_cast %45 : vector<8xf32> to vector<8x1xf32>
    %cst_22 = arith.constant 3.200000e+01 : f32
    %47 = vector.broadcast %cst_22 : f32 to vector<8x1xf32>
    %48 = arith.divf %46, %47 : vector<8x1xf32>
    %49 = vector.broadcast %41 : vector<8x1xf32> to vector<8x32xf32>
    %50 = arith.subf %35, %49 : vector<8x32xf32>
    %cst_23 = arith.constant 9.99999974E-6 : f32
    %51 = vector.broadcast %cst_23 : f32 to vector<8x1xf32>
    %52 = arith.addf %48, %51 : vector<8x1xf32>
    %53 = math.rsqrt %52 : vector<8x1xf32>
    %54 = vector.broadcast %53 : vector<8x1xf32> to vector<8x32xf32>
    %55 = arith.mulf %50, %54 : vector<8x32xf32>
    %56 = vector.broadcast %36 : vector<1x32xf32> to vector<8x32xf32>
    %57 = arith.mulf %55, %56 : vector<8x32xf32>
    %58 = vector.broadcast %37 : vector<1x32xf32> to vector<8x32xf32>
    %59 = arith.addf %57, %58 : vector<8x32xf32>
    %60 = arith.truncf %59 : vector<8x32xf32> to vector<8x32xbf16>
    %c0_24 = arith.constant 0 : index
    %c0_25 = arith.constant 0 : index
    %61 = vector.load %arg7[%c0_24, %c0_25] : memref<32x32xbf16, #tpu.memory_space<vmem>>, vector<32x32xbf16>
    %cst_26 = arith.constant dense<0.000000e+00> : vector<8x32xf32>
    %62 = tpu.matmul %60, %61, %cst_26 {dimension_numbers = #tpu.dot_dimension_numbers<[1], [0], [0], [1], [0, 0, 1, 1], [], []>} : vector<8x32xbf16>, vector<32x32xbf16>, vector<8x32xf32> -> vector<8x32xf32>
    %c0_27 = arith.constant 0 : index
    %c0_28 = arith.constant 0 : index
    %63 = vector.load %arg8[%c0_27, %c0_28] : memref<1x32xf32, #tpu.memory_space<vmem>>, vector<1x32xf32>
    %64 = vector.broadcast %63 : vector<1x32xf32> to vector<8x32xf32>
    %65 = arith.addf %62, %64 : vector<8x32xf32>
    %66 = arith.truncf %29 : vector<8x32xf32> to vector<8x32xbf16>
    %c0_29 = arith.constant 0 : index
    %c0_30 = arith.constant 0 : index
    %67 = vector.load %arg9[%c0_29, %c0_30] : memref<32x64xbf16, #tpu.memory_space<vmem>>, vector<32x64xbf16>
    %cst_31 = arith.constant dense<0.000000e+00> : vector<8x64xf32>
    %68 = tpu.matmul %66, %67, %cst_31 {dimension_numbers = #tpu.dot_dimension_numbers<[1], [0], [0], [1], [0, 0, 1, 1], [], []>} : vector<8x32xbf16>, vector<32x64xbf16>, vector<8x64xf32> -> vector<8x64xf32>
    %c0_32 = arith.constant 0 : index
    %c0_33 = arith.constant 0 : index
    %69 = vector.load %arg10[%c0_32, %c0_33] : memref<1x64xf32, #tpu.memory_space<vmem>>, vector<1x64xf32>
    %70 = vector.broadcast %69 : vector<1x64xf32> to vector<8x64xf32>
    %71 = arith.addf %68, %70 : vector<8x64xf32>
    %72 = vector.extract_strided_slice %65 {offsets = [0, 0], sizes = [8, 8], strides = [1, 1]} : vector<8x32xf32> to vector<8x8xf32>
    %73 = vector.extract_strided_slice %65 {offsets = [0, 8], sizes = [8, 8], strides = [1, 1]} : vector<8x32xf32> to vector<8x8xf32>
    %74 = vector.extract_strided_slice %65 {offsets = [0, 16], sizes = [8, 8], strides = [1, 1]} : vector<8x32xf32> to vector<8x8xf32>
    %75 = vector.extract_strided_slice %65 {offsets = [0, 24], sizes = [8, 8], strides = [1, 1]} : vector<8x32xf32> to vector<8x8xf32>
    %76 = vector.shape_cast %72 : vector<8x8xf32> to vector<1x8x8xf32>
    %77 = vector.shape_cast %73 : vector<8x8xf32> to vector<1x8x8xf32>
    %78 = vector.shape_cast %74 : vector<8x8xf32> to vector<1x8x8xf32>
    %79 = vector.shape_cast %75 : vector<8x8xf32> to vector<1x8x8xf32>
    %80 = tpu.concatenate %76, %77, %78, %79 in 0 : vector<1x8x8xf32>, vector<1x8x8xf32>, vector<1x8x8xf32>, vector<1x8x8xf32> -> vector<4x8x8xf32>
    %81 = arith.truncf %80 : vector<4x8x8xf32> to vector<4x8x8xbf16>
    %82 = vector.extract_strided_slice %71 {offsets = [0, 0], sizes = [8, 32], strides = [1, 1]} : vector<8x64xf32> to vector<8x32xf32>
    %83 = vector.extract_strided_slice %82 {offsets = [0, 0], sizes = [8, 8], strides = [1, 1]} : vector<8x32xf32> to vector<8x8xf32>
    %84 = vector.extract_strided_slice %82 {offsets = [0, 8], sizes = [8, 8], strides = [1, 1]} : vector<8x32xf32> to vector<8x8xf32>
    %85 = vector.extract_strided_slice %82 {offsets = [0, 16], sizes = [8, 8], strides = [1, 1]} : vector<8x32xf32> to vector<8x8xf32>
    %86 = vector.extract_strided_slice %82 {offsets = [0, 24], sizes = [8, 8], strides = [1, 1]} : vector<8x32xf32> to vector<8x8xf32>
    %87 = vector.shape_cast %83 : vector<8x8xf32> to vector<1x8x8xf32>
    %88 = vector.shape_cast %84 : vector<8x8xf32> to vector<1x8x8xf32>
    %89 = vector.shape_cast %85 : vector<8x8xf32> to vector<1x8x8xf32>
    %90 = vector.shape_cast %86 : vector<8x8xf32> to vector<1x8x8xf32>
    %91 = tpu.concatenate %87, %88, %89, %90 in 0 : vector<1x8x8xf32>, vector<1x8x8xf32>, vector<1x8x8xf32>, vector<1x8x8xf32> -> vector<4x8x8xf32>
    %92 = arith.truncf %91 : vector<4x8x8xf32> to vector<4x8x8xbf16>
    %93 = vector.extract_strided_slice %71 {offsets = [0, 32], sizes = [8, 32], strides = [1, 1]} : vector<8x64xf32> to vector<8x32xf32>
    %94 = vector.extract_strided_slice %93 {offsets = [0, 0], sizes = [8, 8], strides = [1, 1]} : vector<8x32xf32> to vector<8x8xf32>
    %95 = vector.extract_strided_slice %93 {offsets = [0, 8], sizes = [8, 8], strides = [1, 1]} : vector<8x32xf32> to vector<8x8xf32>
    %96 = vector.extract_strided_slice %93 {offsets = [0, 16], sizes = [8, 8], strides = [1, 1]} : vector<8x32xf32> to vector<8x8xf32>
    %97 = vector.extract_strided_slice %93 {offsets = [0, 24], sizes = [8, 8], strides = [1, 1]} : vector<8x32xf32> to vector<8x8xf32>
    %98 = vector.shape_cast %94 : vector<8x8xf32> to vector<1x8x8xf32>
    %99 = vector.shape_cast %95 : vector<8x8xf32> to vector<1x8x8xf32>
    %100 = vector.shape_cast %96 : vector<8x8xf32> to vector<1x8x8xf32>
    %101 = vector.shape_cast %97 : vector<8x8xf32> to vector<1x8x8xf32>
    %102 = tpu.concatenate %98, %99, %100, %101 in 0 : vector<1x8x8xf32>, vector<1x8x8xf32>, vector<1x8x8xf32>, vector<1x8x8xf32> -> vector<4x8x8xf32>
    %103 = arith.truncf %102 : vector<4x8x8xf32> to vector<4x8x8xbf16>
    "tpu.trace_start"() <{level = 10 : i32, message = "hqd,hkd->hqk"}> : () -> ()
    %cst_34 = arith.constant dense<0.000000e+00> : vector<4x8x8xf32>
    %104 = tpu.matmul %81, %92, %cst_34 {dimension_numbers = #tpu.dot_dimension_numbers<[2], [2], [1], [1], [0, 0, 0, 1, 1, 1], [0], [0]>} : vector<4x8x8xbf16>, vector<4x8x8xbf16>, vector<4x8x8xf32> -> vector<4x8x8xf32>
    "tpu.trace_stop"() : () -> ()
    %c0_35 = arith.constant 0 : index
    %c0_36 = arith.constant 0 : index
    %c0_37 = arith.constant 0 : index
    %105 = vector.load %arg3[%c0_35, %c0_36, %c0_37] : memref<1x1x8xf32, #tpu.memory_space<vmem>>, vector<1x1x8xf32>
    %106 = vector.broadcast %105 : vector<1x1x8xf32> to vector<4x8x8xf32>
    %107 = arith.addf %104, %106 : vector<4x8x8xf32>
    %cst_38 = arith.constant dense<0xFF800000> : vector<4x8xf32>
    %108 = vector.multi_reduction <maximumf>, %107, %cst_38 [2] : vector<4x8x8xf32> to vector<4x8xf32>
    %109 = vector.shape_cast %108 : vector<4x8xf32> to vector<4x8x1xf32>
    %110 = vector.broadcast %109 : vector<4x8x1xf32> to vector<4x8x8xf32>
    %111 = arith.subf %107, %110 : vector<4x8x8xf32>
    %112 = math.exp %111 : vector<4x8x8xf32>
    %cst_39 = arith.constant dense<0.000000e+00> : vector<4x8xf32>
    %113 = vector.multi_reduction <add>, %112, %cst_39 [2] : vector<4x8x8xf32> to vector<4x8xf32>
    %114 = vector.shape_cast %113 : vector<4x8xf32> to vector<4x8x1xf32>
    %cst_40 = arith.constant 1.000000e+00 : f32
    %115 = vector.broadcast %cst_40 : f32 to vector<4x8x1xf32>
    %116 = arith.divf %115, %114 : vector<4x8x1xf32>
    %117 = vector.broadcast %116 : vector<4x8x1xf32> to vector<4x8x8xf32>
    %118 = arith.mulf %112, %117 : vector<4x8x8xf32>
    %c0_41 = arith.constant 0 : index
    %c0_42 = arith.constant 0 : index
    %c0_43 = arith.constant 0 : index
    %c0_44 = arith.constant 0 : index
    %119 = vector.load %arg20[%c0_41, %c0_42, %c0_43, %c0_44] : memref<1x4x8x8xf32, #tpu.memory_space<vmem>>, vector<1x4x8x8xf32>
    %120 = vector.shape_cast %119 : vector<1x4x8x8xf32> to vector<4x8x8xf32>
    %121 = vector.shape_cast %118 : vector<4x8x8xf32> to vector<1x4x8x8xf32>
    tpu.vector_store %arg20[%c0_41, %c0_42, %c0_43, %c0_44], %121 {strides = array<i32>} : memref<1x4x8x8xf32, #tpu.memory_space<vmem>>, vector<1x4x8x8xf32>,
    %122 = arith.truncf %118 : vector<4x8x8xf32> to vector<4x8x8xbf16>
    "tpu.trace_start"() <{level = 10 : i32, message = "hqk,hkd->hqd"}> : () -> ()
    %cst_45 = arith.constant dense<0.000000e+00> : vector<4x8x8xf32>
    %123 = tpu.matmul %122, %103, %cst_45 {dimension_numbers = #tpu.dot_dimension_numbers<[2], [1], [1], [2], [0, 0, 0, 1, 1, 2], [0], [0]>} : vector<4x8x8xbf16>, vector<4x8x8xbf16>, vector<4x8x8xf32> -> vector<4x8x8xf32>
    "tpu.trace_stop"() : () -> ()
    %124 = vector.extract_strided_slice %123 {offsets = [0, 0, 0], sizes = [1, 8, 8], strides = [1, 1, 1]} : vector<4x8x8xf32> to vector<1x8x8xf32>
    %125 = vector.shape_cast %124 : vector<1x8x8xf32> to vector<8x8xf32>
    %126 = vector.extract_strided_slice %123 {offsets = [1, 0, 0], sizes = [1, 8, 8], strides = [1, 1, 1]} : vector<4x8x8xf32> to vector<1x8x8xf32>
    %127 = vector.shape_cast %126 : vector<1x8x8xf32> to vector<8x8xf32>
    %128 = vector.extract_strided_slice %123 {offsets = [2, 0, 0], sizes = [1, 8, 8], strides = [1, 1, 1]} : vector<4x8x8xf32> to vector<1x8x8xf32>
    %129 = vector.shape_cast %128 : vector<1x8x8xf32> to vector<8x8xf32>
    %130 = vector.extract_strided_slice %123 {offsets = [3, 0, 0], sizes = [1, 8, 8], strides = [1, 1, 1]} : vector<4x8x8xf32> to vector<1x8x8xf32>
    %131 = vector.shape_cast %130 : vector<1x8x8xf32> to vector<8x8xf32>
    %132 = tpu.concatenate %125, %127, %129, %131 in 1 : vector<8x8xf32>, vector<8x8xf32>, vector<8x8xf32>, vector<8x8xf32> -> vector<8x32xf32>
    %133 = arith.truncf %132 : vector<8x32xf32> to vector<8x32xbf16>
    %c0_46 = arith.constant 0 : index
    %c0_47 = arith.constant 0 : index
    %134 = vector.load %arg11[%c0_46, %c0_47] : memref<32x32xbf16, #tpu.memory_space<vmem>>, vector<32x32xbf16>
    %cst_48 = arith.constant dense<0.000000e+00> : vector<8x32xf32>
    %135 = tpu.matmul %133, %134, %cst_48 {dimension_numbers = #tpu.dot_dimension_numbers<[1], [0], [0], [1], [0, 0, 1, 1], [], []>} : vector<8x32xbf16>, vector<32x32xbf16>, vector<8x32xf32> -> vector<8x32xf32>
    %c0_49 = arith.constant 0 : index
    %c0_50 = arith.constant 0 : index
    %136 = vector.load %arg12[%c0_49, %c0_50] : memref<1x32xf32, #tpu.memory_space<vmem>>, vector<1x32xf32>
    %137 = vector.broadcast %136 : vector<1x32xf32> to vector<8x32xf32>
    %138 = arith.addf %135, %137 : vector<8x32xf32>
    %139 = arith.addf %35, %138 : vector<8x32xf32>
    %c0_51 = arith.constant 0 : index
    %c0_52 = arith.constant 0 : index
    %140 = vector.load %arg13[%c0_51, %c0_52] : memref<1x32xf32, #tpu.memory_space<vmem>>, vector<1x32xf32>
    %c0_53 = arith.constant 0 : index
    %c0_54 = arith.constant 0 : index
    %141 = vector.load %arg14[%c0_53, %c0_54] : memref<1x32xf32, #tpu.memory_space<vmem>>, vector<1x32xf32>
    %cst_55 = arith.constant dense<0.000000e+00> : vector<8xf32>
    %142 = vector.multi_reduction <add>, %139, %cst_55 [1] : vector<8x32xf32> to vector<8xf32>
    %143 = vector.shape_cast %142 : vector<8xf32> to vector<8x1xf32>
    %cst_56 = arith.constant 3.200000e+01 : f32
    %144 = vector.broadcast %cst_56 : f32 to vector<8x1xf32>
    %145 = arith.divf %143, %144 : vector<8x1xf32>
    %146 = vector.broadcast %145 : vector<8x1xf32> to vector<8x32xf32>
    %147 = arith.subf %139, %146 : vector<8x32xf32>
    %148 = arith.mulf %147, %147 : vector<8x32xf32>
    %cst_57 = arith.constant dense<0.000000e+00> : vector<8xf32>
    %149 = vector.multi_reduction <add>, %148, %cst_57 [1] : vector<8x32xf32> to vector<8xf32>
    %150 = vector.shape_cast %149 : vector<8xf32> to vector<8x1xf32>
    %cst_58 = arith.constant 3.200000e+01 : f32
    %151 = vector.broadcast %cst_58 : f32 to vector<8x1xf32>
    %152 = arith.divf %150, %151 : vector<8x1xf32>
    %153 = vector.broadcast %145 : vector<8x1xf32> to vector<8x32xf32>
    %154 = arith.subf %139, %153 : vector<8x32xf32>
    %cst_59 = arith.constant 9.99999974E-6 : f32
    %155 = vector.broadcast %cst_59 : f32 to vector<8x1xf32>
    %156 = arith.addf %152, %155 : vector<8x1xf32>
    %157 = math.rsqrt %156 : vector<8x1xf32>
    %158 = vector.broadcast %157 : vector<8x1xf32> to vector<8x32xf32>
    %159 = arith.mulf %154, %158 : vector<8x32xf32>
    %160 = vector.broadcast %140 : vector<1x32xf32> to vector<8x32xf32>
    %161 = arith.mulf %159, %160 : vector<8x32xf32>
    %162 = vector.broadcast %141 : vector<1x32xf32> to vector<8x32xf32>
    %163 = arith.addf %161, %162 : vector<8x32xf32>
    %164 = arith.truncf %163 : vector<8x32xf32> to vector<8x32xbf16>
    %c0_60 = arith.constant 0 : index
    %c0_61 = arith.constant 0 : index
    %165 = vector.load %arg15[%c0_60, %c0_61] : memref<32x128xbf16, #tpu.memory_space<vmem>>, vector<32x128xbf16>
    %cst_62 = arith.constant dense<0.000000e+00> : vector<8x128xf32>
    %166 = tpu.matmul %164, %165, %cst_62 {dimension_numbers = #tpu.dot_dimension_numbers<[1], [0], [0], [1], [0, 0, 1, 1], [], []>} : vector<8x32xbf16>, vector<32x128xbf16>, vector<8x128xf32> -> vector<8x128xf32>
    %c0_63 = arith.constant 0 : index
    %c0_64 = arith.constant 0 : index
    %167 = vector.load %arg16[%c0_63, %c0_64] : memref<1x128xf32, #tpu.memory_space<vmem>>, vector<1x128xf32>
    %168 = vector.broadcast %167 : vector<1x128xf32> to vector<8x128xf32>
    %169 = arith.addf %166, %168 : vector<8x128xf32>
    %cst_65 = arith.constant 5.000000e-01 : f32
    %170 = vector.broadcast %cst_65 : f32 to vector<8x128xf32>
    %171 = arith.mulf %170, %169 : vector<8x128xf32>
    %cst_66 = arith.constant 4.471500e-02 : f32
    %172 = vector.broadcast %cst_66 : f32 to vector<8x128xf32>
    %173 = arith.mulf %172, %169 : vector<8x128xf32>
    %174 = arith.mulf %173, %169 : vector<8x128xf32>
    %175 = arith.mulf %174, %169 : vector<8x128xf32>
    %176 = arith.addf %169, %175 : vector<8x128xf32>
    %cst_67 = arith.constant 0.797884583 : f32
    %177 = vector.broadcast %cst_67 : f32 to vector<8x128xf32>
    %178 = arith.mulf %177, %176 : vector<8x128xf32>
    %179 = math.tanh %178 : vector<8x128xf32>
    %cst_68 = arith.constant 1.000000e+00 : f32
    %180 = vector.broadcast %cst_68 : f32 to vector<8x128xf32>
    %181 = arith.addf %180, %179 : vector<8x128xf32>
    %182 = arith.mulf %171, %181 : vector<8x128xf32>
    %183 = arith.truncf %182 : vector<8x128xf32> to vector<8x128xbf16>
    %c0_69 = arith.constant 0 : index
    %c0_70 = arith.constant 0 : index
    %184 = vector.load %arg17[%c0_69, %c0_70] : memref<128x32xbf16, #tpu.memory_space<vmem>>, vector<128x32xbf16>
    %cst_71 = arith.constant dense<0.000000e+00> : vector<8x32xf32>
    %185 = tpu.matmul %183, %184, %cst_71 {dimension_numbers = #tpu.dot_dimension_numbers<[1], [0], [0], [1], [0, 0, 1, 1], [], []>} : vector<8x128xbf16>, vector<128x32xbf16>, vector<8x32xf32> -> vector<8x32xf32>
    %c0_72 = arith.constant 0 : index
    %c0_73 = arith.constant 0 : index
    %186 = vector.load %arg18[%c0_72, %c0_73] : memref<1x32xf32, #tpu.memory_space<vmem>>, vector<1x32xf32>
    %187 = vector.broadcast %186 : vector<1x32xf32> to vector<8x32xf32>
    %188 = arith.addf %185, %187 : vector<8x32xf32>
    %189 = arith.addf %139, %188 : vector<8x32xf32>
    %c0_74 = arith.constant 0 : index
    %c0_75 = arith.constant 0 : index
    %c0_76 = arith.constant 0 : index
    %190 = vector.load %arg19[%c0_74, %c0_75, %c0_76] : memref<1x8x32xf32, #tpu.memory_space<vmem>>, vector<1x8x32xf32>
    %191 = vector.shape_cast %190 : vector<1x8x32xf32> to vector<8x32xf32>
    %192 = vector.shape_cast %189 : vector<8x32xf32> to vector<1x8x32xf32>
    tpu.vector_store %arg19[%c0_74, %c0_75, %c0_76], %192 {strides = array<i32>} : memref<1x8x32xf32, #tpu.memory_space<vmem>>, vector<1x8x32xf32>,
    return
  }
  func.func @transform_0(%arg0: i32, %arg1: i32) -> (i32, i32, i32) {
    %c0_i32 = arith.constant 0 : i32
    %c0_i32_0 = arith.constant 0 : i32
    %c0_i32_1 = arith.constant 0 : i32
    return %arg0, %c0_i32, %c0_i32_0 : i32, i32, i32
  }
  func.func @transform_1(%arg0: i32, %arg1: i32) -> (i32, i32, i32) {
    %c0_i32 = arith.constant 0 : i32
    %c0_i32_0 = arith.constant 0 : i32
    %c0_i32_1 = arith.constant 0 : i32
    return %arg0, %c0_i32, %c0_i32_0 : i32, i32, i32
  }
  func.func @transform_2(%arg0: i32, %arg1: i32) -> (i32, i32) {
    %c0_i32 = arith.constant 0 : i32
    %c0_i32_0 = arith.constant 0 : i32
    %c0_i32_1 = arith.constant 0 : i32
    return %c0_i32, %c0_i32_0 : i32, i32
  }
  func.func @transform_3(%arg0: i32, %arg1: i32) -> (i32, i32) {
    %c0_i32 = arith.constant 0 : i32
    %c0_i32_0 = arith.constant 0 : i32
    %c0_i32_1 = arith.constant 0 : i32
    return %c0_i32, %c0_i32_0 : i32, i32
  }
  func.func @transform_4(%arg0: i32, %arg1: i32) -> (i32, i32) {
    %c0_i32 = arith.constant 0 : i32
    %c0_i32_0 = arith.constant 0 : i32
    %c0_i32_1 = arith.constant 0 : i32
    return %c0_i32, %c0_i32_0 : i32, i32
  }
  func.func @transform_5(%arg0: i32, %arg1: i32) -> (i32, i32) {
    %c0_i32 = arith.constant 0 : i32
    %c0_i32_0 = arith.constant 0 : i32
    %c0_i32_1 = arith.constant 0 : i32
    return %c0_i32, %c0_i32_0 : i32, i32
  }
  func.func @transform_6(%arg0: i32, %arg1: i32) -> (i32, i32) {
    %c0_i32 = arith.constant 0 : i32
    %c0_i32_0 = arith.constant 0 : i32
    %c0_i32_1 = arith.constant 0 : i32
    return %c0_i32, %c0_i32_0 : i32, i32
  }
  func.func @transform_7(%arg0: i32, %arg1: i32) -> (i32, i32) {
    %c0_i32 = arith.constant 0 : i32
    %c0_i32_0 = arith.constant 0 : i32
    %c0_i32_1 = arith.constant 0 : i32
    return %c0_i32, %c0_i32_0 : i32, i32
  }
  func.func @transform_8(%arg0: i32, %arg1: i32) -> (i32, i32) {
    %c0_i32 = arith.constant 0 : i32
    %c0_i32_0 = arith.constant 0 : i32
    %c0_i32_1 = arith.constant 0 : i32
    return %c0_i32, %c0_i32_0 : i32, i32
  }
  func.func @transform_9(%arg0: i32, %arg1: i32) -> (i32, i32) {
    %c0_i32 = arith.constant 0 : i32
    %c0_i32_0 = arith.constant 0 : i32
    %c0_i32_1 = arith.constant 0 : i32
    return %c0_i32, %c0_i32_0 : i32, i32
  }
  func.func @transform_10(%arg0: i32, %arg1: i32) -> (i32, i32) {
    %c0_i32 = arith.constant 0 : i32
    %c0_i32_0 = arith.constant 0 : i32
    %c0_i32_1 = arith.constant 0 : i32
    return %c0_i32, %c0_i32_0 : i32, i32
  }
  func.func @transform_11(%arg0: i32, %arg1: i32) -> (i32, i32) {
    %c0_i32 = arith.constant 0 : i32
    %c0_i32_0 = arith.constant 0 : i32
    %c0_i32_1 = arith.constant 0 : i32
    return %c0_i32, %c0_i32_0 : i32, i32
  }
  func.func @transform_12(%arg0: i32, %arg1: i32) -> (i32, i32) {
    %c0_i32 = arith.constant 0 : i32
    %c0_i32_0 = arith.constant 0 : i32
    %c0_i32_1 = arith.constant 0 : i32
    return %c0_i32, %c0_i32_0 : i32, i32
  }
  func.func @transform_13(%arg0: i32, %arg1: i32) -> (i32, i32) {
    %c0_i32 = arith.constant 0 : i32
    %c0_i32_0 = arith.constant 0 : i32
    %c0_i32_1 = arith.constant 0 : i32
    return %c0_i32, %c0_i32_0 : i32, i32
  }
  func.func @transform_14(%arg0: i32, %arg1: i32) -> (i32, i32) {
    %c0_i32 = arith.constant 0 : i32
    %c0_i32_0 = arith.constant 0 : i32
    %c0_i32_1 = arith.constant 0 : i32
    return %c0_i32, %c0_i32_0 : i32, i32
  }
  func.func @transform_15(%arg0: i32, %arg1: i32) -> (i32, i32) {
    %c0_i32 = arith.constant 0 : i32
    %c0_i32_0 = arith.constant 0 : i32
    %c0_i32_1 = arith.constant 0 : i32
    return %c0_i32, %c0_i32_0 : i32, i32
  }
  func.func @transform_16(%arg0: i32, %arg1: i32) -> (i32, i32) {
    %c0_i32 = arith.constant 0 : i32
    %c0_i32_0 = arith.constant 0 : i32
    %c0_i32_1 = arith.constant 0 : i32
    return %c0_i32, %c0_i32_0 : i32, i32
  }
  func.func @transform_17(%arg0: i32, %arg1: i32) -> (i32, i32, i32) {
    %c0_i32 = arith.constant 0 : i32
    %c0_i32_0 = arith.constant 0 : i32
    return %arg0, %arg1, %c0_i32 : i32, i32, i32
  }
  func.func @transform_18(%arg0: i32, %arg1: i32) -> (i32, i32, i32, i32) {
    %c0_i32 = arith.constant 0 : i32
    %c0_i32_0 = arith.constant 0 : i32
    %c0_i32_1 = arith.constant 0 : i32
    return %arg0, %c0_i32, %arg1, %c0_i32_0 : i32, i32, i32, i32
  }
}

</mosaic_0001>

<llo_original>
// kernel: tpu_custom_call.1
$region0: #{tpu_custom_call.1}
  #allocation0 [shape = 'u32[]', space=smem, size = 0x4, offset = 0x4, fixed_abs, tag = 'smem constant byte address 0x4 - core index']
  #allocation1 [shape = 'u32[144,128]{1,0:T(1,128)}', space=vmem, size = 0x12000, scoped, tag = 'internal scratch']
  %s0 = inlined_call_operand.vmem [shape: f32[2,8,32], index: 0, kind: input, shape index: {}]
  %s1 = inlined_call_operand.vmem [shape: f32[2,1,8], index: 1, kind: input, shape index: {}]
  %s2 = inlined_call_operand.hbm [shape: f32[8,32], index: 2, kind: input, shape index: {}]
  %s3 = inlined_call_operand.vmem [shape: f32[1,32], index: 3, kind: input, shape index: {}]
  %s4 = inlined_call_operand.vmem [shape: f32[1,32], index: 4, kind: input, shape index: {}]
  %s5 = inlined_call_operand.vmem [shape: bf16[32,32], index: 5, kind: input, shape index: {}]
  %s6 = inlined_call_operand.vmem [shape: f32[1,32], index: 6, kind: input, shape index: {}]
  %s7 = inlined_call_operand.vmem [shape: bf16[32,64], index: 7, kind: input, shape index: {}]
  %s8 = inlined_call_operand.vmem [shape: f32[1,64], index: 8, kind: input, shape index: {}]
  %s9 = inlined_call_operand.vmem [shape: bf16[32,32], index: 9, kind: input, shape index: {}]
  %s10 = inlined_call_operand.vmem [shape: f32[1,32], index: 10, kind: input, shape index: {}]
  %s11 = inlined_call_operand.vmem [shape: f32[1,32], index: 11, kind: input, shape index: {}]
  %s12 = inlined_call_operand.vmem [shape: f32[1,32], index: 12, kind: input, shape index: {}]
  %s13 = inlined_call_operand.vmem [shape: bf16[32,128], index: 13, kind: input, shape index: {}]
  %s14 = inlined_call_operand.vmem [shape: f32[1,128], index: 14, kind: input, shape index: {}]
  %s15 = inlined_call_operand.vmem [shape: bf16[128,32], index: 15, kind: input, shape index: {}]
  %s16 = inlined_call_operand.vmem [shape: f32[1,32], index: 16, kind: input, shape index: {}]
  %s17 = inlined_call_operand.hbm [shape: f32[2,8,32], index: 17, kind: output, shape index: {0}]
  %s18 = inlined_call_operand.hbm [shape: f32[2,4,8,8], index: 18, kind: output, shape index: {1}]
  %19 = xla_tuple %s17, %s18
  %s20 = sld [smem:[#allocation0]]
  $region113: #{tpu_custom_call.1} parent=0
    _
  %s22 = ssub.s32 1, %s20
  %s23 = scalar_select 0, %s22, %s20
  $region1: #{tpu_custom_call.1} parent=0
    #allocation2 [shape = 'u8[4096]{0}', space=vmem, size = 0x1000, scoped, tag = 'input window, operand 2, single buffered']
    #allocation3 [shape = 's32[2]{0}', space=sflag, size = 0x8, scoped, tag = 'scoped memory for tpu_custom_call.1']
    #allocation4 [shape = 's32[2]{0}', space=sflag, size = 0x8, scoped, tag = 'scoped memory for tpu_custom_call.1']
    #allocation5 [shape = 'u8[8192]{0}', space=vmem, size = 0x2000, scoped, tag = 'output window, operand 0']
    #allocation6 [shape = 'u8[32768]{0}', space=vmem, size = 0x8000, scoped, tag = 'output window, operand 1']
    #allocation7 [shape = 's32[2]{0}', space=sflag, size = 0x8, scoped, tag = 'scoped memory for tpu_custom_call.1']
    %24 = vsyncpa [#allocation3], 0
    %25 = vsyncpa [#allocation4], 0
    %s26 = scalar_lea.sflag [#allocation4], 1
    %27 = vsyncpa %s26, 0
    %28 = vsyncpa [#allocation7], 0
    %s29 = scalar_lea.sflag [#allocation7], 1
    %30 = vsyncpa %s29, 0
    loop: start=0, step=1, limit=4
    $region2: #{tpu_custom_call.1} parent=1 // loop_pre_header
      _
    $region3: #{tpu_custom_call.1} parent=1 // loop_header
      %s32 = sphi 0, %s36
      %p33 = scmp.ge.s32.totalorder %s32, 4
      %s39 = sphi 0, %s51
      %s40 = sphi 0, %s47
      %s41 = sphi 0, %s39
      %s42 = sphi 0, %s40
      %s43 = sphi 0, %s41
      %s44 = sphi 0, %s42
      %s54 = sphi 0, %s56
      %s57 = sphi 0, %s54
      %s58 = sphi 0, %s57
      %s74 = sphi 0, %s58
      %s80 = sphi 0, %s82
      %s83 = sphi 0, %s80
      %s84 = sphi 0, %s83
      %s100 = sphi 0, %s84
      %s104 = sphi 0, %s104
      %s106 = sphi 0, %s104
      %s107 = sphi 0, %s106
      %s121 = sphi 0, %s107
      %s125 = sphi 0, %s125
      %s127 = sphi 0, %s125
      %s128 = sphi 0, %s127
      %s142 = sphi 0, %s128
      %s146 = sphi 0, %s146
      %s148 = sphi 0, %s146
      %s149 = sphi 0, %s148
      %s163 = sphi 0, %s149
      %s167 = sphi 0, %s167
      %s169 = sphi 0, %s167
      %s170 = sphi 0, %s169
      %s184 = sphi 0, %s170
      %s188 = sphi 0, %s188
      %s190 = sphi 0, %s188
      %s191 = sphi 0, %s190
      %s205 = sphi 0, %s191
      %s209 = sphi 0, %s209
      %s211 = sphi 0, %s209
      %s212 = sphi 0, %s211
      %s226 = sphi 0, %s212
      %s230 = sphi 0, %s230
      %s232 = sphi 0, %s230
      %s233 = sphi 0, %s232
      %s247 = sphi 0, %s233
      %s251 = sphi 0, %s251
      %s253 = sphi 0, %s251
      %s254 = sphi 0, %s253
      %s268 = sphi 0, %s254
      %s272 = sphi 0, %s272
      %s274 = sphi 0, %s272
      %s275 = sphi 0, %s274
      %s289 = sphi 0, %s275
      %s293 = sphi 0, %s293
      %s295 = sphi 0, %s293
      %s296 = sphi 0, %s295
      %s310 = sphi 0, %s296
      %s314 = sphi 0, %s314
      %s316 = sphi 0, %s314
      %s317 = sphi 0, %s316
      %s331 = sphi 0, %s317
      %s335 = sphi 0, %s335
      %s337 = sphi 0, %s335
      %s338 = sphi 0, %s337
      %s352 = sphi 0, %s338
      %s356 = sphi 0, %s356
      %s358 = sphi 0, %s356
      %s359 = sphi 0, %s358
      %s373 = sphi 0, %s359
      %s377 = sphi 0, %s377
      %s379 = sphi 0, %s377
      %s380 = sphi 0, %s379
      %s394 = sphi 0, %s380
      %s398 = sphi 0, %s398
      %s400 = sphi 0, %s398
      %s401 = sphi 0, %s400
      %s415 = sphi 0, %s401
      %s423 = sphi 0, %s425
      %s426 = sphi 0, %s423
      %s427 = sphi 0, %s426
      %s443 = sphi 0, %s427
      %s451 = sphi 0, %s453
      %s454 = sphi 0, %s451
      %s455 = sphi 0, %s454
      %s471 = sphi 0, %s455
    $region4: #{tpu_custom_call.1} parent=1 // loop_header_branch
      %35 = sbr.rel (%p33) target = $region8
    $region5: #{tpu_custom_call.1} parent=1 // loop_body
      %s37 = ssub.s32 %s32, 1
      %s38 = ssub.s32 %s32, 2
      %s45 = sadd.s32 1, %s40
      %p46 = scmp.ge.s32.totalorder %s45, 1
      %s47 = scalar_select %p46, 0, %s45
      %s48 = sadd.s32 1, %s39
      %s49 = scalar_select %p46, %s48, %s39
      %p50 = scmp.ge.s32.totalorder %s49, 2
      %s51 = scalar_select %p50, 0, %s49
      %s52 = ssub.s32 %s39, %s51
      %p53 = scmp.eq.s32.totalorder %s52, 0
      %s55 = sadd.s32 %s54, 1
      %s56 = scalar_select %p53, %s54, %s55
      %p59 = pneg %p53
      %p60 = scmp.eq.s32.totalorder %s32, 1
      %p61 = por %p59, %p60
      %p62 = scmp.ne.s32.totalorder %s54, %s57
      %p63 = scmp.eq.s32.totalorder %s32, 0
      %p64 = por %p62, %p63
      %p65 = scmp.ne.s32.totalorder %s54, %s57
      %p66 = scmp.eq.s32.totalorder %s37, 1
      %p67 = por %p65, %p66
      %p68 = scmp.ne.s32.totalorder %s57, %s58
      %p69 = scmp.eq.s32.totalorder %s37, 0
      %p70 = por %p68, %p69
      %p71 = scmp.ne.s32.totalorder %s57, %s58
      %p72 = scmp.eq.s32.totalorder %s38, 1
      %p73 = por %p71, %p72
      %p75 = scmp.ne.s32.totalorder %s58, %s74
      %p76 = scmp.eq.s32.totalorder %s38, 0
      %p77 = por %p75, %p76
      %s78 = ssub.s32 %s39, %s51
      %p79 = scmp.eq.s32.totalorder %s78, 0
      %s81 = sadd.s32 %s80, 1
      %s82 = scalar_select %p79, %s80, %s81
      %p85 = pneg %p79
      %p86 = scmp.eq.s32.totalorder %s32, 1
      %p87 = por %p85, %p86
      %p88 = scmp.ne.s32.totalorder %s80, %s83
      %p89 = scmp.eq.s32.totalorder %s32, 0
      %p90 = por %p88, %p89
      %p91 = scmp.ne.s32.totalorder %s80, %s83
      %p92 = scmp.eq.s32.totalorder %s37, 1
      %p93 = por %p91, %p92
      %p94 = scmp.ne.s32.totalorder %s83, %s84
      %p95 = scmp.eq.s32.totalorder %s37, 0
      %p96 = por %p94, %p95
      %p97 = scmp.ne.s32.totalorder %s83, %s84
      %p98 = scmp.eq.s32.totalorder %s38, 1
      %p99 = por %p97, %p98
      %p101 = scmp.ne.s32.totalorder %s84, %s100
      %p102 = scmp.eq.s32.totalorder %s38, 0
      %p103 = por %p101, %p102
      %s105 = sadd.s32 %s104, 1
      %p108 = scmp.eq.s32.totalorder %s32, 1
      %p109 = scmp.ne.s32.totalorder %s104, %s106
      %p110 = scmp.eq.s32.totalorder %s32, 0
      %p111 = por %p109, %p110
      %p112 = scmp.ne.s32.totalorder %s104, %s106
      %p113 = scmp.eq.s32.totalorder %s37, 1
      %p114 = por %p112, %p113
      %p115 = scmp.ne.s32.totalorder %s106, %s107
      %p116 = scmp.eq.s32.totalorder %s37, 0
      %p117 = por %p115, %p116
      %p118 = scmp.ne.s32.totalorder %s106, %s107
      %p119 = scmp.eq.s32.totalorder %s38, 1
      %p120 = por %p118, %p119
      %p122 = scmp.ne.s32.totalorder %s107, %s121
      %p123 = scmp.eq.s32.totalorder %s38, 0
      %p124 = por %p122, %p123
      %s126 = sadd.s32 %s125, 1
      %p129 = scmp.eq.s32.totalorder %s32, 1
      %p130 = scmp.ne.s32.totalorder %s125, %s127
      %p131 = scmp.eq.s32.totalorder %s32, 0
      %p132 = por %p130, %p131
      %p133 = scmp.ne.s32.totalorder %s125, %s127
      %p134 = scmp.eq.s32.totalorder %s37, 1
      %p135 = por %p133, %p134
      %p136 = scmp.ne.s32.totalorder %s127, %s128
      %p137 = scmp.eq.s32.totalorder %s37, 0
      %p138 = por %p136, %p137
      %p139 = scmp.ne.s32.totalorder %s127, %s128
      %p140 = scmp.eq.s32.totalorder %s38, 1
      %p141 = por %p139, %p140
      %p143 = scmp.ne.s32.totalorder %s128, %s142
      %p144 = scmp.eq.s32.totalorder %s38, 0
      %p145 = por %p143, %p144
      %s147 = sadd.s32 %s146, 1
      %p150 = scmp.eq.s32.totalorder %s32, 1
      %p151 = scmp.ne.s32.totalorder %s146, %s148
      %p152 = scmp.eq.s32.totalorder %s32, 0
      %p153 = por %p151, %p152
      %p154 = scmp.ne.s32.totalorder %s146, %s148
      %p155 = scmp.eq.s32.totalorder %s37, 1
      %p156 = por %p154, %p155
      %p157 = scmp.ne.s32.totalorder %s148, %s149
      %p158 = scmp.eq.s32.totalorder %s37, 0
      %p159 = por %p157, %p158
      %p160 = scmp.ne.s32.totalorder %s148, %s149
      %p161 = scmp.eq.s32.totalorder %s38, 1
      %p162 = por %p160, %p161
      %p164 = scmp.ne.s32.totalorder %s149, %s163
      %p165 = scmp.eq.s32.totalorder %s38, 0
      %p166 = por %p164, %p165
      %s168 = sadd.s32 %s167, 1
      %p171 = scmp.eq.s32.totalorder %s32, 1
      %p172 = scmp.ne.s32.totalorder %s167, %s169
      %p173 = scmp.eq.s32.totalorder %s32, 0
      %p174 = por %p172, %p173
      %p175 = scmp.ne.s32.totalorder %s167, %s169
      %p176 = scmp.eq.s32.totalorder %s37, 1
      %p177 = por %p175, %p176
      %p178 = scmp.ne.s32.totalorder %s169, %s170
      %p179 = scmp.eq.s32.totalorder %s37, 0
      %p180 = por %p178, %p179
      %p181 = scmp.ne.s32.totalorder %s169, %s170
      %p182 = scmp.eq.s32.totalorder %s38, 1
      %p183 = por %p181, %p182
      %p185 = scmp.ne.s32.totalorder %s170, %s184
      %p186 = scmp.eq.s32.totalorder %s38, 0
      %p187 = por %p185, %p186
      %s189 = sadd.s32 %s188, 1
      %p192 = scmp.eq.s32.totalorder %s32, 1
      %p193 = scmp.ne.s32.totalorder %s188, %s190
      %p194 = scmp.eq.s32.totalorder %s32, 0
      %p195 = por %p193, %p194
      %p196 = scmp.ne.s32.totalorder %s188, %s190
      %p197 = scmp.eq.s32.totalorder %s37, 1
      %p198 = por %p196, %p197
      %p199 = scmp.ne.s32.totalorder %s190, %s191
      %p200 = scmp.eq.s32.totalorder %s37, 0
      %p201 = por %p199, %p200
      %p202 = scmp.ne.s32.totalorder %s190, %s191
      %p203 = scmp.eq.s32.totalorder %s38, 1
      %p204 = por %p202, %p203
      %p206 = scmp.ne.s32.totalorder %s191, %s205
      %p207 = scmp.eq.s32.totalorder %s38, 0
      %p208 = por %p206, %p207
      %s210 = sadd.s32 %s209, 1
      %p213 = scmp.eq.s32.totalorder %s32, 1
      %p214 = scmp.ne.s32.totalorder %s209, %s211
      %p215 = scmp.eq.s32.totalorder %s32, 0
      %p216 = por %p214, %p215
      %p217 = scmp.ne.s32.totalorder %s209, %s211
      %p218 = scmp.eq.s32.totalorder %s37, 1
      %p219 = por %p217, %p218
      %p220 = scmp.ne.s32.totalorder %s211, %s212
      %p221 = scmp.eq.s32.totalorder %s37, 0
      %p222 = por %p220, %p221
      %p223 = scmp.ne.s32.totalorder %s211, %s212
      %p224 = scmp.eq.s32.totalorder %s38, 1
      %p225 = por %p223, %p224
      %p227 = scmp.ne.s32.totalorder %s212, %s226
      %p228 = scmp.eq.s32.totalorder %s38, 0
      %p229 = por %p227, %p228
      %s231 = sadd.s32 %s230, 1
      %p234 = scmp.eq.s32.totalorder %s32, 1
      %p235 = scmp.ne.s32.totalorder %s230, %s232
      %p236 = scmp.eq.s32.totalorder %s32, 0
      %p237 = por %p235, %p236
      %p238 = scmp.ne.s32.totalorder %s230, %s232
      %p239 = scmp.eq.s32.totalorder %s37, 1
      %p240 = por %p238, %p239
      %p241 = scmp.ne.s32.totalorder %s232, %s233
      %p242 = scmp.eq.s32.totalorder %s37, 0
      %p243 = por %p241, %p242
      %p244 = scmp.ne.s32.totalorder %s232, %s233
      %p245 = scmp.eq.s32.totalorder %s38, 1
      %p246 = por %p244, %p245
      %p248 = scmp.ne.s32.totalorder %s233, %s247
      %p249 = scmp.eq.s32.totalorder %s38, 0
      %p250 = por %p248, %p249
      %s252 = sadd.s32 %s251, 1
      %p255 = scmp.eq.s32.totalorder %s32, 1
      %p256 = scmp.ne.s32.totalorder %s251, %s253
      %p257 = scmp.eq.s32.totalorder %s32, 0
      %p258 = por %p256, %p257
      %p259 = scmp.ne.s32.totalorder %s251, %s253
      %p260 = scmp.eq.s32.totalorder %s37, 1
      %p261 = por %p259, %p260
      %p262 = scmp.ne.s32.totalorder %s253, %s254
      %p263 = scmp.eq.s32.totalorder %s37, 0
      %p264 = por %p262, %p263
      %p265 = scmp.ne.s32.totalorder %s253, %s254
      %p266 = scmp.eq.s32.totalorder %s38, 1
      %p267 = por %p265, %p266
      %p269 = scmp.ne.s32.totalorder %s254, %s268
      %p270 = scmp.eq.s32.totalorder %s38, 0
      %p271 = por %p269, %p270
      %s273 = sadd.s32 %s272, 1
      %p276 = scmp.eq.s32.totalorder %s32, 1
      %p277 = scmp.ne.s32.totalorder %s272, %s274
      %p278 = scmp.eq.s32.totalorder %s32, 0
      %p279 = por %p277, %p278
      %p280 = scmp.ne.s32.totalorder %s272, %s274
      %p281 = scmp.eq.s32.totalorder %s37, 1
      %p282 = por %p280, %p281
      %p283 = scmp.ne.s32.totalorder %s274, %s275
      %p284 = scmp.eq.s32.totalorder %s37, 0
      %p285 = por %p283, %p284
      %p286 = scmp.ne.s32.totalorder %s274, %s275
      %p287 = scmp.eq.s32.totalorder %s38, 1
      %p288 = por %p286, %p287
      %p290 = scmp.ne.s32.totalorder %s275, %s289
      %p291 = scmp.eq.s32.totalorder %s38, 0
      %p292 = por %p290, %p291
      %s294 = sadd.s32 %s293, 1
      %p297 = scmp.eq.s32.totalorder %s32, 1
      %p298 = scmp.ne.s32.totalorder %s293, %s295
      %p299 = scmp.eq.s32.totalorder %s32, 0
      %p300 = por %p298, %p299
      %p301 = scmp.ne.s32.totalorder %s293, %s295
      %p302 = scmp.eq.s32.totalorder %s37, 1
      %p303 = por %p301, %p302
      %p304 = scmp.ne.s32.totalorder %s295, %s296
      %p305 = scmp.eq.s32.totalorder %s37, 0
      %p306 = por %p304, %p305
      %p307 = scmp.ne.s32.totalorder %s295, %s296
      %p308 = scmp.eq.s32.totalorder %s38, 1
      %p309 = por %p307, %p308
      %p311 = scmp.ne.s32.totalorder %s296, %s310
      %p312 = scmp.eq.s32.totalorder %s38, 0
      %p313 = por %p311, %p312
      %s315 = sadd.s32 %s314, 1
      %p318 = scmp.eq.s32.totalorder %s32, 1
      %p319 = scmp.ne.s32.totalorder %s314, %s316
      %p320 = scmp.eq.s32.totalorder %s32, 0
      %p321 = por %p319, %p320
      %p322 = scmp.ne.s32.totalorder %s314, %s316
      %p323 = scmp.eq.s32.totalorder %s37, 1
      %p324 = por %p322, %p323
      %p325 = scmp.ne.s32.totalorder %s316, %s317
      %p326 = scmp.eq.s32.totalorder %s37, 0
      %p327 = por %p325, %p326
      %p328 = scmp.ne.s32.totalorder %s316, %s317
      %p329 = scmp.eq.s32.totalorder %s38, 1
      %p330 = por %p328, %p329
      %p332 = scmp.ne.s32.totalorder %s317, %s331
      %p333 = scmp.eq.s32.totalorder %s38, 0
      %p334 = por %p332, %p333
      %s336 = sadd.s32 %s335, 1
      %p339 = scmp.eq.s32.totalorder %s32, 1
      %p340 = scmp.ne.s32.totalorder %s335, %s337
      %p341 = scmp.eq.s32.totalorder %s32, 0
      %p342 = por %p340, %p341
      %p343 = scmp.ne.s32.totalorder %s335, %s337
      %p344 = scmp.eq.s32.totalorder %s37, 1
      %p345 = por %p343, %p344
      %p346 = scmp.ne.s32.totalorder %s337, %s338
      %p347 = scmp.eq.s32.totalorder %s37, 0
      %p348 = por %p346, %p347
      %p349 = scmp.ne.s32.totalorder %s337, %s338
      %p350 = scmp.eq.s32.totalorder %s38, 1
      %p351 = por %p349, %p350
      %p353 = scmp.ne.s32.totalorder %s338, %s352
      %p354 = scmp.eq.s32.totalorder %s38, 0
      %p355 = por %p353, %p354
      %s357 = sadd.s32 %s356, 1
      %p360 = scmp.eq.s32.totalorder %s32, 1
      %p361 = scmp.ne.s32.totalorder %s356, %s358
      %p362 = scmp.eq.s32.totalorder %s32, 0
      %p363 = por %p361, %p362
      %p364 = scmp.ne.s32.totalorder %s356, %s358
      %p365 = scmp.eq.s32.totalorder %s37, 1
      %p366 = por %p364, %p365
      %p367 = scmp.ne.s32.totalorder %s358, %s359
      %p368 = scmp.eq.s32.totalorder %s37, 0
      %p369 = por %p367, %p368
      %p370 = scmp.ne.s32.totalorder %s358, %s359
      %p371 = scmp.eq.s32.totalorder %s38, 1
      %p372 = por %p370, %p371
      %p374 = scmp.ne.s32.totalorder %s359, %s373
      %p375 = scmp.eq.s32.totalorder %s38, 0
      %p376 = por %p374, %p375
      %s378 = sadd.s32 %s377, 1
      %p381 = scmp.eq.s32.totalorder %s32, 1
      %p382 = scmp.ne.s32.totalorder %s377, %s379
      %p383 = scmp.eq.s32.totalorder %s32, 0
      %p384 = por %p382, %p383
      %p385 = scmp.ne.s32.totalorder %s377, %s379
      %p386 = scmp.eq.s32.totalorder %s37, 1
      %p387 = por %p385, %p386
      %p388 = scmp.ne.s32.totalorder %s379, %s380
      %p389 = scmp.eq.s32.totalorder %s37, 0
      %p390 = por %p388, %p389
      %p391 = scmp.ne.s32.totalorder %s379, %s380
      %p392 = scmp.eq.s32.totalorder %s38, 1
      %p393 = por %p391, %p392
      %p395 = scmp.ne.s32.totalorder %s380, %s394
      %p396 = scmp.eq.s32.totalorder %s38, 0
      %p397 = por %p395, %p396
      %s399 = sadd.s32 %s398, 1
      %p402 = scmp.eq.s32.totalorder %s32, 1
      %p403 = scmp.ne.s32.totalorder %s398, %s400
      %p404 = scmp.eq.s32.totalorder %s32, 0
      %p405 = por %p403, %p404
      %p406 = scmp.ne.s32.totalorder %s398, %s400
      %p407 = scmp.eq.s32.totalorder %s37, 1
      %p408 = por %p406, %p407
      %p409 = scmp.ne.s32.totalorder %s400, %s401
      %p410 = scmp.eq.s32.totalorder %s37, 0
      %p411 = por %p409, %p410
      %p412 = scmp.ne.s32.totalorder %s400, %s401
      %p413 = scmp.eq.s32.totalorder %s38, 1
      %p414 = por %p412, %p413
      %p416 = scmp.ne.s32.totalorder %s401, %s415
      %p417 = scmp.eq.s32.totalorder %s38, 0
      %p418 = por %p416, %p417
      %s419 = ssub.s32 %s39, %s51
      %s420 = ssub.s32 %s40, %s47
      %s421 = sor.u32 %s419, %s420
      %p422 = scmp.eq.s32.totalorder %s421, 0
      %s424 = sadd.s32 %s423, 1
      %s425 = scalar_select %p422, %s423, %s424
      %p428 = pneg %p422
      %p429 = scmp.eq.s32.totalorder %s32, 1
      %p430 = por %p428, %p429
      %p431 = scmp.ne.s32.totalorder %s423, %s426
      %p432 = scmp.eq.s32.totalorder %s32, 0
      %p433 = por %p431, %p432
      %p434 = scmp.ne.s32.totalorder %s423, %s426
      %p435 = scmp.eq.s32.totalorder %s37, 1
      %p436 = por %p434, %p435
      %p437 = scmp.ne.s32.totalorder %s426, %s427
      %p438 = scmp.eq.s32.totalorder %s37, 0
      %p439 = por %p437, %p438
      %p440 = scmp.ne.s32.totalorder %s426, %s427
      %p441 = scmp.eq.s32.totalorder %s38, 1
      %p442 = por %p440, %p441
      %p444 = scmp.ne.s32.totalorder %s427, %s443
      %p445 = scmp.eq.s32.totalorder %s38, 0
      %p446 = por %p444, %p445
      %s447 = ssub.s32 %s39, %s51
      %s448 = ssub.s32 %s40, %s47
      %s449 = sor.u32 %s447, %s448
      %p450 = scmp.eq.s32.totalorder %s449, 0
      %s452 = sadd.s32 %s451, 1
      %s453 = scalar_select %p450, %s451, %s452
      %p456 = pneg %p450
      %p457 = scmp.eq.s32.totalorder %s32, 1
      %p458 = por %p456, %p457
      %p459 = scmp.ne.s32.totalorder %s451, %s454
      %p460 = scmp.eq.s32.totalorder %s32, 0
      %p461 = por %p459, %p460
      %p462 = scmp.ne.s32.totalorder %s451, %s454
      %p463 = scmp.eq.s32.totalorder %s37, 1
      %p464 = por %p462, %p463
      %p465 = scmp.ne.s32.totalorder %s454, %s455
      %p466 = scmp.eq.s32.totalorder %s37, 0
      %p467 = por %p465, %p466
      %p468 = scmp.ne.s32.totalorder %s454, %s455
      %p469 = scmp.eq.s32.totalorder %s38, 1
      %p470 = por %p468, %p469
      %p472 = scmp.ne.s32.totalorder %s455, %s471
      %p473 = scmp.eq.s32.totalorder %s38, 0
      %p474 = por %p472, %p473
      %p475 = scmp.le.s32.totalorder 1, %s32
      %p476 = scmp.lt.s32.totalorder %s32, 3
      %p477 = pnand %p475, %p476
      %p478 = pneg %p477
      // Predicated region
      $region9: #{tpu_custom_call.1} parent=5 // pred_check
        _
      $region10: #{tpu_custom_call.1} parent=5 // pred_check_branch
        %480 = sbr.rel (%p477) target = $region12
      $region11: #{tpu_custom_call.1} parent=5 // pred_region
        %s481 = ssub.s32 %s32, 1
        // Predicated region
        $region13: #{tpu_custom_call.1} parent=11 // pred_check
          %p482 = pneg %p117
        $region14: #{tpu_custom_call.1} parent=11 // pred_check_branch
          %484 = sbr.rel (%p482) target = $region16
        $region15: #{tpu_custom_call.1} parent=11 // pred_region
          %s486 = ssub.s32 128, 128
          %487 = vsyncadd [#allocation3], %s486
          %s489 = sshll.u32 [#allocation2], 4
          %s490 = int_to_ptr.vmem [resolvable:$true] %s489
          %492 = dma.hbm_to_vmem [thread:$0]  %s2, 128, %s490, [#allocation3]
        $region16: #{tpu_custom_call.1} parent=11 // pred_fallthru
          _
        // Predicated region
        $region17: #{tpu_custom_call.1} parent=11 // pred_check
          %p493 = pneg %p138
        $region18: #{tpu_custom_call.1} parent=11 // pred_check_branch
          %495 = sbr.rel (%p493) target = $region20
        $region19: #{tpu_custom_call.1} parent=11 // pred_region
          _
        $region20: #{tpu_custom_call.1} parent=11 // pred_fallthru
          _
        // Predicated region
        $region21: #{tpu_custom_call.1} parent=11 // pred_check
          %p496 = pneg %p159
        $region22: #{tpu_custom_call.1} parent=11 // pred_check_branch
          %498 = sbr.rel (%p496) target = $region24
        $region23: #{tpu_custom_call.1} parent=11 // pred_region
          _
        $region24: #{tpu_custom_call.1} parent=11 // pred_fallthru
          _
        // Predicated region
        $region25: #{tpu_custom_call.1} parent=11 // pred_check
          %p499 = pneg %p180
        $region26: #{tpu_custom_call.1} parent=11 // pred_check_branch
          %501 = sbr.rel (%p499) target = $region28
        $region27: #{tpu_custom_call.1} parent=11 // pred_region
          _
        $region28: #{tpu_custom_call.1} parent=11 // pred_fallthru
          _
        // Predicated region
        $region29: #{tpu_custom_call.1} parent=11 // pred_check
          %p502 = pneg %p201
        $region30: #{tpu_custom_call.1} parent=11 // pred_check_branch
          %504 = sbr.rel (%p502) target = $region32
        $region31: #{tpu_custom_call.1} parent=11 // pred_region
          _
        $region32: #{tpu_custom_call.1} parent=11 // pred_fallthru
          _
        // Predicated region
        $region33: #{tpu_custom_call.1} parent=11 // pred_check
          %p505 = pneg %p222
        $region34: #{tpu_custom_call.1} parent=11 // pred_check_branch
          %507 = sbr.rel (%p505) target = $region36
        $region35: #{tpu_custom_call.1} parent=11 // pred_region
          _
        $region36: #{tpu_custom_call.1} parent=11 // pred_fallthru
          _
        // Predicated region
        $region37: #{tpu_custom_call.1} parent=11 // pred_check
          %p508 = pneg %p243
        $region38: #{tpu_custom_call.1} parent=11 // pred_check_branch
          %510 = sbr.rel (%p508) target = $region40
        $region39: #{tpu_custom_call.1} parent=11 // pred_region
          _
        $region40: #{tpu_custom_call.1} parent=11 // pred_fallthru
          _
        // Predicated region
        $region41: #{tpu_custom_call.1} parent=11 // pred_check
          %p511 = pneg %p264
        $region42: #{tpu_custom_call.1} parent=11 // pred_check_branch
          %513 = sbr.rel (%p511) target = $region44
        $region43: #{tpu_custom_call.1} parent=11 // pred_region
          _
        $region44: #{tpu_custom_call.1} parent=11 // pred_fallthru
          _
        // Predicated region
        $region45: #{tpu_custom_call.1} parent=11 // pred_check
          %p514 = pneg %p285
        $region46: #{tpu_custom_call.1} parent=11 // pred_check_branch
          %516 = sbr.rel (%p514) target = $region48
        $region47: #{tpu_custom_call.1} parent=11 // pred_region
          _
        $region48: #{tpu_custom_call.1} parent=11 // pred_fallthru
          _
        // Predicated region
        $region49: #{tpu_custom_call.1} parent=11 // pred_check
          %p517 = pneg %p306
        $region50: #{tpu_custom_call.1} parent=11 // pred_check_branch
          %519 = sbr.rel (%p517) target = $region52
        $region51: #{tpu_custom_call.1} parent=11 // pred_region
          _
        $region52: #{tpu_custom_call.1} parent=11 // pred_fallthru
          _
        // Predicated region
        $region53: #{tpu_custom_call.1} parent=11 // pred_check
          %p520 = pneg %p327
        $region54: #{tpu_custom_call.1} parent=11 // pred_check_branch
          %522 = sbr.rel (%p520) target = $region56
        $region55: #{tpu_custom_call.1} parent=11 // pred_region
          _
        $region56: #{tpu_custom_call.1} parent=11 // pred_fallthru
          _
        // Predicated region
        $region57: #{tpu_custom_call.1} parent=11 // pred_check
          %p523 = pneg %p348
        $region58: #{tpu_custom_call.1} parent=11 // pred_check_branch
          %525 = sbr.rel (%p523) target = $region60
        $region59: #{tpu_custom_call.1} parent=11 // pred_region
          _
        $region60: #{tpu_custom_call.1} parent=11 // pred_fallthru
          _
        // Predicated region
        $region61: #{tpu_custom_call.1} parent=11 // pred_check
          %p526 = pneg %p369
        $region62: #{tpu_custom_call.1} parent=11 // pred_check_branch
          %528 = sbr.rel (%p526) target = $region64
        $region63: #{tpu_custom_call.1} parent=11 // pred_region
          _
        $region64: #{tpu_custom_call.1} parent=11 // pred_fallthru
          _
        // Predicated region
        $region65: #{tpu_custom_call.1} parent=11 // pred_check
          %p529 = pneg %p390
        $region66: #{tpu_custom_call.1} parent=11 // pred_check_branch
          %531 = sbr.rel (%p529) target = $region68
        $region67: #{tpu_custom_call.1} parent=11 // pred_region
          _
        $region68: #{tpu_custom_call.1} parent=11 // pred_fallthru
          _
        // Predicated region
        $region69: #{tpu_custom_call.1} parent=11 // pred_check
          %p532 = pneg %p411
        $region70: #{tpu_custom_call.1} parent=11 // pred_check_branch
          %534 = sbr.rel (%p532) target = $region72
        $region71: #{tpu_custom_call.1} parent=11 // pred_region
          _
        $region72: #{tpu_custom_call.1} parent=11 // pred_fallthru
          _
      $region12: #{tpu_custom_call.1} parent=5 // pred_fallthru
        _
      %p535 = scmp.lt.s32.totalorder %s32, 2
      // Predicated region
      $region73: #{tpu_custom_call.1} parent=5 // pred_check
        %p536 = pneg %p535
      $region74: #{tpu_custom_call.1} parent=5 // pred_check_branch
        %538 = sbr.rel (%p536) target = $region76
      $region75: #{tpu_custom_call.1} parent=5 // pred_region
        // Predicated region
        $region77: #{tpu_custom_call.1} parent=75 // pred_check
          %p539 = pneg %p64
        $region78: #{tpu_custom_call.1} parent=75 // pred_check_branch
          %541 = sbr.rel (%p539) target = $region80
        $region79: #{tpu_custom_call.1} parent=75 // pred_region
          %p542 = scmp.lt.s32.totalorder %s39, 1
          %s543 = scalar_select %p542, %s39, 1
          %s544 = smul.addr %s543, 8
          %s545 = scalar_lea.vmem %s0, %s544
        $region80: #{tpu_custom_call.1} parent=75 // pred_fallthru
          _
        // Predicated region
        $region81: #{tpu_custom_call.1} parent=75 // pred_check
          %p546 = pneg %p90
        $region82: #{tpu_custom_call.1} parent=75 // pred_check_branch
          %548 = sbr.rel (%p546) target = $region84
        $region83: #{tpu_custom_call.1} parent=75 // pred_region
          %p549 = scmp.lt.s32.totalorder %s39, 1
          %s550 = scalar_select %p549, %s39, 1
          %s551 = scalar_lea.vmem %s1, %s550
        $region84: #{tpu_custom_call.1} parent=75 // pred_fallthru
          _
      $region76: #{tpu_custom_call.1} parent=5 // pred_fallthru
        _
      %p552 = scmp.le.s32.totalorder 1, %s32
      %p553 = scmp.lt.s32.totalorder %s32, 3
      %p554 = pnand %p552, %p553
      %p555 = pneg %p554
      // Predicated region
      $region85: #{tpu_custom_call.1} parent=5 // pred_check
        _
      $region86: #{tpu_custom_call.1} parent=5 // pred_check_branch
        %557 = sbr.rel (%p554) target = $region88
      $region87: #{tpu_custom_call.1} parent=5 // pred_region
        %s558 = ssub.s32 %s32, 1
        // Predicated region
        $region89: #{tpu_custom_call.1} parent=87 // pred_check
          %p559 = pneg %p117
        $region90: #{tpu_custom_call.1} parent=87 // pred_check_branch
          %561 = sbr.rel (%p559) target = $region92
        $region91: #{tpu_custom_call.1} parent=87 // pred_region
          %562 = dma.done [#allocation3], 128
        $region92: #{tpu_custom_call.1} parent=87 // pred_fallthru
          _
        %p563 = scmp.lt.s32.totalorder %s41, 1
        %s564 = scalar_select %p563, %s41, 1
        %s565 = smul.addr %s564, 8
        %s566 = scalar_lea.vmem %s0, %s565
        %p567 = pneg %p70
        %p568 = pneg %p67
        %p569 = scmp.lt.s32.totalorder %s41, 1
        %s570 = scalar_select %p569, %s41, 1
        %s571 = scalar_lea.vmem %s1, %s570
        %p572 = pneg %p96
        %p573 = pneg %p93
        %p574 = pneg %p117
        %p575 = pneg %p114
        %p576 = pneg %p138
        %p577 = pneg %p135
        %p578 = pneg %p159
        %p579 = pneg %p156
        %p580 = pneg %p180
        %p581 = pneg %p177
        %p582 = pneg %p201
        %p583 = pneg %p198
        %p584 = pneg %p222
        %p585 = pneg %p219
        %p586 = pneg %p243
        %p587 = pneg %p240
        %p588 = pneg %p264
        %p589 = pneg %p261
        %p590 = pneg %p285
        %p591 = pneg %p282
        %p592 = pneg %p306
        %p593 = pneg %p303
        %p594 = pneg %p327
        %p595 = pneg %p324
        %p596 = pneg %p348
        %p597 = pneg %p345
        %p598 = pneg %p369
        %p599 = pneg %p366
        %p600 = pneg %p390
        %p601 = pneg %p387
        %p602 = pneg %p411
        %p603 = pneg %p408
        %p604 = pneg %p439
        %p605 = pneg %p436
        %s606 = sand.u32 %s426, 1
        %s607 = scalar_lea.sflag [#allocation4], %s606
        %s608 = sand.u32 %s426, 1
        %s609 = smul.addr %s608, 8
        %s610 = scalar_lea.vmem [#allocation5], %s609
        %p611 = pneg %p467
        %p612 = pneg %p464
        %s613 = sand.u32 %s454, 1
        %s614 = scalar_lea.sflag [#allocation7], %s613
        %s615 = sand.u32 %s454, 1
        %s616 = smul.addr %s615, 32
        %s617 = scalar_lea.vmem [#allocation6], %s616
        %p618 = scmp.lt.s32.totalorder %s41, 1
        %s619 = scalar_select %p618, %s41, 1
        %s620 = smul.addr %s619, 8
        %s621 = scalar_lea.vmem %s0, %s620
        %p622 = scmp.lt.s32.totalorder %s41, 1
        %s623 = scalar_select %p622, %s41, 1
        %s624 = scalar_lea.vmem %s1, %s623
        %s626 = smul.u32 %s42, 8
        %v627 = vld [vmem:[%s621] sm:$0xff]
        %v628 = vld [vmem:[#allocation2] sm:$0xff]
        %v629 = vadd.f32 %v627, %v628
        %v630 = vld [vmem:[%s3] sm:$0x1]
        %v631 = vld [vmem:[%s4] sm:$0x1]
        %vm632 = vcmask 261120
        %v633 = vsel %vm632, %v629, 0.0
        %634 = vadd.xlane.f32.xlu0 %v633
        %v635 = vpop.xlane.xlu0 %634
        %v636 = vrcp.pop 32.0
        %v637 = vmul.f32 %v635, %v636
        %v638 = vsub.f32 %v629, %v637
        %v639 = vmul.f32 %v638, %v638
        %v640 = vsel %vm632, %v639, 0.0
        %641 = vadd.xlane.f32.xlu0 %v640
        %v642 = vpop.xlane.xlu0 %641
        %v643 = vmul.f32 %v642, %v636
        %v644 = vadd.f32 %v643, 1e-05
        %v645 = vrsqrt.pop %v644
        %v646 = vmul.f32 %v638, %v645
        %v648 = vlaneseq
        %v649 = vshrl.u32 %v648, 7
        %v650 = vsub.s32 0, %v649
        %v651 = vrot.slane %v630, %v650
        %v653 = vmul.f32 %v646, %v651
        %v655 = vlaneseq
        %v656 = vshrl.u32 %v655, 7
        %v657 = vsub.s32 0, %v656
        %v658 = vrot.slane %v631, %v657
        %v660 = vadd.f32 %v653, %v658
        %s661 = scalar_lea.vmem %s621, %s626
        %v662 = vld [vmem:[%s661] sm:$0xff]
        %s663 = scalar_lea.vmem [#allocation2], %s626
        %v664 = vld [vmem:[%s663] sm:$0xff]
        %v665 = vadd.f32 %v662, %v664
        %v666 = vsel %vm632, %v665, 0.0
        %667 = vadd.xlane.f32.xlu0 %v666
        %v668 = vpop.xlane.xlu0 %667
        %v669 = vmul.f32 %v668, %v636
        %v670 = vsub.f32 %v665, %v669
        %v671 = vmul.f32 %v670, %v670
        %v672 = vsel %vm632, %v671, 0.0
        %673 = vadd.xlane.f32.xlu0 %v672
        %v674 = vpop.xlane.xlu0 %673
        %v675 = vmul.f32 %v674, %v636
        %v676 = vadd.f32 %v675, 1e-05
        %v677 = vrsqrt.pop %v676
        %v678 = vmul.f32 %v670, %v677
        %v679 = vmul.f32 %v678, %v651
        %v680 = vadd.f32 %v679, %v658
        %v681 = vpack.c.bf16 %v680, %v680
        %v682 = vld [vmem:[%s5] sm:$0xf]
        %v683 = vld [vmem:[%s5 + $0x4] sm:$0xf]
        %v684 = vld [vmem:[%s5 + $0x8] sm:$0xf]
        %v685 = vld [vmem:[%s5 + $0xc] sm:$0xf]
        %v686 = vld [vmem:[%s6] sm:$0x1]
        %v688 = vlaneseq
        %v689 = vshrl.u32 %v688, 7
        %v690 = vsub.s32 0, %v689
        %v691 = vrot.slane %v686, %v690
        %v697 = vunpack.c.l.b16 %v682
        %v698 = vunpack.c.l.b16 %v683
        %v699 = vunpack.c.l.b16 %v684
        %v700 = vunpack.c.l.b16 %v685
        %v701 = vpack.c.b16 %v698, %v697
        %v702 = vpack.c.b16 %v700, %v699
        %v706 = vsel %vm632, %v681, 0
        %708 = vmatprep.subr.bf16.mxu0 0
        %709 = vmatpush1.bf16.msra.mxu0 %v701
        %710 = vmatprep.subr.bf16.mxu0 0
        %711 = vmatpush1.bf16.msra.mxu0 %v702
        %712 = vmatprep.subr.bf16.mxu0 0
        %713 = vmatpush1.bf16.msra.mxu0 0
        %714 = vmatprep.subr.bf16.mxu0 0
        %715 = vmatpush1.bf16.msra.mxu0 0
        %716 = vmatprep.subr.bf16.mxu0 0
        %717 = vmatpush1.bf16.msra.mxu0 0
        %718 = vmatprep.subr.bf16.mxu0 0
        %719 = vmatpush1.bf16.msra.mxu0 0
        %720 = vmatprep.subr.bf16.mxu0 0
        %721 = vmatpush1.bf16.msra.mxu0 0
        %722 = vmatprep.subr.bf16.mxu0 0
        %723 = vmatpush1.bf16.msra.mxu0 0
        %724 = vmatprep.subr.bf16.mxu0 0
        %725 = vmatpush1.bf16.msra.mxu0 0
        %726 = vmatprep.subr.bf16.mxu0 0
        %727 = vmatpush1.bf16.msra.mxu0 0
        %728 = vmatprep.subr.bf16.mxu0 0
        %729 = vmatpush1.bf16.msra.mxu0 0
        %730 = vmatprep.subr.bf16.mxu0 0
        %731 = vmatpush1.bf16.msra.mxu0 0
        %732 = vmatprep.subr.bf16.mxu0 0
        %733 = vmatpush1.bf16.msra.mxu0 0
        %734 = vmatprep.subr.bf16.mxu0 0
        %735 = vmatpush1.bf16.msra.mxu0 0
        %736 = vmatprep.subr.bf16.mxu0 0
        %737 = vmatpush1.bf16.msra.mxu0 0
        %738 = vmatprep.subr.bf16.mxu0 0
        %739 = vmatpush1.bf16.msra.mxu0 0
        %740 = vmatprep.mubr.bf16.mxu0 0
        %741 = vmatmul.mubr.bf16.gmra.mrb[0].mxu0 %v706
        %v742 = vpop.f32.mrb[0].mxu0
        %v743 = vadd.f32 %v691, %v742
        %v744 = vpop.f32.mrb[0].mxu0
        %v745 = vpop.f32.mrb[0].mxu0
        %v746 = vpop.f32.mrb[0].mxu0
        %747 = vdwg.mxu0
        %v748 = vpack.c.bf16 %v660, %v660
        %v749 = vld [vmem:[%s7] sm:$0xf]
        %v750 = vld [vmem:[%s7 + $0x4] sm:$0xf]
        %v751 = vld [vmem:[%s7 + $0x8] sm:$0xf]
        %v752 = vld [vmem:[%s7 + $0xc] sm:$0xf]
        %v753 = vld [vmem:[%s8] sm:$0x1]
        %v755 = vlaneseq
        %v756 = vshrl.u32 %v755, 7
        %v757 = vsub.s32 0, %v756
        %v758 = vrot.slane %v753, %v757
        %v764 = vunpack.c.l.b16 %v749
        %v765 = vunpack.c.l.b16 %v750
        %v766 = vunpack.c.l.b16 %v751
        %v767 = vunpack.c.l.b16 %v752
        %v768 = vpack.c.b16 %v765, %v764
        %v769 = vpack.c.b16 %v767, %v766
        %v773 = vsel %vm632, %v748, 0
        %775 = vmatprep.subr.bf16.mxu0 0
        %776 = vmatpush1.bf16.msra.mxu0 %v768
        %777 = vmatprep.subr.bf16.mxu0 0
        %778 = vmatpush1.bf16.msra.mxu0 %v769
        %779 = vmatprep.subr.bf16.mxu0 0
        %780 = vmatpush1.bf16.msra.mxu0 0
        %781 = vmatprep.subr.bf16.mxu0 0
        %782 = vmatpush1.bf16.msra.mxu0 0
        %783 = vmatprep.subr.bf16.mxu0 0
        %784 = vmatpush1.bf16.msra.mxu0 0
        %785 = vmatprep.subr.bf16.mxu0 0
        %786 = vmatpush1.bf16.msra.mxu0 0
        %787 = vmatprep.subr.bf16.mxu0 0
        %788 = vmatpush1.bf16.msra.mxu0 0
        %789 = vmatprep.subr.bf16.mxu0 0
        %790 = vmatpush1.bf16.msra.mxu0 0
        %791 = vmatprep.subr.bf16.mxu0 0
        %792 = vmatpush1.bf16.msra.mxu0 0
        %793 = vmatprep.subr.bf16.mxu0 0
        %794 = vmatpush1.bf16.msra.mxu0 0
        %795 = vmatprep.subr.bf16.mxu0 0
        %796 = vmatpush1.bf16.msra.mxu0 0
        %797 = vmatprep.subr.bf16.mxu0 0
        %798 = vmatpush1.bf16.msra.mxu0 0
        %799 = vmatprep.subr.bf16.mxu0 0
        %800 = vmatpush1.bf16.msra.mxu0 0
        %801 = vmatprep.subr.bf16.mxu0 0
        %802 = vmatpush1.bf16.msra.mxu0 0
        %803 = vmatprep.subr.bf16.mxu0 0
        %804 = vmatpush1.bf16.msra.mxu0 0
        %805 = vmatprep.subr.bf16.mxu0 0
        %806 = vmatpush1.bf16.msra.mxu0 0
        %807 = vmatprep.mubr.bf16.mxu0 0
        %808 = vmatmul.mubr.bf16.gmra.mrb[0].mxu0 %v773
        %v809 = vpop.f32.mrb[0].mxu0
        %v810 = vadd.f32 %v758, %v809
        %v811 = vpop.f32.mrb[0].mxu0
        %v812 = vpop.f32.mrb[0].mxu0
        %v813 = vpop.f32.mrb[0].mxu0
        %814 = vdwg.mxu0
        %816 = vrot.lane.b32.xlu0 %v743, 120
        %v817 = vpop.permute.xlu0 %816
        %819 = vrot.lane.b32.xlu0 %v743, 112
        %v820 = vpop.permute.xlu0 %819
        %822 = vrot.lane.b32.xlu0 %v743, 104
        %v823 = vpop.permute.xlu0 %822
        %v825 = vcombine.low %v743, %v820
        %v826 = vcombine.high %v743, %v820
        %v828 = vunpack.c.l.s4 1983009808
        %v829 = vunpack.c.0.s8 %v828
        %v830 = vlaneseq
        %v831 = vshrl.u32 %v830, 7
        %v832 = vsub.s32 %v829, %v831
        %v833 = vrot.slane %v825, %v832
        %v835 = vunpack.c.l.s4 1983009808
        %v836 = vunpack.c.0.s8 %v835
        %v837 = vlaneseq
        %v838 = vshrl.u32 %v837, 7
        %v839 = vsub.s32 %v836, %v838
        %v840 = vrot.slane %v826, %v839
        %v841 = vcombine.low %v817, %v823
        %v842 = vcombine.high %v817, %v823
        %v844 = vunpack.c.l.s4 1983009808
        %v845 = vunpack.c.0.s8 %v844
        %v846 = vlaneseq
        %v847 = vshrl.u32 %v846, 7
        %v848 = vsub.s32 %v845, %v847
        %v849 = vrot.slane %v841, %v848
        %v851 = vunpack.c.l.s4 1983009808
        %v852 = vunpack.c.0.s8 %v851
        %v853 = vlaneseq
        %v854 = vshrl.u32 %v853, 7
        %v855 = vsub.s32 %v852, %v854
        %v856 = vrot.slane %v842, %v855
        %v857 = vcombine.low %v833, %v849
        %v858 = vcombine.high %v833, %v849
        %v860 = vunpack.c.l.s4 1934713408
        %v861 = vunpack.c.0.s8 %v860
        %v862 = vlaneseq
        %v863 = vshrl.u32 %v862, 7
        %v864 = vsub.s32 %v861, %v863
        %v865 = vrot.slane %v857, %v864
        %v867 = vunpack.c.l.s4 1934713408
        %v868 = vunpack.c.0.s8 %v867
        %v869 = vlaneseq
        %v870 = vshrl.u32 %v869, 7
        %v871 = vsub.s32 %v868, %v870
        %v872 = vrot.slane %v858, %v871
        %v873 = vcombine.low %v840, %v856
        %v874 = vcombine.high %v840, %v856
        %v876 = vunpack.c.l.s4 1934713408
        %v877 = vunpack.c.0.s8 %v876
        %v878 = vlaneseq
        %v879 = vshrl.u32 %v878, 7
        %v880 = vsub.s32 %v877, %v879
        %v881 = vrot.slane %v873, %v880
        %v883 = vunpack.c.l.s4 1934713408
        %v884 = vunpack.c.0.s8 %v883
        %v885 = vlaneseq
        %v886 = vshrl.u32 %v885, 7
        %v887 = vsub.s32 %v884, %v886
        %v888 = vrot.slane %v874, %v887
        %v889 = vcombine.high %v865, 0.0
        %v890 = vcombine.high %v872, 0.0
        %v891 = vcombine.high %v881, 0.0
        %v892 = vcombine.high %v888, 0.0
        %v893 = vcombine.low %v865, %v872
        %v895 = vunpack.c.l.s4 1983009808
        %v896 = vunpack.c.0.s8 %v895
        %v897 = vlaneseq
        %v898 = vshrl.u32 %v897, 7
        %v899 = vsub.s32 %v896, %v898
        %v900 = vrot.slane %v893, %v899
        %v901 = vcombine.low %v889, %v890
        %v903 = vunpack.c.l.s4 1983009808
        %v904 = vunpack.c.0.s8 %v903
        %v905 = vlaneseq
        %v906 = vshrl.u32 %v905, 7
        %v907 = vsub.s32 %v904, %v906
        %v908 = vrot.slane %v901, %v907
        %v909 = vcombine.low %v881, %v888
        %v911 = vunpack.c.l.s4 1983009808
        %v912 = vunpack.c.0.s8 %v911
        %v913 = vlaneseq
        %v914 = vshrl.u32 %v913, 7
        %v915 = vsub.s32 %v912, %v914
        %v916 = vrot.slane %v909, %v915
        %v917 = vcombine.low %v891, %v892
        %v919 = vunpack.c.l.s4 1983009808
        %v920 = vunpack.c.0.s8 %v919
        %v921 = vlaneseq
        %v922 = vshrl.u32 %v921, 7
        %v923 = vsub.s32 %v920, %v922
        %v924 = vrot.slane %v917, %v923
        %v925 = vcombine.low %v900, %v908
        %v926 = vcombine.high %v900, %v908
        %v928 = vunpack.c.l.s4 1934713408
        %v929 = vunpack.c.0.s8 %v928
        %v930 = vlaneseq
        %v931 = vshrl.u32 %v930, 7
        %v932 = vsub.s32 %v929, %v931
        %v933 = vrot.slane %v925, %v932
        %v935 = vunpack.c.l.s4 1934713408
        %v936 = vunpack.c.0.s8 %v935
        %v937 = vlaneseq
        %v938 = vshrl.u32 %v937, 7
        %v939 = vsub.s32 %v936, %v938
        %v940 = vrot.slane %v926, %v939
        %v941 = vcombine.low %v916, %v924
        %v942 = vcombine.high %v916, %v924
        %v944 = vunpack.c.l.s4 1934713408
        %v945 = vunpack.c.0.s8 %v944
        %v946 = vlaneseq
        %v947 = vshrl.u32 %v946, 7
        %v948 = vsub.s32 %v945, %v947
        %v949 = vrot.slane %v941, %v948
        %v951 = vunpack.c.l.s4 1934713408
        %v952 = vunpack.c.0.s8 %v951
        %v953 = vlaneseq
        %v954 = vshrl.u32 %v953, 7
        %v955 = vsub.s32 %v952, %v954
        %v956 = vrot.slane %v942, %v955
        %v957 = vcombine.low %v933, %v949
        %v958 = vcombine.high %v933, %v949
        %v959 = vcombine.low %v940, %v956
        %v960 = vcombine.high %v940, %v956
        %v961 = vpack.c.bf16 %v957, %v957
        %v962 = vpack.c.bf16 %v958, %v958
        %v963 = vpack.c.bf16 %v959, %v959
        %v964 = vpack.c.bf16 %v960, %v960
        %966 = vrot.lane.b32.xlu0 %v810, 120
        %v967 = vpop.permute.xlu0 %966
        %969 = vrot.lane.b32.xlu0 %v810, 112
        %v970 = vpop.permute.xlu0 %969
        %972 = vrot.lane.b32.xlu0 %v810, 104
        %v973 = vpop.permute.xlu0 %972
        %v975 = vcombine.low %v810, %v970
        %v976 = vcombine.high %v810, %v970
        %v978 = vunpack.c.l.s4 1983009808
        %v979 = vunpack.c.0.s8 %v978
        %v980 = vlaneseq
        %v981 = vshrl.u32 %v980, 7
        %v982 = vsub.s32 %v979, %v981
        %v983 = vrot.slane %v975, %v982
        %v985 = vunpack.c.l.s4 1983009808
        %v986 = vunpack.c.0.s8 %v985
        %v987 = vlaneseq
        %v988 = vshrl.u32 %v987, 7
        %v989 = vsub.s32 %v986, %v988
        %v990 = vrot.slane %v976, %v989
        %v991 = vcombine.low %v967, %v973
        %v992 = vcombine.high %v967, %v973
        %v994 = vunpack.c.l.s4 1983009808
        %v995 = vunpack.c.0.s8 %v994
        %v996 = vlaneseq
        %v997 = vshrl.u32 %v996, 7
        %v998 = vsub.s32 %v995, %v997
        %v999 = vrot.slane %v991, %v998
        %v1001 = vunpack.c.l.s4 1983009808
        %v1002 = vunpack.c.0.s8 %v1001
        %v1003 = vlaneseq
        %v1004 = vshrl.u32 %v1003, 7
        %v1005 = vsub.s32 %v1002, %v1004
        %v1006 = vrot.slane %v992, %v1005
        %v1007 = vcombine.low %v983, %v999
        %v1008 = vcombine.high %v983, %v999
        %v1010 = vunpack.c.l.s4 1934713408
        %v1011 = vunpack.c.0.s8 %v1010
        %v1012 = vlaneseq
        %v1013 = vshrl.u32 %v1012, 7
        %v1014 = vsub.s32 %v1011, %v1013
        %v1015 = vrot.slane %v1007, %v1014
        %v1017 = vunpack.c.l.s4 1934713408
        %v1018 = vunpack.c.0.s8 %v1017
        %v1019 = vlaneseq
        %v1020 = vshrl.u32 %v1019, 7
        %v1021 = vsub.s32 %v1018, %v1020
        %v1022 = vrot.slane %v1008, %v1021
        %v1023 = vcombine.low %v990, %v1006
        %v1024 = vcombine.high %v990, %v1006
        %v1026 = vunpack.c.l.s4 1934713408
        %v1027 = vunpack.c.0.s8 %v1026
        %v1028 = vlaneseq
        %v1029 = vshrl.u32 %v1028, 7
        %v1030 = vsub.s32 %v1027, %v1029
        %v1031 = vrot.slane %v1023, %v1030
        %v1033 = vunpack.c.l.s4 1934713408
        %v1034 = vunpack.c.0.s8 %v1033
        %v1035 = vlaneseq
        %v1036 = vshrl.u32 %v1035, 7
        %v1037 = vsub.s32 %v1034, %v1036
        %v1038 = vrot.slane %v1024, %v1037
        %v1039 = vcombine.high %v1015, 0.0
        %v1040 = vcombine.high %v1022, 0.0
        %v1041 = vcombine.high %v1031, 0.0
        %v1042 = vcombine.high %v1038, 0.0
        %v1043 = vcombine.low %v1015, %v1022
        %v1045 = vunpack.c.l.s4 1983009808
        %v1046 = vunpack.c.0.s8 %v1045
        %v1047 = vlaneseq
        %v1048 = vshrl.u32 %v1047, 7
        %v1049 = vsub.s32 %v1046, %v1048
        %v1050 = vrot.slane %v1043, %v1049
        %v1051 = vcombine.low %v1039, %v1040
        %v1053 = vunpack.c.l.s4 1983009808
        %v1054 = vunpack.c.0.s8 %v1053
        %v1055 = vlaneseq
        %v1056 = vshrl.u32 %v1055, 7
        %v1057 = vsub.s32 %v1054, %v1056
        %v1058 = vrot.slane %v1051, %v1057
        %v1059 = vcombine.low %v1031, %v1038
        %v1061 = vunpack.c.l.s4 1983009808
        %v1062 = vunpack.c.0.s8 %v1061
        %v1063 = vlaneseq
        %v1064 = vshrl.u32 %v1063, 7
        %v1065 = vsub.s32 %v1062, %v1064
        %v1066 = vrot.slane %v1059, %v1065
        %v1067 = vcombine.low %v1041, %v1042
        %v1069 = vunpack.c.l.s4 1983009808
        %v1070 = vunpack.c.0.s8 %v1069
        %v1071 = vlaneseq
        %v1072 = vshrl.u32 %v1071, 7
        %v1073 = vsub.s32 %v1070, %v1072
        %v1074 = vrot.slane %v1067, %v1073
        %v1075 = vcombine.low %v1050, %v1058
        %v1076 = vcombine.high %v1050, %v1058
        %v1078 = vunpack.c.l.s4 1934713408
        %v1079 = vunpack.c.0.s8 %v1078
        %v1080 = vlaneseq
        %v1081 = vshrl.u32 %v1080, 7
        %v1082 = vsub.s32 %v1079, %v1081
        %v1083 = vrot.slane %v1075, %v1082
        %v1085 = vunpack.c.l.s4 1934713408
        %v1086 = vunpack.c.0.s8 %v1085
        %v1087 = vlaneseq
        %v1088 = vshrl.u32 %v1087, 7
        %v1089 = vsub.s32 %v1086, %v1088
        %v1090 = vrot.slane %v1076, %v1089
        %v1091 = vcombine.low %v1066, %v1074
        %v1092 = vcombine.high %v1066, %v1074
        %v1094 = vunpack.c.l.s4 1934713408
        %v1095 = vunpack.c.0.s8 %v1094
        %v1096 = vlaneseq
        %v1097 = vshrl.u32 %v1096, 7
        %v1098 = vsub.s32 %v1095, %v1097
        %v1099 = vrot.slane %v1091, %v1098
        %v1101 = vunpack.c.l.s4 1934713408
        %v1102 = vunpack.c.0.s8 %v1101
        %v1103 = vlaneseq
        %v1104 = vshrl.u32 %v1103, 7
        %v1105 = vsub.s32 %v1102, %v1104
        %v1106 = vrot.slane %v1092, %v1105
        %v1107 = vcombine.low %v1083, %v1099
        %v1108 = vcombine.high %v1083, %v1099
        %v1109 = vcombine.low %v1090, %v1106
        %v1110 = vcombine.high %v1090, %v1106
        %v1111 = vpack.c.bf16 %v1107, %v1107
        %v1112 = vpack.c.bf16 %v1108, %v1108
        %v1113 = vpack.c.bf16 %v1109, %v1109
        %v1114 = vpack.c.bf16 %v1110, %v1110
        %1115 = vrot.lane.b32.xlu0 %v810, 96
        %v1116 = vpop.permute.xlu0 %1115
        %1117 = vrot.lane.b32.xlu0 %v967, 96
        %v1118 = vpop.permute.xlu0 %1117
        %1119 = vrot.lane.b32.xlu0 %v970, 96
        %v1120 = vpop.permute.xlu0 %1119
        %1121 = vrot.lane.b32.xlu0 %v973, 96
        %v1122 = vpop.permute.xlu0 %1121
        %v1127 = vcombine.low %v1116, %v1120
        %v1128 = vcombine.high %v1116, %v1120
        %v1130 = vunpack.c.l.s4 1983009808
        %v1131 = vunpack.c.0.s8 %v1130
        %v1132 = vlaneseq
        %v1133 = vshrl.u32 %v1132, 7
        %v1134 = vsub.s32 %v1131, %v1133
        %v1135 = vrot.slane %v1127, %v1134
        %v1137 = vunpack.c.l.s4 1983009808
        %v1138 = vunpack.c.0.s8 %v1137
        %v1139 = vlaneseq
        %v1140 = vshrl.u32 %v1139, 7
        %v1141 = vsub.s32 %v1138, %v1140
        %v1142 = vrot.slane %v1128, %v1141
        %v1143 = vcombine.low %v1118, %v1122
        %v1144 = vcombine.high %v1118, %v1122
        %v1146 = vunpack.c.l.s4 1983009808
        %v1147 = vunpack.c.0.s8 %v1146
        %v1148 = vlaneseq
        %v1149 = vshrl.u32 %v1148, 7
        %v1150 = vsub.s32 %v1147, %v1149
        %v1151 = vrot.slane %v1143, %v1150
        %v1153 = vunpack.c.l.s4 1983009808
        %v1154 = vunpack.c.0.s8 %v1153
        %v1155 = vlaneseq
        %v1156 = vshrl.u32 %v1155, 7
        %v1157 = vsub.s32 %v1154, %v1156
        %v1158 = vrot.slane %v1144, %v1157
        %v1159 = vcombine.low %v1135, %v1151
        %v1160 = vcombine.high %v1135, %v1151
        %v1162 = vunpack.c.l.s4 1934713408
        %v1163 = vunpack.c.0.s8 %v1162
        %v1164 = vlaneseq
        %v1165 = vshrl.u32 %v1164, 7
        %v1166 = vsub.s32 %v1163, %v1165
        %v1167 = vrot.slane %v1159, %v1166
        %v1169 = vunpack.c.l.s4 1934713408
        %v1170 = vunpack.c.0.s8 %v1169
        %v1171 = vlaneseq
        %v1172 = vshrl.u32 %v1171, 7
        %v1173 = vsub.s32 %v1170, %v1172
        %v1174 = vrot.slane %v1160, %v1173
        %v1175 = vcombine.low %v1142, %v1158
        %v1176 = vcombine.high %v1142, %v1158
        %v1178 = vunpack.c.l.s4 1934713408
        %v1179 = vunpack.c.0.s8 %v1178
        %v1180 = vlaneseq
        %v1181 = vshrl.u32 %v1180, 7
        %v1182 = vsub.s32 %v1179, %v1181
        %v1183 = vrot.slane %v1175, %v1182
        %v1185 = vunpack.c.l.s4 1934713408
        %v1186 = vunpack.c.0.s8 %v1185
        %v1187 = vlaneseq
        %v1188 = vshrl.u32 %v1187, 7
        %v1189 = vsub.s32 %v1186, %v1188
        %v1190 = vrot.slane %v1176, %v1189
        %v1191 = vcombine.high %v1167, 0.0
        %v1192 = vcombine.high %v1174, 0.0
        %v1193 = vcombine.high %v1183, 0.0
        %v1194 = vcombine.high %v1190, 0.0
        %v1195 = vcombine.low %v1167, %v1174
        %v1197 = vunpack.c.l.s4 1983009808
        %v1198 = vunpack.c.0.s8 %v1197
        %v1199 = vlaneseq
        %v1200 = vshrl.u32 %v1199, 7
        %v1201 = vsub.s32 %v1198, %v1200
        %v1202 = vrot.slane %v1195, %v1201
        %v1203 = vcombine.low %v1191, %v1192
        %v1205 = vunpack.c.l.s4 1983009808
        %v1206 = vunpack.c.0.s8 %v1205
        %v1207 = vlaneseq
        %v1208 = vshrl.u32 %v1207, 7
        %v1209 = vsub.s32 %v1206, %v1208
        %v1210 = vrot.slane %v1203, %v1209
        %v1211 = vcombine.low %v1183, %v1190
        %v1213 = vunpack.c.l.s4 1983009808
        %v1214 = vunpack.c.0.s8 %v1213
        %v1215 = vlaneseq
        %v1216 = vshrl.u32 %v1215, 7
        %v1217 = vsub.s32 %v1214, %v1216
        %v1218 = vrot.slane %v1211, %v1217
        %v1219 = vcombine.low %v1193, %v1194
        %v1221 = vunpack.c.l.s4 1983009808
        %v1222 = vunpack.c.0.s8 %v1221
        %v1223 = vlaneseq
        %v1224 = vshrl.u32 %v1223, 7
        %v1225 = vsub.s32 %v1222, %v1224
        %v1226 = vrot.slane %v1219, %v1225
        %v1227 = vcombine.low %v1202, %v1210
        %v1228 = vcombine.high %v1202, %v1210
        %v1230 = vunpack.c.l.s4 1934713408
        %v1231 = vunpack.c.0.s8 %v1230
        %v1232 = vlaneseq
        %v1233 = vshrl.u32 %v1232, 7
        %v1234 = vsub.s32 %v1231, %v1233
        %v1235 = vrot.slane %v1227, %v1234
        %v1237 = vunpack.c.l.s4 1934713408
        %v1238 = vunpack.c.0.s8 %v1237
        %v1239 = vlaneseq
        %v1240 = vshrl.u32 %v1239, 7
        %v1241 = vsub.s32 %v1238, %v1240
        %v1242 = vrot.slane %v1228, %v1241
        %v1243 = vcombine.low %v1218, %v1226
        %v1244 = vcombine.high %v1218, %v1226
        %v1246 = vunpack.c.l.s4 1934713408
        %v1247 = vunpack.c.0.s8 %v1246
        %v1248 = vlaneseq
        %v1249 = vshrl.u32 %v1248, 7
        %v1250 = vsub.s32 %v1247, %v1249
        %v1251 = vrot.slane %v1243, %v1250
        %v1253 = vunpack.c.l.s4 1934713408
        %v1254 = vunpack.c.0.s8 %v1253
        %v1255 = vlaneseq
        %v1256 = vshrl.u32 %v1255, 7
        %v1257 = vsub.s32 %v1254, %v1256
        %v1258 = vrot.slane %v1244, %v1257
        %v1259 = vcombine.low %v1235, %v1251
        %v1260 = vcombine.high %v1235, %v1251
        %v1261 = vcombine.low %v1242, %v1258
        %v1262 = vcombine.high %v1242, %v1258
        %v1263 = vpack.c.bf16 %v1259, %v1259
        %v1264 = vpack.c.bf16 %v1260, %v1260
        %v1265 = vpack.c.bf16 %v1261, %v1261
        %v1266 = vpack.c.bf16 %v1262, %v1262
        %v1267 = vld [vmem:[%s624] sm:$0x1]
        %v1269 = vlaneseq
        %v1270 = vshrl.u32 %v1269, 7
        %v1271 = vsub.s32 0, %v1270
        %v1272 = vrot.slane %v1267, %v1271
        %vm1274 = vcmask 64512
        %v1276 = vsel %vm1274, %v961, 0
        %v1279 = vsel %vm1274, %v1111, 0
        %1281 = vmatprep.subr.bf16.mxu0 0
        %1282 = vmatpush1.bf16.xpose.msra.mxu0 %v1279
        %1283 = vmatprep.subr.bf16.mxu0 0
        %1284 = vmatpush1.bf16.xpose.msra.mxu0 0
        %1285 = vmatprep.subr.bf16.mxu0 0
        %1286 = vmatpush1.bf16.xpose.msra.mxu0 0
        %1287 = vmatprep.subr.bf16.mxu0 0
        %1288 = vmatpush1.bf16.xpose.msra.mxu0 0
        %1289 = vmatprep.subr.bf16.mxu0 0
        %1290 = vmatpush1.bf16.xpose.msra.mxu0 0
        %1291 = vmatprep.subr.bf16.mxu0 0
        %1292 = vmatpush1.bf16.xpose.msra.mxu0 0
        %1293 = vmatprep.subr.bf16.mxu0 0
        %1294 = vmatpush1.bf16.xpose.msra.mxu0 0
        %1295 = vmatprep.subr.bf16.mxu0 0
        %1296 = vmatpush1.bf16.xpose.msra.mxu0 0
        %1297 = vmatprep.subr.bf16.mxu0 0
        %1298 = vmatpush1.bf16.xpose.msra.mxu0 0
        %1299 = vmatprep.subr.bf16.mxu0 0
        %1300 = vmatpush1.bf16.xpose.msra.mxu0 0
        %1301 = vmatprep.subr.bf16.mxu0 0
        %1302 = vmatpush1.bf16.xpose.msra.mxu0 0
        %1303 = vmatprep.subr.bf16.mxu0 0
        %1304 = vmatpush1.bf16.xpose.msra.mxu0 0
        %1305 = vmatprep.subr.bf16.mxu0 0
        %1306 = vmatpush1.bf16.xpose.msra.mxu0 0
        %1307 = vmatprep.subr.bf16.mxu0 0
        %1308 = vmatpush1.bf16.xpose.msra.mxu0 0
        %1309 = vmatprep.subr.bf16.mxu0 0
        %1310 = vmatpush1.bf16.xpose.msra.mxu0 0
        %1311 = vmatprep.subr.bf16.mxu0 0
        %1312 = vmatpush1.bf16.xpose.msra.mxu0 0
        %1313 = vmatprep.mubr.bf16.mxu0 0
        %1314 = vmatmul.mubr.bf16.gmra.mrb[0].mxu0 %v1276
        %v1315 = vpop.f32.mrb[0].mxu0
        %v1316 = vadd.f32 %v1272, %v1315
        %v1317 = vpop.f32.mrb[0].mxu0
        %v1318 = vpop.f32.mrb[0].mxu0
        %v1319 = vpop.f32.mrb[0].mxu0
        %1320 = vdwg.mxu0
        %v1322 = vsel %vm1274, %v962, 0
        %v1325 = vsel %vm1274, %v1112, 0
        %1327 = vmatprep.subr.bf16.mxu0 0
        %1328 = vmatpush1.bf16.xpose.msra.mxu0 %v1325
        %1329 = vmatprep.subr.bf16.mxu0 0
        %1330 = vmatpush1.bf16.xpose.msra.mxu0 0
        %1331 = vmatprep.subr.bf16.mxu0 0
        %1332 = vmatpush1.bf16.xpose.msra.mxu0 0
        %1333 = vmatprep.subr.bf16.mxu0 0
        %1334 = vmatpush1.bf16.xpose.msra.mxu0 0
        %1335 = vmatprep.subr.bf16.mxu0 0
        %1336 = vmatpush1.bf16.xpose.msra.mxu0 0
        %1337 = vmatprep.subr.bf16.mxu0 0
        %1338 = vmatpush1.bf16.xpose.msra.mxu0 0
        %1339 = vmatprep.subr.bf16.mxu0 0
        %1340 = vmatpush1.bf16.xpose.msra.mxu0 0
        %1341 = vmatprep.subr.bf16.mxu0 0
        %1342 = vmatpush1.bf16.xpose.msra.mxu0 0
        %1343 = vmatprep.subr.bf16.mxu0 0
        %1344 = vmatpush1.bf16.xpose.msra.mxu0 0
        %1345 = vmatprep.subr.bf16.mxu0 0
        %1346 = vmatpush1.bf16.xpose.msra.mxu0 0
        %1347 = vmatprep.subr.bf16.mxu0 0
        %1348 = vmatpush1.bf16.xpose.msra.mxu0 0
        %1349 = vmatprep.subr.bf16.mxu0 0
        %1350 = vmatpush1.bf16.xpose.msra.mxu0 0
        %1351 = vmatprep.subr.bf16.mxu0 0
        %1352 = vmatpush1.bf16.xpose.msra.mxu0 0
        %1353 = vmatprep.subr.bf16.mxu0 0
        %1354 = vmatpush1.bf16.xpose.msra.mxu0 0
        %1355 = vmatprep.subr.bf16.mxu0 0
        %1356 = vmatpush1.bf16.xpose.msra.mxu0 0
        %1357 = vmatprep.subr.bf16.mxu0 0
        %1358 = vmatpush1.bf16.xpose.msra.mxu0 0
        %1359 = vmatprep.mubr.bf16.mxu0 0
        %1360 = vmatmul.mubr.bf16.gmra.mrb[0].mxu0 %v1322
        %v1361 = vpop.f32.mrb[0].mxu0
        %v1362 = vadd.f32 %v1272, %v1361
        %v1363 = vpop.f32.mrb[0].mxu0
        %v1364 = vpop.f32.mrb[0].mxu0
        %v1365 = vpop.f32.mrb[0].mxu0
        %1366 = vdwg.mxu0
        %v1368 = vsel %vm1274, %v963, 0
        %v1371 = vsel %vm1274, %v1113, 0
        %1373 = vmatprep.subr.bf16.mxu0 0
        %1374 = vmatpush1.bf16.xpose.msra.mxu0 %v1371
        %1375 = vmatprep.subr.bf16.mxu0 0
        %1376 = vmatpush1.bf16.xpose.msra.mxu0 0
        %1377 = vmatprep.subr.bf16.mxu0 0
        %1378 = vmatpush1.bf16.xpose.msra.mxu0 0
        %1379 = vmatprep.subr.bf16.mxu0 0
        %1380 = vmatpush1.bf16.xpose.msra.mxu0 0
        %1381 = vmatprep.subr.bf16.mxu0 0
        %1382 = vmatpush1.bf16.xpose.msra.mxu0 0
        %1383 = vmatprep.subr.bf16.mxu0 0
        %1384 = vmatpush1.bf16.xpose.msra.mxu0 0
        %1385 = vmatprep.subr.bf16.mxu0 0
        %1386 = vmatpush1.bf16.xpose.msra.mxu0 0
        %1387 = vmatprep.subr.bf16.mxu0 0
        %1388 = vmatpush1.bf16.xpose.msra.mxu0 0
        %1389 = vmatprep.subr.bf16.mxu0 0
        %1390 = vmatpush1.bf16.xpose.msra.mxu0 0
        %1391 = vmatprep.subr.bf16.mxu0 0
        %1392 = vmatpush1.bf16.xpose.msra.mxu0 0
        %1393 = vmatprep.subr.bf16.mxu0 0
        %1394 = vmatpush1.bf16.xpose.msra.mxu0 0
        %1395 = vmatprep.subr.bf16.mxu0 0
        %1396 = vmatpush1.bf16.xpose.msra.mxu0 0
        %1397 = vmatprep.subr.bf16.mxu0 0
        %1398 = vmatpush1.bf16.xpose.msra.mxu0 0
        %1399 = vmatprep.subr.bf16.mxu0 0
        %1400 = vmatpush1.bf16.xpose.msra.mxu0 0
        %1401 = vmatprep.subr.bf16.mxu0 0
        %1402 = vmatpush1.bf16.xpose.msra.mxu0 0
        %1403 = vmatprep.subr.bf16.mxu0 0
        %1404 = vmatpush1.bf16.xpose.msra.mxu0 0
        %1405 = vmatprep.mubr.bf16.mxu0 0
        %1406 = vmatmul.mubr.bf16.gmra.mrb[0].mxu0 %v1368
        %v1407 = vpop.f32.mrb[0].mxu0
        %v1408 = vadd.f32 %v1272, %v1407
        %v1409 = vpop.f32.mrb[0].mxu0
        %v1410 = vpop.f32.mrb[0].mxu0
        %v1411 = vpop.f32.mrb[0].mxu0
        %1412 = vdwg.mxu0
        %v1414 = vsel %vm1274, %v964, 0
        %v1417 = vsel %vm1274, %v1114, 0
        %1419 = vmatprep.subr.bf16.mxu0 0
        %1420 = vmatpush1.bf16.xpose.msra.mxu0 %v1417
        %1421 = vmatprep.subr.bf16.mxu0 0
        %1422 = vmatpush1.bf16.xpose.msra.mxu0 0
        %1423 = vmatprep.subr.bf16.mxu0 0
        %1424 = vmatpush1.bf16.xpose.msra.mxu0 0
        %1425 = vmatprep.subr.bf16.mxu0 0
        %1426 = vmatpush1.bf16.xpose.msra.mxu0 0
        %1427 = vmatprep.subr.bf16.mxu0 0
        %1428 = vmatpush1.bf16.xpose.msra.mxu0 0
        %1429 = vmatprep.subr.bf16.mxu0 0
        %1430 = vmatpush1.bf16.xpose.msra.mxu0 0
        %1431 = vmatprep.subr.bf16.mxu0 0
        %1432 = vmatpush1.bf16.xpose.msra.mxu0 0
        %1433 = vmatprep.subr.bf16.mxu0 0
        %1434 = vmatpush1.bf16.xpose.msra.mxu0 0
        %1435 = vmatprep.subr.bf16.mxu0 0
        %1436 = vmatpush1.bf16.xpose.msra.mxu0 0
        %1437 = vmatprep.subr.bf16.mxu0 0
        %1438 = vmatpush1.bf16.xpose.msra.mxu0 0
        %1439 = vmatprep.subr.bf16.mxu0 0
        %1440 = vmatpush1.bf16.xpose.msra.mxu0 0
        %1441 = vmatprep.subr.bf16.mxu0 0
        %1442 = vmatpush1.bf16.xpose.msra.mxu0 0
        %1443 = vmatprep.subr.bf16.mxu0 0
        %1444 = vmatpush1.bf16.xpose.msra.mxu0 0
        %1445 = vmatprep.subr.bf16.mxu0 0
        %1446 = vmatpush1.bf16.xpose.msra.mxu0 0
        %1447 = vmatprep.subr.bf16.mxu0 0
        %1448 = vmatpush1.bf16.xpose.msra.mxu0 0
        %1449 = vmatprep.subr.bf16.mxu0 0
        %1450 = vmatpush1.bf16.xpose.msra.mxu0 0
        %1451 = vmatprep.mubr.bf16.mxu0 0
        %1452 = vmatmul.mubr.bf16.gmra.mrb[0].mxu0 %v1414
        %v1453 = vpop.f32.mrb[0].mxu0
        %v1454 = vadd.f32 %v1272, %v1453
        %v1455 = vpop.f32.mrb[0].mxu0
        %v1456 = vpop.f32.mrb[0].mxu0
        %v1457 = vpop.f32.mrb[0].mxu0
        %1458 = vdwg.mxu0
        %v1459 = vsel %vm1274, %v1316, -inf
        %1460 = vmax.xlane.f32.xlu0 %v1459
        %v1461 = vpop.xlane.xlu0 %1460
        %v1462 = vsel %vm1274, %v1362, -inf
        %1463 = vmax.xlane.f32.xlu0 %v1462
        %v1464 = vpop.xlane.xlu0 %1463
        %v1465 = vsel %vm1274, %v1408, -inf
        %1466 = vmax.xlane.f32.xlu0 %v1465
        %v1467 = vpop.xlane.xlu0 %1466
        %v1468 = vsel %vm1274, %v1454, -inf
        %1469 = vmax.xlane.f32.xlu0 %v1468
        %v1470 = vpop.xlane.xlu0 %1469
        %v1471 = vsub.f32 %v1316, %v1461
        %v1472 = vsub.f32 %v1362, %v1464
        %v1473 = vsub.f32 %v1408, %v1467
        %v1474 = vsub.f32 %v1454, %v1470
        %v1475 = vmul.f32 %v1471, 1.442695
        %v1476 = vpow.pop %v1475
        %v1477 = vmul.f32 %v1472, 1.442695
        %v1478 = vpow.pop %v1477
        %v1479 = vmul.f32 %v1473, 1.442695
        %v1480 = vpow.pop %v1479
        %v1481 = vmul.f32 %v1474, 1.442695
        %v1482 = vpow.pop %v1481
        %v1483 = vsel %vm1274, %v1476, 0.0
        %1484 = vadd.xlane.f32.xlu0 %v1483
        %v1485 = vpop.xlane.xlu0 %1484
        %v1486 = vsel %vm1274, %v1478, 0.0
        %1487 = vadd.xlane.f32.xlu0 %v1486
        %v1488 = vpop.xlane.xlu0 %1487
        %v1489 = vsel %vm1274, %v1480, 0.0
        %1490 = vadd.xlane.f32.xlu0 %v1489
        %v1491 = vpop.xlane.xlu0 %1490
        %v1492 = vsel %vm1274, %v1482, 0.0
        %1493 = vadd.xlane.f32.xlu0 %v1492
        %v1494 = vpop.xlane.xlu0 %1493
        %v1495 = vrcp.pop %v1485
        %v1496 = vmul.f32 1.0, %v1495
        %v1497 = vrcp.pop %v1488
        %v1498 = vmul.f32 1.0, %v1497
        %v1499 = vrcp.pop %v1491
        %v1500 = vmul.f32 1.0, %v1499
        %v1501 = vrcp.pop %v1494
        %v1502 = vmul.f32 1.0, %v1501
        %v1503 = vmul.f32 %v1476, %v1496
        %v1504 = vmul.f32 %v1478, %v1498
        %v1505 = vmul.f32 %v1480, %v1500
        %v1506 = vmul.f32 %v1482, %v1502
        %1507 = vst.msk [vmem:[%s617] sm:$0xff] %vm1274, %v1503
        %1508 = vst.msk [vmem:[%s617 + $0x8] sm:$0xff] %vm1274, %v1504
        %1509 = vst.msk [vmem:[%s617 + $0x10] sm:$0xff] %vm1274, %v1505
        %1510 = vst.msk [vmem:[%s617 + $0x18] sm:$0xff] %vm1274, %v1506
        %v1511 = vpack.c.bf16 %v1503, %v1503
        %v1512 = vpack.c.bf16 %v1504, %v1504
        %v1513 = vpack.c.bf16 %v1505, %v1505
        %v1514 = vpack.c.bf16 %v1506, %v1506
        %v1516 = vsel %vm1274, %v1511, 0
        %vm1518 = vcmask 1043456
        %v1520 = vsel %vm1518, %v1263, 0
        %1522 = vmatprep.subr.bf16.mxu0 0
        %1523 = vmatpush1.bf16.msra.mxu0 %v1520
        %1524 = vmatprep.subr.bf16.mxu0 0
        %1525 = vmatpush1.bf16.msra.mxu0 0
        %1526 = vmatprep.subr.bf16.mxu0 0
        %1527 = vmatpush1.bf16.msra.mxu0 0
        %1528 = vmatprep.subr.bf16.mxu0 0
        %1529 = vmatpush1.bf16.msra.mxu0 0
        %1530 = vmatprep.subr.bf16.mxu0 0
        %1531 = vmatpush1.bf16.msra.mxu0 0
        %1532 = vmatprep.subr.bf16.mxu0 0
        %1533 = vmatpush1.bf16.msra.mxu0 0
        %1534 = vmatprep.subr.bf16.mxu0 0
        %1535 = vmatpush1.bf16.msra.mxu0 0
        %1536 = vmatprep.subr.bf16.mxu0 0
        %1537 = vmatpush1.bf16.msra.mxu0 0
        %1538 = vmatprep.subr.bf16.mxu0 0
        %1539 = vmatpush1.bf16.msra.mxu0 0
        %1540 = vmatprep.subr.bf16.mxu0 0
        %1541 = vmatpush1.bf16.msra.mxu0 0
        %1542 = vmatprep.subr.bf16.mxu0 0
        %1543 = vmatpush1.bf16.msra.mxu0 0
        %1544 = vmatprep.subr.bf16.mxu0 0
        %1545 = vmatpush1.bf16.msra.mxu0 0
        %1546 = vmatprep.subr.bf16.mxu0 0
        %1547 = vmatpush1.bf16.msra.mxu0 0
        %1548 = vmatprep.subr.bf16.mxu0 0
        %1549 = vmatpush1.bf16.msra.mxu0 0
        %1550 = vmatprep.subr.bf16.mxu0 0
        %1551 = vmatpush1.bf16.msra.mxu0 0
        %1552 = vmatprep.subr.bf16.mxu0 0
        %1553 = vmatpush1.bf16.msra.mxu0 0
        %1554 = vmatprep.mubr.bf16.mxu0 0
        %1555 = vmatmul.mubr.bf16.gmra.mrb[0].mxu0 %v1516
        %v1556 = vpop.f32.mrb[0].mxu0
        %v1557 = vadd.f32 0.0, %v1556
        %v1558 = vpop.f32.mrb[0].mxu0
        %v1559 = vpop.f32.mrb[0].mxu0
        %v1560 = vpop.f32.mrb[0].mxu0
        %1561 = vdwg.mxu0
        %v1563 = vsel %vm1274, %v1512, 0
        %v1566 = vsel %vm1518, %v1264, 0
        %1568 = vmatprep.subr.bf16.mxu0 0
        %1569 = vmatpush1.bf16.msra.mxu0 %v1566
        %1570 = vmatprep.subr.bf16.mxu0 0
        %1571 = vmatpush1.bf16.msra.mxu0 0
        %1572 = vmatprep.subr.bf16.mxu0 0
        %1573 = vmatpush1.bf16.msra.mxu0 0
        %1574 = vmatprep.subr.bf16.mxu0 0
        %1575 = vmatpush1.bf16.msra.mxu0 0
        %1576 = vmatprep.subr.bf16.mxu0 0
        %1577 = vmatpush1.bf16.msra.mxu0 0
        %1578 = vmatprep.subr.bf16.mxu0 0
        %1579 = vmatpush1.bf16.msra.mxu0 0
        %1580 = vmatprep.subr.bf16.mxu0 0
        %1581 = vmatpush1.bf16.msra.mxu0 0
        %1582 = vmatprep.subr.bf16.mxu0 0
        %1583 = vmatpush1.bf16.msra.mxu0 0
        %1584 = vmatprep.subr.bf16.mxu0 0
        %1585 = vmatpush1.bf16.msra.mxu0 0
        %1586 = vmatprep.subr.bf16.mxu0 0
        %1587 = vmatpush1.bf16.msra.mxu0 0
        %1588 = vmatprep.subr.bf16.mxu0 0
        %1589 = vmatpush1.bf16.msra.mxu0 0
        %1590 = vmatprep.subr.bf16.mxu0 0
        %1591 = vmatpush1.bf16.msra.mxu0 0
        %1592 = vmatprep.subr.bf16.mxu0 0
        %1593 = vmatpush1.bf16.msra.mxu0 0
        %1594 = vmatprep.subr.bf16.mxu0 0
        %1595 = vmatpush1.bf16.msra.mxu0 0
        %1596 = vmatprep.subr.bf16.mxu0 0
        %1597 = vmatpush1.bf16.msra.mxu0 0
        %1598 = vmatprep.subr.bf16.mxu0 0
        %1599 = vmatpush1.bf16.msra.mxu0 0
        %1600 = vmatprep.mubr.bf16.mxu0 0
        %1601 = vmatmul.mubr.bf16.gmra.mrb[0].mxu0 %v1563
        %v1602 = vpop.f32.mrb[0].mxu0
        %v1603 = vadd.f32 0.0, %v1602
        %v1604 = vpop.f32.mrb[0].mxu0
        %v1605 = vpop.f32.mrb[0].mxu0
        %v1606 = vpop.f32.mrb[0].mxu0
        %1607 = vdwg.mxu0
        %v1609 = vsel %vm1274, %v1513, 0
        %v1612 = vsel %vm1518, %v1265, 0
        %1614 = vmatprep.subr.bf16.mxu0 0
        %1615 = vmatpush1.bf16.msra.mxu0 %v1612
        %1616 = vmatprep.subr.bf16.mxu0 0
        %1617 = vmatpush1.bf16.msra.mxu0 0
        %1618 = vmatprep.subr.bf16.mxu0 0
        %1619 = vmatpush1.bf16.msra.mxu0 0
        %1620 = vmatprep.subr.bf16.mxu0 0
        %1621 = vmatpush1.bf16.msra.mxu0 0
        %1622 = vmatprep.subr.bf16.mxu0 0
        %1623 = vmatpush1.bf16.msra.mxu0 0
        %1624 = vmatprep.subr.bf16.mxu0 0
        %1625 = vmatpush1.bf16.msra.mxu0 0
        %1626 = vmatprep.subr.bf16.mxu0 0
        %1627 = vmatpush1.bf16.msra.mxu0 0
        %1628 = vmatprep.subr.bf16.mxu0 0
        %1629 = vmatpush1.bf16.msra.mxu0 0
        %1630 = vmatprep.subr.bf16.mxu0 0
        %1631 = vmatpush1.bf16.msra.mxu0 0
        %1632 = vmatprep.subr.bf16.mxu0 0
        %1633 = vmatpush1.bf16.msra.mxu0 0
        %1634 = vmatprep.subr.bf16.mxu0 0
        %1635 = vmatpush1.bf16.msra.mxu0 0
        %1636 = vmatprep.subr.bf16.mxu0 0
        %1637 = vmatpush1.bf16.msra.mxu0 0
        %1638 = vmatprep.subr.bf16.mxu0 0
        %1639 = vmatpush1.bf16.msra.mxu0 0
        %1640 = vmatprep.subr.bf16.mxu0 0
        %1641 = vmatpush1.bf16.msra.mxu0 0
        %1642 = vmatprep.subr.bf16.mxu0 0
        %1643 = vmatpush1.bf16.msra.mxu0 0
        %1644 = vmatprep.subr.bf16.mxu0 0
        %1645 = vmatpush1.bf16.msra.mxu0 0
        %1646 = vmatprep.mubr.bf16.mxu0 0
        %1647 = vmatmul.mubr.bf16.gmra.mrb[0].mxu0 %v1609
        %v1648 = vpop.f32.mrb[0].mxu0
        %v1649 = vadd.f32 0.0, %v1648
        %v1650 = vpop.f32.mrb[0].mxu0
        %v1651 = vpop.f32.mrb[0].mxu0
        %v1652 = vpop.f32.mrb[0].mxu0
        %1653 = vdwg.mxu0
        %v1655 = vsel %vm1274, %v1514, 0
        %v1658 = vsel %vm1518, %v1266, 0
        %1660 = vmatprep.subr.bf16.mxu0 0
        %1661 = vmatpush1.bf16.msra.mxu0 %v1658
        %1662 = vmatprep.subr.bf16.mxu0 0
        %1663 = vmatpush1.bf16.msra.mxu0 0
        %1664 = vmatprep.subr.bf16.mxu0 0
        %1665 = vmatpush1.bf16.msra.mxu0 0
        %1666 = vmatprep.subr.bf16.mxu0 0
        %1667 = vmatpush1.bf16.msra.mxu0 0
        %1668 = vmatprep.subr.bf16.mxu0 0
        %1669 = vmatpush1.bf16.msra.mxu0 0
        %1670 = vmatprep.subr.bf16.mxu0 0
        %1671 = vmatpush1.bf16.msra.mxu0 0
        %1672 = vmatprep.subr.bf16.mxu0 0
        %1673 = vmatpush1.bf16.msra.mxu0 0
        %1674 = vmatprep.subr.bf16.mxu0 0
        %1675 = vmatpush1.bf16.msra.mxu0 0
        %1676 = vmatprep.subr.bf16.mxu0 0
        %1677 = vmatpush1.bf16.msra.mxu0 0
        %1678 = vmatprep.subr.bf16.mxu0 0
        %1679 = vmatpush1.bf16.msra.mxu0 0
        %1680 = vmatprep.subr.bf16.mxu0 0
        %1681 = vmatpush1.bf16.msra.mxu0 0
        %1682 = vmatprep.subr.bf16.mxu0 0
        %1683 = vmatpush1.bf16.msra.mxu0 0
        %1684 = vmatprep.subr.bf16.mxu0 0
        %1685 = vmatpush1.bf16.msra.mxu0 0
        %1686 = vmatprep.subr.bf16.mxu0 0
        %1687 = vmatpush1.bf16.msra.mxu0 0
        %1688 = vmatprep.subr.bf16.mxu0 0
        %1689 = vmatpush1.bf16.msra.mxu0 0
        %1690 = vmatprep.subr.bf16.mxu0 0
        %1691 = vmatpush1.bf16.msra.mxu0 0
        %1692 = vmatprep.mubr.bf16.mxu0 0
        %1693 = vmatmul.mubr.bf16.gmra.mrb[0].mxu0 %v1655
        %v1694 = vpop.f32.mrb[0].mxu0
        %v1695 = vadd.f32 0.0, %v1694
        %v1696 = vpop.f32.mrb[0].mxu0
        %v1697 = vpop.f32.mrb[0].mxu0
        %v1698 = vpop.f32.mrb[0].mxu0
        %1699 = vdwg.mxu0
        %v1700 = vcombine.low %v1557, %v1649
        %v1701 = vcombine.high %v1557, %v1649
        %v1703 = vunpack.c.l.s4 1983009808
        %v1704 = vunpack.c.0.s8 %v1703
        %v1705 = vlaneseq
        %v1706 = vshrl.u32 %v1705, 7
        %v1707 = vsub.s32 %v1704, %v1706
        %v1708 = vrot.slane %v1700, %v1707
        %v1710 = vunpack.c.l.s4 1983009808
        %v1711 = vunpack.c.0.s8 %v1710
        %v1712 = vlaneseq
        %v1713 = vshrl.u32 %v1712, 7
        %v1714 = vsub.s32 %v1711, %v1713
        %v1715 = vrot.slane %v1701, %v1714
        %v1716 = vcombine.low %v1603, %v1695
        %v1717 = vcombine.high %v1603, %v1695
        %v1719 = vunpack.c.l.s4 1983009808
        %v1720 = vunpack.c.0.s8 %v1719
        %v1721 = vlaneseq
        %v1722 = vshrl.u32 %v1721, 7
        %v1723 = vsub.s32 %v1720, %v1722
        %v1724 = vrot.slane %v1716, %v1723
        %v1726 = vunpack.c.l.s4 1983009808
        %v1727 = vunpack.c.0.s8 %v1726
        %v1728 = vlaneseq
        %v1729 = vshrl.u32 %v1728, 7
        %v1730 = vsub.s32 %v1727, %v1729
        %v1731 = vrot.slane %v1717, %v1730
        %v1732 = vcombine.low %v1708, %v1724
        %v1733 = vcombine.high %v1708, %v1724
        %v1735 = vunpack.c.l.s4 1934713408
        %v1736 = vunpack.c.0.s8 %v1735
        %v1737 = vlaneseq
        %v1738 = vshrl.u32 %v1737, 7
        %v1739 = vsub.s32 %v1736, %v1738
        %v1740 = vrot.slane %v1732, %v1739
        %v1742 = vunpack.c.l.s4 1934713408
        %v1743 = vunpack.c.0.s8 %v1742
        %v1744 = vlaneseq
        %v1745 = vshrl.u32 %v1744, 7
        %v1746 = vsub.s32 %v1743, %v1745
        %v1747 = vrot.slane %v1733, %v1746
        %v1748 = vcombine.low %v1715, %v1731
        %v1749 = vcombine.high %v1715, %v1731
        %v1751 = vunpack.c.l.s4 1934713408
        %v1752 = vunpack.c.0.s8 %v1751
        %v1753 = vlaneseq
        %v1754 = vshrl.u32 %v1753, 7
        %v1755 = vsub.s32 %v1752, %v1754
        %v1756 = vrot.slane %v1748, %v1755
        %v1758 = vunpack.c.l.s4 1934713408
        %v1759 = vunpack.c.0.s8 %v1758
        %v1760 = vlaneseq
        %v1761 = vshrl.u32 %v1760, 7
        %v1762 = vsub.s32 %v1759, %v1761
        %v1763 = vrot.slane %v1749, %v1762
        %v1764 = vcombine.high %v1740, 0.0
        %v1765 = vcombine.high %v1747, 0.0
        %v1766 = vcombine.high %v1756, 0.0
        %v1767 = vcombine.high %v1763, 0.0
        %v1768 = vcombine.low %v1740, %v1747
        %v1770 = vunpack.c.l.s4 1983009808
        %v1771 = vunpack.c.0.s8 %v1770
        %v1772 = vlaneseq
        %v1773 = vshrl.u32 %v1772, 7
        %v1774 = vsub.s32 %v1771, %v1773
        %v1775 = vrot.slane %v1768, %v1774
        %v1776 = vcombine.low %v1764, %v1765
        %v1778 = vunpack.c.l.s4 1983009808
        %v1779 = vunpack.c.0.s8 %v1778
        %v1780 = vlaneseq
        %v1781 = vshrl.u32 %v1780, 7
        %v1782 = vsub.s32 %v1779, %v1781
        %v1783 = vrot.slane %v1776, %v1782
        %v1784 = vcombine.low %v1756, %v1763
        %v1786 = vunpack.c.l.s4 1983009808
        %v1787 = vunpack.c.0.s8 %v1786
        %v1788 = vlaneseq
        %v1789 = vshrl.u32 %v1788, 7
        %v1790 = vsub.s32 %v1787, %v1789
        %v1791 = vrot.slane %v1784, %v1790
        %v1792 = vcombine.low %v1766, %v1767
        %v1794 = vunpack.c.l.s4 1983009808
        %v1795 = vunpack.c.0.s8 %v1794
        %v1796 = vlaneseq
        %v1797 = vshrl.u32 %v1796, 7
        %v1798 = vsub.s32 %v1795, %v1797
        %v1799 = vrot.slane %v1792, %v1798
        %v1800 = vcombine.low %v1775, %v1783
        %v1801 = vcombine.high %v1775, %v1783
        %v1803 = vunpack.c.l.s4 1934713408
        %v1804 = vunpack.c.0.s8 %v1803
        %v1805 = vlaneseq
        %v1806 = vshrl.u32 %v1805, 7
        %v1807 = vsub.s32 %v1804, %v1806
        %v1808 = vrot.slane %v1800, %v1807
        %v1810 = vunpack.c.l.s4 1934713408
        %v1811 = vunpack.c.0.s8 %v1810
        %v1812 = vlaneseq
        %v1813 = vshrl.u32 %v1812, 7
        %v1814 = vsub.s32 %v1811, %v1813
        %v1815 = vrot.slane %v1801, %v1814
        %v1816 = vcombine.low %v1791, %v1799
        %v1817 = vcombine.high %v1791, %v1799
        %v1819 = vunpack.c.l.s4 1934713408
        %v1820 = vunpack.c.0.s8 %v1819
        %v1821 = vlaneseq
        %v1822 = vshrl.u32 %v1821, 7
        %v1823 = vsub.s32 %v1820, %v1822
        %v1824 = vrot.slane %v1816, %v1823
        %v1826 = vunpack.c.l.s4 1934713408
        %v1827 = vunpack.c.0.s8 %v1826
        %v1828 = vlaneseq
        %v1829 = vshrl.u32 %v1828, 7
        %v1830 = vsub.s32 %v1827, %v1829
        %v1831 = vrot.slane %v1817, %v1830
        %v1832 = vcombine.low %v1808, %v1824
        %v1833 = vcombine.high %v1808, %v1824
        %v1834 = vcombine.low %v1815, %v1831
        %v1835 = vcombine.high %v1815, %v1831
        %1837 = vrot.lane.b32.xlu0 %v1833, 8
        %v1838 = vpop.permute.xlu0 %1837
        %1841 = vrot.lane.b32.xlu0 %v1834, 16
        %v1842 = vpop.permute.xlu0 %1841
        %1845 = vrot.lane.b32.xlu0 %v1835, 24
        %v1846 = vpop.permute.xlu0 %1845
        %v1848 = vsel %vm1274, %v1832, %v1838
        %vm1849 = vcmask 130048
        %v1850 = vsel %vm1849, %v1848, %v1842
        %vm1851 = vcmask 195584
        %v1852 = vsel %vm1851, %v1850, %v1846
        %v1853 = vpack.c.bf16 %v1852, %v1852
        %v1854 = vld [vmem:[%s9] sm:$0xf]
        %v1855 = vld [vmem:[%s9 + $0x4] sm:$0xf]
        %v1856 = vld [vmem:[%s9 + $0x8] sm:$0xf]
        %v1857 = vld [vmem:[%s9 + $0xc] sm:$0xf]
        %v1858 = vld [vmem:[%s10] sm:$0x1]
        %v1860 = vlaneseq
        %v1861 = vshrl.u32 %v1860, 7
        %v1862 = vsub.s32 0, %v1861
        %v1863 = vrot.slane %v1858, %v1862
        %v1869 = vunpack.c.l.b16 %v1854
        %v1870 = vunpack.c.l.b16 %v1855
        %v1871 = vunpack.c.l.b16 %v1856
        %v1872 = vunpack.c.l.b16 %v1857
        %v1873 = vpack.c.b16 %v1870, %v1869
        %v1874 = vpack.c.b16 %v1872, %v1871
        %v1878 = vsel %vm632, %v1853, 0
        %1880 = vmatprep.subr.bf16.mxu0 0
        %1881 = vmatpush1.bf16.msra.mxu0 %v1873
        %1882 = vmatprep.subr.bf16.mxu0 0
        %1883 = vmatpush1.bf16.msra.mxu0 %v1874
        %1884 = vmatprep.subr.bf16.mxu0 0
        %1885 = vmatpush1.bf16.msra.mxu0 0
        %1886 = vmatprep.subr.bf16.mxu0 0
        %1887 = vmatpush1.bf16.msra.mxu0 0
        %1888 = vmatprep.subr.bf16.mxu0 0
        %1889 = vmatpush1.bf16.msra.mxu0 0
        %1890 = vmatprep.subr.bf16.mxu0 0
        %1891 = vmatpush1.bf16.msra.mxu0 0
        %1892 = vmatprep.subr.bf16.mxu0 0
        %1893 = vmatpush1.bf16.msra.mxu0 0
        %1894 = vmatprep.subr.bf16.mxu0 0
        %1895 = vmatpush1.bf16.msra.mxu0 0
        %1896 = vmatprep.subr.bf16.mxu0 0
        %1897 = vmatpush1.bf16.msra.mxu0 0
        %1898 = vmatprep.subr.bf16.mxu0 0
        %1899 = vmatpush1.bf16.msra.mxu0 0
        %1900 = vmatprep.subr.bf16.mxu0 0
        %1901 = vmatpush1.bf16.msra.mxu0 0
        %1902 = vmatprep.subr.bf16.mxu0 0
        %1903 = vmatpush1.bf16.msra.mxu0 0
        %1904 = vmatprep.subr.bf16.mxu0 0
        %1905 = vmatpush1.bf16.msra.mxu0 0
        %1906 = vmatprep.subr.bf16.mxu0 0
        %1907 = vmatpush1.bf16.msra.mxu0 0
        %1908 = vmatprep.subr.bf16.mxu0 0
        %1909 = vmatpush1.bf16.msra.mxu0 0
        %1910 = vmatprep.subr.bf16.mxu0 0
        %1911 = vmatpush1.bf16.msra.mxu0 0
        %1912 = vmatprep.mubr.bf16.mxu0 0
        %1913 = vmatmul.mubr.bf16.gmra.mrb[0].mxu0 %v1878
        %v1914 = vpop.f32.mrb[0].mxu0
        %v1915 = vadd.f32 %v1863, %v1914
        %v1916 = vpop.f32.mrb[0].mxu0
        %v1917 = vpop.f32.mrb[0].mxu0
        %v1918 = vpop.f32.mrb[0].mxu0
        %1919 = vdwg.mxu0
        %v1920 = vadd.f32 %v665, %v1915
        %v1921 = vld [vmem:[%s11] sm:$0x1]
        %v1922 = vld [vmem:[%s12] sm:$0x1]
        %v1923 = vsel %vm632, %v1920, 0.0
        %1924 = vadd.xlane.f32.xlu0 %v1923
        %v1925 = vpop.xlane.xlu0 %1924
        %v1926 = vmul.f32 %v1925, %v636
        %v1927 = vsub.f32 %v1920, %v1926
        %v1928 = vmul.f32 %v1927, %v1927
        %v1929 = vsel %vm632, %v1928, 0.0
        %1930 = vadd.xlane.f32.xlu0 %v1929
        %v1931 = vpop.xlane.xlu0 %1930
        %v1932 = vmul.f32 %v1931, %v636
        %v1933 = vadd.f32 %v1932, 1e-05
        %v1934 = vrsqrt.pop %v1933
        %v1935 = vmul.f32 %v1927, %v1934
        %v1937 = vlaneseq
        %v1938 = vshrl.u32 %v1937, 7
        %v1939 = vsub.s32 0, %v1938
        %v1940 = vrot.slane %v1921, %v1939
        %v1942 = vmul.f32 %v1935, %v1940
        %v1944 = vlaneseq
        %v1945 = vshrl.u32 %v1944, 7
        %v1946 = vsub.s32 0, %v1945
        %v1947 = vrot.slane %v1922, %v1946
        %v1949 = vadd.f32 %v1942, %v1947
        %v1950 = vpack.c.bf16 %v1949, %v1949
        %v1951 = vld [vmem:[%s13] sm:$0xf]
        %v1952 = vld [vmem:[%s13 + $0x4] sm:$0xf]
        %v1953 = vld [vmem:[%s13 + $0x8] sm:$0xf]
        %v1954 = vld [vmem:[%s13 + $0xc] sm:$0xf]
        %v1955 = vld [vmem:[%s14] sm:$0x1]
        %v1957 = vlaneseq
        %v1958 = vshrl.u32 %v1957, 7
        %v1959 = vsub.s32 0, %v1958
        %v1960 = vrot.slane %v1955, %v1959
        %v1966 = vunpack.c.l.b16 %v1951
        %v1967 = vunpack.c.l.b16 %v1952
        %v1968 = vunpack.c.l.b16 %v1953
        %v1969 = vunpack.c.l.b16 %v1954
        %v1970 = vpack.c.b16 %v1967, %v1966
        %v1971 = vpack.c.b16 %v1969, %v1968
        %v1975 = vsel %vm632, %v1950, 0
        %1977 = vmatprep.subr.bf16.mxu0 0
        %1978 = vmatpush1.bf16.msra.mxu0 %v1970
        %1979 = vmatprep.subr.bf16.mxu0 0
        %1980 = vmatpush1.bf16.msra.mxu0 %v1971
        %1981 = vmatprep.subr.bf16.mxu0 0
        %1982 = vmatpush1.bf16.msra.mxu0 0
        %1983 = vmatprep.subr.bf16.mxu0 0
        %1984 = vmatpush1.bf16.msra.mxu0 0
        %1985 = vmatprep.subr.bf16.mxu0 0
        %1986 = vmatpush1.bf16.msra.mxu0 0
        %1987 = vmatprep.subr.bf16.mxu0 0
        %1988 = vmatpush1.bf16.msra.mxu0 0
        %1989 = vmatprep.subr.bf16.mxu0 0
        %1990 = vmatpush1.bf16.msra.mxu0 0
        %1991 = vmatprep.subr.bf16.mxu0 0
        %1992 = vmatpush1.bf16.msra.mxu0 0
        %1993 = vmatprep.subr.bf16.mxu0 0
        %1994 = vmatpush1.bf16.msra.mxu0 0
        %1995 = vmatprep.subr.bf16.mxu0 0
        %1996 = vmatpush1.bf16.msra.mxu0 0
        %1997 = vmatprep.subr.bf16.mxu0 0
        %1998 = vmatpush1.bf16.msra.mxu0 0
        %1999 = vmatprep.subr.bf16.mxu0 0
        %2000 = vmatpush1.bf16.msra.mxu0 0
        %2001 = vmatprep.subr.bf16.mxu0 0
        %2002 = vmatpush1.bf16.msra.mxu0 0
        %2003 = vmatprep.subr.bf16.mxu0 0
        %2004 = vmatpush1.bf16.msra.mxu0 0
        %2005 = vmatprep.subr.bf16.mxu0 0
        %2006 = vmatpush1.bf16.msra.mxu0 0
        %2007 = vmatprep.subr.bf16.mxu0 0
        %2008 = vmatpush1.bf16.msra.mxu0 0
        %2009 = vmatprep.mubr.bf16.mxu0 0
        %2010 = vmatmul.mubr.bf16.gmra.mrb[0].mxu0 %v1975
        %v2011 = vpop.f32.mrb[0].mxu0
        %v2012 = vadd.f32 %v1960, %v2011
        %v2013 = vpop.f32.mrb[0].mxu0
        %v2014 = vpop.f32.mrb[0].mxu0
        %v2015 = vpop.f32.mrb[0].mxu0
        %2016 = vdwg.mxu0
        %v2017 = vmul.f32 %v2012, 0.5
        %v2018 = vmul.f32 %v2012, 0.044715
        %v2019 = vmul.f32 %v2018, %v2012
        %v2020 = vmul.f32 %v2019, %v2012
        %v2021 = vadd.f32 %v2012, %v2020
        %v2022 = vmul.f32 %v2021, 0.7978846
        %v2023 = vtanh.pop %v2022
        %v2024 = vadd.f32 %v2023, 1.0
        %v2025 = vmul.f32 %v2017, %v2024
        %v2026 = vpack.c.bf16 %v2025, %v2025
        %v2027 = vld [vmem:[%s15] sm:$0xf]
        %v2028 = vld [vmem:[%s15 + $0x4] sm:$0xf]
        %v2029 = vld [vmem:[%s15 + $0x8] sm:$0xf]
        %v2030 = vld [vmem:[%s15 + $0xc] sm:$0xf]
        %v2031 = vld [vmem:[%s15 + $0x10] sm:$0xf]
        %v2032 = vld [vmem:[%s15 + $0x14] sm:$0xf]
        %v2033 = vld [vmem:[%s15 + $0x18] sm:$0xf]
        %v2034 = vld [vmem:[%s15 + $0x1c] sm:$0xf]
        %v2035 = vld [vmem:[%s15 + $0x20] sm:$0xf]
        %v2036 = vld [vmem:[%s15 + $0x24] sm:$0xf]
        %v2037 = vld [vmem:[%s15 + $0x28] sm:$0xf]
        %v2038 = vld [vmem:[%s15 + $0x2c] sm:$0xf]
        %v2039 = vld [vmem:[%s15 + $0x30] sm:$0xf]
        %v2040 = vld [vmem:[%s15 + $0x34] sm:$0xf]
        %v2041 = vld [vmem:[%s15 + $0x38] sm:$0xf]
        %v2042 = vld [vmem:[%s15 + $0x3c] sm:$0xf]
        %v2043 = vld [vmem:[%s16] sm:$0x1]
        %v2045 = vlaneseq
        %v2046 = vshrl.u32 %v2045, 7
        %v2047 = vsub.s32 0, %v2046
        %v2048 = vrot.slane %v2043, %v2047
        %v2066 = vunpack.c.l.b16 %v2027
        %v2067 = vunpack.c.l.b16 %v2028
        %v2068 = vunpack.c.l.b16 %v2029
        %v2069 = vunpack.c.l.b16 %v2030
        %v2070 = vunpack.c.l.b16 %v2031
        %v2071 = vunpack.c.l.b16 %v2032
        %v2072 = vunpack.c.l.b16 %v2033
        %v2073 = vunpack.c.l.b16 %v2034
        %v2074 = vunpack.c.l.b16 %v2035
        %v2075 = vunpack.c.l.b16 %v2036
        %v2076 = vunpack.c.l.b16 %v2037
        %v2077 = vunpack.c.l.b16 %v2038
        %v2078 = vunpack.c.l.b16 %v2039
        %v2079 = vunpack.c.l.b16 %v2040
        %v2080 = vunpack.c.l.b16 %v2041
        %v2081 = vunpack.c.l.b16 %v2042
        %v2082 = vpack.c.b16 %v2067, %v2066
        %v2083 = vpack.c.b16 %v2069, %v2068
        %v2084 = vpack.c.b16 %v2071, %v2070
        %v2085 = vpack.c.b16 %v2073, %v2072
        %v2086 = vpack.c.b16 %v2075, %v2074
        %v2087 = vpack.c.b16 %v2077, %v2076
        %v2088 = vpack.c.b16 %v2079, %v2078
        %v2089 = vpack.c.b16 %v2081, %v2080
        %2098 = vmatprep.subr.bf16.mxu0 0
        %2099 = vmatpush1.bf16.msra.mxu0 %v2082
        %2100 = vmatprep.subr.bf16.mxu0 0
        %2101 = vmatpush1.bf16.msra.mxu0 %v2083
        %2102 = vmatprep.subr.bf16.mxu0 0
        %2103 = vmatpush1.bf16.msra.mxu0 %v2084
        %2104 = vmatprep.subr.bf16.mxu0 0
        %2105 = vmatpush1.bf16.msra.mxu0 %v2085
        %2106 = vmatprep.subr.bf16.mxu0 0
        %2107 = vmatpush1.bf16.msra.mxu0 %v2086
        %2108 = vmatprep.subr.bf16.mxu0 0
        %2109 = vmatpush1.bf16.msra.mxu0 %v2087
        %2110 = vmatprep.subr.bf16.mxu0 0
        %2111 = vmatpush1.bf16.msra.mxu0 %v2088
        %2112 = vmatprep.subr.bf16.mxu0 0
        %2113 = vmatpush1.bf16.msra.mxu0 %v2089
        %2114 = vmatprep.subr.bf16.mxu0 0
        %2115 = vmatpush1.bf16.msra.mxu0 0
        %2116 = vmatprep.subr.bf16.mxu0 0
        %2117 = vmatpush1.bf16.msra.mxu0 0
        %2118 = vmatprep.subr.bf16.mxu0 0
        %2119 = vmatpush1.bf16.msra.mxu0 0
        %2120 = vmatprep.subr.bf16.mxu0 0
        %2121 = vmatpush1.bf16.msra.mxu0 0
        %2122 = vmatprep.subr.bf16.mxu0 0
        %2123 = vmatpush1.bf16.msra.mxu0 0
        %2124 = vmatprep.subr.bf16.mxu0 0
        %2125 = vmatpush1.bf16.msra.mxu0 0
        %2126 = vmatprep.subr.bf16.mxu0 0
        %2127 = vmatpush1.bf16.msra.mxu0 0
        %2128 = vmatprep.subr.bf16.mxu0 0
        %2129 = vmatpush1.bf16.msra.mxu0 0
        %2130 = vmatprep.mubr.bf16.mxu0 0
        %2131 = vmatmul.mubr.bf16.gmra.mrb[0].mxu0 %v2026
        %v2132 = vpop.f32.mrb[0].mxu0
        %v2133 = vadd.f32 %v2048, %v2132
        %v2134 = vpop.f32.mrb[0].mxu0
        %v2135 = vpop.f32.mrb[0].mxu0
        %v2136 = vpop.f32.mrb[0].mxu0
        %2137 = vdwg.mxu0
        %v2138 = vadd.f32 %v1920, %v2133
        %2139 = vst.msk [vmem:[%s610] sm:$0xff] %vm632, %v2138
        %s2140 = sand.u32 %s426, 1
        %s2141 = scalar_lea.sflag [#allocation4], %s2140
        %s2142 = sand.u32 %s426, 1
        %s2143 = smul.addr %s2142, 8
        %s2144 = scalar_lea.vmem [#allocation5], %s2143
        %s2145 = sand.u32 %s454, 1
        %s2146 = scalar_lea.sflag [#allocation7], %s2145
        %s2147 = sand.u32 %s454, 1
        %s2148 = smul.addr %s2147, 32
        %s2149 = scalar_lea.vmem [#allocation6], %s2148
        // Predicated region
        $region93: #{tpu_custom_call.1} parent=87 // pred_check
          %p2150 = pneg %p436
        $region94: #{tpu_custom_call.1} parent=87 // pred_check_branch
          %2152 = sbr.rel (%p2150) target = $region96
        $region95: #{tpu_custom_call.1} parent=87 // pred_region
          %s2154 = ssub.s32 128, 128
          %2155 = vsyncadd %s2141, %s2154
          %s2156 = sadd.s32 %s42, %s41
          %s2157 = smul.addr %s2156, 128
          %s2158 = scalar_lea.hbm %s17, %s2157
          %s2160 = sshll.u32 %s2144, 4
          %s2161 = int_to_ptr.vmem [resolvable:$true] %s2160
          %2163 = dma.vmem_to_hbm [thread:$0]  %s2161, 128, %s2158, %s2141
        $region96: #{tpu_custom_call.1} parent=87 // pred_fallthru
          _
        // Predicated region
        $region97: #{tpu_custom_call.1} parent=87 // pred_check
          %p2164 = pneg %p464
        $region98: #{tpu_custom_call.1} parent=87 // pred_check_branch
          %2166 = sbr.rel (%p2164) target = $region100
        $region99: #{tpu_custom_call.1} parent=87 // pred_region
          %s2168 = ssub.s32 512, 512
          %2169 = vsyncadd %s2146, %s2168
          %s2170 = smul.addr %s41, 4
          %s2171 = sadd.s32 %s42, %s2170
          %s2172 = smul.addr %s2171, 128
          %s2173 = scalar_lea.hbm %s18, %s2172
          %s2174 = sshll.u32 %s2149, 4
          %s2175 = int_to_ptr.vmem [resolvable:$true] %s2174
          %2180 = dma.vmem_to_hbm [thread:$0]  %s2175, 512, %s2173, %s2146, 128, 128, 8
        $region100: #{tpu_custom_call.1} parent=87 // pred_fallthru
          _
      $region88: #{tpu_custom_call.1} parent=5 // pred_fallthru
        _
      %p2181 = scmp.le.s32.totalorder 2, %s32
      // Predicated region
      $region101: #{tpu_custom_call.1} parent=5 // pred_check
        %p2182 = pneg %p2181
      $region102: #{tpu_custom_call.1} parent=5 // pred_check_branch
        %2184 = sbr.rel (%p2182) target = $region104
      $region103: #{tpu_custom_call.1} parent=5 // pred_region
        %s2185 = ssub.s32 %s32, 2
        // Predicated region
        $region105: #{tpu_custom_call.1} parent=103 // pred_check
          %p2186 = pneg %p442
        $region106: #{tpu_custom_call.1} parent=103 // pred_check_branch
          %2188 = sbr.rel (%p2186) target = $region108
        $region107: #{tpu_custom_call.1} parent=103 // pred_region
          %s2189 = sand.u32 %s427, 1
          %s2190 = scalar_lea.sflag [#allocation4], %s2189
          %s2191 = sand.u32 %s427, 1
          %s2192 = smul.addr %s2191, 8
          %s2193 = scalar_lea.vmem [#allocation5], %s2192
          %2194 = dma.done %s2190, 128
        $region108: #{tpu_custom_call.1} parent=103 // pred_fallthru
          _
        // Predicated region
        $region109: #{tpu_custom_call.1} parent=103 // pred_check
          %p2195 = pneg %p470
        $region110: #{tpu_custom_call.1} parent=103 // pred_check_branch
          %2197 = sbr.rel (%p2195) target = $region112
        $region111: #{tpu_custom_call.1} parent=103 // pred_region
          %s2198 = sand.u32 %s455, 1
          %s2199 = scalar_lea.sflag [#allocation7], %s2198
          %s2200 = sand.u32 %s455, 1
          %s2201 = smul.addr %s2200, 32
          %s2202 = scalar_lea.vmem [#allocation6], %s2201
          %2203 = dma.done %s2199, 512
        $region112: #{tpu_custom_call.1} parent=103 // pred_fallthru
          _
      $region104: #{tpu_custom_call.1} parent=5 // pred_fallthru
        _
    $region6: #{tpu_custom_call.1} parent=1 // loop_footer
      %s36 = sadd.s32 1, %s32
    $region7: #{tpu_custom_call.1} parent=1 // loop_footer_branch
      %31 = sbr.rel target = $region3
    $region8: #{tpu_custom_call.1} parent=1 // loop_exit
      _
    %2204 = vsyncpa [#allocation3], 1
    %s2205 = scalar_lea.sflag [#allocation3], 1
    %2206 = vsyncpa %s2205, 1
    %2207 = vsyncpa [#allocation4], 1
    %s2208 = scalar_lea.sflag [#allocation4], 1
    %2209 = vsyncpa %s2208, 1
    %2210 = vsyncpa [#allocation7], 1
    %s2211 = scalar_lea.sflag [#allocation7], 1
    %2212 = vsyncpa %s2211, 1

// kernel: tpu_custom_call.1
$region0: #{tpu_custom_call.1}
  #allocation0 [shape = 'u32[]', space=smem, size = 0x4, offset = 0x4, fixed_abs, tag = 'smem constant byte address 0x4 - core index']
  #allocation1 [shape = 'u32[144,128]{1,0:T(1,128)}', space=vmem, size = 0x12000, scoped, tag = 'internal scratch']
  %s0 = inlined_call_operand.vmem [shape: f32[2,8,32], index: 0, kind: input, shape index: {}]
  %s1 = inlined_call_operand.vmem [shape: f32[2,1,8], index: 1, kind: input, shape index: {}]
  %s2 = inlined_call_operand.hbm [shape: f32[8,32], index: 2, kind: input, shape index: {}]
  %s3 = inlined_call_operand.vmem [shape: f32[1,32], index: 3, kind: input, shape index: {}]
  %s4 = inlined_call_operand.vmem [shape: f32[1,32], index: 4, kind: input, shape index: {}]
  %s5 = inlined_call_operand.vmem [shape: bf16[32,32], index: 5, kind: input, shape index: {}]
  %s6 = inlined_call_operand.vmem [shape: f32[1,32], index: 6, kind: input, shape index: {}]
  %s7 = inlined_call_operand.vmem [shape: bf16[32,64], index: 7, kind: input, shape index: {}]
  %s8 = inlined_call_operand.vmem [shape: f32[1,64], index: 8, kind: input, shape index: {}]
  %s9 = inlined_call_operand.vmem [shape: bf16[32,32], index: 9, kind: input, shape index: {}]
  %s10 = inlined_call_operand.vmem [shape: f32[1,32], index: 10, kind: input, shape index: {}]
  %s11 = inlined_call_operand.vmem [shape: f32[1,32], index: 11, kind: input, shape index: {}]
  %s12 = inlined_call_operand.vmem [shape: f32[1,32], index: 12, kind: input, shape index: {}]
  %s13 = inlined_call_operand.vmem [shape: bf16[32,128], index: 13, kind: input, shape index: {}]
  %s14 = inlined_call_operand.vmem [shape: f32[1,128], index: 14, kind: input, shape index: {}]
  %s15 = inlined_call_operand.vmem [shape: bf16[128,32], index: 15, kind: input, shape index: {}]
  %s16 = inlined_call_operand.vmem [shape: f32[1,32], index: 16, kind: input, shape index: {}]
  %s17 = inlined_call_operand.hbm [shape: f32[2,8,32], index: 17, kind: output, shape index: {0}]
  %s18 = inlined_call_operand.hbm [shape: f32[2,4,8,8], index: 18, kind: output, shape index: {1}]
  %19 = xla_tuple %s17, %s18
  %s20 = sld [smem:[#allocation0]]
  $region113: #{tpu_custom_call.1} parent=0
    _
  %s22 = ssub.s32 1, %s20
  %s23 = scalar_select 0, %s22, %s20
  $region1: #{tpu_custom_call.1} parent=0
    #allocation2 [shape = 'u8[4096]{0}', space=vmem, size = 0x1000, scoped, tag = 'input window, operand 2, single buffered']
    #allocation3 [shape = 's32[2]{0}', space=sflag, size = 0x8, scoped, tag = 'scoped memory for tpu_custom_call.1']
    #allocation4 [shape = 's32[2]{0}', space=sflag, size = 0x8, scoped, tag = 'scoped memory for tpu_custom_call.1']
    #allocation5 [shape = 'u8[8192]{0}', space=vmem, size = 0x2000, scoped, tag = 'output window, operand 0']
    #allocation6 [shape = 'u8[32768]{0}', space=vmem, size = 0x8000, scoped, tag = 'output window, operand 1']
    #allocation7 [shape = 's32[2]{0}', space=sflag, size = 0x8, scoped, tag = 'scoped memory for tpu_custom_call.1']
    %24 = vsyncpa [#allocation3], 0
    %25 = vsyncpa [#allocation4], 0
    %s26 = scalar_lea.sflag [#allocation4], 1
    %27 = vsyncpa %s26, 0
    %28 = vsyncpa [#allocation7], 0
    %s29 = scalar_lea.sflag [#allocation7], 1
    %30 = vsyncpa %s29, 0
    loop: start=0, step=1, limit=4
    $region2: #{tpu_custom_call.1} parent=1 // loop_pre_header
      _
    $region3: #{tpu_custom_call.1} parent=1 // loop_header
      %s32 = sphi 0, %s36
      %p33 = scmp.ge.s32.totalorder %s32, 4
      %s39 = sphi 0, %s51
      %s40 = sphi 0, %s47
      %s41 = sphi 0, %s39
      %s42 = sphi 0, %s40
      %s43 = sphi 0, %s41
      %s44 = sphi 0, %s42
      %s54 = sphi 0, %s56
      %s57 = sphi 0, %s54
      %s58 = sphi 0, %s57
      %s74 = sphi 0, %s58
      %s80 = sphi 0, %s82
      %s83 = sphi 0, %s80
      %s84 = sphi 0, %s83
      %s100 = sphi 0, %s84
      %s104 = sphi 0, %s104
      %s106 = sphi 0, %s104
      %s107 = sphi 0, %s106
      %s121 = sphi 0, %s107
      %s125 = sphi 0, %s125
      %s127 = sphi 0, %s125
      %s128 = sphi 0, %s127
      %s142 = sphi 0, %s128
      %s146 = sphi 0, %s146
      %s148 = sphi 0, %s146
      %s149 = sphi 0, %s148
      %s163 = sphi 0, %s149
      %s167 = sphi 0, %s167
      %s169 = sphi 0, %s167
      %s170 = sphi 0, %s169
      %s184 = sphi 0, %s170
      %s188 = sphi 0, %s188
      %s190 = sphi 0, %s188
      %s191 = sphi 0, %s190
      %s205 = sphi 0, %s191
      %s209 = sphi 0, %s209
      %s211 = sphi 0, %s209
      %s212 = sphi 0, %s211
      %s226 = sphi 0, %s212
      %s230 = sphi 0, %s230
      %s232 = sphi 0, %s230
      %s233 = sphi 0, %s232
      %s247 = sphi 0, %s233
      %s251 = sphi 0, %s251
      %s253 = sphi 0, %s251
      %s254 = sphi 0, %s253
      %s268 = sphi 0, %s254
      %s272 = sphi 0, %s272
      %s274 = sphi 0, %s272
      %s275 = sphi 0, %s274
      %s289 = sphi 0, %s275
      %s293 = sphi 0, %s293
      %s295 = sphi 0, %s293
      %s296 = sphi 0, %s295
      %s310 = sphi 0, %s296
      %s314 = sphi 0, %s314
      %s316 = sphi 0, %s314
      %s317 = sphi 0, %s316
      %s331 = sphi 0, %s317
      %s335 = sphi 0, %s335
      %s337 = sphi 0, %s335
      %s338 = sphi 0, %s337
      %s352 = sphi 0, %s338
      %s356 = sphi 0, %s356
      %s358 = sphi 0, %s356
      %s359 = sphi 0, %s358
      %s373 = sphi 0, %s359
      %s377 = sphi 0, %s377
      %s379 = sphi 0, %s377
      %s380 = sphi 0, %s379
      %s394 = sphi 0, %s380
      %s398 = sphi 0, %s398
      %s400 = sphi 0, %s398
      %s401 = sphi 0, %s400
      %s415 = sphi 0, %s401
      %s423 = sphi 0, %s425
      %s426 = sphi 0, %s423
      %s427 = sphi 0, %s426
      %s443 = sphi 0, %s427
      %s451 = sphi 0, %s453
      %s454 = sphi 0, %s451
      %s455 = sphi 0, %s454
      %s471 = sphi 0, %s455
    $region4: #{tpu_custom_call.1} parent=1 // loop_header_branch
      %35 = sbr.rel (%p33) target = $region8
    $region5: #{tpu_custom_call.1} parent=1 // loop_body
      %s37 = ssub.s32 %s32, 1
      %s38 = ssub.s32 %s32, 2
      %s45 = sadd.s32 1, %s40
      %p46 = scmp.ge.s32.totalorder %s45, 1
      %s47 = scalar_select %p46, 0, %s45
      %s48 = sadd.s32 1, %s39
      %s49 = scalar_select %p46, %s48, %s39
      %p50 = scmp.ge.s32.totalorder %s49, 2
      %s51 = scalar_select %p50, 0, %s49
      %s52 = ssub.s32 %s39, %s51
      %p53 = scmp.eq.s32.totalorder %s52, 0
      %s55 = sadd.s32 %s54, 1
      %s56 = scalar_select %p53, %s54, %s55
      %p59 = pneg %p53
      %p60 = scmp.eq.s32.totalorder %s32, 1
      %p61 = por %p59, %p60
      %p62 = scmp.ne.s32.totalorder %s54, %s57
      %p63 = scmp.eq.s32.totalorder %s32, 0
      %p64 = por %p62, %p63
      %p65 = scmp.ne.s32.totalorder %s54, %s57
      %p66 = scmp.eq.s32.totalorder %s37, 1
      %p67 = por %p65, %p66
      %p68 = scmp.ne.s32.totalorder %s57, %s58
      %p69 = scmp.eq.s32.totalorder %s37, 0
      %p70 = por %p68, %p69
      %p71 = scmp.ne.s32.totalorder %s57, %s58
      %p72 = scmp.eq.s32.totalorder %s38, 1
      %p73 = por %p71, %p72
      %p75 = scmp.ne.s32.totalorder %s58, %s74
      %p76 = scmp.eq.s32.totalorder %s38, 0
      %p77 = por %p75, %p76
      %s78 = ssub.s32 %s39, %s51
      %p79 = scmp.eq.s32.totalorder %s78, 0
      %s81 = sadd.s32 %s80, 1
      %s82 = scalar_select %p79, %s80, %s81
      %p85 = pneg %p79
      %p86 = scmp.eq.s32.totalorder %s32, 1
      %p87 = por %p85, %p86
      %p88 = scmp.ne.s32.totalorder %s80, %s83
      %p89 = scmp.eq.s32.totalorder %s32, 0
      %p90 = por %p88, %p89
      %p91 = scmp.ne.s32.totalorder %s80, %s83
      %p92 = scmp.eq.s32.totalorder %s37, 1
      %p93 = por %p91, %p92
      %p94 = scmp.ne.s32.totalorder %s83, %s84
      %p95 = scmp.eq.s32.totalorder %s37, 0
      %p96 = por %p94, %p95
      %p97 = scmp.ne.s32.totalorder %s83, %s84
      %p98 = scmp.eq.s32.totalorder %s38, 1
      %p99 = por %p97, %p98
      %p101 = scmp.ne.s32.totalorder %s84, %s100
      %p102 = scmp.eq.s32.totalorder %s38, 0
      %p103 = por %p101, %p102
      %s105 = sadd.s32 %s104, 1
      %p108 = scmp.eq.s32.totalorder %s32, 1
      %p109 = scmp.ne.s32.totalorder %s104, %s106
      %p110 = scmp.eq.s32.totalorder %s32, 0
      %p111 = por %p109, %p110
      %p112 = scmp.ne.s32.totalorder %s104, %s106
      %p113 = scmp.eq.s32.totalorder %s37, 1
      %p114 = por %p112, %p113
      %p115 = scmp.ne.s32.totalorder %s106, %s107
      %p116 = scmp.eq.s32.totalorder %s37, 0
      %p117 = por %p115, %p116
      %p118 = scmp.ne.s32.totalorder %s106, %s107
      %p119 = scmp.eq.s32.totalorder %s38, 1
      %p120 = por %p118, %p119
      %p122 = scmp.ne.s32.totalorder %s107, %s121
      %p123 = scmp.eq.s32.totalorder %s38, 0
      %p124 = por %p122, %p123
      %s126 = sadd.s32 %s125, 1
      %p129 = scmp.eq.s32.totalorder %s32, 1
      %p130 = scmp.ne.s32.totalorder %s125, %s127
      %p131 = scmp.eq.s32.totalorder %s32, 0
      %p132 = por %p130, %p131
      %p133 = scmp.ne.s32.totalorder %s125, %s127
      %p134 = scmp.eq.s32.totalorder %s37, 1
      %p135 = por %p133, %p134
      %p136 = scmp.ne.s32.totalorder %s127, %s128
      %p137 = scmp.eq.s32.totalorder %s37, 0
      %p138 = por %p136, %p137
      %p139 = scmp.ne.s32.totalorder %s127, %s128
      %p140 = scmp.eq.s32.totalorder %s38, 1
      %p141 = por %p139, %p140
      %p143 = scmp.ne.s32.totalorder %s128, %s142
      %p144 = scmp.eq.s32.totalorder %s38, 0
      %p145 = por %p143, %p144
      %s147 = sadd.s32 %s146, 1
      %p150 = scmp.eq.s32.totalorder %s32, 1
      %p151 = scmp.ne.s32.totalorder %s146, %s148
      %p152 = scmp.eq.s32.totalorder %s32, 0
      %p153 = por %p151, %p152
      %p154 = scmp.ne.s32.totalorder %s146, %s148
      %p155 = scmp.eq.s32.totalorder %s37, 1
      %p156 = por %p154, %p155
      %p157 = scmp.ne.s32.totalorder %s148, %s149
      %p158 = scmp.eq.s32.totalorder %s37, 0
      %p159 = por %p157, %p158
      %p160 = scmp.ne.s32.totalorder %s148, %s149
      %p161 = scmp.eq.s32.totalorder %s38, 1
      %p162 = por %p160, %p161
      %p164 = scmp.ne.s32.totalorder %s149, %s163
      %p165 = scmp.eq.s32.totalorder %s38, 0
      %p166 = por %p164, %p165
      %s168 = sadd.s32 %s167, 1
      %p171 = scmp.eq.s32.totalorder %s32, 1
      %p172 = scmp.ne.s32.totalorder %s167, %s169
      %p173 = scmp.eq.s32.totalorder %s32, 0
      %p174 = por %p172, %p173
      %p175 = scmp.ne.s32.totalorder %s167, %s169
      %p176 = scmp.eq.s32.totalorder %s37, 1
      %p177 = por %p175, %p176
      %p178 = scmp.ne.s32.totalorder %s169, %s170
      %p179 = scmp.eq.s32.totalorder %s37, 0
      %p180 = por %p178, %p179
      %p181 = scmp.ne.s32.totalorder %s169, %s170
      %p182 = scmp.eq.s32.totalorder %s38, 1
      %p183 = por %p181, %p182
      %p185 = scmp.ne.s32.totalorder %s170, %s184
      %p186 = scmp.eq.s32.totalorder %s38, 0
      %p187 = por %p185, %p186
      %s189 = sadd.s32 %s188, 1
      %p192 = scmp.eq.s32.totalorder %s32, 1
      %p193 = scmp.ne.s32.totalorder %s188, %s190
      %p194 = scmp.eq.s32.totalorder %s32, 0
      %p195 = por %p193, %p194
      %p196 = scmp.ne.s32.totalorder %s188, %s190
      %p197 = scmp.eq.s32.totalorder %s37, 1
      %p198 = por %p196, %p197
      %p199 = scmp.ne.s32.totalorder %s190, %s191
      %p200 = scmp.eq.s32.totalorder %s37, 0
      %p201 = por %p199, %p200
      %p202 = scmp.ne.s32.totalorder %s190, %s191
      %p203 = scmp.eq.s32.totalorder %s38, 1
      %p204 = por %p202, %p203
      %p206 = scmp.ne.s32.totalorder %s191, %s205
      %p207 = scmp.eq.s32.totalorder %s38, 0
      %p208 = por %p206, %p207
      %s210 = sadd.s32 %s209, 1
      %p213 = scmp.eq.s32.totalorder %s32, 1
      %p214 = scmp.ne.s32.totalorder %s209, %s211
      %p215 = scmp.eq.s32.totalorder %s32, 0
      %p216 = por %p214, %p215
      %p217 = scmp.ne.s32.totalorder %s209, %s211
      %p218 = scmp.eq.s32.totalorder %s37, 1
      %p219 = por %p217, %p218
      %p220 = scmp.ne.s32.totalorder %s211, %s212
      %p221 = scmp.eq.s32.totalorder %s37, 0
      %p222 = por %p220, %p221
      %p223 = scmp.ne.s32.totalorder %s211, %s212
      %p224 = scmp.eq.s32.totalorder %s38, 1
      %p225 = por %p223, %p224
      %p227 = scmp.ne.s32.totalorder %s212, %s226
      %p228 = scmp.eq.s32.totalorder %s38, 0
      %p229 = por %p227, %p228
      %s231 = sadd.s32 %s230, 1
      %p234 = scmp.eq.s32.totalorder %s32, 1
      %p235 = scmp.ne.s32.totalorder %s230, %s232
      %p236 = scmp.eq.s32.totalorder %s32, 0
      %p237 = por %p235, %p236
      %p238 = scmp.ne.s32.totalorder %s230, %s232
      %p239 = scmp.eq.s32.totalorder %s37, 1
      %p240 = por %p238, %p239
      %p241 = scmp.ne.s32.totalorder %s232, %s233
      %p242 = scmp.eq.s32.totalorder %s37, 0
      %p243 = por %p241, %p242
      %p244 = scmp.ne.s32.totalorder %s232, %s233
      %p245 = scmp.eq.s32.totalorder %s38, 1
      %p246 = por %p244, %p245
      %p248 = scmp.ne.s32.totalorder %s233, %s247
      %p249 = scmp.eq.s32.totalorder %s38, 0
      %p250 = por %p248, %p249
      %s252 = sadd.s32 %s251, 1
      %p255 = scmp.eq.s32.totalorder %s32, 1
      %p256 = scmp.ne.s32.totalorder %s251, %s253
      %p257 = scmp.eq.s32.totalorder %s32, 0
      %p258 = por %p256, %p257
      %p259 = scmp.ne.s32.totalorder %s251, %s253
      %p260 = scmp.eq.s32.totalorder %s37, 1
      %p261 = por %p259, %p260
      %p262 = scmp.ne.s32.totalorder %s253, %s254
      %p263 = scmp.eq.s32.totalorder %s37, 0
      %p264 = por %p262, %p263
      %p265 = scmp.ne.s32.totalorder %s253, %s254
      %p266 = scmp.eq.s32.totalorder %s38, 1
      %p267 = por %p265, %p266
      %p269 = scmp.ne.s32.totalorder %s254, %s268
      %p270 = scmp.eq.s32.totalorder %s38, 0
      %p271 = por %p269, %p270
      %s273 = sadd.s32 %s272, 1
      %p276 = scmp.eq.s32.totalorder %s32, 1
      %p277 = scmp.ne.s32.totalorder %s272, %s274
      %p278 = scmp.eq.s32.totalorder %s32, 0
      %p279 = por %p277, %p278
      %p280 = scmp.ne.s32.totalorder %s272, %s274
      %p281 = scmp.eq.s32.totalorder %s37, 1
      %p282 = por %p280, %p281
      %p283 = scmp.ne.s32.totalorder %s274, %s275
      %p284 = scmp.eq.s32.totalorder %s37, 0
      %p285 = por %p283, %p284
      %p286 = scmp.ne.s32.totalorder %s274, %s275
      %p287 = scmp.eq.s32.totalorder %s38, 1
      %p288 = por %p286, %p287
      %p290 = scmp.ne.s32.totalorder %s275, %s289
      %p291 = scmp.eq.s32.totalorder %s38, 0
      %p292 = por %p290, %p291
      %s294 = sadd.s32 %s293, 1
      %p297 = scmp.eq.s32.totalorder %s32, 1
      %p298 = scmp.ne.s32.totalorder %s293, %s295
      %p299 = scmp.eq.s32.totalorder %s32, 0
      %p300 = por %p298, %p299
      %p301 = scmp.ne.s32.totalorder %s293, %s295
      %p302 = scmp.eq.s32.totalorder %s37, 1
      %p303 = por %p301, %p302
      %p304 = scmp.ne.s32.totalorder %s295, %s296
      %p305 = scmp.eq.s32.totalorder %s37, 0
      %p306 = por %p304, %p305
      %p307 = scmp.ne.s32.totalorder %s295, %s296
      %p308 = scmp.eq.s32.totalorder %s38, 1
      %p309 = por %p307, %p308
      %p311 = scmp.ne.s32.totalorder %s296, %s310
      %p312 = scmp.eq.s32.totalorder %s38, 0
      %p313 = por %p311, %p312
      %s315 = sadd.s32 %s314, 1
      %p318 = scmp.eq.s32.totalorder %s32, 1
      %p319 = scmp.ne.s32.totalorder %s314, %s316
      %p320 = scmp.eq.s32.totalorder %s32, 0
      %p321 = por %p319, %p320
      %p322 = scmp.ne.s32.totalorder %s314, %s316
      %p323 = scmp.eq.s32.totalorder %s37, 1
      %p324 = por %p322, %p323
      %p325 = scmp.ne.s32.totalorder %s316, %s317
      %p326 = scmp.eq.s32.totalorder %s37, 0
      %p327 = por %p325, %p326
      %p328 = scmp.ne.s32.totalorder %s316, %s317
      %p329 = scmp.eq.s32.totalorder %s38, 1
      %p330 = por %p328, %p329
      %p332 = scmp.ne.s32.totalorder %s317, %s331
      %p333 = scmp.eq.s32.totalorder %s38, 0
      %p334 = por %p332, %p333
      %s336 = sadd.s32 %s335, 1
      %p339 = scmp.eq.s32.totalorder %s32, 1
      %p340 = scmp.ne.s32.totalorder %s335, %s337
      %p341 = scmp.eq.s32.totalorder %s32, 0
      %p342 = por %p340, %p341
      %p343 = scmp.ne.s32.totalorder %s335, %s337
      %p344 = scmp.eq.s32.totalorder %s37, 1
      %p345 = por %p343, %p344
      %p346 = scmp.ne.s32.totalorder %s337, %s338
      %p347 = scmp.eq.s32.totalorder %s37, 0
      %p348 = por %p346, %p347
      %p349 = scmp.ne.s32.totalorder %s337, %s338
      %p350 = scmp.eq.s32.totalorder %s38, 1
      %p351 = por %p349, %p350
      %p353 = scmp.ne.s32.totalorder %s338, %s352
      %p354 = scmp.eq.s32.totalorder %s38, 0
      %p355 = por %p353, %p354
      %s357 = sadd.s32 %s356, 1
      %p360 = scmp.eq.s32.totalorder %s32, 1
      %p361 = scmp.ne.s32.totalorder %s356, %s358
      %p362 = scmp.eq.s32.totalorder %s32, 0
      %p363 = por %p361, %p362
      %p364 = scmp.ne.s32.totalorder %s356, %s358
      %p365 = scmp.eq.s32.totalorder %s37, 1
      %p366 = por %p364, %p365
      %p367 = scmp.ne.s32.totalorder %s358, %s359
      %p368 = scmp.eq.s32.totalorder %s37, 0
      %p369 = por %p367, %p368
      %p370 = scmp.ne.s32.totalorder %s358, %s359
      %p371 = scmp.eq.s32.totalorder %s38, 1
      %p372 = por %p370, %p371
      %p374 = scmp.ne.s32.totalorder %s359, %s373
      %p375 = scmp.eq.s32.totalorder %s38, 0
      %p376 = por %p374, %p375
      %s378 = sadd.s32 %s377, 1
      %p381 = scmp.eq.s32.totalorder %s32, 1
      %p382 = scmp.ne.s32.totalorder %s377, %s379
      %p383 = scmp.eq.s32.totalorder %s32, 0
      %p384 = por %p382, %p383
      %p385 = scmp.ne.s32.totalorder %s377, %s379
      %p386 = scmp.eq.s32.totalorder %s37, 1
      %p387 = por %p385, %p386
      %p388 = scmp.ne.s32.totalorder %s379, %s380
      %p389 = scmp.eq.s32.totalorder %s37, 0
      %p390 = por %p388, %p389
      %p391 = scmp.ne.s32.totalorder %s379, %s380
      %p392 = scmp.eq.s32.totalorder %s38, 1
      %p393 = por %p391, %p392
      %p395 = scmp.ne.s32.totalorder %s380, %s394
      %p396 = scmp.eq.s32.totalorder %s38, 0
      %p397 = por %p395, %p396
      %s399 = sadd.s32 %s398, 1
      %p402 = scmp.eq.s32.totalorder %s32, 1
      %p403 = scmp.ne.s32.totalorder %s398, %s400
      %p404 = scmp.eq.s32.totalorder %s32, 0
      %p405 = por %p403, %p404
      %p406 = scmp.ne.s32.totalorder %s398, %s400
      %p407 = scmp.eq.s32.totalorder %s37, 1
      %p408 = por %p406, %p407
      %p409 = scmp.ne.s32.totalorder %s400, %s401
      %p410 = scmp.eq.s32.totalorder %s37, 0
      %p411 = por %p409, %p410
      %p412 = scmp.ne.s32.totalorder %s400, %s401
      %p413 = scmp.eq.s32.totalorder %s38, 1
      %p414 = por %p412, %p413
      %p416 = scmp.ne.s32.totalorder %s401, %s415
      %p417 = scmp.eq.s32.totalorder %s38, 0
      %p418 = por %p416, %p417
      %s419 = ssub.s32 %s39, %s51
      %s420 = ssub.s32 %s40, %s47
      %s421 = sor.u32 %s419, %s420
      %p422 = scmp.eq.s32.totalorder %s421, 0
      %s424 = sadd.s32 %s423, 1
      %s425 = scalar_select %p422, %s423, %s424
      %p428 = pneg %p422
      %p429 = scmp.eq.s32.totalorder %s32, 1
      %p430 = por %p428, %p429
      %p431 = scmp.ne.s32.totalorder %s423, %s426
      %p432 = scmp.eq.s32.totalorder %s32, 0
      %p433 = por %p431, %p432
      %p434 = scmp.ne.s32.totalorder %s423, %s426
      %p435 = scmp.eq.s32.totalorder %s37, 1
      %p436 = por %p434, %p435
      %p437 = scmp.ne.s32.totalorder %s426, %s427
      %p438 = scmp.eq.s32.totalorder %s37, 0
      %p439 = por %p437, %p438
      %p440 = scmp.ne.s32.totalorder %s426, %s427
      %p441 = scmp.eq.s32.totalorder %s38, 1
      %p442 = por %p440, %p441
      %p444 = scmp.ne.s32.totalorder %s427, %s443
      %p445 = scmp.eq.s32.totalorder %s38, 0
      %p446 = por %p444, %p445
      %s447 = ssub.s32 %s39, %s51
      %s448 = ssub.s32 %s40, %s47
      %s449 = sor.u32 %s447, %s448
      %p450 = scmp.eq.s32.totalorder %s449, 0
      %s452 = sadd.s32 %s451, 1
      %s453 = scalar_select %p450, %s451, %s452
      %p456 = pneg %p450
      %p457 = scmp.eq.s32.totalorder %s32, 1
      %p458 = por %p456, %p457
      %p459 = scmp.ne.s32.totalorder %s451, %s454
      %p460 = scmp.eq.s32.totalorder %s32, 0
      %p461 = por %p459, %p460
      %p462 = scmp.ne.s32.totalorder %s451, %s454
      %p463 = scmp.eq.s32.totalorder %s37, 1
      %p464 = por %p462, %p463
      %p465 = scmp.ne.s32.totalorder %s454, %s455
      %p466 = scmp.eq.s32.totalorder %s37, 0
      %p467 = por %p465, %p466
      %p468 = scmp.ne.s32.totalorder %s454, %s455
      %p469 = scmp.eq.s32.totalorder %s38, 1
      %p470 = por %p468, %p469
      %p472 = scmp.ne.s32.totalorder %s455, %s471
      %p473 = scmp.eq.s32.totalorder %s38, 0
      %p474 = por %p472, %p473
      %p475 = scmp.le.s32.totalorder 1, %s32
      %p476 = scmp.lt.s32.totalorder %s32, 3
      %p477 = pnand %p475, %p476
      %p478 = pneg %p477
      // Predicated region
      $region9: #{tpu_custom_call.1} parent=5 // pred_check
        _
      $region10: #{tpu_custom_call.1} parent=5 // pred_check_branch
        %480 = sbr.rel (%p477) target = $region12
      $region11: #{tpu_custom_call.1} parent=5 // pred_region
        %s481 = ssub.s32 %s32, 1
        // Predicated region
        $region13: #{tpu_custom_call.1} parent=11 // pred_check
          %p482 = pneg %p117
        $region14: #{tpu_custom_call.1} parent=11 // pred_check_branch
          %484 = sbr.rel (%p482) target = $region16
        $region15: #{tpu_custom_call.1} parent=11 // pred_region
          %s486 = ssub.s32 128, 128
          %487 = vsyncadd [#allocation3], %s486
          %s489 = sshll.u32 [#allocation2], 4
          %s490 = int_to_ptr.vmem [resolvable:$true] %s489
          %492 = dma.hbm_to_vmem [thread:$0]  %s2, 128, %s490, [#allocation3]
        $region16: #{tpu_custom_call.1} parent=11 // pred_fallthru
          _
        // Predicated region
        $region17: #{tpu_custom_call.1} parent=11 // pred_check
          %p493 = pneg %p138
        $region18: #{tpu_custom_call.1} parent=11 // pred_check_branch
          %495 = sbr.rel (%p493) target = $region20
        $region19: #{tpu_custom_call.1} parent=11 // pred_region
          _
        $region20: #{tpu_custom_call.1} parent=11 // pred_fallthru
          _
        // Predicated region
        $region21: #{tpu_custom_call.1} parent=11 // pred_check
          %p496 = pneg %p159
        $region22: #{tpu_custom_call.1} parent=11 // pred_check_branch
          %498 = sbr.rel (%p496) target = $region24
        $region23: #{tpu_custom_call.1} parent=11 // pred_region
          _
        $region24: #{tpu_custom_call.1} parent=11 // pred_fallthru
          _
        // Predicated region
        $region25: #{tpu_custom_call.1} parent=11 // pred_check
          %p499 = pneg %p180
        $region26: #{tpu_custom_call.1} parent=11 // pred_check_branch
          %501 = sbr.rel (%p499) target = $region28
        $region27: #{tpu_custom_call.1} parent=11 // pred_region
          _
        $region28: #{tpu_custom_call.1} parent=11 // pred_fallthru
          _
        // Predicated region
        $region29: #{tpu_custom_call.1} parent=11 // pred_check
          %p502 = pneg %p201
        $region30: #{tpu_custom_call.1} parent=11 // pred_check_branch
          %504 = sbr.rel (%p502) target = $region32
        $region31: #{tpu_custom_call.1} parent=11 // pred_region
          _
        $region32: #{tpu_custom_call.1} parent=11 // pred_fallthru
          _
        // Predicated region
        $region33: #{tpu_custom_call.1} parent=11 // pred_check
          %p505 = pneg %p222
        $region34: #{tpu_custom_call.1} parent=11 // pred_check_branch
          %507 = sbr.rel (%p505) target = $region36
        $region35: #{tpu_custom_call.1} parent=11 // pred_region
          _
        $region36: #{tpu_custom_call.1} parent=11 // pred_fallthru
          _
        // Predicated region
        $region37: #{tpu_custom_call.1} parent=11 // pred_check
          %p508 = pneg %p243
        $region38: #{tpu_custom_call.1} parent=11 // pred_check_branch
          %510 = sbr.rel (%p508) target = $region40
        $region39: #{tpu_custom_call.1} parent=11 // pred_region
          _
        $region40: #{tpu_custom_call.1} parent=11 // pred_fallthru
          _
        // Predicated region
        $region41: #{tpu_custom_call.1} parent=11 // pred_check
          %p511 = pneg %p264
        $region42: #{tpu_custom_call.1} parent=11 // pred_check_branch
          %513 = sbr.rel (%p511) target = $region44
        $region43: #{tpu_custom_call.1} parent=11 // pred_region
          _
        $region44: #{tpu_custom_call.1} parent=11 // pred_fallthru
          _
        // Predicated region
        $region45: #{tpu_custom_call.1} parent=11 // pred_check
          %p514 = pneg %p285
        $region46: #{tpu_custom_call.1} parent=11 // pred_check_branch
          %516 = sbr.rel (%p514) target = $region48
        $region47: #{tpu_custom_call.1} parent=11 // pred_region
          _
        $region48: #{tpu_custom_call.1} parent=11 // pred_fallthru
          _
        // Predicated region
        $region49: #{tpu_custom_call.1} parent=11 // pred_check
          %p517 = pneg %p306
        $region50: #{tpu_custom_call.1} parent=11 // pred_check_branch
          %519 = sbr.rel (%p517) target = $region52
        $region51: #{tpu_custom_call.1} parent=11 // pred_region
          _
        $region52: #{tpu_custom_call.1} parent=11 // pred_fallthru
          _
        // Predicated region
        $region53: #{tpu_custom_call.1} parent=11 // pred_check
          %p520 = pneg %p327
        $region54: #{tpu_custom_call.1} parent=11 // pred_check_branch
          %522 = sbr.rel (%p520) target = $region56
        $region55: #{tpu_custom_call.1} parent=11 // pred_region
          _
        $region56: #{tpu_custom_call.1} parent=11 // pred_fallthru
          _
        // Predicated region
        $region57: #{tpu_custom_call.1} parent=11 // pred_check
          %p523 = pneg %p348
        $region58: #{tpu_custom_call.1} parent=11 // pred_check_branch
          %525 = sbr.rel (%p523) target = $region60
        $region59: #{tpu_custom_call.1} parent=11 // pred_region
          _
        $region60: #{tpu_custom_call.1} parent=11 // pred_fallthru
          _
        // Predicated region
        $region61: #{tpu_custom_call.1} parent=11 // pred_check
          %p526 = pneg %p369
        $region62: #{tpu_custom_call.1} parent=11 // pred_check_branch
          %528 = sbr.rel (%p526) target = $region64
        $region63: #{tpu_custom_call.1} parent=11 // pred_region
          _
        $region64: #{tpu_custom_call.1} parent=11 // pred_fallthru
          _
        // Predicated region
        $region65: #{tpu_custom_call.1} parent=11 // pred_check
          %p529 = pneg %p390
        $region66: #{tpu_custom_call.1} parent=11 // pred_check_branch
          %531 = sbr.rel (%p529) target = $region68
        $region67: #{tpu_custom_call.1} parent=11 // pred_region
          _
        $region68: #{tpu_custom_call.1} parent=11 // pred_fallthru
          _
        // Predicated region
        $region69: #{tpu_custom_call.1} parent=11 // pred_check
          %p532 = pneg %p411
        $region70: #{tpu_custom_call.1} parent=11 // pred_check_branch
          %534 = sbr.rel (%p532) target = $region72
        $region71: #{tpu_custom_call.1} parent=11 // pred_region
          _
        $region72: #{tpu_custom_call.1} parent=11 // pred_fallthru
          _
      $region12: #{tpu_custom_call.1} parent=5 // pred_fallthru
        _
      %p535 = scmp.lt.s32.totalorder %s32, 2
      // Predicated region
      $region73: #{tpu_custom_call.1} parent=5 // pred_check
        %p536 = pneg %p535
      $region74: #{tpu_custom_call.1} parent=5 // pred_check_branch
        %538 = sbr.rel (%p536) target = $region76
      $region75: #{tpu_custom_call.1} parent=5 // pred_region
        // Predicated region
        $region77: #{tpu_custom_call.1} parent=75 // pred_check
          %p539 = pneg %p64
        $region78: #{tpu_custom_call.1} parent=75 // pred_check_branch
          %541 = sbr.rel (%p539) target = $region80
        $region79: #{tpu_custom_call.1} parent=75 // pred_region
          %p542 = scmp.lt.s32.totalorder %s39, 1
          %s543 = scalar_select %p542, %s39, 1
          %s544 = smul.addr %s543, 8
          %s545 = scalar_lea.vmem %s0, %s544
        $region80: #{tpu_custom_call.1} parent=75 // pred_fallthru
          _
        // Predicated region
        $region81: #{tpu_custom_call.1} parent=75 // pred_check
          %p546 = pneg %p90
        $region82: #{tpu_custom_call.1} parent=75 // pred_check_branch
          %548 = sbr.rel (%p546) target = $region84
        $region83: #{tpu_custom_call.1} parent=75 // pred_region
          %p549 = scmp.lt.s32.totalorder %s39, 1
          %s550 = scalar_select %p549, %s39, 1
          %s551 = scalar_lea.vmem %s1, %s550
        $region84: #{tpu_custom_call.1} parent=75 // pred_fallthru
          _
      $region76: #{tpu_custom_call.1} parent=5 // pred_fallthru
        _
      %p552 = scmp.le.s32.totalorder 1, %s32
      %p553 = scmp.lt.s32.totalorder %s32, 3
      %p554 = pnand %p552, %p553
      %p555 = pneg %p554
      // Predicated region
      $region85: #{tpu_custom_call.1} parent=5 // pred_check
        _
      $region86: #{tpu_custom_call.1} parent=5 // pred_check_branch
        %557 = sbr.rel (%p554) target = $region88
      $region87: #{tpu_custom_call.1} parent=5 // pred_region
        %s558 = ssub.s32 %s32, 1
        // Predicated region
        $region89: #{tpu_custom_call.1} parent=87 // pred_check
          %p559 = pneg %p117
        $region90: #{tpu_custom_call.1} parent=87 // pred_check_branch
          %561 = sbr.rel (%p559) target = $region92
        $region91: #{tpu_custom_call.1} parent=87 // pred_region
          %562 = dma.done [#allocation3], 128
        $region92: #{tpu_custom_call.1} parent=87 // pred_fallthru
          _
        %p563 = scmp.lt.s32.totalorder %s41, 1
        %s564 = scalar_select %p563, %s41, 1
        %s565 = smul.addr %s564, 8
        %s566 = scalar_lea.vmem %s0, %s565
        %p567 = pneg %p70
        %p568 = pneg %p67
        %p569 = scmp.lt.s32.totalorder %s41, 1
        %s570 = scalar_select %p569, %s41, 1
        %s571 = scalar_lea.vmem %s1, %s570
        %p572 = pneg %p96
        %p573 = pneg %p93
        %p574 = pneg %p117
        %p575 = pneg %p114
        %p576 = pneg %p138
        %p577 = pneg %p135
        %p578 = pneg %p159
        %p579 = pneg %p156
        %p580 = pneg %p180
        %p581 = pneg %p177
        %p582 = pneg %p201
        %p583 = pneg %p198
        %p584 = pneg %p222
        %p585 = pneg %p219
        %p586 = pneg %p243
        %p587 = pneg %p240
        %p588 = pneg %p264
        %p589 = pneg %p261
        %p590 = pneg %p285
        %p591 = pneg %p282
        %p592 = pneg %p306
        %p593 = pneg %p303
        %p594 = pneg %p327
        %p595 = pneg %p324
        %p596 = pneg %p348
        %p597 = pneg %p345
        %p598 = pneg %p369
        %p599 = pneg %p366
        %p600 = pneg %p390
        %p601 = pneg %p387
        %p602 = pneg %p411
        %p603 = pneg %p408
        %p604 = pneg %p439
        %p605 = pneg %p436
        %s606 = sand.u32 %s426, 1
        %s607 = scalar_lea.sflag [#allocation4], %s606
        %s608 = sand.u32 %s426, 1
        %s609 = smul.addr %s608, 8
        %s610 = scalar_lea.vmem [#allocation5], %s609
        %p611 = pneg %p467
        %p612 = pneg %p464
        %s613 = sand.u32 %s454, 1
        %s614 = scalar_lea.sflag [#allocation7], %s613
        %s615 = sand.u32 %s454, 1
        %s616 = smul.addr %s615, 32
        %s617 = scalar_lea.vmem [#allocation6], %s616
        %p618 = scmp.lt.s32.totalorder %s41, 1
        %s619 = scalar_select %p618, %s41, 1
        %s620 = smul.addr %s619, 8
        %s621 = scalar_lea.vmem %s0, %s620
        %p622 = scmp.lt.s32.totalorder %s41, 1
        %s623 = scalar_select %p622, %s41, 1
        %s624 = scalar_lea.vmem %s1, %s623
        %s626 = smul.u32 %s42, 8
        %v627 = vld [vmem:[%s621] sm:$0xff]
        %v628 = vld [vmem:[#allocation2] sm:$0xff]
        %v629 = vadd.f32 %v627, %v628
        %v630 = vld [vmem:[%s3] sm:$0x1]
        %v631 = vld [vmem:[%s4] sm:$0x1]
        %vm632 = vcmask 261120
        %v633 = vsel %vm632, %v629, 0.0
        %634 = vadd.xlane.f32.xlu0 %v633
        %v635 = vpop.xlane.xlu0 %634
        %v636 = vrcp.pop 32.0
        %v637 = vmul.f32 %v635, %v636
        %v638 = vsub.f32 %v629, %v637
        %v639 = vmul.f32 %v638, %v638
        %v640 = vsel %vm632, %v639, 0.0
        %641 = vadd.xlane.f32.xlu0 %v640
        %v642 = vpop.xlane.xlu0 %641
        %v643 = vmul.f32 %v642, %v636
        %v644 = vadd.f32 %v643, 1e-05
        %v645 = vrsqrt.pop %v644
        %v646 = vmul.f32 %v638, %v645
        %v648 = vlaneseq
        %v649 = vshrl.u32 %v648, 7
        %v650 = vsub.s32 0, %v649
        %v651 = vrot.slane %v630, %v650
        %v653 = vmul.f32 %v646, %v651
        %v655 = vlaneseq
        %v656 = vshrl.u32 %v655, 7
        %v657 = vsub.s32 0, %v656
        %v658 = vrot.slane %v631, %v657
        %v660 = vadd.f32 %v653, %v658
        %s661 = scalar_lea.vmem %s621, %s626
        %v662 = vld [vmem:[%s661] sm:$0xff]
        %s663 = scalar_lea.vmem [#allocation2], %s626
        %v664 = vld [vmem:[%s663] sm:$0xff]
        %v665 = vadd.f32 %v662, %v664
        %v666 = vsel %vm632, %v665, 0.0
        %667 = vadd.xlane.f32.xlu0 %v666
        %v668 = vpop.xlane.xlu0 %667
        %v669 = vmul.f32 %v668, %v636
        %v670 = vsub.f32 %v665, %v669
        %v671 = vmul.f32 %v670, %v670
        %v672 = vsel %vm632, %v671, 0.0
        %673 = vadd.xlane.f32.xlu0 %v672
        %v674 = vpop.xlane.xlu0 %673
        %v675 = vmul.f32 %v674, %v636
        %v676 = vadd.f32 %v675, 1e-05
        %v677 = vrsqrt.pop %v676
        %v678 = vmul.f32 %v670, %v677
        %v679 = vmul.f32 %v678, %v651
        %v680 = vadd.f32 %v679, %v658
        %v681 = vpack.c.bf16 %v680, %v680
        %v682 = vld [vmem:[%s5] sm:$0xf]
        %v683 = vld [vmem:[%s5 + $0x4] sm:$0xf]
        %v684 = vld [vmem:[%s5 + $0x8] sm:$0xf]
        %v685 = vld [vmem:[%s5 + $0xc] sm:$0xf]
        %v686 = vld [vmem:[%s6] sm:$0x1]
        %v688 = vlaneseq
        %v689 = vshrl.u32 %v688, 7
        %v690 = vsub.s32 0, %v689
        %v691 = vrot.slane %v686, %v690
        %v697 = vunpack.c.l.b16 %v682
        %v698 = vunpack.c.l.b16 %v683
        %v699 = vunpack.c.l.b16 %v684
        %v700 = vunpack.c.l.b16 %v685
        %v701 = vpack.c.b16 %v698, %v697
        %v702 = vpack.c.b16 %v700, %v699
        %v706 = vsel %vm632, %v681, 0
        %708 = vmatprep.subr.bf16.mxu0 0
        %709 = vmatpush1.bf16.msra.mxu0 %v701
        %710 = vmatprep.subr.bf16.mxu0 0
        %711 = vmatpush1.bf16.msra.mxu0 %v702
        %712 = vmatprep.subr.bf16.mxu0 0
        %713 = vmatpush1.bf16.msra.mxu0 0
        %714 = vmatprep.subr.bf16.mxu0 0
        %715 = vmatpush1.bf16.msra.mxu0 0
        %716 = vmatprep.subr.bf16.mxu0 0
        %717 = vmatpush1.bf16.msra.mxu0 0
        %718 = vmatprep.subr.bf16.mxu0 0
        %719 = vmatpush1.bf16.msra.mxu0 0
        %720 = vmatprep.subr.bf16.mxu0 0
        %721 = vmatpush1.bf16.msra.mxu0 0
        %722 = vmatprep.subr.bf16.mxu0 0
        %723 = vmatpush1.bf16.msra.mxu0 0
        %724 = vmatprep.subr.bf16.mxu0 0
        %725 = vmatpush1.bf16.msra.mxu0 0
        %726 = vmatprep.subr.bf16.mxu0 0
        %727 = vmatpush1.bf16.msra.mxu0 0
        %728 = vmatprep.subr.bf16.mxu0 0
        %729 = vmatpush1.bf16.msra.mxu0 0
        %730 = vmatprep.subr.bf16.mxu0 0
        %731 = vmatpush1.bf16.msra.mxu0 0
        %732 = vmatprep.subr.bf16.mxu0 0
        %733 = vmatpush1.bf16.msra.mxu0 0
        %734 = vmatprep.subr.bf16.mxu0 0
        %735 = vmatpush1.bf16.msra.mxu0 0
        %736 = vmatprep.subr.bf16.mxu0 0
        %737 = vmatpush1.bf16.msra.mxu0 0
        %738 = vmatprep.subr.bf16.mxu0 0
        %739 = vmatpush1.bf16.msra.mxu0 0
        %740 = vmatprep.mubr.bf16.mxu0 0
        %741 = vmatmul.mubr.bf16.gmra.mrb[0].mxu0 %v706
        %v742 = vpop.f32.mrb[0].mxu0
        %v743 = vadd.f32 %v691, %v742
        %v744 = vpop.f32.mrb[0].mxu0
        %v745 = vpop.f32.mrb[0].mxu0
        %v746 = vpop.f32.mrb[0].mxu0
        %747 = vdwg.mxu0
        %v748 = vpack.c.bf16 %v660, %v660
        %v749 = vld [vmem:[%s7] sm:$0xf]
        %v750 = vld [vmem:[%s7 + $0x4] sm:$0xf]
        %v751 = vld [vmem:[%s7 + $0x8] sm:$0xf]
        %v752 = vld [vmem:[%s7 + $0xc] sm:$0xf]
        %v753 = vld [vmem:[%s8] sm:$0x1]
        %v755 = vlaneseq
        %v756 = vshrl.u32 %v755, 7
        %v757 = vsub.s32 0, %v756
        %v758 = vrot.slane %v753, %v757
        %v764 = vunpack.c.l.b16 %v749
        %v765 = vunpack.c.l.b16 %v750
        %v766 = vunpack.c.l.b16 %v751
        %v767 = vunpack.c.l.b16 %v752
        %v768 = vpack.c.b16 %v765, %v764
        %v769 = vpack.c.b16 %v767, %v766
        %v773 = vsel %vm632, %v748, 0
        %775 = vmatprep.subr.bf16.mxu0 0
        %776 = vmatpush1.bf16.msra.mxu0 %v768
        %777 = vmatprep.subr.bf16.mxu0 0
        %778 = vmatpush1.bf16.msra.mxu0 %v769
        %779 = vmatprep.subr.bf16.mxu0 0
        %780 = vmatpush1.bf16.msra.mxu0 0
        %781 = vmatprep.subr.bf16.mxu0 0
        %782 = vmatpush1.bf16.msra.mxu0 0
        %783 = vmatprep.subr.bf16.mxu0 0
        %784 = vmatpush1.bf16.msra.mxu0 0
        %785 = vmatprep.subr.bf16.mxu0 0
        %786 = vmatpush1.bf16.msra.mxu0 0
        %787 = vmatprep.subr.bf16.mxu0 0
        %788 = vmatpush1.bf16.msra.mxu0 0
        %789 = vmatprep.subr.bf16.mxu0 0
        %790 = vmatpush1.bf16.msra.mxu0 0
        %791 = vmatprep.subr.bf16.mxu0 0
        %792 = vmatpush1.bf16.msra.mxu0 0
        %793 = vmatprep.subr.bf16.mxu0 0
        %794 = vmatpush1.bf16.msra.mxu0 0
        %795 = vmatprep.subr.bf16.mxu0 0
        %796 = vmatpush1.bf16.msra.mxu0 0
        %797 = vmatprep.subr.bf16.mxu0 0
        %798 = vmatpush1.bf16.msra.mxu0 0
        %799 = vmatprep.subr.bf16.mxu0 0
        %800 = vmatpush1.bf16.msra.mxu0 0
        %801 = vmatprep.subr.bf16.mxu0 0
        %802 = vmatpush1.bf16.msra.mxu0 0
        %803 = vmatprep.subr.bf16.mxu0 0
        %804 = vmatpush1.bf16.msra.mxu0 0
        %805 = vmatprep.subr.bf16.mxu0 0
        %806 = vmatpush1.bf16.msra.mxu0 0
        %807 = vmatprep.mubr.bf16.mxu0 0
        %808 = vmatmul.mubr.bf16.gmra.mrb[0].mxu0 %v773
        %v809 = vpop.f32.mrb[0].mxu0
        %v810 = vadd.f32 %v758, %v809
        %v811 = vpop.f32.mrb[0].mxu0
        %v812 = vpop.f32.mrb[0].mxu0
        %v813 = vpop.f32.mrb[0].mxu0
        %814 = vdwg.mxu0
        %816 = vrot.lane.b32.xlu0 %v743, 120
        %v817 = vpop.permute.xlu0 %816
        %819 = vrot.lane.b32.xlu0 %v743, 112
        %v820 = vpop.permute.xlu0 %819
        %822 = vrot.lane.b32.xlu0 %v743, 104
        %v823 = vpop.permute.xlu0 %822
        %v825 = vcombine.low %v743, %v820
        %v826 = vcombine.high %v743, %v820
        %v828 = vunpack.c.l.s4 1983009808
        %v829 = vunpack.c.0.s8 %v828
        %v830 = vlaneseq
        %v831 = vshrl.u32 %v830, 7
        %v832 = vsub.s32 %v829, %v831
        %v833 = vrot.slane %v825, %v832
        %v835 = vunpack.c.l.s4 1983009808
        %v836 = vunpack.c.0.s8 %v835
        %v837 = vlaneseq
        %v838 = vshrl.u32 %v837, 7
        %v839 = vsub.s32 %v836, %v838
        %v840 = vrot.slane %v826, %v839
        %v841 = vcombine.low %v817, %v823
        %v842 = vcombine.high %v817, %v823
        %v844 = vunpack.c.l.s4 1983009808
        %v845 = vunpack.c.0.s8 %v844
        %v846 = vlaneseq
        %v847 = vshrl.u32 %v846, 7
        %v848 = vsub.s32 %v845, %v847
        %v849 = vrot.slane %v841, %v848
        %v851 = vunpack.c.l.s4 1983009808
        %v852 = vunpack.c.0.s8 %v851
        %v853 = vlaneseq
        %v854 = vshrl.u32 %v853, 7
        %v855 = vsub.s32 %v852, %v854
        %v856 = vrot.slane %v842, %v855
        %v857 = vcombine.low %v833, %v849
        %v858 = vcombine.high %v833, %v849
        %v860 = vunpack.c.l.s4 1934713408
        %v861 = vunpack.c.0.s8 %v860
        %v862 = vlaneseq
        %v863 = vshrl.u32 %v862, 7
        %v864 = vsub.s32 %v861, %v863
        %v865 = vrot.slane %v857, %v864
        %v867 = vunpack.c.l.s4 1934713408
        %v868 = vunpack.c.0.s8 %v867
        %v869 = vlaneseq
        %v870 = vshrl.u32 %v869, 7
        %v871 = vsub.s32 %v868, %v870
        %v872 = vrot.slane %v858, %v871
        %v873 = vcombine.low %v840, %v856
        %v874 = vcombine.high %v840, %v856
        %v876 = vunpack.c.l.s4 1934713408
        %v877 = vunpack.c.0.s8 %v876
        %v878 = vlaneseq
        %v879 = vshrl.u32 %v878, 7
        %v880 = vsub.s32 %v877, %v879
        %v881 = vrot.slane %v873, %v880
        %v883 = vunpack.c.l.s4 1934713408
        %v884 = vunpack.c.0.s8 %v883
        %v885 = vlaneseq
        %v886 = vshrl.u32 %v885, 7
        %v887 = vsub.s32 %v884, %v886
        %v888 = vrot.slane %v874, %v887
        %v889 = vcombine.high %v865, 0.0
        %v890 = vcombine.high %v872, 0.0
        %v891 = vcombine.high %v881, 0.0
        %v892 = vcombine.high %v888, 0.0
        %v893 = vcombine.low %v865, %v872
        %v895 = vunpack.c.l.s4 1983009808
        %v896 = vunpack.c.0.s8 %v895
        %v897 = vlaneseq
        %v898 = vshrl.u32 %v897, 7
        %v899 = vsub.s32 %v896, %v898
        %v900 = vrot.slane %v893, %v899
        %v901 = vcombine.low %v889, %v890
        %v903 = vunpack.c.l.s4 1983009808
        %v904 = vunpack.c.0.s8 %v903
        %v905 = vlaneseq
        %v906 = vshrl.u32 %v905, 7
        %v907 = vsub.s32 %v904, %v906
        %v908 = vrot.slane %v901, %v907
        %v909 = vcombine.low %v881, %v888
        %v911 = vunpack.c.l.s4 1983009808
        %v912 = vunpack.c.0.s8 %v911
        %v913 = vlaneseq
        %v914 = vshrl.u32 %v913, 7
        %v915 = vsub.s32 %v912, %v914
        %v916 = vrot.slane %v909, %v915
        %v917 = vcombine.low %v891, %v892
        %v919 = vunpack.c.l.s4 1983009808
        %v920 = vunpack.c.0.s8 %v919
        %v921 = vlaneseq
        %v922 = vshrl.u32 %v921, 7
        %v923 = vsub.s32 %v920, %v922
        %v924 = vrot.slane %v917, %v923
        %v925 = vcombine.low %v900, %v908
        %v926 = vcombine.high %v900, %v908
        %v928 = vunpack.c.l.s4 1934713408
        %v929 = vunpack.c.0.s8 %v928
        %v930 = vlaneseq
        %v931 = vshrl.u32 %v930, 7
        %v932 = vsub.s32 %v929, %v931
        %v933 = vrot.slane %v925, %v932
        %v935 = vunpack.c.l.s4 1934713408
        %v936 = vunpack.c.0.s8 %v935
        %v937 = vlaneseq
        %v938 = vshrl.u32 %v937, 7
        %v939 = vsub.s32 %v936, %v938
        %v940 = vrot.slane %v926, %v939
        %v941 = vcombine.low %v916, %v924
        %v942 = vcombine.high %v916, %v924
        %v944 = vunpack.c.l.s4 1934713408
        %v945 = vunpack.c.0.s8 %v944
        %v946 = vlaneseq
        %v947 = vshrl.u32 %v946, 7
        %v948 = vsub.s32 %v945, %v947
        %v949 = vrot.slane %v941, %v948
        %v951 = vunpack.c.l.s4 1934713408
        %v952 = vunpack.c.0.s8 %v951
        %v953 = vlaneseq
        %v954 = vshrl.u32 %v953, 7
        %v955 = vsub.s32 %v952, %v954
        %v956 = vrot.slane %v942, %v955
        %v957 = vcombine.low %v933, %v949
        %v958 = vcombine.high %v933, %v949
        %v959 = vcombine.low %v940, %v956
        %v960 = vcombine.high %v940, %v956
        %v961 = vpack.c.bf16 %v957, %v957
        %v962 = vpack.c.bf16 %v958, %v958
        %v963 = vpack.c.bf16 %v959, %v959
        %v964 = vpack.c.bf16 %v960, %v960
        %966 = vrot.lane.b32.xlu0 %v810, 120
        %v967 = vpop.permute.xlu0 %966
        %969 = vrot.lane.b32.xlu0 %v810, 112
        %v970 = vpop.permute.xlu0 %969
        %972 = vrot.lane.b32.xlu0 %v810, 104
        %v973 = vpop.permute.xlu0 %972
        %v975 = vcombine.low %v810, %v970
        %v976 = vcombine.high %v810, %v970
        %v978 = vunpack.c.l.s4 1983009808
        %v979 = vunpack.c.0.s8 %v978
        %v980 = vlaneseq
        %v981 = vshrl.u32 %v980, 7
        %v982 = vsub.s32 %v979, %v981
        %v983 = vrot.slane %v975, %v982
        %v985 = vunpack.c.l.s4 1983009808
        %v986 = vunpack.c.0.s8 %v985
        %v987 = vlaneseq
        %v988 = vshrl.u32 %v987, 7
        %v989 = vsub.s32 %v986, %v988
        %v990 = vrot.slane %v976, %v989
        %v991 = vcombine.low %v967, %v973
        %v992 = vcombine.high %v967, %v973
        %v994 = vunpack.c.l.s4 1983009808
        %v995 = vunpack.c.0.s8 %v994
        %v996 = vlaneseq
        %v997 = vshrl.u32 %v996, 7
        %v998 = vsub.s32 %v995, %v997
        %v999 = vrot.slane %v991, %v998
        %v1001 = vunpack.c.l.s4 1983009808
        %v1002 = vunpack.c.0.s8 %v1001
        %v1003 = vlaneseq
        %v1004 = vshrl.u32 %v1003, 7
        %v1005 = vsub.s32 %v1002, %v1004
        %v1006 = vrot.slane %v992, %v1005
        %v1007 = vcombine.low %v983, %v999
        %v1008 = vcombine.high %v983, %v999
        %v1010 = vunpack.c.l.s4 1934713408
        %v1011 = vunpack.c.0.s8 %v1010
        %v1012 = vlaneseq
        %v1013 = vshrl.u32 %v1012, 7
        %v1014 = vsub.s32 %v1011, %v1013
        %v1015 = vrot.slane %v1007, %v1014
        %v1017 = vunpack.c.l.s4 1934713408
        %v1018 = vunpack.c.0.s8 %v1017
        %v1019 = vlaneseq
        %v1020 = vshrl.u32 %v1019, 7
        %v1021 = vsub.s32 %v1018, %v1020
        %v1022 = vrot.slane %v1008, %v1021
        %v1023 = vcombine.low %v990, %v1006
        %v1024 = vcombine.high %v990, %v1006
        %v1026 = vunpack.c.l.s4 1934713408
        %v1027 = vunpack.c.0.s8 %v1026
        %v1028 = vlaneseq
        %v1029 = vshrl.u32 %v1028, 7
        %v1030 = vsub.s32 %v1027, %v1029
        %v1031 = vrot.slane %v1023, %v1030
        %v1033 = vunpack.c.l.s4 1934713408
        %v1034 = vunpack.c.0.s8 %v1033
        %v1035 = vlaneseq
        %v1036 = vshrl.u32 %v1035, 7
        %v1037 = vsub.s32 %v1034, %v1036
        %v1038 = vrot.slane %v1024, %v1037
        %v1039 = vcombine.high %v1015, 0.0
        %v1040 = vcombine.high %v1022, 0.0
        %v1041 = vcombine.high %v1031, 0.0
        %v1042 = vcombine.high %v1038, 0.0
        %v1043 = vcombine.low %v1015, %v1022
        %v1045 = vunpack.c.l.s4 1983009808
        %v1046 = vunpack.c.0.s8 %v1045
        %v1047 = vlaneseq
        %v1048 = vshrl.u32 %v1047, 7
        %v1049 = vsub.s32 %v1046, %v1048
        %v1050 = vrot.slane %v1043, %v1049
        %v1051 = vcombine.low %v1039, %v1040
        %v1053 = vunpack.c.l.s4 1983009808
        %v1054 = vunpack.c.0.s8 %v1053
        %v1055 = vlaneseq
        %v1056 = vshrl.u32 %v1055, 7
        %v1057 = vsub.s32 %v1054, %v1056
        %v1058 = vrot.slane %v1051, %v1057
        %v1059 = vcombine.low %v1031, %v1038
        %v1061 = vunpack.c.l.s4 1983009808
        %v1062 = vunpack.c.0.s8 %v1061
        %v1063 = vlaneseq
        %v1064 = vshrl.u32 %v1063, 7
        %v1065 = vsub.s32 %v1062, %v1064
        %v1066 = vrot.slane %v1059, %v1065
        %v1067 = vcombine.low %v1041, %v1042
        %v1069 = vunpack.c.l.s4 1983009808
        %v1070 = vunpack.c.0.s8 %v1069
        %v1071 = vlaneseq
        %v1072 = vshrl.u32 %v1071, 7
        %v1073 = vsub.s32 %v1070, %v1072
        %v1074 = vrot.slane %v1067, %v1073
        %v1075 = vcombine.low %v1050, %v1058
        %v1076 = vcombine.high %v1050, %v1058
        %v1078 = vunpack.c.l.s4 1934713408
        %v1079 = vunpack.c.0.s8 %v1078
        %v1080 = vlaneseq
        %v1081 = vshrl.u32 %v1080, 7
        %v1082 = vsub.s32 %v1079, %v1081
        %v1083 = vrot.slane %v1075, %v1082
        %v1085 = vunpack.c.l.s4 1934713408
        %v1086 = vunpack.c.0.s8 %v1085
        %v1087 = vlaneseq
        %v1088 = vshrl.u32 %v1087, 7
        %v1089 = vsub.s32 %v1086, %v1088
        %v1090 = vrot.slane %v1076, %v1089
        %v1091 = vcombine.low %v1066, %v1074
        %v1092 = vcombine.high %v1066, %v1074
        %v1094 = vunpack.c.l.s4 1934713408
        %v1095 = vunpack.c.0.s8 %v1094
        %v1096 = vlaneseq
        %v1097 = vshrl.u32 %v1096, 7
        %v1098 = vsub.s32 %v1095, %v1097
        %v1099 = vrot.slane %v1091, %v1098
        %v1101 = vunpack.c.l.s4 1934713408
        %v1102 = vunpack.c.0.s8 %v1101
        %v1103 = vlaneseq
        %v1104 = vshrl.u32 %v1103, 7
        %v1105 = vsub.s32 %v1102, %v1104
        %v1106 = vrot.slane %v1092, %v1105
        %v1107 = vcombine.low %v1083, %v1099
        %v1108 = vcombine.high %v1083, %v1099
        %v1109 = vcombine.low %v1090, %v1106
        %v1110 = vcombine.high %v1090, %v1106
        %v1111 = vpack.c.bf16 %v1107, %v1107
        %v1112 = vpack.c.bf16 %v1108, %v1108
        %v1113 = vpack.c.bf16 %v1109, %v1109
        %v1114 = vpack.c.bf16 %v1110, %v1110
        %1115 = vrot.lane.b32.xlu0 %v810, 96
        %v1116 = vpop.permute.xlu0 %1115
        %1117 = vrot.lane.b32.xlu0 %v967, 96
        %v1118 = vpop.permute.xlu0 %1117
        %1119 = vrot.lane.b32.xlu0 %v970, 96
        %v1120 = vpop.permute.xlu0 %1119
        %1121 = vrot.lane.b32.xlu0 %v973, 96
        %v1122 = vpop.permute.xlu0 %1121
        %v1127 = vcombine.low %v1116, %v1120
        %v1128 = vcombine.high %v1116, %v1120
        %v1130 = vunpack.c.l.s4 1983009808
        %v1131 = vunpack.c.0.s8 %v1130
        %v1132 = vlaneseq
        %v1133 = vshrl.u32 %v1132, 7
        %v1134 = vsub.s32 %v1131, %v1133
        %v1135 = vrot.slane %v1127, %v1134
        %v1137 = vunpack.c.l.s4 1983009808
        %v1138 = vunpack.c.0.s8 %v1137
        %v1139 = vlaneseq
        %v1140 = vshrl.u32 %v1139, 7
        %v1141 = vsub.s32 %v1138, %v1140
        %v1142 = vrot.slane %v1128, %v1141
        %v1143 = vcombine.low %v1118, %v1122
        %v1144 = vcombine.high %v1118, %v1122
        %v1146 = vunpack.c.l.s4 1983009808
        %v1147 = vunpack.c.0.s8 %v1146
        %v1148 = vlaneseq
        %v1149 = vshrl.u32 %v1148, 7
        %v1150 = vsub.s32 %v1147, %v1149
        %v1151 = vrot.slane %v1143, %v1150
        %v1153 = vunpack.c.l.s4 1983009808
        %v1154 = vunpack.c.0.s8 %v1153
        %v1155 = vlaneseq
        %v1156 = vshrl.u32 %v1155, 7
        %v1157 = vsub.s32 %v1154, %v1156
        %v1158 = vrot.slane %v1144, %v1157
        %v1159 = vcombine.low %v1135, %v1151
        %v1160 = vcombine.high %v1135, %v1151
        %v1162 = vunpack.c.l.s4 1934713408
        %v1163 = vunpack.c.0.s8 %v1162
        %v1164 = vlaneseq
        %v1165 = vshrl.u32 %v1164, 7
        %v1166 = vsub.s32 %v1163, %v1165
        %v1167 = vrot.slane %v1159, %v1166
        %v1169 = vunpack.c.l.s4 1934713408
        %v1170 = vunpack.c.0.s8 %v1169
        %v1171 = vlaneseq
        %v1172 = vshrl.u32 %v1171, 7
        %v1173 = vsub.s32 %v1170, %v1172
        %v1174 = vrot.slane %v1160, %v1173
        %v1175 = vcombine.low %v1142, %v1158
        %v1176 = vcombine.high %v1142, %v1158
        %v1178 = vunpack.c.l.s4 1934713408
        %v1179 = vunpack.c.0.s8 %v1178
        %v1180 = vlaneseq
        %v1181 = vshrl.u32 %v1180, 7
        %v1182 = vsub.s32 %v1179, %v1181
        %v1183 = vrot.slane %v1175, %v1182
        %v1185 = vunpack.c.l.s4 1934713408
        %v1186 = vunpack.c.0.s8 %v1185
        %v1187 = vlaneseq
        %v1188 = vshrl.u32 %v1187, 7
        %v1189 = vsub.s32 %v1186, %v1188
        %v1190 = vrot.slane %v1176, %v1189
        %v1191 = vcombine.high %v1167, 0.0
        %v1192 = vcombine.high %v1174, 0.0
        %v1193 = vcombine.high %v1183, 0.0
        %v1194 = vcombine.high %v1190, 0.0
        %v1195 = vcombine.low %v1167, %v1174
        %v1197 = vunpack.c.l.s4 1983009808
        %v1198 = vunpack.c.0.s8 %v1197
        %v1199 = vlaneseq
        %v1200 = vshrl.u32 %v1199, 7
        %v1201 = vsub.s32 %v1198, %v1200
        %v1202 = vrot.slane %v1195, %v1201
        %v1203 = vcombine.low %v1191, %v1192
        %v1205 = vunpack.c.l.s4 1983009808
        %v1206 = vunpack.c.0.s8 %v1205
        %v1207 = vlaneseq
        %v1208 = vshrl.u32 %v1207, 7
        %v1209 = vsub.s32 %v1206, %v1208
        %v1210 = vrot.slane %v1203, %v1209
        %v1211 = vcombine.low %v1183, %v1190
        %v1213 = vunpack.c.l.s4 1983009808
        %v1214 = vunpack.c.0.s8 %v1213
        %v1215 = vlaneseq
        %v1216 = vshrl.u32 %v1215, 7
        %v1217 = vsub.s32 %v1214, %v1216
        %v1218 = vrot.slane %v1211, %v1217
        %v1219 = vcombine.low %v1193, %v1194
        %v1221 = vunpack.c.l.s4 1983009808
        %v1222 = vunpack.c.0.s8 %v1221
        %v1223 = vlaneseq
        %v1224 = vshrl.u32 %v1223, 7
        %v1225 = vsub.s32 %v1222, %v1224
        %v1226 = vrot.slane %v1219, %v1225
        %v1227 = vcombine.low %v1202, %v1210
        %v1228 = vcombine.high %v1202, %v1210
        %v1230 = vunpack.c.l.s4 1934713408
        %v1231 = vunpack.c.0.s8 %v1230
        %v1232 = vlaneseq
        %v1233 = vshrl.u32 %v1232, 7
        %v1234 = vsub.s32 %v1231, %v1233
        %v1235 = vrot.slane %v1227, %v1234
        %v1237 = vunpack.c.l.s4 1934713408
        %v1238 = vunpack.c.0.s8 %v1237
        %v1239 = vlaneseq
        %v1240 = vshrl.u32 %v1239, 7
        %v1241 = vsub.s32 %v1238, %v1240
        %v1242 = vrot.slane %v1228, %v1241
        %v1243 = vcombine.low %v1218, %v1226
        %v1244 = vcombine.high %v1218, %v1226
        %v1246 = vunpack.c.l.s4 1934713408
        %v1247 = vunpack.c.0.s8 %v1246
        %v1248 = vlaneseq
        %v1249 = vshrl.u32 %v1248, 7
        %v1250 = vsub.s32 %v1247, %v1249
        %v1251 = vrot.slane %v1243, %v1250
        %v1253 = vunpack.c.l.s4 1934713408
        %v1254 = vunpack.c.0.s8 %v1253
        %v1255 = vlaneseq
        %v1256 = vshrl.u32 %v1255, 7
        %v1257 = vsub.s32 %v1254, %v1256
        %v1258 = vrot.slane %v1244, %v1257
        %v1259 = vcombine.low %v1235, %v1251
        %v1260 = vcombine.high %v1235, %v1251
        %v1261 = vcombine.low %v1242, %v1258
        %v1262 = vcombine.high %v1242, %v1258
        %v1263 = vpack.c.bf16 %v1259, %v1259
        %v1264 = vpack.c.bf16 %v1260, %v1260
        %v1265 = vpack.c.bf16 %v1261, %v1261
        %v1266 = vpack.c.bf16 %v1262, %v1262
        %v1267 = vld [vmem:[%s624] sm:$0x1]
        %v1269 = vlaneseq
        %v1270 = vshrl.u32 %v1269, 7
        %v1271 = vsub.s32 0, %v1270
        %v1272 = vrot.slane %v1267, %v1271
        %vm1274 = vcmask 64512
        %v1276 = vsel %vm1274, %v961, 0
        %v1279 = vsel %vm1274, %v1111, 0
        %1281 = vmatprep.subr.bf16.mxu0 0
        %1282 = vmatpush1.bf16.xpose.msra.mxu0 %v1279
        %1283 = vmatprep.subr.bf16.mxu0 0
        %1284 = vmatpush1.bf16.xpose.msra.mxu0 0
        %1285 = vmatprep.subr.bf16.mxu0 0
        %1286 = vmatpush1.bf16.xpose.msra.mxu0 0
        %1287 = vmatprep.subr.bf16.mxu0 0
        %1288 = vmatpush1.bf16.xpose.msra.mxu0 0
        %1289 = vmatprep.subr.bf16.mxu0 0
        %1290 = vmatpush1.bf16.xpose.msra.mxu0 0
        %1291 = vmatprep.subr.bf16.mxu0 0
        %1292 = vmatpush1.bf16.xpose.msra.mxu0 0
        %1293 = vmatprep.subr.bf16.mxu0 0
        %1294 = vmatpush1.bf16.xpose.msra.mxu0 0
        %1295 = vmatprep.subr.bf16.mxu0 0
        %1296 = vmatpush1.bf16.xpose.msra.mxu0 0
        %1297 = vmatprep.subr.bf16.mxu0 0
        %1298 = vmatpush1.bf16.xpose.msra.mxu0 0
        %1299 = vmatprep.subr.bf16.mxu0 0
        %1300 = vmatpush1.bf16.xpose.msra.mxu0 0
        %1301 = vmatprep.subr.bf16.mxu0 0
        %1302 = vmatpush1.bf16.xpose.msra.mxu0 0
        %1303 = vmatprep.subr.bf16.mxu0 0
        %1304 = vmatpush1.bf16.xpose.msra.mxu0 0
        %1305 = vmatprep.subr.bf16.mxu0 0
        %1306 = vmatpush1.bf16.xpose.msra.mxu0 0
        %1307 = vmatprep.subr.bf16.mxu0 0
        %1308 = vmatpush1.bf16.xpose.msra.mxu0 0
        %1309 = vmatprep.subr.bf16.mxu0 0
        %1310 = vmatpush1.bf16.xpose.msra.mxu0 0
        %1311 = vmatprep.subr.bf16.mxu0 0
        %1312 = vmatpush1.bf16.xpose.msra.mxu0 0
        %1313 = vmatprep.mubr.bf16.mxu0 0
        %1314 = vmatmul.mubr.bf16.gmra.mrb[0].mxu0 %v1276
        %v1315 = vpop.f32.mrb[0].mxu0
        %v1316 = vadd.f32 %v1272, %v1315
        %v1317 = vpop.f32.mrb[0].mxu0
        %v1318 = vpop.f32.mrb[0].mxu0
        %v1319 = vpop.f32.mrb[0].mxu0
        %1320 = vdwg.mxu0
        %v1322 = vsel %vm1274, %v962, 0
        %v1325 = vsel %vm1274, %v1112, 0
        %1327 = vmatprep.subr.bf16.mxu0 0
        %1328 = vmatpush1.bf16.xpose.msra.mxu0 %v1325
        %1329 = vmatprep.subr.bf16.mxu0 0
        %1330 = vmatpush1.bf16.xpose.msra.mxu0 0
        %1331 = vmatprep.subr.bf16.mxu0 0
        %1332 = vmatpush1.bf16.xpose.msra.mxu0 0
        %1333 = vmatprep.subr.bf16.mxu0 0
        %1334 = vmatpush1.bf16.xpose.msra.mxu0 0
        %1335 = vmatprep.subr.bf16.mxu0 0
        %1336 = vmatpush1.bf16.xpose.msra.mxu0 0
        %1337 = vmatprep.subr.bf16.mxu0 0
        %1338 = vmatpush1.bf16.xpose.msra.mxu0 0
        %1339 = vmatprep.subr.bf16.mxu0 0
        %1340 = vmatpush1.bf16.xpose.msra.mxu0 0
        %1341 = vmatprep.subr.bf16.mxu0 0
        %1342 = vmatpush1.bf16.xpose.msra.mxu0 0
        %1343 = vmatprep.subr.bf16.mxu0 0
        %1344 = vmatpush1.bf16.xpose.msra.mxu0 0
        %1345 = vmatprep.subr.bf16.mxu0 0
        %1346 = vmatpush1.bf16.xpose.msra.mxu0 0
        %1347 = vmatprep.subr.bf16.mxu0 0
        %1348 = vmatpush1.bf16.xpose.msra.mxu0 0
        %1349 = vmatprep.subr.bf16.mxu0 0
        %1350 = vmatpush1.bf16.xpose.msra.mxu0 0
        %1351 = vmatprep.subr.bf16.mxu0 0
        %1352 = vmatpush1.bf16.xpose.msra.mxu0 0
        %1353 = vmatprep.subr.bf16.mxu0 0
        %1354 = vmatpush1.bf16.xpose.msra.mxu0 0
        %1355 = vmatprep.subr.bf16.mxu0 0
        %1356 = vmatpush1.bf16.xpose.msra.mxu0 0
        %1357 = vmatprep.subr.bf16.mxu0 0
        %1358 = vmatpush1.bf16.xpose.msra.mxu0 0
        %1359 = vmatprep.mubr.bf16.mxu0 0
        %1360 = vmatmul.mubr.bf16.gmra.mrb[0].mxu0 %v1322
        %v1361 = vpop.f32.mrb[0].mxu0
        %v1362 = vadd.f32 %v1272, %v1361
        %v1363 = vpop.f32.mrb[0].mxu0
        %v1364 = vpop.f32.mrb[0].mxu0
        %v1365 = vpop.f32.mrb[0].mxu0
        %1366 = vdwg.mxu0
        %v1368 = vsel %vm1274, %v963, 0
        %v1371 = vsel %vm1274, %v1113, 0
        %1373 = vmatprep.subr.bf16.mxu0 0
        %1374 = vmatpush1.bf16.xpose.msra.mxu0 %v1371
        %1375 = vmatprep.subr.bf16.mxu0 0
        %1376 = vmatpush1.bf16.xpose.msra.mxu0 0
        %1377 = vmatprep.subr.bf16.mxu0 0
        %1378 = vmatpush1.bf16.xpose.msra.mxu0 0
        %1379 = vmatprep.subr.bf16.mxu0 0
        %1380 = vmatpush1.bf16.xpose.msra.mxu0 0
        %1381 = vmatprep.subr.bf16.mxu0 0
        %1382 = vmatpush1.bf16.xpose.msra.mxu0 0
        %1383 = vmatprep.subr.bf16.mxu0 0
        %1384 = vmatpush1.bf16.xpose.msra.mxu0 0
        %1385 = vmatprep.subr.bf16.mxu0 0
        %1386 = vmatpush1.bf16.xpose.msra.mxu0 0
        %1387 = vmatprep.subr.bf16.mxu0 0
        %1388 = vmatpush1.bf16.xpose.msra.mxu0 0
        %1389 = vmatprep.subr.bf16.mxu0 0
        %1390 = vmatpush1.bf16.xpose.msra.mxu0 0
        %1391 = vmatprep.subr.bf16.mxu0 0
        %1392 = vmatpush1.bf16.xpose.msra.mxu0 0
        %1393 = vmatprep.subr.bf16.mxu0 0
        %1394 = vmatpush1.bf16.xpose.msra.mxu0 0
        %1395 = vmatprep.subr.bf16.mxu0 0
        %1396 = vmatpush1.bf16.xpose.msra.mxu0 0
        %1397 = vmatprep.subr.bf16.mxu0 0
        %1398 = vmatpush1.bf16.xpose.msra.mxu0 0
        %1399 = vmatprep.subr.bf16.mxu0 0
        %1400 = vmatpush1.bf16.xpose.msra.mxu0 0
        %1401 = vmatprep.subr.bf16.mxu0 0
        %1402 = vmatpush1.bf16.xpose.msra.mxu0 0
        %1403 = vmatprep.subr.bf16.mxu0 0
        %1404 = vmatpush1.bf16.xpose.msra.mxu0 0
        %1405 = vmatprep.mubr.bf16.mxu0 0
        %1406 = vmatmul.mubr.bf16.gmra.mrb[0].mxu0 %v1368
        %v1407 = vpop.f32.mrb[0].mxu0
        %v1408 = vadd.f32 %v1272, %v1407
        %v1409 = vpop.f32.mrb[0].mxu0
        %v1410 = vpop.f32.mrb[0].mxu0
        %v1411 = vpop.f32.mrb[0].mxu0
        %1412 = vdwg.mxu0
        %v1414 = vsel %vm1274, %v964, 0
        %v1417 = vsel %vm1274, %v1114, 0
        %1419 = vmatprep.subr.bf16.mxu0 0
        %1420 = vmatpush1.bf16.xpose.msra.mxu0 %v1417
        %1421 = vmatprep.subr.bf16.mxu0 0
        %1422 = vmatpush1.bf16.xpose.msra.mxu0 0
        %1423 = vmatprep.subr.bf16.mxu0 0
        %1424 = vmatpush1.bf16.xpose.msra.mxu0 0
        %1425 = vmatprep.subr.bf16.mxu0 0
        %1426 = vmatpush1.bf16.xpose.msra.mxu0 0
        %1427 = vmatprep.subr.bf16.mxu0 0
        %1428 = vmatpush1.bf16.xpose.msra.mxu0 0
        %1429 = vmatprep.subr.bf16.mxu0 0
        %1430 = vmatpush1.bf16.xpose.msra.mxu0 0
        %1431 = vmatprep.subr.bf16.mxu0 0
        %1432 = vmatpush1.bf16.xpose.msra.mxu0 0
        %1433 = vmatprep.subr.bf16.mxu0 0
        %1434 = vmatpush1.bf16.xpose.msra.mxu0 0
        %1435 = vmatprep.subr.bf16.mxu0 0
        %1436 = vmatpush1.bf16.xpose.msra.mxu0 0
        %1437 = vmatprep.subr.bf16.mxu0 0
        %1438 = vmatpush1.bf16.xpose.msra.mxu0 0
        %1439 = vmatprep.subr.bf16.mxu0 0
        %1440 = vmatpush1.bf16.xpose.msra.mxu0 0
        %1441 = vmatprep.subr.bf16.mxu0 0
        %1442 = vmatpush1.bf16.xpose.msra.mxu0 0
        %1443 = vmatprep.subr.bf16.mxu0 0
        %1444 = vmatpush1.bf16.xpose.msra.mxu0 0
        %1445 = vmatprep.subr.bf16.mxu0 0
        %1446 = vmatpush1.bf16.xpose.msra.mxu0 0
        %1447 = vmatprep.subr.bf16.mxu0 0
        %1448 = vmatpush1.bf16.xpose.msra.mxu0 0
        %1449 = vmatprep.subr.bf16.mxu0 0
        %1450 = vmatpush1.bf16.xpose.msra.mxu0 0
        %1451 = vmatprep.mubr.bf16.mxu0 0
        %1452 = vmatmul.mubr.bf16.gmra.mrb[0].mxu0 %v1414
        %v1453 = vpop.f32.mrb[0].mxu0
        %v1454 = vadd.f32 %v1272, %v1453
        %v1455 = vpop.f32.mrb[0].mxu0
        %v1456 = vpop.f32.mrb[0].mxu0
        %v1457 = vpop.f32.mrb[0].mxu0
        %1458 = vdwg.mxu0
        %v1459 = vsel %vm1274, %v1316, -inf
        %1460 = vmax.xlane.f32.xlu0 %v1459
        %v1461 = vpop.xlane.xlu0 %1460
        %v1462 = vsel %vm1274, %v1362, -inf
        %1463 = vmax.xlane.f32.xlu0 %v1462
        %v1464 = vpop.xlane.xlu0 %1463
        %v1465 = vsel %vm1274, %v1408, -inf
        %1466 = vmax.xlane.f32.xlu0 %v1465
        %v1467 = vpop.xlane.xlu0 %1466
        %v1468 = vsel %vm1274, %v1454, -inf
        %1469 = vmax.xlane.f32.xlu0 %v1468
        %v1470 = vpop.xlane.xlu0 %1469
        %v1471 = vsub.f32 %v1316, %v1461
        %v1472 = vsub.f32 %v1362, %v1464
        %v1473 = vsub.f32 %v1408, %v1467
        %v1474 = vsub.f32 %v1454, %v1470
        %v1475 = vmul.f32 %v1471, 1.442695
        %v1476 = vpow.pop %v1475
        %v1477 = vmul.f32 %v1472, 1.442695
        %v1478 = vpow.pop %v1477
        %v1479 = vmul.f32 %v1473, 1.442695
        %v1480 = vpow.pop %v1479
        %v1481 = vmul.f32 %v1474, 1.442695
        %v1482 = vpow.pop %v1481
        %v1483 = vsel %vm1274, %v1476, 0.0
        %1484 = vadd.xlane.f32.xlu0 %v1483
        %v1485 = vpop.xlane.xlu0 %1484
        %v1486 = vsel %vm1274, %v1478, 0.0
        %1487 = vadd.xlane.f32.xlu0 %v1486
        %v1488 = vpop.xlane.xlu0 %1487
        %v1489 = vsel %vm1274, %v1480, 0.0
        %1490 = vadd.xlane.f32.xlu0 %v1489
        %v1491 = vpop.xlane.xlu0 %1490
        %v1492 = vsel %vm1274, %v1482, 0.0
        %1493 = vadd.xlane.f32.xlu0 %v1492
        %v1494 = vpop.xlane.xlu0 %1493
        %v1495 = vrcp.pop %v1485
        %v1496 = vmul.f32 1.0, %v1495
        %v1497 = vrcp.pop %v1488
        %v1498 = vmul.f32 1.0, %v1497
        %v1499 = vrcp.pop %v1491
        %v1500 = vmul.f32 1.0, %v1499
        %v1501 = vrcp.pop %v1494
        %v1502 = vmul.f32 1.0, %v1501
        %v1503 = vmul.f32 %v1476, %v1496
        %v1504 = vmul.f32 %v1478, %v1498
        %v1505 = vmul.f32 %v1480, %v1500
        %v1506 = vmul.f32 %v1482, %v1502
        %1507 = vst.msk [vmem:[%s617] sm:$0xff] %vm1274, %v1503
        %1508 = vst.msk [vmem:[%s617 + $0x8] sm:$0xff] %vm1274, %v1504
        %1509 = vst.msk [vmem:[%s617 + $0x10] sm:$0xff] %vm1274, %v1505
        %1510 = vst.msk [vmem:[%s617 + $0x18] sm:$0xff] %vm1274, %v1506
        %v1511 = vpack.c.bf16 %v1503, %v1503
        %v1512 = vpack.c.bf16 %v1504, %v1504
        %v1513 = vpack.c.bf16 %v1505, %v1505
        %v1514 = vpack.c.bf16 %v1506, %v1506
        %v1516 = vsel %vm1274, %v1511, 0
        %vm1518 = vcmask 1043456
        %v1520 = vsel %vm1518, %v1263, 0
        %1522 = vmatprep.subr.bf16.mxu0 0
        %1523 = vmatpush1.bf16.msra.mxu0 %v1520
        %1524 = vmatprep.subr.bf16.mxu0 0
        %1525 = vmatpush1.bf16.msra.mxu0 0
        %1526 = vmatprep.subr.bf16.mxu0 0
        %1527 = vmatpush1.bf16.msra.mxu0 0
        %1528 = vmatprep.subr.bf16.mxu0 0
        %1529 = vmatpush1.bf16.msra.mxu0 0
        %1530 = vmatprep.subr.bf16.mxu0 0
        %1531 = vmatpush1.bf16.msra.mxu0 0
        %1532 = vmatprep.subr.bf16.mxu0 0
        %1533 = vmatpush1.bf16.msra.mxu0 0
        %1534 = vmatprep.subr.bf16.mxu0 0
        %1535 = vmatpush1.bf16.msra.mxu0 0
        %1536 = vmatprep.subr.bf16.mxu0 0
        %1537 = vmatpush1.bf16.msra.mxu0 0
        %1538 = vmatprep.subr.bf16.mxu0 0
        %1539 = vmatpush1.bf16.msra.mxu0 0
        %1540 = vmatprep.subr.bf16.mxu0 0
        %1541 = vmatpush1.bf16.msra.mxu0 0
        %1542 = vmatprep.subr.bf16.mxu0 0
        %1543 = vmatpush1.bf16.msra.mxu0 0
        %1544 = vmatprep.subr.bf16.mxu0 0
        %1545 = vmatpush1.bf16.msra.mxu0 0
        %1546 = vmatprep.subr.bf16.mxu0 0
        %1547 = vmatpush1.bf16.msra.mxu0 0
        %1548 = vmatprep.subr.bf16.mxu0 0
        %1549 = vmatpush1.bf16.msra.mxu0 0
        %1550 = vmatprep.subr.bf16.mxu0 0
        %1551 = vmatpush1.bf16.msra.mxu0 0
        %1552 = vmatprep.subr.bf16.mxu0 0
        %1553 = vmatpush1.bf16.msra.mxu0 0
        %1554 = vmatprep.mubr.bf16.mxu0 0
        %1555 = vmatmul.mubr.bf16.gmra.mrb[0].mxu0 %v1516
        %v1556 = vpop.f32.mrb[0].mxu0
        %v1557 = vadd.f32 0.0, %v1556
        %v1558 = vpop.f32.mrb[0].mxu0
        %v1559 = vpop.f32.mrb[0].mxu0
        %v1560 = vpop.f32.mrb[0].mxu0
        %1561 = vdwg.mxu0
        %v1563 = vsel %vm1274, %v1512, 0
        %v1566 = vsel %vm1518, %v1264, 0
        %1568 = vmatprep.subr.bf16.mxu0 0
        %1569 = vmatpush1.bf16.msra.mxu0 %v1566
        %1570 = vmatprep.subr.bf16.mxu0 0
        %1571 = vmatpush1.bf16.msra.mxu0 0
        %1572 = vmatprep.subr.bf16.mxu0 0
        %1573 = vmatpush1.bf16.msra.mxu0 0
        %1574 = vmatprep.subr.bf16.mxu0 0
        %1575 = vmatpush1.bf16.msra.mxu0 0
        %1576 = vmatprep.subr.bf16.mxu0 0
        %1577 = vmatpush1.bf16.msra.mxu0 0
        %1578 = vmatprep.subr.bf16.mxu0 0
        %1579 = vmatpush1.bf16.msra.mxu0 0
        %1580 = vmatprep.subr.bf16.mxu0 0
        %1581 = vmatpush1.bf16.msra.mxu0 0
        %1582 = vmatprep.subr.bf16.mxu0 0
        %1583 = vmatpush1.bf16.msra.mxu0 0
        %1584 = vmatprep.subr.bf16.mxu0 0
        %1585 = vmatpush1.bf16.msra.mxu0 0
        %1586 = vmatprep.subr.bf16.mxu0 0
        %1587 = vmatpush1.bf16.msra.mxu0 0
        %1588 = vmatprep.subr.bf16.mxu0 0
        %1589 = vmatpush1.bf16.msra.mxu0 0
        %1590 = vmatprep.subr.bf16.mxu0 0
        %1591 = vmatpush1.bf16.msra.mxu0 0
        %1592 = vmatprep.subr.bf16.mxu0 0
        %1593 = vmatpush1.bf16.msra.mxu0 0
        %1594 = vmatprep.subr.bf16.mxu0 0
        %1595 = vmatpush1.bf16.msra.mxu0 0
        %1596 = vmatprep.subr.bf16.mxu0 0
        %1597 = vmatpush1.bf16.msra.mxu0 0
        %1598 = vmatprep.subr.bf16.mxu0 0
        %1599 = vmatpush1.bf16.msra.mxu0 0
        %1600 = vmatprep.mubr.bf16.mxu0 0
        %1601 = vmatmul.mubr.bf16.gmra.mrb[0].mxu0 %v1563
        %v1602 = vpop.f32.mrb[0].mxu0
        %v1603 = vadd.f32 0.0, %v1602
        %v1604 = vpop.f32.mrb[0].mxu0
        %v1605 = vpop.f32.mrb[0].mxu0
        %v1606 = vpop.f32.mrb[0].mxu0
        %1607 = vdwg.mxu0
        %v1609 = vsel %vm1274, %v1513, 0
        %v1612 = vsel %vm1518, %v1265, 0
        %1614 = vmatprep.subr.bf16.mxu0 0
        %1615 = vmatpush1.bf16.msra.mxu0 %v1612
        %1616 = vmatprep.subr.bf16.mxu0 0
        %1617 = vmatpush1.bf16.msra.mxu0 0
        %1618 = vmatprep.subr.bf16.mxu0 0
        %1619 = vmatpush1.bf16.msra.mxu0 0
        %1620 = vmatprep.subr.bf16.mxu0 0
        %1621 = vmatpush1.bf16.msra.mxu0 0
        %1622 = vmatprep.subr.bf16.mxu0 0
        %1623 = vmatpush1.bf16.msra.mxu0 0
        %1624 = vmatprep.subr.bf16.mxu0 0
        %1625 = vmatpush1.bf16.msra.mxu0 0
        %1626 = vmatprep.subr.bf16.mxu0 0
        %1627 = vmatpush1.bf16.msra.mxu0 0
        %1628 = vmatprep.subr.bf16.mxu0 0
        %1629 = vmatpush1.bf16.msra.mxu0 0
        %1630 = vmatprep.subr.bf16.mxu0 0
        %1631 = vmatpush1.bf16.msra.mxu0 0
        %1632 = vmatprep.subr.bf16.mxu0 0
        %1633 = vmatpush1.bf16.msra.mxu0 0
        %1634 = vmatprep.subr.bf16.mxu0 0
        %1635 = vmatpush1.bf16.msra.mxu0 0
        %1636 = vmatprep.subr.bf16.mxu0 0
        %1637 = vmatpush1.bf16.msra.mxu0 0
        %1638 = vmatprep.subr.bf16.mxu0 0
        %1639 = vmatpush1.bf16.msra.mxu0 0
        %1640 = vmatprep.subr.bf16.mxu0 0
        %1641 = vmatpush1.bf16.msra.mxu0 0
        %1642 = vmatprep.subr.bf16.mxu0 0
        %1643 = vmatpush1.bf16.msra.mxu0 0
        %1644 = vmatprep.subr.bf16.mxu0 0
        %1645 = vmatpush1.bf16.msra.mxu0 0
        %1646 = vmatprep.mubr.bf16.mxu0 0
        %1647 = vmatmul.mubr.bf16.gmra.mrb[0].mxu0 %v1609
        %v1648 = vpop.f32.mrb[0].mxu0
        %v1649 = vadd.f32 0.0, %v1648
        %v1650 = vpop.f32.mrb[0].mxu0
        %v1651 = vpop.f32.mrb[0].mxu0
        %v1652 = vpop.f32.mrb[0].mxu0
        %1653 = vdwg.mxu0
        %v1655 = vsel %vm1274, %v1514, 0
        %v1658 = vsel %vm1518, %v1266, 0
        %1660 = vmatprep.subr.bf16.mxu0 0
        %1661 = vmatpush1.bf16.msra.mxu0 %v1658
        %1662 = vmatprep.subr.bf16.mxu0 0
        %1663 = vmatpush1.bf16.msra.mxu0 0
        %1664 = vmatprep.subr.bf16.mxu0 0
        %1665 = vmatpush1.bf16.msra.mxu0 0
        %1666 = vmatprep.subr.bf16.mxu0 0
        %1667 = vmatpush1.bf16.msra.mxu0 0
        %1668 = vmatprep.subr.bf16.mxu0 0
        %1669 = vmatpush1.bf16.msra.mxu0 0
        %1670 = vmatprep.subr.bf16.mxu0 0
        %1671 = vmatpush1.bf16.msra.mxu0 0
        %1672 = vmatprep.subr.bf16.mxu0 0
        %1673 = vmatpush1.bf16.msra.mxu0 0
        %1674 = vmatprep.subr.bf16.mxu0 0
        %1675 = vmatpush1.bf16.msra.mxu0 0
        %1676 = vmatprep.subr.bf16.mxu0 0
        %1677 = vmatpush1.bf16.msra.mxu0 0
        %1678 = vmatprep.subr.bf16.mxu0 0
        %1679 = vmatpush1.bf16.msra.mxu0 0
        %1680 = vmatprep.subr.bf16.mxu0 0
        %1681 = vmatpush1.bf16.msra.mxu0 0
        %1682 = vmatprep.subr.bf16.mxu0 0
        %1683 = vmatpush1.bf16.msra.mxu0 0
        %1684 = vmatprep.subr.bf16.mxu0 0
        %1685 = vmatpush1.bf16.msra.mxu0 0
        %1686 = vmatprep.subr.bf16.mxu0 0
        %1687 = vmatpush1.bf16.msra.mxu0 0
        %1688 = vmatprep.subr.bf16.mxu0 0
        %1689 = vmatpush1.bf16.msra.mxu0 0
        %1690 = vmatprep.subr.bf16.mxu0 0
        %1691 = vmatpush1.bf16.msra.mxu0 0
        %1692 = vmatprep.mubr.bf16.mxu0 0
        %1693 = vmatmul.mubr.bf16.gmra.mrb[0].mxu0 %v1655
        %v1694 = vpop.f32.mrb[0].mxu0
        %v1695 = vadd.f32 0.0, %v1694
        %v1696 = vpop.f32.mrb[0].mxu0
        %v1697 = vpop.f32.mrb[0].mxu0
        %v1698 = vpop.f32.mrb[0].mxu0
        %1699 = vdwg.mxu0
        %v1700 = vcombine.low %v1557, %v1649
        %v1701 = vcombine.high %v1557, %v1649
        %v1703 = vunpack.c.l.s4 1983009808
        %v1704 = vunpack.c.0.s8 %v1703
        %v1705 = vlaneseq
        %v1706 = vshrl.u32 %v1705, 7
        %v1707 = vsub.s32 %v1704, %v1706
        %v1708 = vrot.slane %v1700, %v1707
        %v1710 = vunpack.c.l.s4 1983009808
        %v1711 = vunpack.c.0.s8 %v1710
        %v1712 = vlaneseq
        %v1713 = vshrl.u32 %v1712, 7
        %v1714 = vsub.s32 %v1711, %v1713
        %v1715 = vrot.slane %v1701, %v1714
        %v1716 = vcombine.low %v1603, %v1695
        %v1717 = vcombine.high %v1603, %v1695
        %v1719 = vunpack.c.l.s4 1983009808
        %v1720 = vunpack.c.0.s8 %v1719
        %v1721 = vlaneseq
        %v1722 = vshrl.u32 %v1721, 7
        %v1723 = vsub.s32 %v1720, %v1722
        %v1724 = vrot.slane %v1716, %v1723
        %v1726 = vunpack.c.l.s4 1983009808
        %v1727 = vunpack.c.0.s8 %v1726
        %v1728 = vlaneseq
        %v1729 = vshrl.u32 %v1728, 7
        %v1730 = vsub.s32 %v1727, %v1729
        %v1731 = vrot.slane %v1717, %v1730
        %v1732 = vcombine.low %v1708, %v1724
        %v1733 = vcombine.high %v1708, %v1724
        %v1735 = vunpack.c.l.s4 1934713408
        %v1736 = vunpack.c.0.s8 %v1735
        %v1737 = vlaneseq
        %v1738 = vshrl.u32 %v1737, 7
        %v1739 = vsub.s32 %v1736, %v1738
        %v1740 = vrot.slane %v1732, %v1739
        %v1742 = vunpack.c.l.s4 1934713408
        %v1743 = vunpack.c.0.s8 %v1742
        %v1744 = vlaneseq
        %v1745 = vshrl.u32 %v1744, 7
        %v1746 = vsub.s32 %v1743, %v1745
        %v1747 = vrot.slane %v1733, %v1746
        %v1748 = vcombine.low %v1715, %v1731
        %v1749 = vcombine.high %v1715, %v1731
        %v1751 = vunpack.c.l.s4 1934713408
        %v1752 = vunpack.c.0.s8 %v1751
        %v1753 = vlaneseq
        %v1754 = vshrl.u32 %v1753, 7
        %v1755 = vsub.s32 %v1752, %v1754
        %v1756 = vrot.slane %v1748, %v1755
        %v1758 = vunpack.c.l.s4 1934713408
        %v1759 = vunpack.c.0.s8 %v1758
        %v1760 = vlaneseq
        %v1761 = vshrl.u32 %v1760, 7
        %v1762 = vsub.s32 %v1759, %v1761
        %v1763 = vrot.slane %v1749, %v1762
        %v1764 = vcombine.high %v1740, 0.0
        %v1765 = vcombine.high %v1747, 0.0
        %v1766 = vcombine.high %v1756, 0.0
        %v1767 = vcombine.high %v1763, 0.0
        %v1768 = vcombine.low %v1740, %v1747
        %v1770 = vunpack.c.l.s4 1983009808
        %v1771 = vunpack.c.0.s8 %v1770
        %v1772 = vlaneseq
        %v1773 = vshrl.u32 %v1772, 7
        %v1774 = vsub.s32 %v1771, %v1773
        %v1775 = vrot.slane %v1768, %v1774
        %v1776 = vcombine.low %v1764, %v1765
        %v1778 = vunpack.c.l.s4 1983009808
        %v1779 = vunpack.c.0.s8 %v1778
        %v1780 = vlaneseq
        %v1781 = vshrl.u32 %v1780, 7
        %v1782 = vsub.s32 %v1779, %v1781
        %v1783 = vrot.slane %v1776, %v1782
        %v1784 = vcombine.low %v1756, %v1763
        %v1786 = vunpack.c.l.s4 1983009808
        %v1787 = vunpack.c.0.s8 %v1786
        %v1788 = vlaneseq
        %v1789 = vshrl.u32 %v1788, 7
        %v1790 = vsub.s32 %v1787, %v1789
        %v1791 = vrot.slane %v1784, %v1790
        %v1792 = vcombine.low %v1766, %v1767
        %v1794 = vunpack.c.l.s4 1983009808
        %v1795 = vunpack.c.0.s8 %v1794
        %v1796 = vlaneseq
        %v1797 = vshrl.u32 %v1796, 7
        %v1798 = vsub.s32 %v1795, %v1797
        %v1799 = vrot.slane %v1792, %v1798
        %v1800 = vcombine.low %v1775, %v1783
        %v1801 = vcombine.high %v1775, %v1783
        %v1803 = vunpack.c.l.s4 1934713408
        %v1804 = vunpack.c.0.s8 %v1803
        %v1805 = vlaneseq
        %v1806 = vshrl.u32 %v1805, 7
        %v1807 = vsub.s32 %v1804, %v1806
        %v1808 = vrot.slane %v1800, %v1807
        %v1810 = vunpack.c.l.s4 1934713408
        %v1811 = vunpack.c.0.s8 %v1810
        %v1812 = vlaneseq
        %v1813 = vshrl.u32 %v1812, 7
        %v1814 = vsub.s32 %v1811, %v1813
        %v1815 = vrot.slane %v1801, %v1814
        %v1816 = vcombine.low %v1791, %v1799
        %v1817 = vcombine.high %v1791, %v1799
        %v1819 = vunpack.c.l.s4 1934713408
        %v1820 = vunpack.c.0.s8 %v1819
        %v1821 = vlaneseq
        %v1822 = vshrl.u32 %v1821, 7
        %v1823 = vsub.s32 %v1820, %v1822
        %v1824 = vrot.slane %v1816, %v1823
        %v1826 = vunpack.c.l.s4 1934713408
        %v1827 = vunpack.c.0.s8 %v1826
        %v1828 = vlaneseq
        %v1829 = vshrl.u32 %v1828, 7
        %v1830 = vsub.s32 %v1827, %v1829
        %v1831 = vrot.slane %v1817, %v1830
        %v1832 = vcombine.low %v1808, %v1824
        %v1833 = vcombine.high %v1808, %v1824
        %v1834 = vcombine.low %v1815, %v1831
        %v1835 = vcombine.high %v1815, %v1831
        %1837 = vrot.lane.b32.xlu0 %v1833, 8
        %v1838 = vpop.permute.xlu0 %1837
        %1841 = vrot.lane.b32.xlu0 %v1834, 16
        %v1842 = vpop.permute.xlu0 %1841
        %1845 = vrot.lane.b32.xlu0 %v1835, 24
        %v1846 = vpop.permute.xlu0 %1845
        %v1848 = vsel %vm1274, %v1832, %v1838
        %vm1849 = vcmask 130048
        %v1850 = vsel %vm1849, %v1848, %v1842
        %vm1851 = vcmask 195584
        %v1852 = vsel %vm1851, %v1850, %v1846
        %v1853 = vpack.c.bf16 %v1852, %v1852
        %v1854 = vld [vmem:[%s9] sm:$0xf]
        %v1855 = vld [vmem:[%s9 + $0x4] sm:$0xf]
        %v1856 = vld [vmem:[%s9 + $0x8] sm:$0xf]
        %v1857 = vld [vmem:[%s9 + $0xc] sm:$0xf]
        %v1858 = vld [vmem:[%s10] sm:$0x1]
        %v1860 = vlaneseq
        %v1861 = vshrl.u32 %v1860, 7
        %v1862 = vsub.s32 0, %v1861
        %v1863 = vrot.slane %v1858, %v1862
        %v1869 = vunpack.c.l.b16 %v1854
        %v1870 = vunpack.c.l.b16 %v1855
        %v1871 = vunpack.c.l.b16 %v1856
        %v1872 = vunpack.c.l.b16 %v1857
        %v1873 = vpack.c.b16 %v1870, %v1869
        %v1874 = vpack.c.b16 %v1872, %v1871
        %v1878 = vsel %vm632, %v1853, 0
        %1880 = vmatprep.subr.bf16.mxu0 0
        %1881 = vmatpush1.bf16.msra.mxu0 %v1873
        %1882 = vmatprep.subr.bf16.mxu0 0
        %1883 = vmatpush1.bf16.msra.mxu0 %v1874
        %1884 = vmatprep.subr.bf16.mxu0 0
        %1885 = vmatpush1.bf16.msra.mxu0 0
        %1886 = vmatprep.subr.bf16.mxu0 0
        %1887 = vmatpush1.bf16.msra.mxu0 0
        %1888 = vmatprep.subr.bf16.mxu0 0
        %1889 = vmatpush1.bf16.msra.mxu0 0
        %1890 = vmatprep.subr.bf16.mxu0 0
        %1891 = vmatpush1.bf16.msra.mxu0 0
        %1892 = vmatprep.subr.bf16.mxu0 0
        %1893 = vmatpush1.bf16.msra.mxu0 0
        %1894 = vmatprep.subr.bf16.mxu0 0
        %1895 = vmatpush1.bf16.msra.mxu0 0
        %1896 = vmatprep.subr.bf16.mxu0 0
        %1897 = vmatpush1.bf16.msra.mxu0 0
        %1898 = vmatprep.subr.bf16.mxu0 0
        %1899 = vmatpush1.bf16.msra.mxu0 0
        %1900 = vmatprep.subr.bf16.mxu0 0
        %1901 = vmatpush1.bf16.msra.mxu0 0
        %1902 = vmatprep.subr.bf16.mxu0 0
        %1903 = vmatpush1.bf16.msra.mxu0 0
        %1904 = vmatprep.subr.bf16.mxu0 0
        %1905 = vmatpush1.bf16.msra.mxu0 0
        %1906 = vmatprep.subr.bf16.mxu0 0
        %1907 = vmatpush1.bf16.msra.mxu0 0
        %1908 = vmatprep.subr.bf16.mxu0 0
        %1909 = vmatpush1.bf16.msra.mxu0 0
        %1910 = vmatprep.subr.bf16.mxu0 0
        %1911 = vmatpush1.bf16.msra.mxu0 0
        %1912 = vmatprep.mubr.bf16.mxu0 0
        %1913 = vmatmul.mubr.bf16.gmra.mrb[0].mxu0 %v1878
        %v1914 = vpop.f32.mrb[0].mxu0
        %v1915 = vadd.f32 %v1863, %v1914
        %v1916 = vpop.f32.mrb[0].mxu0
        %v1917 = vpop.f32.mrb[0].mxu0
        %v1918 = vpop.f32.mrb[0].mxu0
        %1919 = vdwg.mxu0
        %v1920 = vadd.f32 %v665, %v1915
        %v1921 = vld [vmem:[%s11] sm:$0x1]
        %v1922 = vld [vmem:[%s12] sm:$0x1]
        %v1923 = vsel %vm632, %v1920, 0.0
        %1924 = vadd.xlane.f32.xlu0 %v1923
        %v1925 = vpop.xlane.xlu0 %1924
        %v1926 = vmul.f32 %v1925, %v636
        %v1927 = vsub.f32 %v1920, %v1926
        %v1928 = vmul.f32 %v1927, %v1927
        %v1929 = vsel %vm632, %v1928, 0.0
        %1930 = vadd.xlane.f32.xlu0 %v1929
        %v1931 = vpop.xlane.xlu0 %1930
        %v1932 = vmul.f32 %v1931, %v636
        %v1933 = vadd.f32 %v1932, 1e-05
        %v1934 = vrsqrt.pop %v1933
        %v1935 = vmul.f32 %v1927, %v1934
        %v1937 = vlaneseq
        %v1938 = vshrl.u32 %v1937, 7
        %v1939 = vsub.s32 0, %v1938
        %v1940 = vrot.slane %v1921, %v1939
        %v1942 = vmul.f32 %v1935, %v1940
        %v1944 = vlaneseq
        %v1945 = vshrl.u32 %v1944, 7
        %v1946 = vsub.s32 0, %v1945
        %v1947 = vrot.slane %v1922, %v1946
        %v1949 = vadd.f32 %v1942, %v1947
        %v1950 = vpack.c.bf16 %v1949, %v1949
        %v1951 = vld [vmem:[%s13] sm:$0xf]
        %v1952 = vld [vmem:[%s13 + $0x4] sm:$0xf]
        %v1953 = vld [vmem:[%s13 + $0x8] sm:$0xf]
        %v1954 = vld [vmem:[%s13 + $0xc] sm:$0xf]
        %v1955 = vld [vmem:[%s14] sm:$0x1]
        %v1957 = vlaneseq
        %v1958 = vshrl.u32 %v1957, 7
        %v1959 = vsub.s32 0, %v1958
        %v1960 = vrot.slane %v1955, %v1959
        %v1966 = vunpack.c.l.b16 %v1951
        %v1967 = vunpack.c.l.b16 %v1952
        %v1968 = vunpack.c.l.b16 %v1953
        %v1969 = vunpack.c.l.b16 %v1954
        %v1970 = vpack.c.b16 %v1967, %v1966
        %v1971 = vpack.c.b16 %v1969, %v1968
        %v1975 = vsel %vm632, %v1950, 0
        %1977 = vmatprep.subr.bf16.mxu0 0
        %1978 = vmatpush1.bf16.msra.mxu0 %v1970
        %1979 = vmatprep.subr.bf16.mxu0 0
        %1980 = vmatpush1.bf16.msra.mxu0 %v1971
        %1981 = vmatprep.subr.bf16.mxu0 0
        %1982 = vmatpush1.bf16.msra.mxu0 0
        %1983 = vmatprep.subr.bf16.mxu0 0
        %1984 = vmatpush1.bf16.msra.mxu0 0
        %1985 = vmatprep.subr.bf16.mxu0 0
        %1986 = vmatpush1.bf16.msra.mxu0 0
        %1987 = vmatprep.subr.bf16.mxu0 0
        %1988 = vmatpush1.bf16.msra.mxu0 0
        %1989 = vmatprep.subr.bf16.mxu0 0
        %1990 = vmatpush1.bf16.msra.mxu0 0
        %1991 = vmatprep.subr.bf16.mxu0 0
        %1992 = vmatpush1.bf16.msra.mxu0 0
        %1993 = vmatprep.subr.bf16.mxu0 0
        %1994 = vmatpush1.bf16.msra.mxu0 0
        %1995 = vmatprep.subr.bf16.mxu0 0
        %1996 = vmatpush1.bf16.msra.mxu0 0
        %1997 = vmatprep.subr.bf16.mxu0 0
        %1998 = vmatpush1.bf16.msra.mxu0 0
        %1999 = vmatprep.subr.bf16.mxu0 0
        %2000 = vmatpush1.bf16.msra.mxu0 0
        %2001 = vmatprep.subr.bf16.mxu0 0
        %2002 = vmatpush1.bf16.msra.mxu0 0
        %2003 = vmatprep.subr.bf16.mxu0 0
        %2004 = vmatpush1.bf16.msra.mxu0 0
        %2005 = vmatprep.subr.bf16.mxu0 0
        %2006 = vmatpush1.bf16.msra.mxu0 0
        %2007 = vmatprep.subr.bf16.mxu0 0
        %2008 = vmatpush1.bf16.msra.mxu0 0
        %2009 = vmatprep.mubr.bf16.mxu0 0
        %2010 = vmatmul.mubr.bf16.gmra.mrb[0].mxu0 %v1975
        %v2011 = vpop.f32.mrb[0].mxu0
        %v2012 = vadd.f32 %v1960, %v2011
        %v2013 = vpop.f32.mrb[0].mxu0
        %v2014 = vpop.f32.mrb[0].mxu0
        %v2015 = vpop.f32.mrb[0].mxu0
        %2016 = vdwg.mxu0
        %v2017 = vmul.f32 %v2012, 0.5
        %v2018 = vmul.f32 %v2012, 0.044715
        %v2019 = vmul.f32 %v2018, %v2012
        %v2020 = vmul.f32 %v2019, %v2012
        %v2021 = vadd.f32 %v2012, %v2020
        %v2022 = vmul.f32 %v2021, 0.7978846
        %v2023 = vtanh.pop %v2022
        %v2024 = vadd.f32 %v2023, 1.0
        %v2025 = vmul.f32 %v2017, %v2024
        %v2026 = vpack.c.bf16 %v2025, %v2025
        %v2027 = vld [vmem:[%s15] sm:$0xf]
        %v2028 = vld [vmem:[%s15 + $0x4] sm:$0xf]
        %v2029 = vld [vmem:[%s15 + $0x8] sm:$0xf]
        %v2030 = vld [vmem:[%s15 + $0xc] sm:$0xf]
        %v2031 = vld [vmem:[%s15 + $0x10] sm:$0xf]
        %v2032 = vld [vmem:[%s15 + $0x14] sm:$0xf]
        %v2033 = vld [vmem:[%s15 + $0x18] sm:$0xf]
        %v2034 = vld [vmem:[%s15 + $0x1c] sm:$0xf]
        %v2035 = vld [vmem:[%s15 + $0x20] sm:$0xf]
        %v2036 = vld [vmem:[%s15 + $0x24] sm:$0xf]
        %v2037 = vld [vmem:[%s15 + $0x28] sm:$0xf]
        %v2038 = vld [vmem:[%s15 + $0x2c] sm:$0xf]
        %v2039 = vld [vmem:[%s15 + $0x30] sm:$0xf]
        %v2040 = vld [vmem:[%s15 + $0x34] sm:$0xf]
        %v2041 = vld [vmem:[%s15 + $0x38] sm:$0xf]
        %v2042 = vld [vmem:[%s15 + $0x3c] sm:$0xf]
        %v2043 = vld [vmem:[%s16] sm:$0x1]
        %v2045 = vlaneseq
        %v2046 = vshrl.u32 %v2045, 7
        %v2047 = vsub.s32 0, %v2046
        %v2048 = vrot.slane %v2043, %v2047
        %v2066 = vunpack.c.l.b16 %v2027
        %v2067 = vunpack.c.l.b16 %v2028
        %v2068 = vunpack.c.l.b16 %v2029
        %v2069 = vunpack.c.l.b16 %v2030
        %v2070 = vunpack.c.l.b16 %v2031
        %v2071 = vunpack.c.l.b16 %v2032
        %v2072 = vunpack.c.l.b16 %v2033
        %v2073 = vunpack.c.l.b16 %v2034
        %v2074 = vunpack.c.l.b16 %v2035
        %v2075 = vunpack.c.l.b16 %v2036
        %v2076 = vunpack.c.l.b16 %v2037
        %v2077 = vunpack.c.l.b16 %v2038
        %v2078 = vunpack.c.l.b16 %v2039
        %v2079 = vunpack.c.l.b16 %v2040
        %v2080 = vunpack.c.l.b16 %v2041
        %v2081 = vunpack.c.l.b16 %v2042
        %v2082 = vpack.c.b16 %v2067, %v2066
        %v2083 = vpack.c.b16 %v2069, %v2068
        %v2084 = vpack.c.b16 %v2071, %v2070
        %v2085 = vpack.c.b16 %v2073, %v2072
        %v2086 = vpack.c.b16 %v2075, %v2074
        %v2087 = vpack.c.b16 %v2077, %v2076
        %v2088 = vpack.c.b16 %v2079, %v2078
        %v2089 = vpack.c.b16 %v2081, %v2080
        %2098 = vmatprep.subr.bf16.mxu0 0
        %2099 = vmatpush1.bf16.msra.mxu0 %v2082
        %2100 = vmatprep.subr.bf16.mxu0 0
        %2101 = vmatpush1.bf16.msra.mxu0 %v2083
        %2102 = vmatprep.subr.bf16.mxu0 0
        %2103 = vmatpush1.bf16.msra.mxu0 %v2084
        %2104 = vmatprep.subr.bf16.mxu0 0
        %2105 = vmatpush1.bf16.msra.mxu0 %v2085
        %2106 = vmatprep.subr.bf16.mxu0 0
        %2107 = vmatpush1.bf16.msra.mxu0 %v2086
        %2108 = vmatprep.subr.bf16.mxu0 0
        %2109 = vmatpush1.bf16.msra.mxu0 %v2087
        %2110 = vmatprep.subr.bf16.mxu0 0
        %2111 = vmatpush1.bf16.msra.mxu0 %v2088
        %2112 = vmatprep.subr.bf16.mxu0 0
        %2113 = vmatpush1.bf16.msra.mxu0 %v2089
        %2114 = vmatprep.subr.bf16.mxu0 0
        %2115 = vmatpush1.bf16.msra.mxu0 0
        %2116 = vmatprep.subr.bf16.mxu0 0
        %2117 = vmatpush1.bf16.msra.mxu0 0
        %2118 = vmatprep.subr.bf16.mxu0 0
        %2119 = vmatpush1.bf16.msra.mxu0 0
        %2120 = vmatprep.subr.bf16.mxu0 0
        %2121 = vmatpush1.bf16.msra.mxu0 0
        %2122 = vmatprep.subr.bf16.mxu0 0
        %2123 = vmatpush1.bf16.msra.mxu0 0
        %2124 = vmatprep.subr.bf16.mxu0 0
        %2125 = vmatpush1.bf16.msra.mxu0 0
        %2126 = vmatprep.subr.bf16.mxu0 0
        %2127 = vmatpush1.bf16.msra.mxu0 0
        %2128 = vmatprep.subr.bf16.mxu0 0
        %2129 = vmatpush1.bf16.msra.mxu0 0
        %2130 = vmatprep.mubr.bf16.mxu0 0
        %2131 = vmatmul.mubr.bf16.gmra.mrb[0].mxu0 %v2026
        %v2132 = vpop.f32.mrb[0].mxu0
        %v2133 = vadd.f32 %v2048, %v2132
        %v2134 = vpop.f32.mrb[0].mxu0
        %v2135 = vpop.f32.mrb[0].mxu0
        %v2136 = vpop.f32.mrb[0].mxu0
        %2137 = vdwg.mxu0
        %v2138 = vadd.f32 %v1920, %v2133
        %2139 = vst.msk [vmem:[%s610] sm:$0xff] %vm632, %v2138
        %s2140 = sand.u32 %s426, 1
        %s2141 = scalar_lea.sflag [#allocation4], %s2140
        %s2142 = sand.u32 %s426, 1
        %s2143 = smul.addr %s2142, 8
        %s2144 = scalar_lea.vmem [#allocation5], %s2143
        %s2145 = sand.u32 %s454, 1
        %s2146 = scalar_lea.sflag [#allocation7], %s2145
        %s2147 = sand.u32 %s454, 1
        %s2148 = smul.addr %s2147, 32
        %s2149 = scalar_lea.vmem [#allocation6], %s2148
        // Predicated region
        $region93: #{tpu_custom_call.1} parent=87 // pred_check
          %p2150 = pneg %p436
        $region94: #{tpu_custom_call.1} parent=87 // pred_check_branch
          %2152 = sbr.rel (%p2150) target = $region96
        $region95: #{tpu_custom_call.1} parent=87 // pred_region
          %s2154 = ssub.s32 128, 128
          %2155 = vsyncadd %s2141, %s2154
          %s2156 = sadd.s32 %s42, %s41
          %s2157 = smul.addr %s2156, 128
          %s2158 = scalar_lea.hbm %s17, %s2157
          %s2160 = sshll.u32 %s2144, 4
          %s2161 = int_to_ptr.vmem [resolvable:$true] %s2160
          %2163 = dma.vmem_to_hbm [thread:$0]  %s2161, 128, %s2158, %s2141
        $region96: #{tpu_custom_call.1} parent=87 // pred_fallthru
          _
        // Predicated region
        $region97: #{tpu_custom_call.1} parent=87 // pred_check
          %p2164 = pneg %p464
        $region98: #{tpu_custom_call.1} parent=87 // pred_check_branch
          %2166 = sbr.rel (%p2164) target = $region100
        $region99: #{tpu_custom_call.1} parent=87 // pred_region
          %s2168 = ssub.s32 512, 512
          %2169 = vsyncadd %s2146, %s2168
          %s2170 = smul.addr %s41, 4
          %s2171 = sadd.s32 %s42, %s2170
          %s2172 = smul.addr %s2171, 128
          %s2173 = scalar_lea.hbm %s18, %s2172
          %s2174 = sshll.u32 %s2149, 4
          %s2175 = int_to_ptr.vmem [resolvable:$true] %s2174
          %2180 = dma.vmem_to_hbm [thread:$0]  %s2175, 512, %s2173, %s2146, 128, 128, 8
        $region100: #{tpu_custom_call.1} parent=87 // pred_fallthru
          _
      $region88: #{tpu_custom_call.1} parent=5 // pred_fallthru
        _
      %p2181 = scmp.le.s32.totalorder 2, %s32
      // Predicated region
      $region101: #{tpu_custom_call.1} parent=5 // pred_check
        %p2182 = pneg %p2181
      $region102: #{tpu_custom_call.1} parent=5 // pred_check_branch
        %2184 = sbr.rel (%p2182) target = $region104
      $region103: #{tpu_custom_call.1} parent=5 // pred_region
        %s2185 = ssub.s32 %s32, 2
        // Predicated region
        $region105: #{tpu_custom_call.1} parent=103 // pred_check
          %p2186 = pneg %p442
        $region106: #{tpu_custom_call.1} parent=103 // pred_check_branch
          %2188 = sbr.rel (%p2186) target = $region108
        $region107: #{tpu_custom_call.1} parent=103 // pred_region
          %s2189 = sand.u32 %s427, 1
          %s2190 = scalar_lea.sflag [#allocation4], %s2189
          %s2191 = sand.u32 %s427, 1
          %s2192 = smul.addr %s2191, 8
          %s2193 = scalar_lea.vmem [#allocation5], %s2192
          %2194 = dma.done %s2190, 128
        $region108: #{tpu_custom_call.1} parent=103 // pred_fallthru
          _
        // Predicated region
        $region109: #{tpu_custom_call.1} parent=103 // pred_check
          %p2195 = pneg %p470
        $region110: #{tpu_custom_call.1} parent=103 // pred_check_branch
          %2197 = sbr.rel (%p2195) target = $region112
        $region111: #{tpu_custom_call.1} parent=103 // pred_region
          %s2198 = sand.u32 %s455, 1
          %s2199 = scalar_lea.sflag [#allocation7], %s2198
          %s2200 = sand.u32 %s455, 1
          %s2201 = smul.addr %s2200, 32
          %s2202 = scalar_lea.vmem [#allocation6], %s2201
          %2203 = dma.done %s2199, 512
        $region112: #{tpu_custom_call.1} parent=103 // pred_fallthru
          _
      $region104: #{tpu_custom_call.1} parent=5 // pred_fallthru
        _
    $region6: #{tpu_custom_call.1} parent=1 // loop_footer
      %s36 = sadd.s32 1, %s32
    $region7: #{tpu_custom_call.1} parent=1 // loop_footer_branch
      %31 = sbr.rel target = $region3
    $region8: #{tpu_custom_call.1} parent=1 // loop_exit
      _
    %2204 = vsyncpa [#allocation3], 1
    %s2205 = scalar_lea.sflag [#allocation3], 1
    %2206 = vsyncpa %s2205, 1
    %2207 = vsyncpa [#allocation4], 1
    %s2208 = scalar_lea.sflag [#allocation4], 1
    %2209 = vsyncpa %s2208, 1
    %2210 = vsyncpa [#allocation7], 1
    %s2211 = scalar_lea.sflag [#allocation7], 1
    %2212 = vsyncpa %s2211, 1

// kernel: tpu_custom_call.1
$region0: #{tpu_custom_call.1}
  #allocation0 [shape = 'u32[]', space=smem, size = 0x4, offset = 0x4, fixed_abs, tag = 'smem constant byte address 0x4 - core index']
  #allocation1 [shape = 'u32[144,128]{1,0:T(1,128)}', space=vmem, size = 0x12000, scoped, tag = 'internal scratch']
  %s0 = inlined_call_operand.vmem [shape: f32[2,8,32], index: 0, kind: input, shape index: {}]
  %s1 = inlined_call_operand.vmem [shape: f32[2,1,8], index: 1, kind: input, shape index: {}]
  %s2 = inlined_call_operand.hbm [shape: f32[8,32], index: 2, kind: input, shape index: {}]
  %s3 = inlined_call_operand.vmem [shape: f32[1,32], index: 3, kind: input, shape index: {}]
  %s4 = inlined_call_operand.vmem [shape: f32[1,32], index: 4, kind: input, shape index: {}]
  %s5 = inlined_call_operand.vmem [shape: bf16[32,32], index: 5, kind: input, shape index: {}]
  %s6 = inlined_call_operand.vmem [shape: f32[1,32], index: 6, kind: input, shape index: {}]
  %s7 = inlined_call_operand.vmem [shape: bf16[32,64], index: 7, kind: input, shape index: {}]
  %s8 = inlined_call_operand.vmem [shape: f32[1,64], index: 8, kind: input, shape index: {}]
  %s9 = inlined_call_operand.vmem [shape: bf16[32,32], index: 9, kind: input, shape index: {}]
  %s10 = inlined_call_operand.vmem [shape: f32[1,32], index: 10, kind: input, shape index: {}]
  %s11 = inlined_call_operand.vmem [shape: f32[1,32], index: 11, kind: input, shape index: {}]
  %s12 = inlined_call_operand.vmem [shape: f32[1,32], index: 12, kind: input, shape index: {}]
  %s13 = inlined_call_operand.vmem [shape: bf16[32,128], index: 13, kind: input, shape index: {}]
  %s14 = inlined_call_operand.vmem [shape: f32[1,128], index: 14, kind: input, shape index: {}]
  %s15 = inlined_call_operand.vmem [shape: bf16[128,32], index: 15, kind: input, shape index: {}]
  %s16 = inlined_call_operand.vmem [shape: f32[1,32], index: 16, kind: input, shape index: {}]
  %s17 = inlined_call_operand.hbm [shape: f32[2,8,32], index: 17, kind: output, shape index: {0}]
  %s18 = inlined_call_operand.hbm [shape: f32[2,4,8,8], index: 18, kind: output, shape index: {1}]
  %19 = xla_tuple %s17, %s18
  %s20 = sld [smem:[#allocation0]]
  $region113: #{tpu_custom_call.1} parent=0
    _
  %s22 = ssub.s32 1, %s20
  %s23 = scalar_select 0, %s22, %s20
  $region1: #{tpu_custom_call.1} parent=0
    #allocation2 [shape = 'u8[4096]{0}', space=vmem, size = 0x1000, scoped, tag = 'input window, operand 2, single buffered']
    #allocation3 [shape = 's32[2]{0}', space=sflag, size = 0x8, scoped, tag = 'scoped memory for tpu_custom_call.1']
    #allocation4 [shape = 's32[2]{0}', space=sflag, size = 0x8, scoped, tag = 'scoped memory for tpu_custom_call.1']
    #allocation5 [shape = 'u8[8192]{0}', space=vmem, size = 0x2000, scoped, tag = 'output window, operand 0']
    #allocation6 [shape = 'u8[32768]{0}', space=vmem, size = 0x8000, scoped, tag = 'output window, operand 1']
    #allocation7 [shape = 's32[2]{0}', space=sflag, size = 0x8, scoped, tag = 'scoped memory for tpu_custom_call.1']
    %24 = vsyncpa [#allocation3], 0
    %25 = vsyncpa [#allocation4], 0
    %s26 = scalar_lea.sflag [#allocation4], 1
    %27 = vsyncpa %s26, 0
    %28 = vsyncpa [#allocation7], 0
    %s29 = scalar_lea.sflag [#allocation7], 1
    %30 = vsyncpa %s29, 0
    loop: start=0, step=1, limit=4
    $region2: #{tpu_custom_call.1} parent=1 // loop_pre_header
      _
    $region3: #{tpu_custom_call.1} parent=1 // loop_header
      %s32 = sphi 0, %s36
      %p33 = scmp.ge.s32.totalorder %s32, 4
      %s39 = sphi 0, %s51
      %s40 = sphi 0, %s47
      %s41 = sphi 0, %s39
      %s42 = sphi 0, %s40
      %s43 = sphi 0, %s41
      %s44 = sphi 0, %s42
      %s54 = sphi 0, %s56
      %s57 = sphi 0, %s54
      %s58 = sphi 0, %s57
      %s74 = sphi 0, %s58
      %s80 = sphi 0, %s82
      %s83 = sphi 0, %s80
      %s84 = sphi 0, %s83
      %s100 = sphi 0, %s84
      %s104 = sphi 0, %s104
      %s106 = sphi 0, %s104
      %s107 = sphi 0, %s106
      %s121 = sphi 0, %s107
      %s125 = sphi 0, %s125
      %s127 = sphi 0, %s125
      %s128 = sphi 0, %s127
      %s142 = sphi 0, %s128
      %s146 = sphi 0, %s146
      %s148 = sphi 0, %s146
      %s149 = sphi 0, %s148
      %s163 = sphi 0, %s149
      %s167 = sphi 0, %s167
      %s169 = sphi 0, %s167
      %s170 = sphi 0, %s169
      %s184 = sphi 0, %s170
      %s188 = sphi 0, %s188
      %s190 = sphi 0, %s188
      %s191 = sphi 0, %s190
      %s205 = sphi 0, %s191
      %s209 = sphi 0, %s209
      %s211 = sphi 0, %s209
      %s212 = sphi 0, %s211
      %s226 = sphi 0, %s212
      %s230 = sphi 0, %s230
      %s232 = sphi 0, %s230
      %s233 = sphi 0, %s232
      %s247 = sphi 0, %s233
      %s251 = sphi 0, %s251
      %s253 = sphi 0, %s251
      %s254 = sphi 0, %s253
      %s268 = sphi 0, %s254
      %s272 = sphi 0, %s272
      %s274 = sphi 0, %s272
      %s275 = sphi 0, %s274
      %s289 = sphi 0, %s275
      %s293 = sphi 0, %s293
      %s295 = sphi 0, %s293
      %s296 = sphi 0, %s295
      %s310 = sphi 0, %s296
      %s314 = sphi 0, %s314
      %s316 = sphi 0, %s314
      %s317 = sphi 0, %s316
      %s331 = sphi 0, %s317
      %s335 = sphi 0, %s335
      %s337 = sphi 0, %s335
      %s338 = sphi 0, %s337
      %s352 = sphi 0, %s338
      %s356 = sphi 0, %s356
      %s358 = sphi 0, %s356
      %s359 = sphi 0, %s358
      %s373 = sphi 0, %s359
      %s377 = sphi 0, %s377
      %s379 = sphi 0, %s377
      %s380 = sphi 0, %s379
      %s394 = sphi 0, %s380
      %s398 = sphi 0, %s398
      %s400 = sphi 0, %s398
      %s401 = sphi 0, %s400
      %s415 = sphi 0, %s401
      %s423 = sphi 0, %s425
      %s426 = sphi 0, %s423
      %s427 = sphi 0, %s426
      %s443 = sphi 0, %s427
      %s451 = sphi 0, %s453
      %s454 = sphi 0, %s451
      %s455 = sphi 0, %s454
      %s471 = sphi 0, %s455
    $region4: #{tpu_custom_call.1} parent=1 // loop_header_branch
      %35 = sbr.rel (%p33) target = $region8
    $region5: #{tpu_custom_call.1} parent=1 // loop_body
      %s37 = ssub.s32 %s32, 1
      %s38 = ssub.s32 %s32, 2
      %s45 = sadd.s32 1, %s40
      %p46 = scmp.ge.s32.totalorder %s45, 1
      %s47 = scalar_select %p46, 0, %s45
      %s48 = sadd.s32 1, %s39
      %s49 = scalar_select %p46, %s48, %s39
      %p50 = scmp.ge.s32.totalorder %s49, 2
      %s51 = scalar_select %p50, 0, %s49
      %s52 = ssub.s32 %s39, %s51
      %p53 = scmp.eq.s32.totalorder %s52, 0
      %s55 = sadd.s32 %s54, 1
      %s56 = scalar_select %p53, %s54, %s55
      %p59 = pneg %p53
      %p60 = scmp.eq.s32.totalorder %s32, 1
      %p61 = por %p59, %p60
      %p62 = scmp.ne.s32.totalorder %s54, %s57
      %p63 = scmp.eq.s32.totalorder %s32, 0
      %p64 = por %p62, %p63
      %p65 = scmp.ne.s32.totalorder %s54, %s57
      %p66 = scmp.eq.s32.totalorder %s37, 1
      %p67 = por %p65, %p66
      %p68 = scmp.ne.s32.totalorder %s57, %s58
      %p69 = scmp.eq.s32.totalorder %s37, 0
      %p70 = por %p68, %p69
      %p71 = scmp.ne.s32.totalorder %s57, %s58
      %p72 = scmp.eq.s32.totalorder %s38, 1
      %p73 = por %p71, %p72
      %p75 = scmp.ne.s32.totalorder %s58, %s74
      %p76 = scmp.eq.s32.totalorder %s38, 0
      %p77 = por %p75, %p76
      %s78 = ssub.s32 %s39, %s51
      %p79 = scmp.eq.s32.totalorder %s78, 0
      %s81 = sadd.s32 %s80, 1
      %s82 = scalar_select %p79, %s80, %s81
      %p85 = pneg %p79
      %p86 = scmp.eq.s32.totalorder %s32, 1
      %p87 = por %p85, %p86
      %p88 = scmp.ne.s32.totalorder %s80, %s83
      %p89 = scmp.eq.s32.totalorder %s32, 0
      %p90 = por %p88, %p89
      %p91 = scmp.ne.s32.totalorder %s80, %s83
      %p92 = scmp.eq.s32.totalorder %s37, 1
      %p93 = por %p91, %p92
      %p94 = scmp.ne.s32.totalorder %s83, %s84
      %p95 = scmp.eq.s32.totalorder %s37, 0
      %p96 = por %p94, %p95
      %p97 = scmp.ne.s32.totalorder %s83, %s84
      %p98 = scmp.eq.s32.totalorder %s38, 1
      %p99 = por %p97, %p98
      %p101 = scmp.ne.s32.totalorder %s84, %s100
      %p102 = scmp.eq.s32.totalorder %s38, 0
      %p103 = por %p101, %p102
      %s105 = sadd.s32 %s104, 1
      %p108 = scmp.eq.s32.totalorder %s32, 1
      %p109 = scmp.ne.s32.totalorder %s104, %s106
      %p110 = scmp.eq.s32.totalorder %s32, 0
      %p111 = por %p109, %p110
      %p112 = scmp.ne.s32.totalorder %s104, %s106
      %p113 = scmp.eq.s32.totalorder %s37, 1
      %p114 = por %p112, %p113
      %p115 = scmp.ne.s32.totalorder %s106, %s107
      %p116 = scmp.eq.s32.totalorder %s37, 0
      %p117 = por %p115, %p116
      %p118 = scmp.ne.s32.totalorder %s106, %s107
      %p119 = scmp.eq.s32.totalorder %s38, 1
      %p120 = por %p118, %p119
      %p122 = scmp.ne.s32.totalorder %s107, %s121
      %p123 = scmp.eq.s32.totalorder %s38, 0
      %p124 = por %p122, %p123
      %s126 = sadd.s32 %s125, 1
      %p129 = scmp.eq.s32.totalorder %s32, 1
      %p130 = scmp.ne.s32.totalorder %s125, %s127
      %p131 = scmp.eq.s32.totalorder %s32, 0
      %p132 = por %p130, %p131
      %p133 = scmp.ne.s32.totalorder %s125, %s127
      %p134 = scmp.eq.s32.totalorder %s37, 1
      %p135 = por %p133, %p134
      %p136 = scmp.ne.s32.totalorder %s127, %s128
      %p137 = scmp.eq.s32.totalorder %s37, 0
      %p138 = por %p136, %p137
      %p139 = scmp.ne.s32.totalorder %s127, %s128
      %p140 = scmp.eq.s32.totalorder %s38, 1
      %p141 = por %p139, %p140
      %p143 = scmp.ne.s32.totalorder %s128, %s142
      %p144 = scmp.eq.s32.totalorder %s38, 0
      %p145 = por %p143, %p144
      %s147 = sadd.s32 %s146, 1
      %p150 = scmp.eq.s32.totalorder %s32, 1
      %p151 = scmp.ne.s32.totalorder %s146, %s148
      %p152 = scmp.eq.s32.totalorder %s32, 0
      %p153 = por %p151, %p152
      %p154 = scmp.ne.s32.totalorder %s146, %s148
      %p155 = scmp.eq.s32.totalorder %s37, 1
      %p156 = por %p154, %p155
      %p157 = scmp.ne.s32.totalorder %s148, %s149
      %p158 = scmp.eq.s32.totalorder %s37, 0
      %p159 = por %p157, %p158
      %p160 = scmp.ne.s32.totalorder %s148, %s149
      %p161 = scmp.eq.s32.totalorder %s38, 1
      %p162 = por %p160, %p161
      %p164 = scmp.ne.s32.totalorder %s149, %s163
      %p165 = scmp.eq.s32.totalorder %s38, 0
      %p166 = por %p164, %p165
      %s168 = sadd.s32 %s167, 1
      %p171 = scmp.eq.s32.totalorder %s32, 1
      %p172 = scmp.ne.s32.totalorder %s167, %s169
      %p173 = scmp.eq.s32.totalorder %s32, 0
      %p174 = por %p172, %p173
      %p175 = scmp.ne.s32.totalorder %s167, %s169
      %p176 = scmp.eq.s32.totalorder %s37, 1
      %p177 = por %p175, %p176
      %p178 = scmp.ne.s32.totalorder %s169, %s170
      %p179 = scmp.eq.s32.totalorder %s37, 0
      %p180 = por %p178, %p179
      %p181 = scmp.ne.s32.totalorder %s169, %s170
      %p182 = scmp.eq.s32.totalorder %s38, 1
      %p183 = por %p181, %p182
      %p185 = scmp.ne.s32.totalorder %s170, %s184
      %p186 = scmp.eq.s32.totalorder %s38, 0
      %p187 = por %p185, %p186
      %s189 = sadd.s32 %s188, 1
      %p192 = scmp.eq.s32.totalorder %s32, 1
      %p193 = scmp.ne.s32.totalorder %s188, %s190
      %p194 = scmp.eq.s32.totalorder %s32, 0
      %p195 = por %p193, %p194
      %p196 = scmp.ne.s32.totalorder %s188, %s190
      %p197 = scmp.eq.s32.totalorder %s37, 1
      %p198 = por %p196, %p197
      %p199 = scmp.ne.s32.totalorder %s190, %s191
      %p200 = scmp.eq.s32.totalorder %s37, 0
      %p201 = por %p199, %p200
      %p202 = scmp.ne.s32.totalorder %s190, %s191
      %p203 = scmp.eq.s32.totalorder %s38, 1
      %p204 = por %p202, %p203
      %p206 = scmp.ne.s32.totalorder %s191, %s205
      %p207 = scmp.eq.s32.totalorder %s38, 0
      %p208 = por %p206, %p207
      %s210 = sadd.s32 %s209, 1
      %p213 = scmp.eq.s32.totalorder %s32, 1
      %p214 = scmp.ne.s32.totalorder %s209, %s211
      %p215 = scmp.eq.s32.totalorder %s32, 0
      %p216 = por %p214, %p215
      %p217 = scmp.ne.s32.totalorder %s209, %s211
      %p218 = scmp.eq.s32.totalorder %s37, 1
      %p219 = por %p217, %p218
      %p220 = scmp.ne.s32.totalorder %s211, %s212
      %p221 = scmp.eq.s32.totalorder %s37, 0
      %p222 = por %p220, %p221
      %p223 = scmp.ne.s32.totalorder %s211, %s212
      %p224 = scmp.eq.s32.totalorder %s38, 1
      %p225 = por %p223, %p224
      %p227 = scmp.ne.s32.totalorder %s212, %s226
      %p228 = scmp.eq.s32.totalorder %s38, 0
      %p229 = por %p227, %p228
      %s231 = sadd.s32 %s230, 1
      %p234 = scmp.eq.s32.totalorder %s32, 1
      %p235 = scmp.ne.s32.totalorder %s230, %s232
      %p236 = scmp.eq.s32.totalorder %s32, 0
      %p237 = por %p235, %p236
      %p238 = scmp.ne.s32.totalorder %s230, %s232
      %p239 = scmp.eq.s32.totalorder %s37, 1
      %p240 = por %p238, %p239
      %p241 = scmp.ne.s32.totalorder %s232, %s233
      %p242 = scmp.eq.s32.totalorder %s37, 0
      %p243 = por %p241, %p242
      %p244 = scmp.ne.s32.totalorder %s232, %s233
      %p245 = scmp.eq.s32.totalorder %s38, 1
      %p246 = por %p244, %p245
      %p248 = scmp.ne.s32.totalorder %s233, %s247
      %p249 = scmp.eq.s32.totalorder %s38, 0
      %p250 = por %p248, %p249
      %s252 = sadd.s32 %s251, 1
      %p255 = scmp.eq.s32.totalorder %s32, 1
      %p256 = scmp.ne.s32.totalorder %s251, %s253
      %p257 = scmp.eq.s32.totalorder %s32, 0
      %p258 = por %p256, %p257
      %p259 = scmp.ne.s32.totalorder %s251, %s253
      %p260 = scmp.eq.s32.totalorder %s37, 1
      %p261 = por %p259, %p260
      %p262 = scmp.ne.s32.totalorder %s253, %s254
      %p263 = scmp.eq.s32.totalorder %s37, 0
      %p264 = por %p262, %p263
      %p265 = scmp.ne.s32.totalorder %s253, %s254
      %p266 = scmp.eq.s32.totalorder %s38, 1
      %p267 = por %p265, %p266
      %p269 = scmp.ne.s32.totalorder %s254, %s268
      %p270 = scmp.eq.s32.totalorder %s38, 0
      %p271 = por %p269, %p270
      %s273 = sadd.s32 %s272, 1
      %p276 = scmp.eq.s32.totalorder %s32, 1
      %p277 = scmp.ne.s32.totalorder %s272, %s274
      %p278 = scmp.eq.s32.totalorder %s32, 0
      %p279 = por %p277, %p278
      %p280 = scmp.ne.s32.totalorder %s272, %s274
      %p281 = scmp.eq.s32.totalorder %s37, 1
      %p282 = por %p280, %p281
      %p283 = scmp.ne.s32.totalorder %s274, %s275
      %p284 = scmp.eq.s32.totalorder %s37, 0
      %p285 = por %p283, %p284
      %p286 = scmp.ne.s32.totalorder %s274, %s275
      %p287 = scmp.eq.s32.totalorder %s38, 1
      %p288 = por %p286, %p287
      %p290 = scmp.ne.s32.totalorder %s275, %s289
      %p291 = scmp.eq.s32.totalorder %s38, 0
      %p292 = por %p290, %p291
      %s294 = sadd.s32 %s293, 1
      %p297 = scmp.eq.s32.totalorder %s32, 1
      %p298 = scmp.ne.s32.totalorder %s293, %s295
      %p299 = scmp.eq.s32.totalorder %s32, 0
      %p300 = por %p298, %p299
      %p301 = scmp.ne.s32.totalorder %s293, %s295
      %p302 = scmp.eq.s32.totalorder %s37, 1
      %p303 = por %p301, %p302
      %p304 = scmp.ne.s32.totalorder %s295, %s296
      %p305 = scmp.eq.s32.totalorder %s37, 0
      %p306 = por %p304, %p305
      %p307 = scmp.ne.s32.totalorder %s295, %s296
      %p308 = scmp.eq.s32.totalorder %s38, 1
      %p309 = por %p307, %p308
      %p311 = scmp.ne.s32.totalorder %s296, %s310
      %p312 = scmp.eq.s32.totalorder %s38, 0
      %p313 = por %p311, %p312
      %s315 = sadd.s32 %s314, 1
      %p318 = scmp.eq.s32.totalorder %s32, 1
      %p319 = scmp.ne.s32.totalorder %s314, %s316
      %p320 = scmp.eq.s32.totalorder %s32, 0
      %p321 = por %p319, %p320
      %p322 = scmp.ne.s32.totalorder %s314, %s316
      %p323 = scmp.eq.s32.totalorder %s37, 1
      %p324 = por %p322, %p323
      %p325 = scmp.ne.s32.totalorder %s316, %s317
      %p326 = scmp.eq.s32.totalorder %s37, 0
      %p327 = por %p325, %p326
      %p328 = scmp.ne.s32.totalorder %s316, %s317
      %p329 = scmp.eq.s32.totalorder %s38, 1
      %p330 = por %p328, %p329
      %p332 = scmp.ne.s32.totalorder %s317, %s331
      %p333 = scmp.eq.s32.totalorder %s38, 0
      %p334 = por %p332, %p333
      %s336 = sadd.s32 %s335, 1
      %p339 = scmp.eq.s32.totalorder %s32, 1
      %p340 = scmp.ne.s32.totalorder %s335, %s337
      %p341 = scmp.eq.s32.totalorder %s32, 0
      %p342 = por %p340, %p341
      %p343 = scmp.ne.s32.totalorder %s335, %s337
      %p344 = scmp.eq.s32.totalorder %s37, 1
      %p345 = por %p343, %p344
      %p346 = scmp.ne.s32.totalorder %s337, %s338
      %p347 = scmp.eq.s32.totalorder %s37, 0
      %p348 = por %p346, %p347
      %p349 = scmp.ne.s32.totalorder %s337, %s338
      %p350 = scmp.eq.s32.totalorder %s38, 1
      %p351 = por %p349, %p350
      %p353 = scmp.ne.s32.totalorder %s338, %s352
      %p354 = scmp.eq.s32.totalorder %s38, 0
      %p355 = por %p353, %p354
      %s357 = sadd.s32 %s356, 1
      %p360 = scmp.eq.s32.totalorder %s32, 1
      %p361 = scmp.ne.s32.totalorder %s356, %s358
      %p362 = scmp.eq.s32.totalorder %s32, 0
      %p363 = por %p361, %p362
      %p364 = scmp.ne.s32.totalorder %s356, %s358
      %p365 = scmp.eq.s32.totalorder %s37, 1
      %p366 = por %p364, %p365
      %p367 = scmp.ne.s32.totalorder %s358, %s359
      %p368 = scmp.eq.s32.totalorder %s37, 0
      %p369 = por %p367, %p368
      %p370 = scmp.ne.s32.totalorder %s358, %s359
      %p371 = scmp.eq.s32.totalorder %s38, 1
      %p372 = por %p370, %p371
      %p374 = scmp.ne.s32.totalorder %s359, %s373
      %p375 = scmp.eq.s32.totalorder %s38, 0
      %p376 = por %p374, %p375
      %s378 = sadd.s32 %s377, 1
      %p381 = scmp.eq.s32.totalorder %s32, 1
      %p382 = scmp.ne.s32.totalorder %s377, %s379
      %p383 = scmp.eq.s32.totalorder %s32, 0
      %p384 = por %p382, %p383
      %p385 = scmp.ne.s32.totalorder %s377, %s379
      %p386 = scmp.eq.s32.totalorder %s37, 1
      %p387 = por %p385, %p386
      %p388 = scmp.ne.s32.totalorder %s379, %s380
      %p389 = scmp.eq.s32.totalorder %s37, 0
      %p390 = por %p388, %p389
      %p391 = scmp.ne.s32.totalorder %s379, %s380
      %p392 = scmp.eq.s32.totalorder %s38, 1
      %p393 = por %p391, %p392
      %p395 = scmp.ne.s32.totalorder %s380, %s394
      %p396 = scmp.eq.s32.totalorder %s38, 0
      %p397 = por %p395, %p396
      %s399 = sadd.s32 %s398, 1
      %p402 = scmp.eq.s32.totalorder %s32, 1
      %p403 = scmp.ne.s32.totalorder %s398, %s400
      %p404 = scmp.eq.s32.totalorder %s32, 0
      %p405 = por %p403, %p404
      %p406 = scmp.ne.s32.totalorder %s398, %s400
      %p407 = scmp.eq.s32.totalorder %s37, 1
      %p408 = por %p406, %p407
      %p409 = scmp.ne.s32.totalorder %s400, %s401
      %p410 = scmp.eq.s32.totalorder %s37, 0
      %p411 = por %p409, %p410
      %p412 = scmp.ne.s32.totalorder %s400, %s401
      %p413 = scmp.eq.s32.totalorder %s38, 1
      %p414 = por %p412, %p413
      %p416 = scmp.ne.s32.totalorder %s401, %s415
      %p417 = scmp.eq.s32.totalorder %s38, 0
      %p418 = por %p416, %p417
      %s419 = ssub.s32 %s39, %s51
      %s420 = ssub.s32 %s40, %s47
      %s421 = sor.u32 %s419, %s420
      %p422 = scmp.eq.s32.totalorder %s421, 0
      %s424 = sadd.s32 %s423, 1
      %s425 = scalar_select %p422, %s423, %s424
      %p428 = pneg %p422
      %p429 = scmp.eq.s32.totalorder %s32, 1
      %p430 = por %p428, %p429
      %p431 = scmp.ne.s32.totalorder %s423, %s426
      %p432 = scmp.eq.s32.totalorder %s32, 0
      %p433 = por %p431, %p432
      %p434 = scmp.ne.s32.totalorder %s423, %s426
      %p435 = scmp.eq.s32.totalorder %s37, 1
      %p436 = por %p434, %p435
      %p437 = scmp.ne.s32.totalorder %s426, %s427
      %p438 = scmp.eq.s32.totalorder %s37, 0
      %p439 = por %p437, %p438
      %p440 = scmp.ne.s32.totalorder %s426, %s427
      %p441 = scmp.eq.s32.totalorder %s38, 1
      %p442 = por %p440, %p441
      %p444 = scmp.ne.s32.totalorder %s427, %s443
      %p445 = scmp.eq.s32.totalorder %s38, 0
      %p446 = por %p444, %p445
      %s447 = ssub.s32 %s39, %s51
      %s448 = ssub.s32 %s40, %s47
      %s449 = sor.u32 %s447, %s448
      %p450 = scmp.eq.s32.totalorder %s449, 0
      %s452 = sadd.s32 %s451, 1
      %s453 = scalar_select %p450, %s451, %s452
      %p456 = pneg %p450
      %p457 = scmp.eq.s32.totalorder %s32, 1
      %p458 = por %p456, %p457
      %p459 = scmp.ne.s32.totalorder %s451, %s454
      %p460 = scmp.eq.s32.totalorder %s32, 0
      %p461 = por %p459, %p460
      %p462 = scmp.ne.s32.totalorder %s451, %s454
      %p463 = scmp.eq.s32.totalorder %s37, 1
      %p464 = por %p462, %p463
      %p465 = scmp.ne.s32.totalorder %s454, %s455
      %p466 = scmp.eq.s32.totalorder %s37, 0
      %p467 = por %p465, %p466
      %p468 = scmp.ne.s32.totalorder %s454, %s455
      %p469 = scmp.eq.s32.totalorder %s38, 1
      %p470 = por %p468, %p469
      %p472 = scmp.ne.s32.totalorder %s455, %s471
      %p473 = scmp.eq.s32.totalorder %s38, 0
      %p474 = por %p472, %p473
      %p475 = scmp.le.s32.totalorder 1, %s32
      %p476 = scmp.lt.s32.totalorder %s32, 3
      %p477 = pnand %p475, %p476
      %p478 = pneg %p477
      // Predicated region
      $region9: #{tpu_custom_call.1} parent=5 // pred_check
        _
      $region10: #{tpu_custom_call.1} parent=5 // pred_check_branch
        %480 = sbr.rel (%p477) target = $region12
      $region11: #{tpu_custom_call.1} parent=5 // pred_region
        %s481 = ssub.s32 %s32, 1
        // Predicated region
        $region13: #{tpu_custom_call.1} parent=11 // pred_check
          %p482 = pneg %p117
        $region14: #{tpu_custom_call.1} parent=11 // pred_check_branch
          %484 = sbr.rel (%p482) target = $region16
        $region15: #{tpu_custom_call.1} parent=11 // pred_region
          %s486 = ssub.s32 128, 128
          %487 = vsyncadd [#allocation3], %s486
          %s489 = sshll.u32 [#allocation2], 4
          %s490 = int_to_ptr.vmem [resolvable:$true] %s489
          %492 = dma.hbm_to_vmem [thread:$0]  %s2, 128, %s490, [#allocation3]
        $region16: #{tpu_custom_call.1} parent=11 // pred_fallthru
          _
        // Predicated region
        $region17: #{tpu_custom_call.1} parent=11 // pred_check
          %p493 = pneg %p138
        $region18: #{tpu_custom_call.1} parent=11 // pred_check_branch
          %495 = sbr.rel (%p493) target = $region20
        $region19: #{tpu_custom_call.1} parent=11 // pred_region
          _
        $region20: #{tpu_custom_call.1} parent=11 // pred_fallthru
          _
        // Predicated region
        $region21: #{tpu_custom_call.1} parent=11 // pred_check
          %p496 = pneg %p159
        $region22: #{tpu_custom_call.1} parent=11 // pred_check_branch
          %498 = sbr.rel (%p496) target = $region24
        $region23: #{tpu_custom_call.1} parent=11 // pred_region
          _
        $region24: #{tpu_custom_call.1} parent=11 // pred_fallthru
          _
        // Predicated region
        $region25: #{tpu_custom_call.1} parent=11 // pred_check
          %p499 = pneg %p180
        $region26: #{tpu_custom_call.1} parent=11 // pred_check_branch
          %501 = sbr.rel (%p499) target = $region28
        $region27: #{tpu_custom_call.1} parent=11 // pred_region
          _
        $region28: #{tpu_custom_call.1} parent=11 // pred_fallthru
          _
        // Predicated region
        $region29: #{tpu_custom_call.1} parent=11 // pred_check
          %p502 = pneg %p201
        $region30: #{tpu_custom_call.1} parent=11 // pred_check_branch
          %504 = sbr.rel (%p502) target = $region32
        $region31: #{tpu_custom_call.1} parent=11 // pred_region
          _
        $region32: #{tpu_custom_call.1} parent=11 // pred_fallthru
          _
        // Predicated region
        $region33: #{tpu_custom_call.1} parent=11 // pred_check
          %p505 = pneg %p222
        $region34: #{tpu_custom_call.1} parent=11 // pred_check_branch
          %507 = sbr.rel (%p505) target = $region36
        $region35: #{tpu_custom_call.1} parent=11 // pred_region
          _
        $region36: #{tpu_custom_call.1} parent=11 // pred_fallthru
          _
        // Predicated region
        $region37: #{tpu_custom_call.1} parent=11 // pred_check
          %p508 = pneg %p243
        $region38: #{tpu_custom_call.1} parent=11 // pred_check_branch
          %510 = sbr.rel (%p508) target = $region40
        $region39: #{tpu_custom_call.1} parent=11 // pred_region
          _
        $region40: #{tpu_custom_call.1} parent=11 // pred_fallthru
          _
        // Predicated region
        $region41: #{tpu_custom_call.1} parent=11 // pred_check
          %p511 = pneg %p264
        $region42: #{tpu_custom_call.1} parent=11 // pred_check_branch
          %513 = sbr.rel (%p511) target = $region44
        $region43: #{tpu_custom_call.1} parent=11 // pred_region
          _
        $region44: #{tpu_custom_call.1} parent=11 // pred_fallthru
          _
        // Predicated region
        $region45: #{tpu_custom_call.1} parent=11 // pred_check
          %p514 = pneg %p285
        $region46: #{tpu_custom_call.1} parent=11 // pred_check_branch
          %516 = sbr.rel (%p514) target = $region48
        $region47: #{tpu_custom_call.1} parent=11 // pred_region
          _
        $region48: #{tpu_custom_call.1} parent=11 // pred_fallthru
          _
        // Predicated region
        $region49: #{tpu_custom_call.1} parent=11 // pred_check
          %p517 = pneg %p306
        $region50: #{tpu_custom_call.1} parent=11 // pred_check_branch
          %519 = sbr.rel (%p517) target = $region52
        $region51: #{tpu_custom_call.1} parent=11 // pred_region
          _
        $region52: #{tpu_custom_call.1} parent=11 // pred_fallthru
          _
        // Predicated region
        $region53: #{tpu_custom_call.1} parent=11 // pred_check
          %p520 = pneg %p327
        $region54: #{tpu_custom_call.1} parent=11 // pred_check_branch
          %522 = sbr.rel (%p520) target = $region56
        $region55: #{tpu_custom_call.1} parent=11 // pred_region
          _
        $region56: #{tpu_custom_call.1} parent=11 // pred_fallthru
          _
        // Predicated region
        $region57: #{tpu_custom_call.1} parent=11 // pred_check
          %p523 = pneg %p348
        $region58: #{tpu_custom_call.1} parent=11 // pred_check_branch
          %525 = sbr.rel (%p523) target = $region60
        $region59: #{tpu_custom_call.1} parent=11 // pred_region
          _
        $region60: #{tpu_custom_call.1} parent=11 // pred_fallthru
          _
        // Predicated region
        $region61: #{tpu_custom_call.1} parent=11 // pred_check
          %p526 = pneg %p369
        $region62: #{tpu_custom_call.1} parent=11 // pred_check_branch
          %528 = sbr.rel (%p526) target = $region64
        $region63: #{tpu_custom_call.1} parent=11 // pred_region
          _
        $region64: #{tpu_custom_call.1} parent=11 // pred_fallthru
          _
        // Predicated region
        $region65: #{tpu_custom_call.1} parent=11 // pred_check
          %p529 = pneg %p390
        $region66: #{tpu_custom_call.1} parent=11 // pred_check_branch
          %531 = sbr.rel (%p529) target = $region68
        $region67: #{tpu_custom_call.1} parent=11 // pred_region
          _
        $region68: #{tpu_custom_call.1} parent=11 // pred_fallthru
          _
        // Predicated region
        $region69: #{tpu_custom_call.1} parent=11 // pred_check
          %p532 = pneg %p411
        $region70: #{tpu_custom_call.1} parent=11 // pred_check_branch
          %534 = sbr.rel (%p532) target = $region72
        $region71: #{tpu_custom_call.1} parent=11 // pred_region
          _
        $region72: #{tpu_custom_call.1} parent=11 // pred_fallthru
          _
      $region12: #{tpu_custom_call.1} parent=5 // pred_fallthru
        _
      %p535 = scmp.lt.s32.totalorder %s32, 2
      // Predicated region
      $region73: #{tpu_custom_call.1} parent=5 // pred_check
        %p536 = pneg %p535
      $region74: #{tpu_custom_call.1} parent=5 // pred_check_branch
        %538 = sbr.rel (%p536) target = $region76
      $region75: #{tpu_custom_call.1} parent=5 // pred_region
        // Predicated region
        $region77: #{tpu_custom_call.1} parent=75 // pred_check
          %p539 = pneg %p64
        $region78: #{tpu_custom_call.1} parent=75 // pred_check_branch
          %541 = sbr.rel (%p539) target = $region80
        $region79: #{tpu_custom_call.1} parent=75 // pred_region
          %p542 = scmp.lt.s32.totalorder %s39, 1
          %s543 = scalar_select %p542, %s39, 1
          %s544 = smul.addr %s543, 8
          %s545 = scalar_lea.vmem %s0, %s544
        $region80: #{tpu_custom_call.1} parent=75 // pred_fallthru
          _
        // Predicated region
        $region81: #{tpu_custom_call.1} parent=75 // pred_check
          %p546 = pneg %p90
        $region82: #{tpu_custom_call.1} parent=75 // pred_check_branch
          %548 = sbr.rel (%p546) target = $region84
        $region83: #{tpu_custom_call.1} parent=75 // pred_region
          %p549 = scmp.lt.s32.totalorder %s39, 1
          %s550 = scalar_select %p549, %s39, 1
          %s551 = scalar_lea.vmem %s1, %s550
        $region84: #{tpu_custom_call.1} parent=75 // pred_fallthru
          _
      $region76: #{tpu_custom_call.1} parent=5 // pred_fallthru
        _
      %p552 = scmp.le.s32.totalorder 1, %s32
      %p553 = scmp.lt.s32.totalorder %s32, 3
      %p554 = pnand %p552, %p553
      %p555 = pneg %p554
      // Predicated region
      $region85: #{tpu_custom_call.1} parent=5 // pred_check
        _
      $region86: #{tpu_custom_call.1} parent=5 // pred_check_branch
        %557 = sbr.rel (%p554) target = $region88
      $region87: #{tpu_custom_call.1} parent=5 // pred_region
        %s558 = ssub.s32 %s32, 1
        // Predicated region
        $region89: #{tpu_custom_call.1} parent=87 // pred_check
          %p559 = pneg %p117
        $region90: #{tpu_custom_call.1} parent=87 // pred_check_branch
          %561 = sbr.rel (%p559) target = $region92
        $region91: #{tpu_custom_call.1} parent=87 // pred_region
          %562 = dma.done [#allocation3], 128
        $region92: #{tpu_custom_call.1} parent=87 // pred_fallthru
          _
        %p563 = scmp.lt.s32.totalorder %s41, 1
        %s564 = scalar_select %p563, %s41, 1
        %s565 = smul.addr %s564, 8
        %s566 = scalar_lea.vmem %s0, %s565
        %p567 = pneg %p70
        %p568 = pneg %p67
        %p569 = scmp.lt.s32.totalorder %s41, 1
        %s570 = scalar_select %p569, %s41, 1
        %s571 = scalar_lea.vmem %s1, %s570
        %p572 = pneg %p96
        %p573 = pneg %p93
        %p574 = pneg %p117
        %p575 = pneg %p114
        %p576 = pneg %p138
        %p577 = pneg %p135
        %p578 = pneg %p159
        %p579 = pneg %p156
        %p580 = pneg %p180
        %p581 = pneg %p177
        %p582 = pneg %p201
        %p583 = pneg %p198
        %p584 = pneg %p222
        %p585 = pneg %p219
        %p586 = pneg %p243
        %p587 = pneg %p240
        %p588 = pneg %p264
        %p589 = pneg %p261
        %p590 = pneg %p285
        %p591 = pneg %p282
        %p592 = pneg %p306
        %p593 = pneg %p303
        %p594 = pneg %p327
        %p595 = pneg %p324
        %p596 = pneg %p348
        %p597 = pneg %p345
        %p598 = pneg %p369
        %p599 = pneg %p366
        %p600 = pneg %p390
        %p601 = pneg %p387
        %p602 = pneg %p411
        %p603 = pneg %p408
        %p604 = pneg %p439
        %p605 = pneg %p436
        %s606 = sand.u32 %s426, 1
        %s607 = scalar_lea.sflag [#allocation4], %s606
        %s608 = sand.u32 %s426, 1
        %s609 = smul.addr %s608, 8
        %s610 = scalar_lea.vmem [#allocation5], %s609
        %p611 = pneg %p467
        %p612 = pneg %p464
        %s613 = sand.u32 %s454, 1
        %s614 = scalar_lea.sflag [#allocation7], %s613
        %s615 = sand.u32 %s454, 1
        %s616 = smul.addr %s615, 32
        %s617 = scalar_lea.vmem [#allocation6], %s616
        %p618 = scmp.lt.s32.totalorder %s41, 1
        %s619 = scalar_select %p618, %s41, 1
        %s620 = smul.addr %s619, 8
        %s621 = scalar_lea.vmem %s0, %s620
        %p622 = scmp.lt.s32.totalorder %s41, 1
        %s623 = scalar_select %p622, %s41, 1
        %s624 = scalar_lea.vmem %s1, %s623
        %s626 = smul.u32 %s42, 8
        %v627 = vld [vmem:[%s621] sm:$0xff]
        %v628 = vld [vmem:[#allocation2] sm:$0xff]
        %v629 = vadd.f32 %v627, %v628
        %v630 = vld [vmem:[%s3] sm:$0x1]
        %v631 = vld [vmem:[%s4] sm:$0x1]
        %vm632 = vcmask 261120
        %v633 = vsel %vm632, %v629, 0.0
        %634 = vadd.xlane.f32.xlu0 %v633
        %v635 = vpop.xlane.xlu0 %634
        %v636 = vrcp.pop 32.0
        %v637 = vmul.f32 %v635, %v636
        %v638 = vsub.f32 %v629, %v637
        %v639 = vmul.f32 %v638, %v638
        %v640 = vsel %vm632, %v639, 0.0
        %641 = vadd.xlane.f32.xlu0 %v640
        %v642 = vpop.xlane.xlu0 %641
        %v643 = vmul.f32 %v642, %v636
        %v644 = vadd.f32 %v643, 1e-05
        %v645 = vrsqrt.pop %v644
        %v646 = vmul.f32 %v638, %v645
        %v648 = vlaneseq
        %v649 = vshrl.u32 %v648, 7
        %v650 = vsub.s32 0, %v649
        %v651 = vrot.slane %v630, %v650
        %v653 = vmul.f32 %v646, %v651
        %v655 = vlaneseq
        %v656 = vshrl.u32 %v655, 7
        %v657 = vsub.s32 0, %v656
        %v658 = vrot.slane %v631, %v657
        %v660 = vadd.f32 %v653, %v658
        %s661 = scalar_lea.vmem %s621, %s626
        %v662 = vld [vmem:[%s661] sm:$0xff]
        %s663 = scalar_lea.vmem [#allocation2], %s626
        %v664 = vld [vmem:[%s663] sm:$0xff]
        %v665 = vadd.f32 %v662, %v664
        %v666 = vsel %vm632, %v665, 0.0
        %667 = vadd.xlane.f32.xlu0 %v666
        %v668 = vpop.xlane.xlu0 %667
        %v669 = vmul.f32 %v668, %v636
        %v670 = vsub.f32 %v665, %v669
        %v671 = vmul.f32 %v670, %v670
        %v672 = vsel %vm632, %v671, 0.0
        %673 = vadd.xlane.f32.xlu0 %v672
        %v674 = vpop.xlane.xlu0 %673
        %v675 = vmul.f32 %v674, %v636
        %v676 = vadd.f32 %v675, 1e-05
        %v677 = vrsqrt.pop %v676
        %v678 = vmul.f32 %v670, %v677
        %v679 = vmul.f32 %v678, %v651
        %v680 = vadd.f32 %v679, %v658
        %v681 = vpack.c.bf16 %v680, %v680
        %v682 = vld [vmem:[%s5] sm:$0xf]
        %v683 = vld [vmem:[%s5 + $0x4] sm:$0xf]
        %v684 = vld [vmem:[%s5 + $0x8] sm:$0xf]
        %v685 = vld [vmem:[%s5 + $0xc] sm:$0xf]
        %v686 = vld [vmem:[%s6] sm:$0x1]
        %v688 = vlaneseq
        %v689 = vshrl.u32 %v688, 7
        %v690 = vsub.s32 0, %v689
        %v691 = vrot.slane %v686, %v690
        %v697 = vunpack.c.l.b16 %v682
        %v698 = vunpack.c.l.b16 %v683
        %v699 = vunpack.c.l.b16 %v684
        %v700 = vunpack.c.l.b16 %v685
        %v701 = vpack.c.b16 %v698, %v697
        %v702 = vpack.c.b16 %v700, %v699
        %v706 = vsel %vm632, %v681, 0
        %708 = vmatprep.subr.bf16.mxu0 0
        %709 = vmatpush1.bf16.msra.mxu0 %v701
        %710 = vmatprep.subr.bf16.mxu0 0
        %711 = vmatpush1.bf16.msra.mxu0 %v702
        %712 = vmatprep.subr.bf16.mxu0 0
        %713 = vmatpush1.bf16.msra.mxu0 0
        %714 = vmatprep.subr.bf16.mxu0 0
        %715 = vmatpush1.bf16.msra.mxu0 0
        %716 = vmatprep.subr.bf16.mxu0 0
        %717 = vmatpush1.bf16.msra.mxu0 0
        %718 = vmatprep.subr.bf16.mxu0 0
        %719 = vmatpush1.bf16.msra.mxu0 0
        %720 = vmatprep.subr.bf16.mxu0 0
        %721 = vmatpush1.bf16.msra.mxu0 0
        %722 = vmatprep.subr.bf16.mxu0 0
        %723 = vmatpush1.bf16.msra.mxu0 0
        %724 = vmatprep.subr.bf16.mxu0 0
        %725 = vmatpush1.bf16.msra.mxu0 0
        %726 = vmatprep.subr.bf16.mxu0 0
        %727 = vmatpush1.bf16.msra.mxu0 0
        %728 = vmatprep.subr.bf16.mxu0 0
        %729 = vmatpush1.bf16.msra.mxu0 0
        %730 = vmatprep.subr.bf16.mxu0 0
        %731 = vmatpush1.bf16.msra.mxu0 0
        %732 = vmatprep.subr.bf16.mxu0 0
        %733 = vmatpush1.bf16.msra.mxu0 0
        %734 = vmatprep.subr.bf16.mxu0 0
        %735 = vmatpush1.bf16.msra.mxu0 0
        %736 = vmatprep.subr.bf16.mxu0 0
        %737 = vmatpush1.bf16.msra.mxu0 0
        %738 = vmatprep.subr.bf16.mxu0 0
        %739 = vmatpush1.bf16.msra.mxu0 0
        %740 = vmatprep.mubr.bf16.mxu0 0
        %741 = vmatmul.mubr.bf16.gmra.mrb[0].mxu0 %v706
        %v742 = vpop.f32.mrb[0].mxu0
        %v743 = vadd.f32 %v691, %v742
        %v744 = vpop.f32.mrb[0].mxu0
        %v745 = vpop.f32.mrb[0].mxu0
        %v746 = vpop.f32.mrb[0].mxu0
        %747 = vdwg.mxu0
        %v748 = vpack.c.bf16 %v660, %v660
        %v749 = vld [vmem:[%s7] sm:$0xf]
        %v750 = vld [vmem:[%s7 + $0x4] sm:$0xf]
        %v751 = vld [vmem:[%s7 + $0x8] sm:$0xf]
        %v752 = vld [vmem:[%s7 + $0xc] sm:$0xf]
        %v753 = vld [vmem:[%s8] sm:$0x1]
        %v755 = vlaneseq
        %v756 = vshrl.u32 %v755, 7
        %v757 = vsub.s32 0, %v756
        %v758 = vrot.slane %v753, %v757
        %v764 = vunpack.c.l.b16 %v749
        %v765 = vunpack.c.l.b16 %v750
        %v766 = vunpack.c.l.b16 %v751
        %v767 = vunpack.c.l.b16 %v752
        %v768 = vpack.c.b16 %v765, %v764
        %v769 = vpack.c.b16 %v767, %v766
        %v773 = vsel %vm632, %v748, 0
        %775 = vmatprep.subr.bf16.mxu0 0
        %776 = vmatpush1.bf16.msra.mxu0 %v768
        %777 = vmatprep.subr.bf16.mxu0 0
        %778 = vmatpush1.bf16.msra.mxu0 %v769
        %779 = vmatprep.subr.bf16.mxu0 0
        %780 = vmatpush1.bf16.msra.mxu0 0
        %781 = vmatprep.subr.bf16.mxu0 0
        %782 = vmatpush1.bf16.msra.mxu0 0
        %783 = vmatprep.subr.bf16.mxu0 0
        %784 = vmatpush1.bf16.msra.mxu0 0
        %785 = vmatprep.subr.bf16.mxu0 0
        %786 = vmatpush1.bf16.msra.mxu0 0
        %787 = vmatprep.subr.bf16.mxu0 0
        %788 = vmatpush1.bf16.msra.mxu0 0
        %789 = vmatprep.subr.bf16.mxu0 0
        %790 = vmatpush1.bf16.msra.mxu0 0
        %791 = vmatprep.subr.bf16.mxu0 0
        %792 = vmatpush1.bf16.msra.mxu0 0
        %793 = vmatprep.subr.bf16.mxu0 0
        %794 = vmatpush1.bf16.msra.mxu0 0
        %795 = vmatprep.subr.bf16.mxu0 0
        %796 = vmatpush1.bf16.msra.mxu0 0
        %797 = vmatprep.subr.bf16.mxu0 0
        %798 = vmatpush1.bf16.msra.mxu0 0
        %799 = vmatprep.subr.bf16.mxu0 0
        %800 = vmatpush1.bf16.msra.mxu0 0
        %801 = vmatprep.subr.bf16.mxu0 0
        %802 = vmatpush1.bf16.msra.mxu0 0
        %803 = vmatprep.subr.bf16.mxu0 0
        %804 = vmatpush1.bf16.msra.mxu0 0
        %805 = vmatprep.subr.bf16.mxu0 0
        %806 = vmatpush1.bf16.msra.mxu0 0
        %807 = vmatprep.mubr.bf16.mxu0 0
        %808 = vmatmul.mubr.bf16.gmra.mrb[0].mxu0 %v773
        %v809 = vpop.f32.mrb[0].mxu0
        %v810 = vadd.f32 %v758, %v809
        %v811 = vpop.f32.mrb[0].mxu0
        %v812 = vpop.f32.mrb[0].mxu0
        %v813 = vpop.f32.mrb[0].mxu0
        %814 = vdwg.mxu0
        %816 = vrot.lane.b32.xlu0 %v743, 120
        %v817 = vpop.permute.xlu0 %816
        %819 = vrot.lane.b32.xlu0 %v743, 112
        %v820 = vpop.permute.xlu0 %819
        %822 = vrot.lane.b32.xlu0 %v743, 104
        %v823 = vpop.permute.xlu0 %822
        %v825 = vpack.c.bf16 %v743, %v743
        %v826 = vpack.c.bf16 %v817, %v817
        %v827 = vpack.c.bf16 %v820, %v820
        %v828 = vpack.c.bf16 %v823, %v823
        %830 = vrot.lane.b32.xlu0 %v810, 120
        %v831 = vpop.permute.xlu0 %830
        %833 = vrot.lane.b32.xlu0 %v810, 112
        %v834 = vpop.permute.xlu0 %833
        %836 = vrot.lane.b32.xlu0 %v810, 104
        %v837 = vpop.permute.xlu0 %836
        %v839 = vpack.c.bf16 %v810, %v810
        %v840 = vpack.c.bf16 %v831, %v831
        %v841 = vpack.c.bf16 %v834, %v834
        %v842 = vpack.c.bf16 %v837, %v837
        %v843 = vld [vmem:[%s624] sm:$0x1]
        %v845 = vlaneseq
        %v846 = vshrl.u32 %v845, 7
        %v847 = vsub.s32 0, %v846
        %v848 = vrot.slane %v843, %v847
        %vm850 = vcmask 64512
        %v852 = vsel %vm850, %v825, 0
        %v855 = vsel %vm850, %v839, 0
        %857 = vmatprep.subr.bf16.mxu0 0
        %858 = vmatpush1.bf16.xpose.msra.mxu0 %v855
        %859 = vmatprep.subr.bf16.mxu0 0
        %860 = vmatpush1.bf16.xpose.msra.mxu0 0
        %861 = vmatprep.subr.bf16.mxu0 0
        %862 = vmatpush1.bf16.xpose.msra.mxu0 0
        %863 = vmatprep.subr.bf16.mxu0 0
        %864 = vmatpush1.bf16.xpose.msra.mxu0 0
        %865 = vmatprep.subr.bf16.mxu0 0
        %866 = vmatpush1.bf16.xpose.msra.mxu0 0
        %867 = vmatprep.subr.bf16.mxu0 0
        %868 = vmatpush1.bf16.xpose.msra.mxu0 0
        %869 = vmatprep.subr.bf16.mxu0 0
        %870 = vmatpush1.bf16.xpose.msra.mxu0 0
        %871 = vmatprep.subr.bf16.mxu0 0
        %872 = vmatpush1.bf16.xpose.msra.mxu0 0
        %873 = vmatprep.subr.bf16.mxu0 0
        %874 = vmatpush1.bf16.xpose.msra.mxu0 0
        %875 = vmatprep.subr.bf16.mxu0 0
        %876 = vmatpush1.bf16.xpose.msra.mxu0 0
        %877 = vmatprep.subr.bf16.mxu0 0
        %878 = vmatpush1.bf16.xpose.msra.mxu0 0
        %879 = vmatprep.subr.bf16.mxu0 0
        %880 = vmatpush1.bf16.xpose.msra.mxu0 0
        %881 = vmatprep.subr.bf16.mxu0 0
        %882 = vmatpush1.bf16.xpose.msra.mxu0 0
        %883 = vmatprep.subr.bf16.mxu0 0
        %884 = vmatpush1.bf16.xpose.msra.mxu0 0
        %885 = vmatprep.subr.bf16.mxu0 0
        %886 = vmatpush1.bf16.xpose.msra.mxu0 0
        %887 = vmatprep.subr.bf16.mxu0 0
        %888 = vmatpush1.bf16.xpose.msra.mxu0 0
        %889 = vmatprep.mubr.bf16.mxu0 0
        %890 = vmatmul.mubr.bf16.gmra.mrb[0].mxu0 %v852
        %v891 = vpop.f32.mrb[0].mxu0
        %v892 = vadd.f32 %v848, %v891
        %v893 = vpop.f32.mrb[0].mxu0
        %v894 = vpop.f32.mrb[0].mxu0
        %v895 = vpop.f32.mrb[0].mxu0
        %896 = vdwg.mxu0
        %v898 = vsel %vm850, %v826, 0
        %v901 = vsel %vm850, %v840, 0
        %903 = vmatprep.subr.bf16.mxu0 0
        %904 = vmatpush1.bf16.xpose.msra.mxu0 %v901
        %905 = vmatprep.subr.bf16.mxu0 0
        %906 = vmatpush1.bf16.xpose.msra.mxu0 0
        %907 = vmatprep.subr.bf16.mxu0 0
        %908 = vmatpush1.bf16.xpose.msra.mxu0 0
        %909 = vmatprep.subr.bf16.mxu0 0
        %910 = vmatpush1.bf16.xpose.msra.mxu0 0
        %911 = vmatprep.subr.bf16.mxu0 0
        %912 = vmatpush1.bf16.xpose.msra.mxu0 0
        %913 = vmatprep.subr.bf16.mxu0 0
        %914 = vmatpush1.bf16.xpose.msra.mxu0 0
        %915 = vmatprep.subr.bf16.mxu0 0
        %916 = vmatpush1.bf16.xpose.msra.mxu0 0
        %917 = vmatprep.subr.bf16.mxu0 0
        %918 = vmatpush1.bf16.xpose.msra.mxu0 0
        %919 = vmatprep.subr.bf16.mxu0 0
        %920 = vmatpush1.bf16.xpose.msra.mxu0 0
        %921 = vmatprep.subr.bf16.mxu0 0
        %922 = vmatpush1.bf16.xpose.msra.mxu0 0
        %923 = vmatprep.subr.bf16.mxu0 0
        %924 = vmatpush1.bf16.xpose.msra.mxu0 0
        %925 = vmatprep.subr.bf16.mxu0 0
        %926 = vmatpush1.bf16.xpose.msra.mxu0 0
        %927 = vmatprep.subr.bf16.mxu0 0
        %928 = vmatpush1.bf16.xpose.msra.mxu0 0
        %929 = vmatprep.subr.bf16.mxu0 0
        %930 = vmatpush1.bf16.xpose.msra.mxu0 0
        %931 = vmatprep.subr.bf16.mxu0 0
        %932 = vmatpush1.bf16.xpose.msra.mxu0 0
        %933 = vmatprep.subr.bf16.mxu0 0
        %934 = vmatpush1.bf16.xpose.msra.mxu0 0
        %935 = vmatprep.mubr.bf16.mxu0 0
        %936 = vmatmul.mubr.bf16.gmra.mrb[0].mxu0 %v898
        %v937 = vpop.f32.mrb[0].mxu0
        %v938 = vadd.f32 %v848, %v937
        %v939 = vpop.f32.mrb[0].mxu0
        %v940 = vpop.f32.mrb[0].mxu0
        %v941 = vpop.f32.mrb[0].mxu0
        %942 = vdwg.mxu0
        %v944 = vsel %vm850, %v827, 0
        %v947 = vsel %vm850, %v841, 0
        %949 = vmatprep.subr.bf16.mxu0 0
        %950 = vmatpush1.bf16.xpose.msra.mxu0 %v947
        %951 = vmatprep.subr.bf16.mxu0 0
        %952 = vmatpush1.bf16.xpose.msra.mxu0 0
        %953 = vmatprep.subr.bf16.mxu0 0
        %954 = vmatpush1.bf16.xpose.msra.mxu0 0
        %955 = vmatprep.subr.bf16.mxu0 0
        %956 = vmatpush1.bf16.xpose.msra.mxu0 0
        %957 = vmatprep.subr.bf16.mxu0 0
        %958 = vmatpush1.bf16.xpose.msra.mxu0 0
        %959 = vmatprep.subr.bf16.mxu0 0
        %960 = vmatpush1.bf16.xpose.msra.mxu0 0
        %961 = vmatprep.subr.bf16.mxu0 0
        %962 = vmatpush1.bf16.xpose.msra.mxu0 0
        %963 = vmatprep.subr.bf16.mxu0 0
        %964 = vmatpush1.bf16.xpose.msra.mxu0 0
        %965 = vmatprep.subr.bf16.mxu0 0
        %966 = vmatpush1.bf16.xpose.msra.mxu0 0
        %967 = vmatprep.subr.bf16.mxu0 0
        %968 = vmatpush1.bf16.xpose.msra.mxu0 0
        %969 = vmatprep.subr.bf16.mxu0 0
        %970 = vmatpush1.bf16.xpose.msra.mxu0 0
        %971 = vmatprep.subr.bf16.mxu0 0
        %972 = vmatpush1.bf16.xpose.msra.mxu0 0
        %973 = vmatprep.subr.bf16.mxu0 0
        %974 = vmatpush1.bf16.xpose.msra.mxu0 0
        %975 = vmatprep.subr.bf16.mxu0 0
        %976 = vmatpush1.bf16.xpose.msra.mxu0 0
        %977 = vmatprep.subr.bf16.mxu0 0
        %978 = vmatpush1.bf16.xpose.msra.mxu0 0
        %979 = vmatprep.subr.bf16.mxu0 0
        %980 = vmatpush1.bf16.xpose.msra.mxu0 0
        %981 = vmatprep.mubr.bf16.mxu0 0
        %982 = vmatmul.mubr.bf16.gmra.mrb[0].mxu0 %v944
        %v983 = vpop.f32.mrb[0].mxu0
        %v984 = vadd.f32 %v848, %v983
        %v985 = vpop.f32.mrb[0].mxu0
        %v986 = vpop.f32.mrb[0].mxu0
        %v987 = vpop.f32.mrb[0].mxu0
        %988 = vdwg.mxu0
        %v990 = vsel %vm850, %v828, 0
        %v993 = vsel %vm850, %v842, 0
        %995 = vmatprep.subr.bf16.mxu0 0
        %996 = vmatpush1.bf16.xpose.msra.mxu0 %v993
        %997 = vmatprep.subr.bf16.mxu0 0
        %998 = vmatpush1.bf16.xpose.msra.mxu0 0
        %999 = vmatprep.subr.bf16.mxu0 0
        %1000 = vmatpush1.bf16.xpose.msra.mxu0 0
        %1001 = vmatprep.subr.bf16.mxu0 0
        %1002 = vmatpush1.bf16.xpose.msra.mxu0 0
        %1003 = vmatprep.subr.bf16.mxu0 0
        %1004 = vmatpush1.bf16.xpose.msra.mxu0 0
        %1005 = vmatprep.subr.bf16.mxu0 0
        %1006 = vmatpush1.bf16.xpose.msra.mxu0 0
        %1007 = vmatprep.subr.bf16.mxu0 0
        %1008 = vmatpush1.bf16.xpose.msra.mxu0 0
        %1009 = vmatprep.subr.bf16.mxu0 0
        %1010 = vmatpush1.bf16.xpose.msra.mxu0 0
        %1011 = vmatprep.subr.bf16.mxu0 0
        %1012 = vmatpush1.bf16.xpose.msra.mxu0 0
        %1013 = vmatprep.subr.bf16.mxu0 0
        %1014 = vmatpush1.bf16.xpose.msra.mxu0 0
        %1015 = vmatprep.subr.bf16.mxu0 0
        %1016 = vmatpush1.bf16.xpose.msra.mxu0 0
        %1017 = vmatprep.subr.bf16.mxu0 0
        %1018 = vmatpush1.bf16.xpose.msra.mxu0 0
        %1019 = vmatprep.subr.bf16.mxu0 0
        %1020 = vmatpush1.bf16.xpose.msra.mxu0 0
        %1021 = vmatprep.subr.bf16.mxu0 0
        %1022 = vmatpush1.bf16.xpose.msra.mxu0 0
        %1023 = vmatprep.subr.bf16.mxu0 0
        %1024 = vmatpush1.bf16.xpose.msra.mxu0 0
        %1025 = vmatprep.subr.bf16.mxu0 0
        %1026 = vmatpush1.bf16.xpose.msra.mxu0 0
        %1027 = vmatprep.mubr.bf16.mxu0 0
        %1028 = vmatmul.mubr.bf16.gmra.mrb[0].mxu0 %v990
        %v1029 = vpop.f32.mrb[0].mxu0
        %v1030 = vadd.f32 %v848, %v1029
        %v1031 = vpop.f32.mrb[0].mxu0
        %v1032 = vpop.f32.mrb[0].mxu0
        %v1033 = vpop.f32.mrb[0].mxu0
        %1034 = vdwg.mxu0
        %v1035 = vsel %vm850, %v892, -inf
        %1036 = vmax.xlane.f32.xlu0 %v1035
        %v1037 = vpop.xlane.xlu0 %1036
        %v1038 = vsel %vm850, %v938, -inf
        %1039 = vmax.xlane.f32.xlu0 %v1038
        %v1040 = vpop.xlane.xlu0 %1039
        %v1041 = vsel %vm850, %v984, -inf
        %1042 = vmax.xlane.f32.xlu0 %v1041
        %v1043 = vpop.xlane.xlu0 %1042
        %v1044 = vsel %vm850, %v1030, -inf
        %1045 = vmax.xlane.f32.xlu0 %v1044
        %v1046 = vpop.xlane.xlu0 %1045
        %v1047 = vsub.f32 %v892, %v1037
        %v1048 = vsub.f32 %v938, %v1040
        %v1049 = vsub.f32 %v984, %v1043
        %v1050 = vsub.f32 %v1030, %v1046
        %v1051 = vmul.f32 %v1047, 1.442695
        %v1052 = vpow.pop %v1051
        %v1053 = vmul.f32 %v1048, 1.442695
        %v1054 = vpow.pop %v1053
        %v1055 = vmul.f32 %v1049, 1.442695
        %v1056 = vpow.pop %v1055
        %v1057 = vmul.f32 %v1050, 1.442695
        %v1058 = vpow.pop %v1057
        %v1059 = vsel %vm850, %v1052, 0.0
        %1060 = vadd.xlane.f32.xlu0 %v1059
        %v1061 = vpop.xlane.xlu0 %1060
        %v1062 = vsel %vm850, %v1054, 0.0
        %1063 = vadd.xlane.f32.xlu0 %v1062
        %v1064 = vpop.xlane.xlu0 %1063
        %v1065 = vsel %vm850, %v1056, 0.0
        %1066 = vadd.xlane.f32.xlu0 %v1065
        %v1067 = vpop.xlane.xlu0 %1066
        %v1068 = vsel %vm850, %v1058, 0.0
        %1069 = vadd.xlane.f32.xlu0 %v1068
        %v1070 = vpop.xlane.xlu0 %1069
        %v1071 = vrcp.pop %v1061
        %v1072 = vmul.f32 1.0, %v1071
        %v1073 = vrcp.pop %v1064
        %v1074 = vmul.f32 1.0, %v1073
        %v1075 = vrcp.pop %v1067
        %v1076 = vmul.f32 1.0, %v1075
        %v1077 = vrcp.pop %v1070
        %v1078 = vmul.f32 1.0, %v1077
        %v1079 = vmul.f32 %v1052, %v1072
        %v1080 = vmul.f32 %v1054, %v1074
        %v1081 = vmul.f32 %v1056, %v1076
        %v1082 = vmul.f32 %v1058, %v1078
        %1083 = vst.msk [vmem:[%s617] sm:$0xff] %vm850, %v1079
        %1084 = vst.msk [vmem:[%s617 + $0x8] sm:$0xff] %vm850, %v1080
        %1085 = vst.msk [vmem:[%s617 + $0x10] sm:$0xff] %vm850, %v1081
        %1086 = vst.msk [vmem:[%s617 + $0x18] sm:$0xff] %vm850, %v1082
        %v1087 = vpack.c.bf16 %v1079, %v1079
        %v1088 = vpack.c.bf16 %v1080, %v1080
        %v1089 = vpack.c.bf16 %v1081, %v1081
        %v1090 = vpack.c.bf16 %v1082, %v1082
        %1092 = vrot.lane.b32.xlu0 %v839, 96
        %v1093 = vpop.permute.xlu0 %1092
        %v1095 = vsel %vm850, %v1087, 0
        %vm1097 = vcmask 1043456
        %v1099 = vsel %vm1097, %v1093, 0
        %1101 = vmatprep.subr.bf16.mxu0 0
        %1102 = vmatpush1.bf16.msra.mxu0 %v1099
        %1103 = vmatprep.subr.bf16.mxu0 0
        %1104 = vmatpush1.bf16.msra.mxu0 0
        %1105 = vmatprep.subr.bf16.mxu0 0
        %1106 = vmatpush1.bf16.msra.mxu0 0
        %1107 = vmatprep.subr.bf16.mxu0 0
        %1108 = vmatpush1.bf16.msra.mxu0 0
        %1109 = vmatprep.subr.bf16.mxu0 0
        %1110 = vmatpush1.bf16.msra.mxu0 0
        %1111 = vmatprep.subr.bf16.mxu0 0
        %1112 = vmatpush1.bf16.msra.mxu0 0
        %1113 = vmatprep.subr.bf16.mxu0 0
        %1114 = vmatpush1.bf16.msra.mxu0 0
        %1115 = vmatprep.subr.bf16.mxu0 0
        %1116 = vmatpush1.bf16.msra.mxu0 0
        %1117 = vmatprep.subr.bf16.mxu0 0
        %1118 = vmatpush1.bf16.msra.mxu0 0
        %1119 = vmatprep.subr.bf16.mxu0 0
        %1120 = vmatpush1.bf16.msra.mxu0 0
        %1121 = vmatprep.subr.bf16.mxu0 0
        %1122 = vmatpush1.bf16.msra.mxu0 0
        %1123 = vmatprep.subr.bf16.mxu0 0
        %1124 = vmatpush1.bf16.msra.mxu0 0
        %1125 = vmatprep.subr.bf16.mxu0 0
        %1126 = vmatpush1.bf16.msra.mxu0 0
        %1127 = vmatprep.subr.bf16.mxu0 0
        %1128 = vmatpush1.bf16.msra.mxu0 0
        %1129 = vmatprep.subr.bf16.mxu0 0
        %1130 = vmatpush1.bf16.msra.mxu0 0
        %1131 = vmatprep.subr.bf16.mxu0 0
        %1132 = vmatpush1.bf16.msra.mxu0 0
        %1133 = vmatprep.mubr.bf16.mxu0 0
        %1134 = vmatmul.mubr.bf16.gmra.mrb[0].mxu0 %v1095
        %v1135 = vpop.f32.mrb[0].mxu0
        %v1136 = vadd.f32 0.0, %v1135
        %v1137 = vpop.f32.mrb[0].mxu0
        %v1138 = vpop.f32.mrb[0].mxu0
        %v1139 = vpop.f32.mrb[0].mxu0
        %1140 = vdwg.mxu0
        %1142 = vrot.lane.b32.xlu0 %v840, 96
        %v1143 = vpop.permute.xlu0 %1142
        %v1145 = vsel %vm850, %v1088, 0
        %v1148 = vsel %vm1097, %v1143, 0
        %1150 = vmatprep.subr.bf16.mxu0 0
        %1151 = vmatpush1.bf16.msra.mxu0 %v1148
        %1152 = vmatprep.subr.bf16.mxu0 0
        %1153 = vmatpush1.bf16.msra.mxu0 0
        %1154 = vmatprep.subr.bf16.mxu0 0
        %1155 = vmatpush1.bf16.msra.mxu0 0
        %1156 = vmatprep.subr.bf16.mxu0 0
        %1157 = vmatpush1.bf16.msra.mxu0 0
        %1158 = vmatprep.subr.bf16.mxu0 0
        %1159 = vmatpush1.bf16.msra.mxu0 0
        %1160 = vmatprep.subr.bf16.mxu0 0
        %1161 = vmatpush1.bf16.msra.mxu0 0
        %1162 = vmatprep.subr.bf16.mxu0 0
        %1163 = vmatpush1.bf16.msra.mxu0 0
        %1164 = vmatprep.subr.bf16.mxu0 0
        %1165 = vmatpush1.bf16.msra.mxu0 0
        %1166 = vmatprep.subr.bf16.mxu0 0
        %1167 = vmatpush1.bf16.msra.mxu0 0
        %1168 = vmatprep.subr.bf16.mxu0 0
        %1169 = vmatpush1.bf16.msra.mxu0 0
        %1170 = vmatprep.subr.bf16.mxu0 0
        %1171 = vmatpush1.bf16.msra.mxu0 0
        %1172 = vmatprep.subr.bf16.mxu0 0
        %1173 = vmatpush1.bf16.msra.mxu0 0
        %1174 = vmatprep.subr.bf16.mxu0 0
        %1175 = vmatpush1.bf16.msra.mxu0 0
        %1176 = vmatprep.subr.bf16.mxu0 0
        %1177 = vmatpush1.bf16.msra.mxu0 0
        %1178 = vmatprep.subr.bf16.mxu0 0
        %1179 = vmatpush1.bf16.msra.mxu0 0
        %1180 = vmatprep.subr.bf16.mxu0 0
        %1181 = vmatpush1.bf16.msra.mxu0 0
        %1182 = vmatprep.mubr.bf16.mxu0 0
        %1183 = vmatmul.mubr.bf16.gmra.mrb[0].mxu0 %v1145
        %v1184 = vpop.f32.mrb[0].mxu0
        %v1185 = vadd.f32 0.0, %v1184
        %v1186 = vpop.f32.mrb[0].mxu0
        %v1187 = vpop.f32.mrb[0].mxu0
        %v1188 = vpop.f32.mrb[0].mxu0
        %1189 = vdwg.mxu0
        %1191 = vrot.lane.b32.xlu0 %v841, 96
        %v1192 = vpop.permute.xlu0 %1191
        %v1194 = vsel %vm850, %v1089, 0
        %v1197 = vsel %vm1097, %v1192, 0
        %1199 = vmatprep.subr.bf16.mxu0 0
        %1200 = vmatpush1.bf16.msra.mxu0 %v1197
        %1201 = vmatprep.subr.bf16.mxu0 0
        %1202 = vmatpush1.bf16.msra.mxu0 0
        %1203 = vmatprep.subr.bf16.mxu0 0
        %1204 = vmatpush1.bf16.msra.mxu0 0
        %1205 = vmatprep.subr.bf16.mxu0 0
        %1206 = vmatpush1.bf16.msra.mxu0 0
        %1207 = vmatprep.subr.bf16.mxu0 0
        %1208 = vmatpush1.bf16.msra.mxu0 0
        %1209 = vmatprep.subr.bf16.mxu0 0
        %1210 = vmatpush1.bf16.msra.mxu0 0
        %1211 = vmatprep.subr.bf16.mxu0 0
        %1212 = vmatpush1.bf16.msra.mxu0 0
        %1213 = vmatprep.subr.bf16.mxu0 0
        %1214 = vmatpush1.bf16.msra.mxu0 0
        %1215 = vmatprep.subr.bf16.mxu0 0
        %1216 = vmatpush1.bf16.msra.mxu0 0
        %1217 = vmatprep.subr.bf16.mxu0 0
        %1218 = vmatpush1.bf16.msra.mxu0 0
        %1219 = vmatprep.subr.bf16.mxu0 0
        %1220 = vmatpush1.bf16.msra.mxu0 0
        %1221 = vmatprep.subr.bf16.mxu0 0
        %1222 = vmatpush1.bf16.msra.mxu0 0
        %1223 = vmatprep.subr.bf16.mxu0 0
        %1224 = vmatpush1.bf16.msra.mxu0 0
        %1225 = vmatprep.subr.bf16.mxu0 0
        %1226 = vmatpush1.bf16.msra.mxu0 0
        %1227 = vmatprep.subr.bf16.mxu0 0
        %1228 = vmatpush1.bf16.msra.mxu0 0
        %1229 = vmatprep.subr.bf16.mxu0 0
        %1230 = vmatpush1.bf16.msra.mxu0 0
        %1231 = vmatprep.mubr.bf16.mxu0 0
        %1232 = vmatmul.mubr.bf16.gmra.mrb[0].mxu0 %v1194
        %v1233 = vpop.f32.mrb[0].mxu0
        %v1234 = vadd.f32 0.0, %v1233
        %v1235 = vpop.f32.mrb[0].mxu0
        %v1236 = vpop.f32.mrb[0].mxu0
        %v1237 = vpop.f32.mrb[0].mxu0
        %1238 = vdwg.mxu0
        %1240 = vrot.lane.b32.xlu0 %v842, 96
        %v1241 = vpop.permute.xlu0 %1240
        %v1243 = vsel %vm850, %v1090, 0
        %v1246 = vsel %vm1097, %v1241, 0
        %1248 = vmatprep.subr.bf16.mxu0 0
        %1249 = vmatpush1.bf16.msra.mxu0 %v1246
        %1250 = vmatprep.subr.bf16.mxu0 0
        %1251 = vmatpush1.bf16.msra.mxu0 0
        %1252 = vmatprep.subr.bf16.mxu0 0
        %1253 = vmatpush1.bf16.msra.mxu0 0
        %1254 = vmatprep.subr.bf16.mxu0 0
        %1255 = vmatpush1.bf16.msra.mxu0 0
        %1256 = vmatprep.subr.bf16.mxu0 0
        %1257 = vmatpush1.bf16.msra.mxu0 0
        %1258 = vmatprep.subr.bf16.mxu0 0
        %1259 = vmatpush1.bf16.msra.mxu0 0
        %1260 = vmatprep.subr.bf16.mxu0 0
        %1261 = vmatpush1.bf16.msra.mxu0 0
        %1262 = vmatprep.subr.bf16.mxu0 0
        %1263 = vmatpush1.bf16.msra.mxu0 0
        %1264 = vmatprep.subr.bf16.mxu0 0
        %1265 = vmatpush1.bf16.msra.mxu0 0
        %1266 = vmatprep.subr.bf16.mxu0 0
        %1267 = vmatpush1.bf16.msra.mxu0 0
        %1268 = vmatprep.subr.bf16.mxu0 0
        %1269 = vmatpush1.bf16.msra.mxu0 0
        %1270 = vmatprep.subr.bf16.mxu0 0
        %1271 = vmatpush1.bf16.msra.mxu0 0
        %1272 = vmatprep.subr.bf16.mxu0 0
        %1273 = vmatpush1.bf16.msra.mxu0 0
        %1274 = vmatprep.subr.bf16.mxu0 0
        %1275 = vmatpush1.bf16.msra.mxu0 0
        %1276 = vmatprep.subr.bf16.mxu0 0
        %1277 = vmatpush1.bf16.msra.mxu0 0
        %1278 = vmatprep.subr.bf16.mxu0 0
        %1279 = vmatpush1.bf16.msra.mxu0 0
        %1280 = vmatprep.mubr.bf16.mxu0 0
        %1281 = vmatmul.mubr.bf16.gmra.mrb[0].mxu0 %v1243
        %v1282 = vpop.f32.mrb[0].mxu0
        %v1283 = vadd.f32 0.0, %v1282
        %v1284 = vpop.f32.mrb[0].mxu0
        %v1285 = vpop.f32.mrb[0].mxu0
        %v1286 = vpop.f32.mrb[0].mxu0
        %1287 = vdwg.mxu0
        %1289 = vrot.lane.b32.xlu0 %v1185, 8
        %v1290 = vpop.permute.xlu0 %1289
        %1293 = vrot.lane.b32.xlu0 %v1234, 16
        %v1294 = vpop.permute.xlu0 %1293
        %1297 = vrot.lane.b32.xlu0 %v1283, 24
        %v1298 = vpop.permute.xlu0 %1297
        %v1300 = vsel %vm850, %v1136, %v1290
        %vm1301 = vcmask 130048
        %v1302 = vsel %vm1301, %v1300, %v1294
        %vm1303 = vcmask 195584
        %v1304 = vsel %vm1303, %v1302, %v1298
        %v1305 = vpack.c.bf16 %v1304, %v1304
        %v1306 = vld [vmem:[%s9] sm:$0xf]
        %v1307 = vld [vmem:[%s9 + $0x4] sm:$0xf]
        %v1308 = vld [vmem:[%s9 + $0x8] sm:$0xf]
        %v1309 = vld [vmem:[%s9 + $0xc] sm:$0xf]
        %v1310 = vld [vmem:[%s10] sm:$0x1]
        %v1312 = vlaneseq
        %v1313 = vshrl.u32 %v1312, 7
        %v1314 = vsub.s32 0, %v1313
        %v1315 = vrot.slane %v1310, %v1314
        %v1321 = vunpack.c.l.b16 %v1306
        %v1322 = vunpack.c.l.b16 %v1307
        %v1323 = vunpack.c.l.b16 %v1308
        %v1324 = vunpack.c.l.b16 %v1309
        %v1325 = vpack.c.b16 %v1322, %v1321
        %v1326 = vpack.c.b16 %v1324, %v1323
        %v1330 = vsel %vm632, %v1305, 0
        %1332 = vmatprep.subr.bf16.mxu0 0
        %1333 = vmatpush1.bf16.msra.mxu0 %v1325
        %1334 = vmatprep.subr.bf16.mxu0 0
        %1335 = vmatpush1.bf16.msra.mxu0 %v1326
        %1336 = vmatprep.subr.bf16.mxu0 0
        %1337 = vmatpush1.bf16.msra.mxu0 0
        %1338 = vmatprep.subr.bf16.mxu0 0
        %1339 = vmatpush1.bf16.msra.mxu0 0
        %1340 = vmatprep.subr.bf16.mxu0 0
        %1341 = vmatpush1.bf16.msra.mxu0 0
        %1342 = vmatprep.subr.bf16.mxu0 0
        %1343 = vmatpush1.bf16.msra.mxu0 0
        %1344 = vmatprep.subr.bf16.mxu0 0
        %1345 = vmatpush1.bf16.msra.mxu0 0
        %1346 = vmatprep.subr.bf16.mxu0 0
        %1347 = vmatpush1.bf16.msra.mxu0 0
        %1348 = vmatprep.subr.bf16.mxu0 0
        %1349 = vmatpush1.bf16.msra.mxu0 0
        %1350 = vmatprep.subr.bf16.mxu0 0
        %1351 = vmatpush1.bf16.msra.mxu0 0
        %1352 = vmatprep.subr.bf16.mxu0 0
        %1353 = vmatpush1.bf16.msra.mxu0 0
        %1354 = vmatprep.subr.bf16.mxu0 0
        %1355 = vmatpush1.bf16.msra.mxu0 0
        %1356 = vmatprep.subr.bf16.mxu0 0
        %1357 = vmatpush1.bf16.msra.mxu0 0
        %1358 = vmatprep.subr.bf16.mxu0 0
        %1359 = vmatpush1.bf16.msra.mxu0 0
        %1360 = vmatprep.subr.bf16.mxu0 0
        %1361 = vmatpush1.bf16.msra.mxu0 0
        %1362 = vmatprep.subr.bf16.mxu0 0
        %1363 = vmatpush1.bf16.msra.mxu0 0
        %1364 = vmatprep.mubr.bf16.mxu0 0
        %1365 = vmatmul.mubr.bf16.gmra.mrb[0].mxu0 %v1330
        %v1366 = vpop.f32.mrb[0].mxu0
        %v1367 = vadd.f32 %v1315, %v1366
        %v1368 = vpop.f32.mrb[0].mxu0
        %v1369 = vpop.f32.mrb[0].mxu0
        %v1370 = vpop.f32.mrb[0].mxu0
        %1371 = vdwg.mxu0
        %v1372 = vadd.f32 %v665, %v1367
        %v1373 = vld [vmem:[%s11] sm:$0x1]
        %v1374 = vld [vmem:[%s12] sm:$0x1]
        %v1375 = vsel %vm632, %v1372, 0.0
        %1376 = vadd.xlane.f32.xlu0 %v1375
        %v1377 = vpop.xlane.xlu0 %1376
        %v1378 = vmul.f32 %v1377, %v636
        %v1379 = vsub.f32 %v1372, %v1378
        %v1380 = vmul.f32 %v1379, %v1379
        %v1381 = vsel %vm632, %v1380, 0.0
        %1382 = vadd.xlane.f32.xlu0 %v1381
        %v1383 = vpop.xlane.xlu0 %1382
        %v1384 = vmul.f32 %v1383, %v636
        %v1385 = vadd.f32 %v1384, 1e-05
        %v1386 = vrsqrt.pop %v1385
        %v1387 = vmul.f32 %v1379, %v1386
        %v1389 = vlaneseq
        %v1390 = vshrl.u32 %v1389, 7
        %v1391 = vsub.s32 0, %v1390
        %v1392 = vrot.slane %v1373, %v1391
        %v1394 = vmul.f32 %v1387, %v1392
        %v1396 = vlaneseq
        %v1397 = vshrl.u32 %v1396, 7
        %v1398 = vsub.s32 0, %v1397
        %v1399 = vrot.slane %v1374, %v1398
        %v1401 = vadd.f32 %v1394, %v1399
        %v1402 = vpack.c.bf16 %v1401, %v1401
        %v1403 = vld [vmem:[%s13] sm:$0xf]
        %v1404 = vld [vmem:[%s13 + $0x4] sm:$0xf]
        %v1405 = vld [vmem:[%s13 + $0x8] sm:$0xf]
        %v1406 = vld [vmem:[%s13 + $0xc] sm:$0xf]
        %v1407 = vld [vmem:[%s14] sm:$0x1]
        %v1409 = vlaneseq
        %v1410 = vshrl.u32 %v1409, 7
        %v1411 = vsub.s32 0, %v1410
        %v1412 = vrot.slane %v1407, %v1411
        %v1418 = vunpack.c.l.b16 %v1403
        %v1419 = vunpack.c.l.b16 %v1404
        %v1420 = vunpack.c.l.b16 %v1405
        %v1421 = vunpack.c.l.b16 %v1406
        %v1422 = vpack.c.b16 %v1419, %v1418
        %v1423 = vpack.c.b16 %v1421, %v1420
        %v1427 = vsel %vm632, %v1402, 0
        %1429 = vmatprep.subr.bf16.mxu0 0
        %1430 = vmatpush1.bf16.msra.mxu0 %v1422
        %1431 = vmatprep.subr.bf16.mxu0 0
        %1432 = vmatpush1.bf16.msra.mxu0 %v1423
        %1433 = vmatprep.subr.bf16.mxu0 0
        %1434 = vmatpush1.bf16.msra.mxu0 0
        %1435 = vmatprep.subr.bf16.mxu0 0
        %1436 = vmatpush1.bf16.msra.mxu0 0
        %1437 = vmatprep.subr.bf16.mxu0 0
        %1438 = vmatpush1.bf16.msra.mxu0 0
        %1439 = vmatprep.subr.bf16.mxu0 0
        %1440 = vmatpush1.bf16.msra.mxu0 0
        %1441 = vmatprep.subr.bf16.mxu0 0
        %1442 = vmatpush1.bf16.msra.mxu0 0
        %1443 = vmatprep.subr.bf16.mxu0 0
        %1444 = vmatpush1.bf16.msra.mxu0 0
        %1445 = vmatprep.subr.bf16.mxu0 0
        %1446 = vmatpush1.bf16.msra.mxu0 0
        %1447 = vmatprep.subr.bf16.mxu0 0
        %1448 = vmatpush1.bf16.msra.mxu0 0
        %1449 = vmatprep.subr.bf16.mxu0 0
        %1450 = vmatpush1.bf16.msra.mxu0 0
        %1451 = vmatprep.subr.bf16.mxu0 0
        %1452 = vmatpush1.bf16.msra.mxu0 0
        %1453 = vmatprep.subr.bf16.mxu0 0
        %1454 = vmatpush1.bf16.msra.mxu0 0
        %1455 = vmatprep.subr.bf16.mxu0 0
        %1456 = vmatpush1.bf16.msra.mxu0 0
        %1457 = vmatprep.subr.bf16.mxu0 0
        %1458 = vmatpush1.bf16.msra.mxu0 0
        %1459 = vmatprep.subr.bf16.mxu0 0
        %1460 = vmatpush1.bf16.msra.mxu0 0
        %1461 = vmatprep.mubr.bf16.mxu0 0
        %1462 = vmatmul.mubr.bf16.gmra.mrb[0].mxu0 %v1427
        %v1463 = vpop.f32.mrb[0].mxu0
        %v1464 = vadd.f32 %v1412, %v1463
        %v1465 = vpop.f32.mrb[0].mxu0
        %v1466 = vpop.f32.mrb[0].mxu0
        %v1467 = vpop.f32.mrb[0].mxu0
        %1468 = vdwg.mxu0
        %v1469 = vmul.f32 %v1464, 0.5
        %v1470 = vmul.f32 %v1464, 0.044715
        %v1471 = vmul.f32 %v1470, %v1464
        %v1472 = vmul.f32 %v1471, %v1464
        %v1473 = vadd.f32 %v1464, %v1472
        %v1474 = vmul.f32 %v1473, 0.7978846
        %v1475 = vtanh.pop %v1474
        %v1476 = vadd.f32 %v1475, 1.0
        %v1477 = vmul.f32 %v1469, %v1476
        %v1478 = vpack.c.bf16 %v1477, %v1477
        %v1479 = vld [vmem:[%s15] sm:$0xf]
        %v1480 = vld [vmem:[%s15 + $0x4] sm:$0xf]
        %v1481 = vld [vmem:[%s15 + $0x8] sm:$0xf]
        %v1482 = vld [vmem:[%s15 + $0xc] sm:$0xf]
        %v1483 = vld [vmem:[%s15 + $0x10] sm:$0xf]
        %v1484 = vld [vmem:[%s15 + $0x14] sm:$0xf]
        %v1485 = vld [vmem:[%s15 + $0x18] sm:$0xf]
        %v1486 = vld [vmem:[%s15 + $0x1c] sm:$0xf]
        %v1487 = vld [vmem:[%s15 + $0x20] sm:$0xf]
        %v1488 = vld [vmem:[%s15 + $0x24] sm:$0xf]
        %v1489 = vld [vmem:[%s15 + $0x28] sm:$0xf]
        %v1490 = vld [vmem:[%s15 + $0x2c] sm:$0xf]
        %v1491 = vld [vmem:[%s15 + $0x30] sm:$0xf]
        %v1492 = vld [vmem:[%s15 + $0x34] sm:$0xf]
        %v1493 = vld [vmem:[%s15 + $0x38] sm:$0xf]
        %v1494 = vld [vmem:[%s15 + $0x3c] sm:$0xf]
        %v1495 = vld [vmem:[%s16] sm:$0x1]
        %v1497 = vlaneseq
        %v1498 = vshrl.u32 %v1497, 7
        %v1499 = vsub.s32 0, %v1498
        %v1500 = vrot.slane %v1495, %v1499
        %v1518 = vunpack.c.l.b16 %v1479
        %v1519 = vunpack.c.l.b16 %v1480
        %v1520 = vunpack.c.l.b16 %v1481
        %v1521 = vunpack.c.l.b16 %v1482
        %v1522 = vunpack.c.l.b16 %v1483
        %v1523 = vunpack.c.l.b16 %v1484
        %v1524 = vunpack.c.l.b16 %v1485
        %v1525 = vunpack.c.l.b16 %v1486
        %v1526 = vunpack.c.l.b16 %v1487
        %v1527 = vunpack.c.l.b16 %v1488
        %v1528 = vunpack.c.l.b16 %v1489
        %v1529 = vunpack.c.l.b16 %v1490
        %v1530 = vunpack.c.l.b16 %v1491
        %v1531 = vunpack.c.l.b16 %v1492
        %v1532 = vunpack.c.l.b16 %v1493
        %v1533 = vunpack.c.l.b16 %v1494
        %v1534 = vpack.c.b16 %v1519, %v1518
        %v1535 = vpack.c.b16 %v1521, %v1520
        %v1536 = vpack.c.b16 %v1523, %v1522
        %v1537 = vpack.c.b16 %v1525, %v1524
        %v1538 = vpack.c.b16 %v1527, %v1526
        %v1539 = vpack.c.b16 %v1529, %v1528
        %v1540 = vpack.c.b16 %v1531, %v1530
        %v1541 = vpack.c.b16 %v1533, %v1532
        %1550 = vmatprep.subr.bf16.mxu0 0
        %1551 = vmatpush1.bf16.msra.mxu0 %v1534
        %1552 = vmatprep.subr.bf16.mxu0 0
        %1553 = vmatpush1.bf16.msra.mxu0 %v1535
        %1554 = vmatprep.subr.bf16.mxu0 0
        %1555 = vmatpush1.bf16.msra.mxu0 %v1536
        %1556 = vmatprep.subr.bf16.mxu0 0
        %1557 = vmatpush1.bf16.msra.mxu0 %v1537
        %1558 = vmatprep.subr.bf16.mxu0 0
        %1559 = vmatpush1.bf16.msra.mxu0 %v1538
        %1560 = vmatprep.subr.bf16.mxu0 0
        %1561 = vmatpush1.bf16.msra.mxu0 %v1539
        %1562 = vmatprep.subr.bf16.mxu0 0
        %1563 = vmatpush1.bf16.msra.mxu0 %v1540
        %1564 = vmatprep.subr.bf16.mxu0 0
        %1565 = vmatpush1.bf16.msra.mxu0 %v1541
        %1566 = vmatprep.subr.bf16.mxu0 0
        %1567 = vmatpush1.bf16.msra.mxu0 0
        %1568 = vmatprep.subr.bf16.mxu0 0
        %1569 = vmatpush1.bf16.msra.mxu0 0
        %1570 = vmatprep.subr.bf16.mxu0 0
        %1571 = vmatpush1.bf16.msra.mxu0 0
        %1572 = vmatprep.subr.bf16.mxu0 0
        %1573 = vmatpush1.bf16.msra.mxu0 0
        %1574 = vmatprep.subr.bf16.mxu0 0
        %1575 = vmatpush1.bf16.msra.mxu0 0
        %1576 = vmatprep.subr.bf16.mxu0 0
        %1577 = vmatpush1.bf16.msra.mxu0 0
        %1578 = vmatprep.subr.bf16.mxu0 0
        %1579 = vmatpush1.bf16.msra.mxu0 0
        %1580 = vmatprep.subr.bf16.mxu0 0
        %1581 = vmatpush1.bf16.msra.mxu0 0
        %1582 = vmatprep.mubr.bf16.mxu0 0
        %1583 = vmatmul.mubr.bf16.gmra.mrb[0].mxu0 %v1478
        %v1584 = vpop.f32.mrb[0].mxu0
        %v1585 = vadd.f32 %v1500, %v1584
        %v1586 = vpop.f32.mrb[0].mxu0
        %v1587 = vpop.f32.mrb[0].mxu0
        %v1588 = vpop.f32.mrb[0].mxu0
        %1589 = vdwg.mxu0
        %v1590 = vadd.f32 %v1372, %v1585
        %1591 = vst.msk [vmem:[%s610] sm:$0xff] %vm632, %v1590
        %s1592 = sand.u32 %s426, 1
        %s1593 = scalar_lea.sflag [#allocation4], %s1592
        %s1594 = sand.u32 %s426, 1
        %s1595 = smul.addr %s1594, 8
        %s1596 = scalar_lea.vmem [#allocation5], %s1595
        %s1597 = sand.u32 %s454, 1
        %s1598 = scalar_lea.sflag [#allocation7], %s1597
        %s1599 = sand.u32 %s454, 1
        %s1600 = smul.addr %s1599, 32
        %s1601 = scalar_lea.vmem [#allocation6], %s1600
        // Predicated region
        $region93: #{tpu_custom_call.1} parent=87 // pred_check
          %p1602 = pneg %p436
        $region94: #{tpu_custom_call.1} parent=87 // pred_check_branch
          %1604 = sbr.rel (%p1602) target = $region96
        $region95: #{tpu_custom_call.1} parent=87 // pred_region
          %s1606 = ssub.s32 128, 128
          %1607 = vsyncadd %s1593, %s1606
          %s1608 = sadd.s32 %s42, %s41
          %s1609 = smul.addr %s1608, 128
          %s1610 = scalar_lea.hbm %s17, %s1609
          %s1612 = sshll.u32 %s1596, 4
          %s1613 = int_to_ptr.vmem [resolvable:$true] %s1612
          %1615 = dma.vmem_to_hbm [thread:$0]  %s1613, 128, %s1610, %s1593
        $region96: #{tpu_custom_call.1} parent=87 // pred_fallthru
          _
        // Predicated region
        $region97: #{tpu_custom_call.1} parent=87 // pred_check
          %p1616 = pneg %p464
        $region98: #{tpu_custom_call.1} parent=87 // pred_check_branch
          %1618 = sbr.rel (%p1616) target = $region100
        $region99: #{tpu_custom_call.1} parent=87 // pred_region
          %s1620 = ssub.s32 512, 512
          %1621 = vsyncadd %s1598, %s1620
          %s1622 = smul.addr %s41, 4
          %s1623 = sadd.s32 %s42, %s1622
          %s1624 = smul.addr %s1623, 128
          %s1625 = scalar_lea.hbm %s18, %s1624
          %s1626 = sshll.u32 %s1601, 4
          %s1627 = int_to_ptr.vmem [resolvable:$true] %s1626
          %1632 = dma.vmem_to_hbm [thread:$0]  %s1627, 512, %s1625, %s1598, 128, 128, 8
        $region100: #{tpu_custom_call.1} parent=87 // pred_fallthru
          _
      $region88: #{tpu_custom_call.1} parent=5 // pred_fallthru
        _
      %p1633 = scmp.le.s32.totalorder 2, %s32
      // Predicated region
      $region101: #{tpu_custom_call.1} parent=5 // pred_check
        %p1634 = pneg %p1633
      $region102: #{tpu_custom_call.1} parent=5 // pred_check_branch
        %1636 = sbr.rel (%p1634) target = $region104
      $region103: #{tpu_custom_call.1} parent=5 // pred_region
        %s1637 = ssub.s32 %s32, 2
        // Predicated region
        $region105: #{tpu_custom_call.1} parent=103 // pred_check
          %p1638 = pneg %p442
        $region106: #{tpu_custom_call.1} parent=103 // pred_check_branch
          %1640 = sbr.rel (%p1638) target = $region108
        $region107: #{tpu_custom_call.1} parent=103 // pred_region
          %s1641 = sand.u32 %s427, 1
          %s1642 = scalar_lea.sflag [#allocation4], %s1641
          %s1643 = sand.u32 %s427, 1
          %s1644 = smul.addr %s1643, 8
          %s1645 = scalar_lea.vmem [#allocation5], %s1644
          %1646 = dma.done %s1642, 128
        $region108: #{tpu_custom_call.1} parent=103 // pred_fallthru
          _
        // Predicated region
        $region109: #{tpu_custom_call.1} parent=103 // pred_check
          %p1647 = pneg %p470
        $region110: #{tpu_custom_call.1} parent=103 // pred_check_branch
          %1649 = sbr.rel (%p1647) target = $region112
        $region111: #{tpu_custom_call.1} parent=103 // pred_region
          %s1650 = sand.u32 %s455, 1
          %s1651 = scalar_lea.sflag [#allocation7], %s1650
          %s1652 = sand.u32 %s455, 1
          %s1653 = smul.addr %s1652, 32
          %s1654 = scalar_lea.vmem [#allocation6], %s1653
          %1655 = dma.done %s1651, 512
        $region112: #{tpu_custom_call.1} parent=103 // pred_fallthru
          _
      $region104: #{tpu_custom_call.1} parent=5 // pred_fallthru
        _
    $region6: #{tpu_custom_call.1} parent=1 // loop_footer
      %s36 = sadd.s32 1, %s32
    $region7: #{tpu_custom_call.1} parent=1 // loop_footer_branch
      %31 = sbr.rel target = $region3
    $region8: #{tpu_custom_call.1} parent=1 // loop_exit
      _
    %1656 = vsyncpa [#allocation3], 1
    %s1657 = scalar_lea.sflag [#allocation3], 1
    %1658 = vsyncpa %s1657, 1
    %1659 = vsyncpa [#allocation4], 1
    %s1660 = scalar_lea.sflag [#allocation4], 1
    %1661 = vsyncpa %s1660, 1
    %1662 = vsyncpa [#allocation7], 1
    %s1663 = scalar_lea.sflag [#allocation7], 1
    %1664 = vsyncpa %s1663, 1

// kernel: tpu_custom_call.1
$region0: #{tpu_custom_call.1}
  #allocation0 [shape = 'u32[]', space=smem, size = 0x4, offset = 0x4, fixed_abs, tag = 'smem constant byte address 0x4 - core index']
  #allocation1 [shape = 'u32[144,128]{1,0:T(1,128)}', space=vmem, size = 0x12000, scoped, tag = 'internal scratch']
  %s0 = inlined_call_operand.vmem [shape: f32[2,8,32], index: 0, kind: input, shape index: {}]
  %s1 = inlined_call_operand.vmem [shape: f32[2,1,8], index: 1, kind: input, shape index: {}]
  %s2 = inlined_call_operand.hbm [shape: f32[8,32], index: 2, kind: input, shape index: {}]
  %s3 = inlined_call_operand.vmem [shape: f32[1,32], index: 3, kind: input, shape index: {}]
  %s4 = inlined_call_operand.vmem [shape: f32[1,32], index: 4, kind: input, shape index: {}]
  %s5 = inlined_call_operand.vmem [shape: bf16[32,32], index: 5, kind: input, shape index: {}]
  %s6 = inlined_call_operand.vmem [shape: f32[1,32], index: 6, kind: input, shape index: {}]
  %s7 = inlined_call_operand.vmem [shape: bf16[32,64], index: 7, kind: input, shape index: {}]
  %s8 = inlined_call_operand.vmem [shape: f32[1,64], index: 8, kind: input, shape index: {}]
  %s9 = inlined_call_operand.vmem [shape: bf16[32,32], index: 9, kind: input, shape index: {}]
  %s10 = inlined_call_operand.vmem [shape: f32[1,32], index: 10, kind: input, shape index: {}]
  %s11 = inlined_call_operand.vmem [shape: f32[1,32], index: 11, kind: input, shape index: {}]
  %s12 = inlined_call_operand.vmem [shape: f32[1,32], index: 12, kind: input, shape index: {}]
  %s13 = inlined_call_operand.vmem [shape: bf16[32,128], index: 13, kind: input, shape index: {}]
  %s14 = inlined_call_operand.vmem [shape: f32[1,128], index: 14, kind: input, shape index: {}]
  %s15 = inlined_call_operand.vmem [shape: bf16[128,32], index: 15, kind: input, shape index: {}]
  %s16 = inlined_call_operand.vmem [shape: f32[1,32], index: 16, kind: input, shape index: {}]
  %s17 = inlined_call_operand.hbm [shape: f32[2,8,32], index: 17, kind: output, shape index: {0}]
  %s18 = inlined_call_operand.hbm [shape: f32[2,4,8,8], index: 18, kind: output, shape index: {1}]
  %19 = xla_tuple %s17, %s18
  %s20 = sld [smem:[#allocation0]]
  $region113: #{tpu_custom_call.1} parent=0
    _
  %s22 = ssub.s32 1, %s20
  %s23 = scalar_select 0, %s22, %s20
  $region1: #{tpu_custom_call.1} parent=0
    #allocation2 [shape = 'u8[4096]{0}', space=vmem, size = 0x1000, scoped, tag = 'input window, operand 2, single buffered']
    #allocation3 [shape = 's32[2]{0}', space=sflag, size = 0x8, scoped, tag = 'scoped memory for tpu_custom_call.1']
    #allocation4 [shape = 's32[2]{0}', space=sflag, size = 0x8, scoped, tag = 'scoped memory for tpu_custom_call.1']
    #allocation5 [shape = 'u8[8192]{0}', space=vmem, size = 0x2000, scoped, tag = 'output window, operand 0']
    #allocation6 [shape = 'u8[32768]{0}', space=vmem, size = 0x8000, scoped, tag = 'output window, operand 1']
    #allocation7 [shape = 's32[2]{0}', space=sflag, size = 0x8, scoped, tag = 'scoped memory for tpu_custom_call.1']
    %24 = vsyncpa [#allocation3], 0
    %25 = vsyncpa [#allocation4], 0
    %s26 = scalar_lea.sflag [#allocation4], 1
    %27 = vsyncpa %s26, 0
    %28 = vsyncpa [#allocation7], 0
    %s29 = scalar_lea.sflag [#allocation7], 1
    %30 = vsyncpa %s29, 0
    loop: start=0, step=1, limit=4
    $region2: #{tpu_custom_call.1} parent=1 // loop_pre_header
      _
    $region3: #{tpu_custom_call.1} parent=1 // loop_header
      %s32 = sphi 0, %s36
      %p33 = scmp.ge.s32.totalorder %s32, 4
      %s39 = sphi 0, %s51
      %s40 = sphi 0, %s47
      %s41 = sphi 0, %s39
      %s42 = sphi 0, %s40
      %s43 = sphi 0, %s41
      %s44 = sphi 0, %s42
      %s54 = sphi 0, %s56
      %s57 = sphi 0, %s54
      %s58 = sphi 0, %s57
      %s74 = sphi 0, %s58
      %s80 = sphi 0, %s82
      %s83 = sphi 0, %s80
      %s84 = sphi 0, %s83
      %s100 = sphi 0, %s84
      %s104 = sphi 0, %s104
      %s106 = sphi 0, %s104
      %s107 = sphi 0, %s106
      %s121 = sphi 0, %s107
      %s125 = sphi 0, %s125
      %s127 = sphi 0, %s125
      %s128 = sphi 0, %s127
      %s142 = sphi 0, %s128
      %s146 = sphi 0, %s146
      %s148 = sphi 0, %s146
      %s149 = sphi 0, %s148
      %s163 = sphi 0, %s149
      %s167 = sphi 0, %s167
      %s169 = sphi 0, %s167
      %s170 = sphi 0, %s169
      %s184 = sphi 0, %s170
      %s188 = sphi 0, %s188
      %s190 = sphi 0, %s188
      %s191 = sphi 0, %s190
      %s205 = sphi 0, %s191
      %s209 = sphi 0, %s209
      %s211 = sphi 0, %s209
      %s212 = sphi 0, %s211
      %s226 = sphi 0, %s212
      %s230 = sphi 0, %s230
      %s232 = sphi 0, %s230
      %s233 = sphi 0, %s232
      %s247 = sphi 0, %s233
      %s251 = sphi 0, %s251
      %s253 = sphi 0, %s251
      %s254 = sphi 0, %s253
      %s268 = sphi 0, %s254
      %s272 = sphi 0, %s272
      %s274 = sphi 0, %s272
      %s275 = sphi 0, %s274
      %s289 = sphi 0, %s275
      %s293 = sphi 0, %s293
      %s295 = sphi 0, %s293
      %s296 = sphi 0, %s295
      %s310 = sphi 0, %s296
      %s314 = sphi 0, %s314
      %s316 = sphi 0, %s314
      %s317 = sphi 0, %s316
      %s331 = sphi 0, %s317
      %s335 = sphi 0, %s335
      %s337 = sphi 0, %s335
      %s338 = sphi 0, %s337
      %s352 = sphi 0, %s338
      %s356 = sphi 0, %s356
      %s358 = sphi 0, %s356
      %s359 = sphi 0, %s358
      %s373 = sphi 0, %s359
      %s377 = sphi 0, %s377
      %s379 = sphi 0, %s377
      %s380 = sphi 0, %s379
      %s394 = sphi 0, %s380
      %s398 = sphi 0, %s398
      %s400 = sphi 0, %s398
      %s401 = sphi 0, %s400
      %s415 = sphi 0, %s401
      %s423 = sphi 0, %s425
      %s426 = sphi 0, %s423
      %s427 = sphi 0, %s426
      %s443 = sphi 0, %s427
      %s451 = sphi 0, %s453
      %s454 = sphi 0, %s451
      %s455 = sphi 0, %s454
      %s471 = sphi 0, %s455
    $region4: #{tpu_custom_call.1} parent=1 // loop_header_branch
      %35 = sbr.rel (%p33) target = $region8
    $region5: #{tpu_custom_call.1} parent=1 // loop_body
      %s37 = ssub.s32 %s32, 1
      %s38 = ssub.s32 %s32, 2
      %s45 = sadd.s32 1, %s40
      %p46 = scmp.ge.s32.totalorder %s45, 1
      %s47 = scalar_select %p46, 0, %s45
      %s48 = sadd.s32 1, %s39
      %s49 = scalar_select %p46, %s48, %s39
      %p50 = scmp.ge.s32.totalorder %s49, 2
      %s51 = scalar_select %p50, 0, %s49
      %s52 = ssub.s32 %s39, %s51
      %p53 = scmp.eq.s32.totalorder %s52, 0
      %s55 = sadd.s32 %s54, 1
      %s56 = scalar_select %p53, %s54, %s55
      %p59 = pneg %p53
      %p60 = scmp.eq.s32.totalorder %s32, 1
      %p61 = por %p59, %p60
      %p62 = scmp.ne.s32.totalorder %s54, %s57
      %p63 = scmp.eq.s32.totalorder %s32, 0
      %p64 = por %p62, %p63
      %p65 = scmp.ne.s32.totalorder %s54, %s57
      %p66 = scmp.eq.s32.totalorder %s37, 1
      %p67 = por %p65, %p66
      %p68 = scmp.ne.s32.totalorder %s57, %s58
      %p69 = scmp.eq.s32.totalorder %s37, 0
      %p70 = por %p68, %p69
      %p71 = scmp.ne.s32.totalorder %s57, %s58
      %p72 = scmp.eq.s32.totalorder %s38, 1
      %p73 = por %p71, %p72
      %p75 = scmp.ne.s32.totalorder %s58, %s74
      %p76 = scmp.eq.s32.totalorder %s38, 0
      %p77 = por %p75, %p76
      %s78 = ssub.s32 %s39, %s51
      %p79 = scmp.eq.s32.totalorder %s78, 0
      %s81 = sadd.s32 %s80, 1
      %s82 = scalar_select %p79, %s80, %s81
      %p85 = pneg %p79
      %p86 = scmp.eq.s32.totalorder %s32, 1
      %p87 = por %p85, %p86
      %p88 = scmp.ne.s32.totalorder %s80, %s83
      %p89 = scmp.eq.s32.totalorder %s32, 0
      %p90 = por %p88, %p89
      %p91 = scmp.ne.s32.totalorder %s80, %s83
      %p92 = scmp.eq.s32.totalorder %s37, 1
      %p93 = por %p91, %p92
      %p94 = scmp.ne.s32.totalorder %s83, %s84
      %p95 = scmp.eq.s32.totalorder %s37, 0
      %p96 = por %p94, %p95
      %p97 = scmp.ne.s32.totalorder %s83, %s84
      %p98 = scmp.eq.s32.totalorder %s38, 1
      %p99 = por %p97, %p98
      %p101 = scmp.ne.s32.totalorder %s84, %s100
      %p102 = scmp.eq.s32.totalorder %s38, 0
      %p103 = por %p101, %p102
      %s105 = sadd.s32 %s104, 1
      %p108 = scmp.eq.s32.totalorder %s32, 1
      %p109 = scmp.ne.s32.totalorder %s104, %s106
      %p110 = scmp.eq.s32.totalorder %s32, 0
      %p111 = por %p109, %p110
      %p112 = scmp.ne.s32.totalorder %s104, %s106
      %p113 = scmp.eq.s32.totalorder %s37, 1
      %p114 = por %p112, %p113
      %p115 = scmp.ne.s32.totalorder %s106, %s107
      %p116 = scmp.eq.s32.totalorder %s37, 0
      %p117 = por %p115, %p116
      %p118 = scmp.ne.s32.totalorder %s106, %s107
      %p119 = scmp.eq.s32.totalorder %s38, 1
      %p120 = por %p118, %p119
      %p122 = scmp.ne.s32.totalorder %s107, %s121
      %p123 = scmp.eq.s32.totalorder %s38, 0
      %p124 = por %p122, %p123
      %s126 = sadd.s32 %s125, 1
      %p129 = scmp.eq.s32.totalorder %s32, 1
      %p130 = scmp.ne.s32.totalorder %s125, %s127
      %p131 = scmp.eq.s32.totalorder %s32, 0
      %p132 = por %p130, %p131
      %p133 = scmp.ne.s32.totalorder %s125, %s127
      %p134 = scmp.eq.s32.totalorder %s37, 1
      %p135 = por %p133, %p134
      %p136 = scmp.ne.s32.totalorder %s127, %s128
      %p137 = scmp.eq.s32.totalorder %s37, 0
      %p138 = por %p136, %p137
      %p139 = scmp.ne.s32.totalorder %s127, %s128
      %p140 = scmp.eq.s32.totalorder %s38, 1
      %p141 = por %p139, %p140
      %p143 = scmp.ne.s32.totalorder %s128, %s142
      %p144 = scmp.eq.s32.totalorder %s38, 0
      %p145 = por %p143, %p144
      %s147 = sadd.s32 %s146, 1
      %p150 = scmp.eq.s32.totalorder %s32, 1
      %p151 = scmp.ne.s32.totalorder %s146, %s148
      %p152 = scmp.eq.s32.totalorder %s32, 0
      %p153 = por %p151, %p152
      %p154 = scmp.ne.s32.totalorder %s146, %s148
      %p155 = scmp.eq.s32.totalorder %s37, 1
      %p156 = por %p154, %p155
      %p157 = scmp.ne.s32.totalorder %s148, %s149
      %p158 = scmp.eq.s32.totalorder %s37, 0
      %p159 = por %p157, %p158
      %p160 = scmp.ne.s32.totalorder %s148, %s149
      %p161 = scmp.eq.s32.totalorder %s38, 1
      %p162 = por %p160, %p161
      %p164 = scmp.ne.s32.totalorder %s149, %s163
      %p165 = scmp.eq.s32.totalorder %s38, 0
      %p166 = por %p164, %p165
      %s168 = sadd.s32 %s167, 1
      %p171 = scmp.eq.s32.totalorder %s32, 1
      %p172 = scmp.ne.s32.totalorder %s167, %s169
      %p173 = scmp.eq.s32.totalorder %s32, 0
      %p174 = por %p172, %p173
      %p175 = scmp.ne.s32.totalorder %s167, %s169
      %p176 = scmp.eq.s32.totalorder %s37, 1
      %p177 = por %p175, %p176
      %p178 = scmp.ne.s32.totalorder %s169, %s170
      %p179 = scmp.eq.s32.totalorder %s37, 0
      %p180 = por %p178, %p179
      %p181 = scmp.ne.s32.totalorder %s169, %s170
      %p182 = scmp.eq.s32.totalorder %s38, 1
      %p183 = por %p181, %p182
      %p185 = scmp.ne.s32.totalorder %s170, %s184
      %p186 = scmp.eq.s32.totalorder %s38, 0
      %p187 = por %p185, %p186
      %s189 = sadd.s32 %s188, 1
      %p192 = scmp.eq.s32.totalorder %s32, 1
      %p193 = scmp.ne.s32.totalorder %s188, %s190
      %p194 = scmp.eq.s32.totalorder %s32, 0
      %p195 = por %p193, %p194
      %p196 = scmp.ne.s32.totalorder %s188, %s190
      %p197 = scmp.eq.s32.totalorder %s37, 1
      %p198 = por %p196, %p197
      %p199 = scmp.ne.s32.totalorder %s190, %s191
      %p200 = scmp.eq.s32.totalorder %s37, 0
      %p201 = por %p199, %p200
      %p202 = scmp.ne.s32.totalorder %s190, %s191
      %p203 = scmp.eq.s32.totalorder %s38, 1
      %p204 = por %p202, %p203
      %p206 = scmp.ne.s32.totalorder %s191, %s205
      %p207 = scmp.eq.s32.totalorder %s38, 0
      %p208 = por %p206, %p207
      %s210 = sadd.s32 %s209, 1
      %p213 = scmp.eq.s32.totalorder %s32, 1
      %p214 = scmp.ne.s32.totalorder %s209, %s211
      %p215 = scmp.eq.s32.totalorder %s32, 0
      %p216 = por %p214, %p215
      %p217 = scmp.ne.s32.totalorder %s209, %s211
      %p218 = scmp.eq.s32.totalorder %s37, 1
      %p219 = por %p217, %p218
      %p220 = scmp.ne.s32.totalorder %s211, %s212
      %p221 = scmp.eq.s32.totalorder %s37, 0
      %p222 = por %p220, %p221
      %p223 = scmp.ne.s32.totalorder %s211, %s212
      %p224 = scmp.eq.s32.totalorder %s38, 1
      %p225 = por %p223, %p224
      %p227 = scmp.ne.s32.totalorder %s212, %s226
      %p228 = scmp.eq.s32.totalorder %s38, 0
      %p229 = por %p227, %p228
      %s231 = sadd.s32 %s230, 1
      %p234 = scmp.eq.s32.totalorder %s32, 1
      %p235 = scmp.ne.s32.totalorder %s230, %s232
      %p236 = scmp.eq.s32.totalorder %s32, 0
      %p237 = por %p235, %p236
      %p238 = scmp.ne.s32.totalorder %s230, %s232
      %p239 = scmp.eq.s32.totalorder %s37, 1
      %p240 = por %p238, %p239
      %p241 = scmp.ne.s32.totalorder %s232, %s233
      %p242 = scmp.eq.s32.totalorder %s37, 0
      %p243 = por %p241, %p242
      %p244 = scmp.ne.s32.totalorder %s232, %s233
      %p245 = scmp.eq.s32.totalorder %s38, 1
      %p246 = por %p244, %p245
      %p248 = scmp.ne.s32.totalorder %s233, %s247
      %p249 = scmp.eq.s32.totalorder %s38, 0
      %p250 = por %p248, %p249
      %s252 = sadd.s32 %s251, 1
      %p255 = scmp.eq.s32.totalorder %s32, 1
      %p256 = scmp.ne.s32.totalorder %s251, %s253
      %p257 = scmp.eq.s32.totalorder %s32, 0
      %p258 = por %p256, %p257
      %p259 = scmp.ne.s32.totalorder %s251, %s253
      %p260 = scmp.eq.s32.totalorder %s37, 1
      %p261 = por %p259, %p260
      %p262 = scmp.ne.s32.totalorder %s253, %s254
      %p263 = scmp.eq.s32.totalorder %s37, 0
      %p264 = por %p262, %p263
      %p265 = scmp.ne.s32.totalorder %s253, %s254
      %p266 = scmp.eq.s32.totalorder %s38, 1
      %p267 = por %p265, %p266
      %p269 = scmp.ne.s32.totalorder %s254, %s268
      %p270 = scmp.eq.s32.totalorder %s38, 0
      %p271 = por %p269, %p270
      %s273 = sadd.s32 %s272, 1
      %p276 = scmp.eq.s32.totalorder %s32, 1
      %p277 = scmp.ne.s32.totalorder %s272, %s274
      %p278 = scmp.eq.s32.totalorder %s32, 0
      %p279 = por %p277, %p278
      %p280 = scmp.ne.s32.totalorder %s272, %s274
      %p281 = scmp.eq.s32.totalorder %s37, 1
      %p282 = por %p280, %p281
      %p283 = scmp.ne.s32.totalorder %s274, %s275
      %p284 = scmp.eq.s32.totalorder %s37, 0
      %p285 = por %p283, %p284
      %p286 = scmp.ne.s32.totalorder %s274, %s275
      %p287 = scmp.eq.s32.totalorder %s38, 1
      %p288 = por %p286, %p287
      %p290 = scmp.ne.s32.totalorder %s275, %s289
      %p291 = scmp.eq.s32.totalorder %s38, 0
      %p292 = por %p290, %p291
      %s294 = sadd.s32 %s293, 1
      %p297 = scmp.eq.s32.totalorder %s32, 1
      %p298 = scmp.ne.s32.totalorder %s293, %s295
      %p299 = scmp.eq.s32.totalorder %s32, 0
      %p300 = por %p298, %p299
      %p301 = scmp.ne.s32.totalorder %s293, %s295
      %p302 = scmp.eq.s32.totalorder %s37, 1
      %p303 = por %p301, %p302
      %p304 = scmp.ne.s32.totalorder %s295, %s296
      %p305 = scmp.eq.s32.totalorder %s37, 0
      %p306 = por %p304, %p305
      %p307 = scmp.ne.s32.totalorder %s295, %s296
      %p308 = scmp.eq.s32.totalorder %s38, 1
      %p309 = por %p307, %p308
      %p311 = scmp.ne.s32.totalorder %s296, %s310
      %p312 = scmp.eq.s32.totalorder %s38, 0
      %p313 = por %p311, %p312
      %s315 = sadd.s32 %s314, 1
      %p318 = scmp.eq.s32.totalorder %s32, 1
      %p319 = scmp.ne.s32.totalorder %s314, %s316
      %p320 = scmp.eq.s32.totalorder %s32, 0
      %p321 = por %p319, %p320
      %p322 = scmp.ne.s32.totalorder %s314, %s316
      %p323 = scmp.eq.s32.totalorder %s37, 1
      %p324 = por %p322, %p323
      %p325 = scmp.ne.s32.totalorder %s316, %s317
      %p326 = scmp.eq.s32.totalorder %s37, 0
      %p327 = por %p325, %p326
      %p328 = scmp.ne.s32.totalorder %s316, %s317
      %p329 = scmp.eq.s32.totalorder %s38, 1
      %p330 = por %p328, %p329
      %p332 = scmp.ne.s32.totalorder %s317, %s331
      %p333 = scmp.eq.s32.totalorder %s38, 0
      %p334 = por %p332, %p333
      %s336 = sadd.s32 %s335, 1
      %p339 = scmp.eq.s32.totalorder %s32, 1
      %p340 = scmp.ne.s32.totalorder %s335, %s337
      %p341 = scmp.eq.s32.totalorder %s32, 0
      %p342 = por %p340, %p341
      %p343 = scmp.ne.s32.totalorder %s335, %s337
      %p344 = scmp.eq.s32.totalorder %s37, 1
      %p345 = por %p343, %p344
      %p346 = scmp.ne.s32.totalorder %s337, %s338
      %p347 = scmp.eq.s32.totalorder %s37, 0
      %p348 = por %p346, %p347
      %p349 = scmp.ne.s32.totalorder %s337, %s338
      %p350 = scmp.eq.s32.totalorder %s38, 1
      %p351 = por %p349, %p350
      %p353 = scmp.ne.s32.totalorder %s338, %s352
      %p354 = scmp.eq.s32.totalorder %s38, 0
      %p355 = por %p353, %p354
      %s357 = sadd.s32 %s356, 1
      %p360 = scmp.eq.s32.totalorder %s32, 1
      %p361 = scmp.ne.s32.totalorder %s356, %s358
      %p362 = scmp.eq.s32.totalorder %s32, 0
      %p363 = por %p361, %p362
      %p364 = scmp.ne.s32.totalorder %s356, %s358
      %p365 = scmp.eq.s32.totalorder %s37, 1
      %p366 = por %p364, %p365
      %p367 = scmp.ne.s32.totalorder %s358, %s359
      %p368 = scmp.eq.s32.totalorder %s37, 0
      %p369 = por %p367, %p368
      %p370 = scmp.ne.s32.totalorder %s358, %s359
      %p371 = scmp.eq.s32.totalorder %s38, 1
      %p372 = por %p370, %p371
      %p374 = scmp.ne.s32.totalorder %s359, %s373
      %p375 = scmp.eq.s32.totalorder %s38, 0
      %p376 = por %p374, %p375
      %s378 = sadd.s32 %s377, 1
      %p381 = scmp.eq.s32.totalorder %s32, 1
      %p382 = scmp.ne.s32.totalorder %s377, %s379
      %p383 = scmp.eq.s32.totalorder %s32, 0
      %p384 = por %p382, %p383
      %p385 = scmp.ne.s32.totalorder %s377, %s379
      %p386 = scmp.eq.s32.totalorder %s37, 1
      %p387 = por %p385, %p386
      %p388 = scmp.ne.s32.totalorder %s379, %s380
      %p389 = scmp.eq.s32.totalorder %s37, 0
      %p390 = por %p388, %p389
      %p391 = scmp.ne.s32.totalorder %s379, %s380
      %p392 = scmp.eq.s32.totalorder %s38, 1
      %p393 = por %p391, %p392
      %p395 = scmp.ne.s32.totalorder %s380, %s394
      %p396 = scmp.eq.s32.totalorder %s38, 0
      %p397 = por %p395, %p396
      %s399 = sadd.s32 %s398, 1
      %p402 = scmp.eq.s32.totalorder %s32, 1
      %p403 = scmp.ne.s32.totalorder %s398, %s400
      %p404 = scmp.eq.s32.totalorder %s32, 0
      %p405 = por %p403, %p404
      %p406 = scmp.ne.s32.totalorder %s398, %s400
      %p407 = scmp.eq.s32.totalorder %s37, 1
      %p408 = por %p406, %p407
      %p409 = scmp.ne.s32.totalorder %s400, %s401
      %p410 = scmp.eq.s32.totalorder %s37, 0
      %p411 = por %p409, %p410
      %p412 = scmp.ne.s32.totalorder %s400, %s401
      %p413 = scmp.eq.s32.totalorder %s38, 1
      %p414 = por %p412, %p413
      %p416 = scmp.ne.s32.totalorder %s401, %s415
      %p417 = scmp.eq.s32.totalorder %s38, 0
      %p418 = por %p416, %p417
      %s419 = ssub.s32 %s39, %s51
      %s420 = ssub.s32 %s40, %s47
      %s421 = sor.u32 %s419, %s420
      %p422 = scmp.eq.s32.totalorder %s421, 0
      %s424 = sadd.s32 %s423, 1
      %s425 = scalar_select %p422, %s423, %s424
      %p428 = pneg %p422
      %p429 = scmp.eq.s32.totalorder %s32, 1
      %p430 = por %p428, %p429
      %p431 = scmp.ne.s32.totalorder %s423, %s426
      %p432 = scmp.eq.s32.totalorder %s32, 0
      %p433 = por %p431, %p432
      %p434 = scmp.ne.s32.totalorder %s423, %s426
      %p435 = scmp.eq.s32.totalorder %s37, 1
      %p436 = por %p434, %p435
      %p437 = scmp.ne.s32.totalorder %s426, %s427
      %p438 = scmp.eq.s32.totalorder %s37, 0
      %p439 = por %p437, %p438
      %p440 = scmp.ne.s32.totalorder %s426, %s427
      %p441 = scmp.eq.s32.totalorder %s38, 1
      %p442 = por %p440, %p441
      %p444 = scmp.ne.s32.totalorder %s427, %s443
      %p445 = scmp.eq.s32.totalorder %s38, 0
      %p446 = por %p444, %p445
      %s447 = ssub.s32 %s39, %s51
      %s448 = ssub.s32 %s40, %s47
      %s449 = sor.u32 %s447, %s448
      %p450 = scmp.eq.s32.totalorder %s449, 0
      %s452 = sadd.s32 %s451, 1
      %s453 = scalar_select %p450, %s451, %s452
      %p456 = pneg %p450
      %p457 = scmp.eq.s32.totalorder %s32, 1
      %p458 = por %p456, %p457
      %p459 = scmp.ne.s32.totalorder %s451, %s454
      %p460 = scmp.eq.s32.totalorder %s32, 0
      %p461 = por %p459, %p460
      %p462 = scmp.ne.s32.totalorder %s451, %s454
      %p463 = scmp.eq.s32.totalorder %s37, 1
      %p464 = por %p462, %p463
      %p465 = scmp.ne.s32.totalorder %s454, %s455
      %p466 = scmp.eq.s32.totalorder %s37, 0
      %p467 = por %p465, %p466
      %p468 = scmp.ne.s32.totalorder %s454, %s455
      %p469 = scmp.eq.s32.totalorder %s38, 1
      %p470 = por %p468, %p469
      %p472 = scmp.ne.s32.totalorder %s455, %s471
      %p473 = scmp.eq.s32.totalorder %s38, 0
      %p474 = por %p472, %p473
      %p475 = scmp.le.s32.totalorder 1, %s32
      %p476 = scmp.lt.s32.totalorder %s32, 3
      %p477 = pnand %p475, %p476
      %p478 = pneg %p477
      // Predicated region
      $region9: #{tpu_custom_call.1} parent=5 // pred_check
        _
      $region10: #{tpu_custom_call.1} parent=5 // pred_check_branch
        %480 = sbr.rel (%p477) target = $region12
      $region11: #{tpu_custom_call.1} parent=5 // pred_region
        %s481 = ssub.s32 %s32, 1
        // Predicated region
        $region13: #{tpu_custom_call.1} parent=11 // pred_check
          %p482 = pneg %p117
        $region14: #{tpu_custom_call.1} parent=11 // pred_check_branch
          %484 = sbr.rel (%p482) target = $region16
        $region15: #{tpu_custom_call.1} parent=11 // pred_region
          %s486 = ssub.s32 128, 128
          %487 = vsyncadd [#allocation3], %s486
          %s489 = sshll.u32 [#allocation2], 4
          %s490 = int_to_ptr.vmem [resolvable:$true] %s489
          %492 = dma.hbm_to_vmem [thread:$0]  %s2, 128, %s490, [#allocation3]
        $region16: #{tpu_custom_call.1} parent=11 // pred_fallthru
          _
        // Predicated region
        $region17: #{tpu_custom_call.1} parent=11 // pred_check
          %p493 = pneg %p138
        $region18: #{tpu_custom_call.1} parent=11 // pred_check_branch
          %495 = sbr.rel (%p493) target = $region20
        $region19: #{tpu_custom_call.1} parent=11 // pred_region
          _
        $region20: #{tpu_custom_call.1} parent=11 // pred_fallthru
          _
        // Predicated region
        $region21: #{tpu_custom_call.1} parent=11 // pred_check
          %p496 = pneg %p159
        $region22: #{tpu_custom_call.1} parent=11 // pred_check_branch
          %498 = sbr.rel (%p496) target = $region24
        $region23: #{tpu_custom_call.1} parent=11 // pred_region
          _
        $region24: #{tpu_custom_call.1} parent=11 // pred_fallthru
          _
        // Predicated region
        $region25: #{tpu_custom_call.1} parent=11 // pred_check
          %p499 = pneg %p180
        $region26: #{tpu_custom_call.1} parent=11 // pred_check_branch
          %501 = sbr.rel (%p499) target = $region28
        $region27: #{tpu_custom_call.1} parent=11 // pred_region
          _
        $region28: #{tpu_custom_call.1} parent=11 // pred_fallthru
          _
        // Predicated region
        $region29: #{tpu_custom_call.1} parent=11 // pred_check
          %p502 = pneg %p201
        $region30: #{tpu_custom_call.1} parent=11 // pred_check_branch
          %504 = sbr.rel (%p502) target = $region32
        $region31: #{tpu_custom_call.1} parent=11 // pred_region
          _
        $region32: #{tpu_custom_call.1} parent=11 // pred_fallthru
          _
        // Predicated region
        $region33: #{tpu_custom_call.1} parent=11 // pred_check
          %p505 = pneg %p222
        $region34: #{tpu_custom_call.1} parent=11 // pred_check_branch
          %507 = sbr.rel (%p505) target = $region36
        $region35: #{tpu_custom_call.1} parent=11 // pred_region
          _
        $region36: #{tpu_custom_call.1} parent=11 // pred_fallthru
          _
        // Predicated region
        $region37: #{tpu_custom_call.1} parent=11 // pred_check
          %p508 = pneg %p243
        $region38: #{tpu_custom_call.1} parent=11 // pred_check_branch
          %510 = sbr.rel (%p508) target = $region40
        $region39: #{tpu_custom_call.1} parent=11 // pred_region
          _
        $region40: #{tpu_custom_call.1} parent=11 // pred_fallthru
          _
        // Predicated region
        $region41: #{tpu_custom_call.1} parent=11 // pred_check
          %p511 = pneg %p264
        $region42: #{tpu_custom_call.1} parent=11 // pred_check_branch
          %513 = sbr.rel (%p511) target = $region44
        $region43: #{tpu_custom_call.1} parent=11 // pred_region
          _
        $region44: #{tpu_custom_call.1} parent=11 // pred_fallthru
          _
        // Predicated region
        $region45: #{tpu_custom_call.1} parent=11 // pred_check
          %p514 = pneg %p285
        $region46: #{tpu_custom_call.1} parent=11 // pred_check_branch
          %516 = sbr.rel (%p514) target = $region48
        $region47: #{tpu_custom_call.1} parent=11 // pred_region
          _
        $region48: #{tpu_custom_call.1} parent=11 // pred_fallthru
          _
        // Predicated region
        $region49: #{tpu_custom_call.1} parent=11 // pred_check
          %p517 = pneg %p306
        $region50: #{tpu_custom_call.1} parent=11 // pred_check_branch
          %519 = sbr.rel (%p517) target = $region52
        $region51: #{tpu_custom_call.1} parent=11 // pred_region
          _
        $region52: #{tpu_custom_call.1} parent=11 // pred_fallthru
          _
        // Predicated region
        $region53: #{tpu_custom_call.1} parent=11 // pred_check
          %p520 = pneg %p327
        $region54: #{tpu_custom_call.1} parent=11 // pred_check_branch
          %522 = sbr.rel (%p520) target = $region56
        $region55: #{tpu_custom_call.1} parent=11 // pred_region
          _
        $region56: #{tpu_custom_call.1} parent=11 // pred_fallthru
          _
        // Predicated region
        $region57: #{tpu_custom_call.1} parent=11 // pred_check
          %p523 = pneg %p348
        $region58: #{tpu_custom_call.1} parent=11 // pred_check_branch
          %525 = sbr.rel (%p523) target = $region60
        $region59: #{tpu_custom_call.1} parent=11 // pred_region
          _
        $region60: #{tpu_custom_call.1} parent=11 // pred_fallthru
          _
        // Predicated region
        $region61: #{tpu_custom_call.1} parent=11 // pred_check
          %p526 = pneg %p369
        $region62: #{tpu_custom_call.1} parent=11 // pred_check_branch
          %528 = sbr.rel (%p526) target = $region64
        $region63: #{tpu_custom_call.1} parent=11 // pred_region
          _
        $region64: #{tpu_custom_call.1} parent=11 // pred_fallthru
          _
        // Predicated region
        $region65: #{tpu_custom_call.1} parent=11 // pred_check
          %p529 = pneg %p390
        $region66: #{tpu_custom_call.1} parent=11 // pred_check_branch
          %531 = sbr.rel (%p529) target = $region68
        $region67: #{tpu_custom_call.1} parent=11 // pred_region
          _
        $region68: #{tpu_custom_call.1} parent=11 // pred_fallthru
          _
        // Predicated region
        $region69: #{tpu_custom_call.1} parent=11 // pred_check
          %p532 = pneg %p411
        $region70: #{tpu_custom_call.1} parent=11 // pred_check_branch
          %534 = sbr.rel (%p532) target = $region72
        $region71: #{tpu_custom_call.1} parent=11 // pred_region
          _
        $region72: #{tpu_custom_call.1} parent=11 // pred_fallthru
          _
      $region12: #{tpu_custom_call.1} parent=5 // pred_fallthru
        _
      %p535 = scmp.lt.s32.totalorder %s32, 2
      // Predicated region
      $region73: #{tpu_custom_call.1} parent=5 // pred_check
        %p536 = pneg %p535
      $region74: #{tpu_custom_call.1} parent=5 // pred_check_branch
        %538 = sbr.rel (%p536) target = $region76
      $region75: #{tpu_custom_call.1} parent=5 // pred_region
        // Predicated region
        $region77: #{tpu_custom_call.1} parent=75 // pred_check
          %p539 = pneg %p64
        $region78: #{tpu_custom_call.1} parent=75 // pred_check_branch
          %541 = sbr.rel (%p539) target = $region80
        $region79: #{tpu_custom_call.1} parent=75 // pred_region
          %p542 = scmp.lt.s32.totalorder %s39, 1
          %s543 = scalar_select %p542, %s39, 1
          %s544 = smul.addr %s543, 8
          %s545 = scalar_lea.vmem %s0, %s544
        $region80: #{tpu_custom_call.1} parent=75 // pred_fallthru
          _
        // Predicated region
        $region81: #{tpu_custom_call.1} parent=75 // pred_check
          %p546 = pneg %p90
        $region82: #{tpu_custom_call.1} parent=75 // pred_check_branch
          %548 = sbr.rel (%p546) target = $region84
        $region83: #{tpu_custom_call.1} parent=75 // pred_region
          %p549 = scmp.lt.s32.totalorder %s39, 1
          %s550 = scalar_select %p549, %s39, 1
          %s551 = scalar_lea.vmem %s1, %s550
        $region84: #{tpu_custom_call.1} parent=75 // pred_fallthru
          _
      $region76: #{tpu_custom_call.1} parent=5 // pred_fallthru
        _
      %p552 = scmp.le.s32.totalorder 1, %s32
      %p553 = scmp.lt.s32.totalorder %s32, 3
      %p554 = pnand %p552, %p553
      %p555 = pneg %p554
      // Predicated region
      $region85: #{tpu_custom_call.1} parent=5 // pred_check
        _
      $region86: #{tpu_custom_call.1} parent=5 // pred_check_branch
        %557 = sbr.rel (%p554) target = $region88
      $region87: #{tpu_custom_call.1} parent=5 // pred_region
        %s558 = ssub.s32 %s32, 1
        // Predicated region
        $region89: #{tpu_custom_call.1} parent=87 // pred_check
          %p559 = pneg %p117
        $region90: #{tpu_custom_call.1} parent=87 // pred_check_branch
          %561 = sbr.rel (%p559) target = $region92
        $region91: #{tpu_custom_call.1} parent=87 // pred_region
          %562 = dma.done [#allocation3], 128
        $region92: #{tpu_custom_call.1} parent=87 // pred_fallthru
          _
        %p563 = scmp.lt.s32.totalorder %s41, 1
        %s564 = scalar_select %p563, %s41, 1
        %s565 = smul.addr %s564, 8
        %s566 = scalar_lea.vmem %s0, %s565
        %p567 = pneg %p70
        %p568 = pneg %p67
        %p569 = scmp.lt.s32.totalorder %s41, 1
        %s570 = scalar_select %p569, %s41, 1
        %s571 = scalar_lea.vmem %s1, %s570
        %p572 = pneg %p96
        %p573 = pneg %p93
        %p574 = pneg %p117
        %p575 = pneg %p114
        %p576 = pneg %p138
        %p577 = pneg %p135
        %p578 = pneg %p159
        %p579 = pneg %p156
        %p580 = pneg %p180
        %p581 = pneg %p177
        %p582 = pneg %p201
        %p583 = pneg %p198
        %p584 = pneg %p222
        %p585 = pneg %p219
        %p586 = pneg %p243
        %p587 = pneg %p240
        %p588 = pneg %p264
        %p589 = pneg %p261
        %p590 = pneg %p285
        %p591 = pneg %p282
        %p592 = pneg %p306
        %p593 = pneg %p303
        %p594 = pneg %p327
        %p595 = pneg %p324
        %p596 = pneg %p348
        %p597 = pneg %p345
        %p598 = pneg %p369
        %p599 = pneg %p366
        %p600 = pneg %p390
        %p601 = pneg %p387
        %p602 = pneg %p411
        %p603 = pneg %p408
        %p604 = pneg %p439
        %p605 = pneg %p436
        %s606 = sand.u32 %s426, 1
        %s607 = scalar_lea.sflag [#allocation4], %s606
        %s608 = sand.u32 %s426, 1
        %s609 = smul.addr %s608, 8
        %s610 = scalar_lea.vmem [#allocation5], %s609
        %p611 = pneg %p467
        %p612 = pneg %p464
        %s613 = sand.u32 %s454, 1
        %s614 = scalar_lea.sflag [#allocation7], %s613
        %s615 = sand.u32 %s454, 1
        %s616 = smul.addr %s615, 32
        %s617 = scalar_lea.vmem [#allocation6], %s616
        %p618 = scmp.lt.s32.totalorder %s41, 1
        %s619 = scalar_select %p618, %s41, 1
        %s620 = smul.addr %s619, 8
        %s621 = scalar_lea.vmem %s0, %s620
        %p622 = scmp.lt.s32.totalorder %s41, 1
        %s623 = scalar_select %p622, %s41, 1
        %s624 = scalar_lea.vmem %s1, %s623
        %s626 = smul.u32 %s42, 8
        %v627 = vld [vmem:[%s621] sm:$0xff]
        %v628 = vld [vmem:[#allocation2] sm:$0xff]
        %v629 = vadd.f32 %v627, %v628
        %v630 = vld [vmem:[%s3] sm:$0x1]
        %v631 = vld [vmem:[%s4] sm:$0x1]
        %vm632 = vcmask 261120
        %v633 = vsel %vm632, %v629, 0.0
        %634 = vadd.xlane.f32.xlu0 %v633
        %v635 = vpop.xlane.xlu0 %634
        %v636 = vrcp.pop 32.0
        %v637 = vmul.f32 %v635, %v636
        %v638 = vsub.f32 %v629, %v637
        %v639 = vmul.f32 %v638, %v638
        %v640 = vsel %vm632, %v639, 0.0
        %641 = vadd.xlane.f32.xlu0 %v640
        %v642 = vpop.xlane.xlu0 %641
        %v643 = vmul.f32 %v642, %v636
        %v644 = vadd.f32 %v643, 1e-05
        %v645 = vrsqrt.pop %v644
        %v646 = vmul.f32 %v638, %v645
        %v648 = vlaneseq
        %v649 = vshrl.u32 %v648, 7
        %v650 = vsub.s32 0, %v649
        %v651 = vrot.slane %v630, %v650
        %v653 = vmul.f32 %v646, %v651
        %v655 = vlaneseq
        %v656 = vshrl.u32 %v655, 7
        %v657 = vsub.s32 0, %v656
        %v658 = vrot.slane %v631, %v657
        %v660 = vadd.f32 %v653, %v658
        %s661 = scalar_lea.vmem %s621, %s626
        %v662 = vld [vmem:[%s661] sm:$0xff]
        %s663 = scalar_lea.vmem [#allocation2], %s626
        %v664 = vld [vmem:[%s663] sm:$0xff]
        %v665 = vadd.f32 %v662, %v664
        %v666 = vsel %vm632, %v665, 0.0
        %667 = vadd.xlane.f32.xlu0 %v666
        %v668 = vpop.xlane.xlu0 %667
        %v669 = vmul.f32 %v668, %v636
        %v670 = vsub.f32 %v665, %v669
        %v671 = vmul.f32 %v670, %v670
        %v672 = vsel %vm632, %v671, 0.0
        %673 = vadd.xlane.f32.xlu0 %v672
        %v674 = vpop.xlane.xlu0 %673
        %v675 = vmul.f32 %v674, %v636
        %v676 = vadd.f32 %v675, 1e-05
        %v677 = vrsqrt.pop %v676
        %v678 = vmul.f32 %v670, %v677
        %v679 = vmul.f32 %v678, %v651
        %v680 = vadd.f32 %v679, %v658
        %v681 = vpack.c.bf16 %v680, %v680
        %v682 = vld [vmem:[%s5] sm:$0xf]
        %v683 = vld [vmem:[%s5 + $0x4] sm:$0xf]
        %v684 = vld [vmem:[%s5 + $0x8] sm:$0xf]
        %v685 = vld [vmem:[%s5 + $0xc] sm:$0xf]
        %v686 = vld [vmem:[%s6] sm:$0x1]
        %v688 = vlaneseq
        %v689 = vshrl.u32 %v688, 7
        %v690 = vsub.s32 0, %v689
        %v691 = vrot.slane %v686, %v690
        %v697 = vunpack.c.l.b16 %v682
        %v698 = vunpack.c.l.b16 %v683
        %v699 = vunpack.c.l.b16 %v684
        %v700 = vunpack.c.l.b16 %v685
        %v701 = vpack.c.b16 %v698, %v697
        %v702 = vpack.c.b16 %v700, %v699
        %v706 = vsel %vm632, %v681, 0
        %708 = vmatprep.subr.bf16.mxu0 0
        %709 = vmatpush1.bf16.msra.mxu0 %v701
        %710 = vmatprep.subr.bf16.mxu0 0
        %711 = vmatpush1.bf16.msra.mxu0 %v702
        %712 = vmatprep.subr.bf16.mxu0 0
        %713 = vmatpush1.bf16.msra.mxu0 0
        %714 = vmatprep.subr.bf16.mxu0 0
        %715 = vmatpush1.bf16.msra.mxu0 0
        %716 = vmatprep.subr.bf16.mxu0 0
        %717 = vmatpush1.bf16.msra.mxu0 0
        %718 = vmatprep.subr.bf16.mxu0 0
        %719 = vmatpush1.bf16.msra.mxu0 0
        %720 = vmatprep.subr.bf16.mxu0 0
        %721 = vmatpush1.bf16.msra.mxu0 0
        %722 = vmatprep.subr.bf16.mxu0 0
        %723 = vmatpush1.bf16.msra.mxu0 0
        %724 = vmatprep.subr.bf16.mxu0 0
        %725 = vmatpush1.bf16.msra.mxu0 0
        %726 = vmatprep.subr.bf16.mxu0 0
        %727 = vmatpush1.bf16.msra.mxu0 0
        %728 = vmatprep.subr.bf16.mxu0 0
        %729 = vmatpush1.bf16.msra.mxu0 0
        %730 = vmatprep.subr.bf16.mxu0 0
        %731 = vmatpush1.bf16.msra.mxu0 0
        %732 = vmatprep.subr.bf16.mxu0 0
        %733 = vmatpush1.bf16.msra.mxu0 0
        %734 = vmatprep.subr.bf16.mxu0 0
        %735 = vmatpush1.bf16.msra.mxu0 0
        %736 = vmatprep.subr.bf16.mxu0 0
        %737 = vmatpush1.bf16.msra.mxu0 0
        %738 = vmatprep.subr.bf16.mxu0 0
        %739 = vmatpush1.bf16.msra.mxu0 0
        %740 = vmatprep.mubr.bf16.mxu0 0
        %741 = vmatmul.mubr.bf16.gmra.mrb[0].mxu0 %v706
        %v742 = vpop.f32.mrb[0].mxu0
        %v743 = vadd.f32 %v691, %v742
        %v744 = vpop.f32.mrb[0].mxu0
        %v745 = vpop.f32.mrb[0].mxu0
        %v746 = vpop.f32.mrb[0].mxu0
        %747 = vdwg.mxu0
        %v748 = vpack.c.bf16 %v660, %v660
        %v749 = vld [vmem:[%s7] sm:$0xf]
        %v750 = vld [vmem:[%s7 + $0x4] sm:$0xf]
        %v751 = vld [vmem:[%s7 + $0x8] sm:$0xf]
        %v752 = vld [vmem:[%s7 + $0xc] sm:$0xf]
        %v753 = vld [vmem:[%s8] sm:$0x1]
        %v755 = vlaneseq
        %v756 = vshrl.u32 %v755, 7
        %v757 = vsub.s32 0, %v756
        %v758 = vrot.slane %v753, %v757
        %v764 = vunpack.c.l.b16 %v749
        %v765 = vunpack.c.l.b16 %v750
        %v766 = vunpack.c.l.b16 %v751
        %v767 = vunpack.c.l.b16 %v752
        %v768 = vpack.c.b16 %v765, %v764
        %v769 = vpack.c.b16 %v767, %v766
        %v773 = vsel %vm632, %v748, 0
        %775 = vmatprep.subr.bf16.mxu0 0
        %776 = vmatpush1.bf16.msra.mxu0 %v768
        %777 = vmatprep.subr.bf16.mxu0 0
        %778 = vmatpush1.bf16.msra.mxu0 %v769
        %779 = vmatprep.subr.bf16.mxu0 0
        %780 = vmatpush1.bf16.msra.mxu0 0
        %781 = vmatprep.subr.bf16.mxu0 0
        %782 = vmatpush1.bf16.msra.mxu0 0
        %783 = vmatprep.subr.bf16.mxu0 0
        %784 = vmatpush1.bf16.msra.mxu0 0
        %785 = vmatprep.subr.bf16.mxu0 0
        %786 = vmatpush1.bf16.msra.mxu0 0
        %787 = vmatprep.subr.bf16.mxu0 0
        %788 = vmatpush1.bf16.msra.mxu0 0
        %789 = vmatprep.subr.bf16.mxu0 0
        %790 = vmatpush1.bf16.msra.mxu0 0
        %791 = vmatprep.subr.bf16.mxu0 0
        %792 = vmatpush1.bf16.msra.mxu0 0
        %793 = vmatprep.subr.bf16.mxu0 0
        %794 = vmatpush1.bf16.msra.mxu0 0
        %795 = vmatprep.subr.bf16.mxu0 0
        %796 = vmatpush1.bf16.msra.mxu0 0
        %797 = vmatprep.subr.bf16.mxu0 0
        %798 = vmatpush1.bf16.msra.mxu0 0
        %799 = vmatprep.subr.bf16.mxu0 0
        %800 = vmatpush1.bf16.msra.mxu0 0
        %801 = vmatprep.subr.bf16.mxu0 0
        %802 = vmatpush1.bf16.msra.mxu0 0
        %803 = vmatprep.subr.bf16.mxu0 0
        %804 = vmatpush1.bf16.msra.mxu0 0
        %805 = vmatprep.subr.bf16.mxu0 0
        %806 = vmatpush1.bf16.msra.mxu0 0
        %807 = vmatprep.mubr.bf16.mxu0 0
        %808 = vmatmul.mubr.bf16.gmra.mrb[0].mxu0 %v773
        %v809 = vpop.f32.mrb[0].mxu0
        %v810 = vadd.f32 %v758, %v809
        %v811 = vpop.f32.mrb[0].mxu0
        %v812 = vpop.f32.mrb[0].mxu0
        %v813 = vpop.f32.mrb[0].mxu0
        %814 = vdwg.mxu0
        %816 = vrot.lane.b32.xlu0 %v743, 120
        %v817 = vpop.permute.xlu0 %816
        %819 = vrot.lane.b32.xlu0 %v743, 112
        %v820 = vpop.permute.xlu0 %819
        %822 = vrot.lane.b32.xlu0 %v743, 104
        %v823 = vpop.permute.xlu0 %822
        %v825 = vpack.c.bf16 %v743, %v743
        %v826 = vpack.c.bf16 %v817, %v817
        %v827 = vpack.c.bf16 %v820, %v820
        %v828 = vpack.c.bf16 %v823, %v823
        %830 = vrot.lane.b32.xlu0 %v810, 120
        %v831 = vpop.permute.xlu0 %830
        %833 = vrot.lane.b32.xlu0 %v810, 112
        %v834 = vpop.permute.xlu0 %833
        %836 = vrot.lane.b32.xlu0 %v810, 104
        %v837 = vpop.permute.xlu0 %836
        %v839 = vpack.c.bf16 %v810, %v810
        %v840 = vpack.c.bf16 %v831, %v831
        %v841 = vpack.c.bf16 %v834, %v834
        %v842 = vpack.c.bf16 %v837, %v837
        %v843 = vld [vmem:[%s624] sm:$0x1]
        %v845 = vlaneseq
        %v846 = vshrl.u32 %v845, 7
        %v847 = vsub.s32 0, %v846
        %v848 = vrot.slane %v843, %v847
        %vm850 = vcmask 64512
        %v852 = vsel %vm850, %v825, 0
        %v855 = vsel %vm850, %v839, 0
        %857 = vmatprep.subr.bf16.mxu0 0
        %858 = vmatpush1.bf16.xpose.msra.mxu0 %v855
        %859 = vmatprep.subr.bf16.mxu0 0
        %860 = vmatpush1.bf16.xpose.msra.mxu0 0
        %861 = vmatprep.subr.bf16.mxu0 0
        %862 = vmatpush1.bf16.xpose.msra.mxu0 0
        %863 = vmatprep.subr.bf16.mxu0 0
        %864 = vmatpush1.bf16.xpose.msra.mxu0 0
        %865 = vmatprep.subr.bf16.mxu0 0
        %866 = vmatpush1.bf16.xpose.msra.mxu0 0
        %867 = vmatprep.subr.bf16.mxu0 0
        %868 = vmatpush1.bf16.xpose.msra.mxu0 0
        %869 = vmatprep.subr.bf16.mxu0 0
        %870 = vmatpush1.bf16.xpose.msra.mxu0 0
        %871 = vmatprep.subr.bf16.mxu0 0
        %872 = vmatpush1.bf16.xpose.msra.mxu0 0
        %873 = vmatprep.subr.bf16.mxu0 0
        %874 = vmatpush1.bf16.xpose.msra.mxu0 0
        %875 = vmatprep.subr.bf16.mxu0 0
        %876 = vmatpush1.bf16.xpose.msra.mxu0 0
        %877 = vmatprep.subr.bf16.mxu0 0
        %878 = vmatpush1.bf16.xpose.msra.mxu0 0
        %879 = vmatprep.subr.bf16.mxu0 0
        %880 = vmatpush1.bf16.xpose.msra.mxu0 0
        %881 = vmatprep.subr.bf16.mxu0 0
        %882 = vmatpush1.bf16.xpose.msra.mxu0 0
        %883 = vmatprep.subr.bf16.mxu0 0
        %884 = vmatpush1.bf16.xpose.msra.mxu0 0
        %885 = vmatprep.subr.bf16.mxu0 0
        %886 = vmatpush1.bf16.xpose.msra.mxu0 0
        %887 = vmatprep.subr.bf16.mxu0 0
        %888 = vmatpush1.bf16.xpose.msra.mxu0 0
        %889 = vmatprep.mubr.bf16.mxu0 0
        %890 = vmatmul.mubr.bf16.gmra.mrb[0].mxu0 %v852
        %v891 = vpop.f32.mrb[0].mxu0
        %v892 = vadd.f32 %v848, %v891
        %v893 = vpop.f32.mrb[0].mxu0
        %v894 = vpop.f32.mrb[0].mxu0
        %v895 = vpop.f32.mrb[0].mxu0
        %896 = vdwg.mxu0
        %v898 = vsel %vm850, %v826, 0
        %v901 = vsel %vm850, %v840, 0
        %903 = vmatprep.subr.bf16.mxu0 0
        %904 = vmatpush1.bf16.xpose.msra.mxu0 %v901
        %905 = vmatprep.subr.bf16.mxu0 0
        %906 = vmatpush1.bf16.xpose.msra.mxu0 0
        %907 = vmatprep.subr.bf16.mxu0 0
        %908 = vmatpush1.bf16.xpose.msra.mxu0 0
        %909 = vmatprep.subr.bf16.mxu0 0
        %910 = vmatpush1.bf16.xpose.msra.mxu0 0
        %911 = vmatprep.subr.bf16.mxu0 0
        %912 = vmatpush1.bf16.xpose.msra.mxu0 0
        %913 = vmatprep.subr.bf16.mxu0 0
        %914 = vmatpush1.bf16.xpose.msra.mxu0 0
        %915 = vmatprep.subr.bf16.mxu0 0
        %916 = vmatpush1.bf16.xpose.msra.mxu0 0
        %917 = vmatprep.subr.bf16.mxu0 0
        %918 = vmatpush1.bf16.xpose.msra.mxu0 0
        %919 = vmatprep.subr.bf16.mxu0 0
        %920 = vmatpush1.bf16.xpose.msra.mxu0 0
        %921 = vmatprep.subr.bf16.mxu0 0
        %922 = vmatpush1.bf16.xpose.msra.mxu0 0
        %923 = vmatprep.subr.bf16.mxu0 0
        %924 = vmatpush1.bf16.xpose.msra.mxu0 0
        %925 = vmatprep.subr.bf16.mxu0 0
        %926 = vmatpush1.bf16.xpose.msra.mxu0 0
        %927 = vmatprep.subr.bf16.mxu0 0
        %928 = vmatpush1.bf16.xpose.msra.mxu0 0
        %929 = vmatprep.subr.bf16.mxu0 0
        %930 = vmatpush1.bf16.xpose.msra.mxu0 0
        %931 = vmatprep.subr.bf16.mxu0 0
        %932 = vmatpush1.bf16.xpose.msra.mxu0 0
        %933 = vmatprep.subr.bf16.mxu0 0
        %934 = vmatpush1.bf16.xpose.msra.mxu0 0
        %935 = vmatprep.mubr.bf16.mxu0 0
        %936 = vmatmul.mubr.bf16.gmra.mrb[0].mxu0 %v898
        %v937 = vpop.f32.mrb[0].mxu0
        %v938 = vadd.f32 %v848, %v937
        %v939 = vpop.f32.mrb[0].mxu0
        %v940 = vpop.f32.mrb[0].mxu0
        %v941 = vpop.f32.mrb[0].mxu0
        %942 = vdwg.mxu0
        %v944 = vsel %vm850, %v827, 0
        %v947 = vsel %vm850, %v841, 0
        %949 = vmatprep.subr.bf16.mxu0 0
        %950 = vmatpush1.bf16.xpose.msra.mxu0 %v947
        %951 = vmatprep.subr.bf16.mxu0 0
        %952 = vmatpush1.bf16.xpose.msra.mxu0 0
        %953 = vmatprep.subr.bf16.mxu0 0
        %954 = vmatpush1.bf16.xpose.msra.mxu0 0
        %955 = vmatprep.subr.bf16.mxu0 0
        %956 = vmatpush1.bf16.xpose.msra.mxu0 0
        %957 = vmatprep.subr.bf16.mxu0 0
        %958 = vmatpush1.bf16.xpose.msra.mxu0 0
        %959 = vmatprep.subr.bf16.mxu0 0
        %960 = vmatpush1.bf16.xpose.msra.mxu0 0
        %961 = vmatprep.subr.bf16.mxu0 0
        %962 = vmatpush1.bf16.xpose.msra.mxu0 0
        %963 = vmatprep.subr.bf16.mxu0 0
        %964 = vmatpush1.bf16.xpose.msra.mxu0 0
        %965 = vmatprep.subr.bf16.mxu0 0
        %966 = vmatpush1.bf16.xpose.msra.mxu0 0
        %967 = vmatprep.subr.bf16.mxu0 0
        %968 = vmatpush1.bf16.xpose.msra.mxu0 0
        %969 = vmatprep.subr.bf16.mxu0 0
        %970 = vmatpush1.bf16.xpose.msra.mxu0 0
        %971 = vmatprep.subr.bf16.mxu0 0
        %972 = vmatpush1.bf16.xpose.msra.mxu0 0
        %973 = vmatprep.subr.bf16.mxu0 0
        %974 = vmatpush1.bf16.xpose.msra.mxu0 0
        %975 = vmatprep.subr.bf16.mxu0 0
        %976 = vmatpush1.bf16.xpose.msra.mxu0 0
        %977 = vmatprep.subr.bf16.mxu0 0
        %978 = vmatpush1.bf16.xpose.msra.mxu0 0
        %979 = vmatprep.subr.bf16.mxu0 0
        %980 = vmatpush1.bf16.xpose.msra.mxu0 0
        %981 = vmatprep.mubr.bf16.mxu0 0
        %982 = vmatmul.mubr.bf16.gmra.mrb[0].mxu0 %v944
        %v983 = vpop.f32.mrb[0].mxu0
        %v984 = vadd.f32 %v848, %v983
        %v985 = vpop.f32.mrb[0].mxu0
        %v986 = vpop.f32.mrb[0].mxu0
        %v987 = vpop.f32.mrb[0].mxu0
        %988 = vdwg.mxu0
        %v990 = vsel %vm850, %v828, 0
        %v993 = vsel %vm850, %v842, 0
        %995 = vmatprep.subr.bf16.mxu0 0
        %996 = vmatpush1.bf16.xpose.msra.mxu0 %v993
        %997 = vmatprep.subr.bf16.mxu0 0
        %998 = vmatpush1.bf16.xpose.msra.mxu0 0
        %999 = vmatprep.subr.bf16.mxu0 0
        %1000 = vmatpush1.bf16.xpose.msra.mxu0 0
        %1001 = vmatprep.subr.bf16.mxu0 0
        %1002 = vmatpush1.bf16.xpose.msra.mxu0 0
        %1003 = vmatprep.subr.bf16.mxu0 0
        %1004 = vmatpush1.bf16.xpose.msra.mxu0 0
        %1005 = vmatprep.subr.bf16.mxu0 0
        %1006 = vmatpush1.bf16.xpose.msra.mxu0 0
        %1007 = vmatprep.subr.bf16.mxu0 0
        %1008 = vmatpush1.bf16.xpose.msra.mxu0 0
        %1009 = vmatprep.subr.bf16.mxu0 0
        %1010 = vmatpush1.bf16.xpose.msra.mxu0 0
        %1011 = vmatprep.subr.bf16.mxu0 0
        %1012 = vmatpush1.bf16.xpose.msra.mxu0 0
        %1013 = vmatprep.subr.bf16.mxu0 0
        %1014 = vmatpush1.bf16.xpose.msra.mxu0 0
        %1015 = vmatprep.subr.bf16.mxu0 0
        %1016 = vmatpush1.bf16.xpose.msra.mxu0 0
        %1017 = vmatprep.subr.bf16.mxu0 0
        %1018 = vmatpush1.bf16.xpose.msra.mxu0 0
        %1019 = vmatprep.subr.bf16.mxu0 0
        %1020 = vmatpush1.bf16.xpose.msra.mxu0 0
        %1021 = vmatprep.subr.bf16.mxu0 0
        %1022 = vmatpush1.bf16.xpose.msra.mxu0 0
        %1023 = vmatprep.subr.bf16.mxu0 0
        %1024 = vmatpush1.bf16.xpose.msra.mxu0 0
        %1025 = vmatprep.subr.bf16.mxu0 0
        %1026 = vmatpush1.bf16.xpose.msra.mxu0 0
        %1027 = vmatprep.mubr.bf16.mxu0 0
        %1028 = vmatmul.mubr.bf16.gmra.mrb[0].mxu0 %v990
        %v1029 = vpop.f32.mrb[0].mxu0
        %v1030 = vadd.f32 %v848, %v1029
        %v1031 = vpop.f32.mrb[0].mxu0
        %v1032 = vpop.f32.mrb[0].mxu0
        %v1033 = vpop.f32.mrb[0].mxu0
        %1034 = vdwg.mxu0
        %v1035 = vsel %vm850, %v892, -inf
        %1036 = vmax.xlane.f32.xlu0 %v1035
        %v1037 = vpop.xlane.xlu0 %1036
        %v1038 = vsel %vm850, %v938, -inf
        %1039 = vmax.xlane.f32.xlu0 %v1038
        %v1040 = vpop.xlane.xlu0 %1039
        %v1041 = vsel %vm850, %v984, -inf
        %1042 = vmax.xlane.f32.xlu0 %v1041
        %v1043 = vpop.xlane.xlu0 %1042
        %v1044 = vsel %vm850, %v1030, -inf
        %1045 = vmax.xlane.f32.xlu0 %v1044
        %v1046 = vpop.xlane.xlu0 %1045
        %v1047 = vsub.f32 %v892, %v1037
        %v1048 = vsub.f32 %v938, %v1040
        %v1049 = vsub.f32 %v984, %v1043
        %v1050 = vsub.f32 %v1030, %v1046
        %v1051 = vmul.f32 %v1047, 1.442695
        %v1052 = vpow.pop %v1051
        %v1053 = vmul.f32 %v1048, 1.442695
        %v1054 = vpow.pop %v1053
        %v1055 = vmul.f32 %v1049, 1.442695
        %v1056 = vpow.pop %v1055
        %v1057 = vmul.f32 %v1050, 1.442695
        %v1058 = vpow.pop %v1057
        %v1059 = vsel %vm850, %v1052, 0.0
        %1060 = vadd.xlane.f32.xlu0 %v1059
        %v1061 = vpop.xlane.xlu0 %1060
        %v1062 = vsel %vm850, %v1054, 0.0
        %1063 = vadd.xlane.f32.xlu0 %v1062
        %v1064 = vpop.xlane.xlu0 %1063
        %v1065 = vsel %vm850, %v1056, 0.0
        %1066 = vadd.xlane.f32.xlu0 %v1065
        %v1067 = vpop.xlane.xlu0 %1066
        %v1068 = vsel %vm850, %v1058, 0.0
        %1069 = vadd.xlane.f32.xlu0 %v1068
        %v1070 = vpop.xlane.xlu0 %1069
        %v1071 = vrcp.pop %v1061
        %v1072 = vmul.f32 1.0, %v1071
        %v1073 = vrcp.pop %v1064
        %v1074 = vmul.f32 1.0, %v1073
        %v1075 = vrcp.pop %v1067
        %v1076 = vmul.f32 1.0, %v1075
        %v1077 = vrcp.pop %v1070
        %v1078 = vmul.f32 1.0, %v1077
        %v1079 = vmul.f32 %v1052, %v1072
        %v1080 = vmul.f32 %v1054, %v1074
        %v1081 = vmul.f32 %v1056, %v1076
        %v1082 = vmul.f32 %v1058, %v1078
        %1083 = vst.msk [vmem:[%s617] sm:$0xff] %vm850, %v1079
        %1084 = vst.msk [vmem:[%s617 + $0x8] sm:$0xff] %vm850, %v1080
        %1085 = vst.msk [vmem:[%s617 + $0x10] sm:$0xff] %vm850, %v1081
        %1086 = vst.msk [vmem:[%s617 + $0x18] sm:$0xff] %vm850, %v1082
        %v1087 = vpack.c.bf16 %v1079, %v1079
        %v1088 = vpack.c.bf16 %v1080, %v1080
        %v1089 = vpack.c.bf16 %v1081, %v1081
        %v1090 = vpack.c.bf16 %v1082, %v1082
        %1092 = vrot.lane.b32.xlu0 %v839, 96
        %v1093 = vpop.permute.xlu0 %1092
        %v1095 = vsel %vm850, %v1087, 0
        %vm1097 = vcmask 1043456
        %v1099 = vsel %vm1097, %v1093, 0
        %1101 = vmatprep.subr.bf16.mxu0 0
        %1102 = vmatpush1.bf16.msra.mxu0 %v1099
        %1103 = vmatprep.subr.bf16.mxu0 0
        %1104 = vmatpush1.bf16.msra.mxu0 0
        %1105 = vmatprep.subr.bf16.mxu0 0
        %1106 = vmatpush1.bf16.msra.mxu0 0
        %1107 = vmatprep.subr.bf16.mxu0 0
        %1108 = vmatpush1.bf16.msra.mxu0 0
        %1109 = vmatprep.subr.bf16.mxu0 0
        %1110 = vmatpush1.bf16.msra.mxu0 0
        %1111 = vmatprep.subr.bf16.mxu0 0
        %1112 = vmatpush1.bf16.msra.mxu0 0
        %1113 = vmatprep.subr.bf16.mxu0 0
        %1114 = vmatpush1.bf16.msra.mxu0 0
        %1115 = vmatprep.subr.bf16.mxu0 0
        %1116 = vmatpush1.bf16.msra.mxu0 0
        %1117 = vmatprep.subr.bf16.mxu0 0
        %1118 = vmatpush1.bf16.msra.mxu0 0
        %1119 = vmatprep.subr.bf16.mxu0 0
        %1120 = vmatpush1.bf16.msra.mxu0 0
        %1121 = vmatprep.subr.bf16.mxu0 0
        %1122 = vmatpush1.bf16.msra.mxu0 0
        %1123 = vmatprep.subr.bf16.mxu0 0
        %1124 = vmatpush1.bf16.msra.mxu0 0
        %1125 = vmatprep.subr.bf16.mxu0 0
        %1126 = vmatpush1.bf16.msra.mxu0 0
        %1127 = vmatprep.subr.bf16.mxu0 0
        %1128 = vmatpush1.bf16.msra.mxu0 0
        %1129 = vmatprep.subr.bf16.mxu0 0
        %1130 = vmatpush1.bf16.msra.mxu0 0
        %1131 = vmatprep.subr.bf16.mxu0 0
        %1132 = vmatpush1.bf16.msra.mxu0 0
        %1133 = vmatprep.mubr.bf16.mxu0 0
        %1134 = vmatmul.mubr.bf16.gmra.mrb[0].mxu0 %v1095
        %v1135 = vpop.f32.mrb[0].mxu0
        %v1136 = vadd.f32 0.0, %v1135
        %v1137 = vpop.f32.mrb[0].mxu0
        %v1138 = vpop.f32.mrb[0].mxu0
        %v1139 = vpop.f32.mrb[0].mxu0
        %1140 = vdwg.mxu0
        %1142 = vrot.lane.b32.xlu0 %v840, 96
        %v1143 = vpop.permute.xlu0 %1142
        %v1145 = vsel %vm850, %v1088, 0
        %v1148 = vsel %vm1097, %v1143, 0
        %1150 = vmatprep.subr.bf16.mxu0 0
        %1151 = vmatpush1.bf16.msra.mxu0 %v1148
        %1152 = vmatprep.subr.bf16.mxu0 0
        %1153 = vmatpush1.bf16.msra.mxu0 0
        %1154 = vmatprep.subr.bf16.mxu0 0
        %1155 = vmatpush1.bf16.msra.mxu0 0
        %1156 = vmatprep.subr.bf16.mxu0 0
        %1157 = vmatpush1.bf16.msra.mxu0 0
        %1158 = vmatprep.subr.bf16.mxu0 0
        %1159 = vmatpush1.bf16.msra.mxu0 0
        %1160 = vmatprep.subr.bf16.mxu0 0
        %1161 = vmatpush1.bf16.msra.mxu0 0
        %1162 = vmatprep.subr.bf16.mxu0 0
        %1163 = vmatpush1.bf16.msra.mxu0 0
        %1164 = vmatprep.subr.bf16.mxu0 0
        %1165 = vmatpush1.bf16.msra.mxu0 0
        %1166 = vmatprep.subr.bf16.mxu0 0
        %1167 = vmatpush1.bf16.msra.mxu0 0
        %1168 = vmatprep.subr.bf16.mxu0 0
        %1169 = vmatpush1.bf16.msra.mxu0 0
        %1170 = vmatprep.subr.bf16.mxu0 0
        %1171 = vmatpush1.bf16.msra.mxu0 0
        %1172 = vmatprep.subr.bf16.mxu0 0
        %1173 = vmatpush1.bf16.msra.mxu0 0
        %1174 = vmatprep.subr.bf16.mxu0 0
        %1175 = vmatpush1.bf16.msra.mxu0 0
        %1176 = vmatprep.subr.bf16.mxu0 0
        %1177 = vmatpush1.bf16.msra.mxu0 0
        %1178 = vmatprep.subr.bf16.mxu0 0
        %1179 = vmatpush1.bf16.msra.mxu0 0
        %1180 = vmatprep.subr.bf16.mxu0 0
        %1181 = vmatpush1.bf16.msra.mxu0 0
        %1182 = vmatprep.mubr.bf16.mxu0 0
        %1183 = vmatmul.mubr.bf16.gmra.mrb[0].mxu0 %v1145
        %v1184 = vpop.f32.mrb[0].mxu0
        %v1185 = vadd.f32 0.0, %v1184
        %v1186 = vpop.f32.mrb[0].mxu0
        %v1187 = vpop.f32.mrb[0].mxu0
        %v1188 = vpop.f32.mrb[0].mxu0
        %1189 = vdwg.mxu0
        %1191 = vrot.lane.b32.xlu0 %v841, 96
        %v1192 = vpop.permute.xlu0 %1191
        %v1194 = vsel %vm850, %v1089, 0
        %v1197 = vsel %vm1097, %v1192, 0
        %1199 = vmatprep.subr.bf16.mxu0 0
        %1200 = vmatpush1.bf16.msra.mxu0 %v1197
        %1201 = vmatprep.subr.bf16.mxu0 0
        %1202 = vmatpush1.bf16.msra.mxu0 0
        %1203 = vmatprep.subr.bf16.mxu0 0
        %1204 = vmatpush1.bf16.msra.mxu0 0
        %1205 = vmatprep.subr.bf16.mxu0 0
        %1206 = vmatpush1.bf16.msra.mxu0 0
        %1207 = vmatprep.subr.bf16.mxu0 0
        %1208 = vmatpush1.bf16.msra.mxu0 0
        %1209 = vmatprep.subr.bf16.mxu0 0
        %1210 = vmatpush1.bf16.msra.mxu0 0
        %1211 = vmatprep.subr.bf16.mxu0 0
        %1212 = vmatpush1.bf16.msra.mxu0 0
        %1213 = vmatprep.subr.bf16.mxu0 0
        %1214 = vmatpush1.bf16.msra.mxu0 0
        %1215 = vmatprep.subr.bf16.mxu0 0
        %1216 = vmatpush1.bf16.msra.mxu0 0
        %1217 = vmatprep.subr.bf16.mxu0 0
        %1218 = vmatpush1.bf16.msra.mxu0 0
        %1219 = vmatprep.subr.bf16.mxu0 0
        %1220 = vmatpush1.bf16.msra.mxu0 0
        %1221 = vmatprep.subr.bf16.mxu0 0
        %1222 = vmatpush1.bf16.msra.mxu0 0
        %1223 = vmatprep.subr.bf16.mxu0 0
        %1224 = vmatpush1.bf16.msra.mxu0 0
        %1225 = vmatprep.subr.bf16.mxu0 0
        %1226 = vmatpush1.bf16.msra.mxu0 0
        %1227 = vmatprep.subr.bf16.mxu0 0
        %1228 = vmatpush1.bf16.msra.mxu0 0
        %1229 = vmatprep.subr.bf16.mxu0 0
        %1230 = vmatpush1.bf16.msra.mxu0 0
        %1231 = vmatprep.mubr.bf16.mxu0 0
        %1232 = vmatmul.mubr.bf16.gmra.mrb[0].mxu0 %v1194
        %v1233 = vpop.f32.mrb[0].mxu0
        %v1234 = vadd.f32 0.0, %v1233
        %v1235 = vpop.f32.mrb[0].mxu0
        %v1236 = vpop.f32.mrb[0].mxu0
        %v1237 = vpop.f32.mrb[0].mxu0
        %1238 = vdwg.mxu0
        %1240 = vrot.lane.b32.xlu0 %v842, 96
        %v1241 = vpop.permute.xlu0 %1240
        %v1243 = vsel %vm850, %v1090, 0
        %v1246 = vsel %vm1097, %v1241, 0
        %1248 = vmatprep.subr.bf16.mxu0 0
        %1249 = vmatpush1.bf16.msra.mxu0 %v1246
        %1250 = vmatprep.subr.bf16.mxu0 0
        %1251 = vmatpush1.bf16.msra.mxu0 0
        %1252 = vmatprep.subr.bf16.mxu0 0
        %1253 = vmatpush1.bf16.msra.mxu0 0
        %1254 = vmatprep.subr.bf16.mxu0 0
        %1255 = vmatpush1.bf16.msra.mxu0 0
        %1256 = vmatprep.subr.bf16.mxu0 0
        %1257 = vmatpush1.bf16.msra.mxu0 0
        %1258 = vmatprep.subr.bf16.mxu0 0
        %1259 = vmatpush1.bf16.msra.mxu0 0
        %1260 = vmatprep.subr.bf16.mxu0 0
        %1261 = vmatpush1.bf16.msra.mxu0 0
        %1262 = vmatprep.subr.bf16.mxu0 0
        %1263 = vmatpush1.bf16.msra.mxu0 0
        %1264 = vmatprep.subr.bf16.mxu0 0
        %1265 = vmatpush1.bf16.msra.mxu0 0
        %1266 = vmatprep.subr.bf16.mxu0 0
        %1267 = vmatpush1.bf16.msra.mxu0 0
        %1268 = vmatprep.subr.bf16.mxu0 0
        %1269 = vmatpush1.bf16.msra.mxu0 0
        %1270 = vmatprep.subr.bf16.mxu0 0
        %1271 = vmatpush1.bf16.msra.mxu0 0
        %1272 = vmatprep.subr.bf16.mxu0 0
        %1273 = vmatpush1.bf16.msra.mxu0 0
        %1274 = vmatprep.subr.bf16.mxu0 0
        %1275 = vmatpush1.bf16.msra.mxu0 0
        %1276 = vmatprep.subr.bf16.mxu0 0
        %1277 = vmatpush1.bf16.msra.mxu0 0
        %1278 = vmatprep.subr.bf16.mxu0 0
        %1279 = vmatpush1.bf16.msra.mxu0 0
        %1280 = vmatprep.mubr.bf16.mxu0 0
        %1281 = vmatmul.mubr.bf16.gmra.mrb[0].mxu0 %v1243
        %v1282 = vpop.f32.mrb[0].mxu0
        %v1283 = vadd.f32 0.0, %v1282
        %v1284 = vpop.f32.mrb[0].mxu0
        %v1285 = vpop.f32.mrb[0].mxu0
        %v1286 = vpop.f32.mrb[0].mxu0
        %1287 = vdwg.mxu0
        %1289 = vrot.lane.b32.xlu0 %v1185, 8
        %v1290 = vpop.permute.xlu0 %1289
        %1293 = vrot.lane.b32.xlu0 %v1234, 16
        %v1294 = vpop.permute.xlu0 %1293
        %1297 = vrot.lane.b32.xlu0 %v1283, 24
        %v1298 = vpop.permute.xlu0 %1297
        %v1300 = vsel %vm850, %v1136, %v1290
        %vm1301 = vcmask 130048
        %v1302 = vsel %vm1301, %v1300, %v1294
        %vm1303 = vcmask 195584
        %v1304 = vsel %vm1303, %v1302, %v1298
        %v1305 = vpack.c.bf16 %v1304, %v1304
        %v1306 = vld [vmem:[%s9] sm:$0xf]
        %v1307 = vld [vmem:[%s9 + $0x4] sm:$0xf]
        %v1308 = vld [vmem:[%s9 + $0x8] sm:$0xf]
        %v1309 = vld [vmem:[%s9 + $0xc] sm:$0xf]
        %v1310 = vld [vmem:[%s10] sm:$0x1]
        %v1312 = vlaneseq
        %v1313 = vshrl.u32 %v1312, 7
        %v1314 = vsub.s32 0, %v1313
        %v1315 = vrot.slane %v1310, %v1314
        %v1321 = vunpack.c.l.b16 %v1306
        %v1322 = vunpack.c.l.b16 %v1307
        %v1323 = vunpack.c.l.b16 %v1308
        %v1324 = vunpack.c.l.b16 %v1309
        %v1325 = vpack.c.b16 %v1322, %v1321
        %v1326 = vpack.c.b16 %v1324, %v1323
        %v1330 = vsel %vm632, %v1305, 0
        %1332 = vmatprep.subr.bf16.mxu0 0
        %1333 = vmatpush1.bf16.msra.mxu0 %v1325
        %1334 = vmatprep.subr.bf16.mxu0 0
        %1335 = vmatpush1.bf16.msra.mxu0 %v1326
        %1336 = vmatprep.subr.bf16.mxu0 0
        %1337 = vmatpush1.bf16.msra.mxu0 0
        %1338 = vmatprep.subr.bf16.mxu0 0
        %1339 = vmatpush1.bf16.msra.mxu0 0
        %1340 = vmatprep.subr.bf16.mxu0 0
        %1341 = vmatpush1.bf16.msra.mxu0 0
        %1342 = vmatprep.subr.bf16.mxu0 0
        %1343 = vmatpush1.bf16.msra.mxu0 0
        %1344 = vmatprep.subr.bf16.mxu0 0
        %1345 = vmatpush1.bf16.msra.mxu0 0
        %1346 = vmatprep.subr.bf16.mxu0 0
        %1347 = vmatpush1.bf16.msra.mxu0 0
        %1348 = vmatprep.subr.bf16.mxu0 0
        %1349 = vmatpush1.bf16.msra.mxu0 0
        %1350 = vmatprep.subr.bf16.mxu0 0
        %1351 = vmatpush1.bf16.msra.mxu0 0
        %1352 = vmatprep.subr.bf16.mxu0 0
        %1353 = vmatpush1.bf16.msra.mxu0 0
        %1354 = vmatprep.subr.bf16.mxu0 0
        %1355 = vmatpush1.bf16.msra.mxu0 0
        %1356 = vmatprep.subr.bf16.mxu0 0
        %1357 = vmatpush1.bf16.msra.mxu0 0
        %1358 = vmatprep.subr.bf16.mxu0 0
        %1359 = vmatpush1.bf16.msra.mxu0 0
        %1360 = vmatprep.subr.bf16.mxu0 0
        %1361 = vmatpush1.bf16.msra.mxu0 0
        %1362 = vmatprep.subr.bf16.mxu0 0
        %1363 = vmatpush1.bf16.msra.mxu0 0
        %1364 = vmatprep.mubr.bf16.mxu0 0
        %1365 = vmatmul.mubr.bf16.gmra.mrb[0].mxu0 %v1330
        %v1366 = vpop.f32.mrb[0].mxu0
        %v1367 = vadd.f32 %v1315, %v1366
        %v1368 = vpop.f32.mrb[0].mxu0
        %v1369 = vpop.f32.mrb[0].mxu0
        %v1370 = vpop.f32.mrb[0].mxu0
        %1371 = vdwg.mxu0
        %v1372 = vadd.f32 %v665, %v1367
        %v1373 = vld [vmem:[%s11] sm:$0x1]
        %v1374 = vld [vmem:[%s12] sm:$0x1]
        %v1375 = vsel %vm632, %v1372, 0.0
        %1376 = vadd.xlane.f32.xlu0 %v1375
        %v1377 = vpop.xlane.xlu0 %1376
        %v1378 = vmul.f32 %v1377, %v636
        %v1379 = vsub.f32 %v1372, %v1378
        %v1380 = vmul.f32 %v1379, %v1379
        %v1381 = vsel %vm632, %v1380, 0.0
        %1382 = vadd.xlane.f32.xlu0 %v1381
        %v1383 = vpop.xlane.xlu0 %1382
        %v1384 = vmul.f32 %v1383, %v636
        %v1385 = vadd.f32 %v1384, 1e-05
        %v1386 = vrsqrt.pop %v1385
        %v1387 = vmul.f32 %v1379, %v1386
        %v1389 = vlaneseq
        %v1390 = vshrl.u32 %v1389, 7
        %v1391 = vsub.s32 0, %v1390
        %v1392 = vrot.slane %v1373, %v1391
        %v1394 = vmul.f32 %v1387, %v1392
        %v1396 = vlaneseq
        %v1397 = vshrl.u32 %v1396, 7
        %v1398 = vsub.s32 0, %v1397
        %v1399 = vrot.slane %v1374, %v1398
        %v1401 = vadd.f32 %v1394, %v1399
        %v1402 = vpack.c.bf16 %v1401, %v1401
        %v1403 = vld [vmem:[%s13] sm:$0xf]
        %v1404 = vld [vmem:[%s13 + $0x4] sm:$0xf]
        %v1405 = vld [vmem:[%s13 + $0x8] sm:$0xf]
        %v1406 = vld [vmem:[%s13 + $0xc] sm:$0xf]
        %v1407 = vld [vmem:[%s14] sm:$0x1]
        %v1409 = vlaneseq
        %v1410 = vshrl.u32 %v1409, 7
        %v1411 = vsub.s32 0, %v1410
        %v1412 = vrot.slane %v1407, %v1411
        %v1418 = vunpack.c.l.b16 %v1403
        %v1419 = vunpack.c.l.b16 %v1404
        %v1420 = vunpack.c.l.b16 %v1405
        %v1421 = vunpack.c.l.b16 %v1406
        %v1422 = vpack.c.b16 %v1419, %v1418
        %v1423 = vpack.c.b16 %v1421, %v1420
        %v1427 = vsel %vm632, %v1402, 0
        %1429 = vmatprep.subr.bf16.mxu0 0
        %1430 = vmatpush1.bf16.msra.mxu0 %v1422
        %1431 = vmatprep.subr.bf16.mxu0 0
        %1432 = vmatpush1.bf16.msra.mxu0 %v1423
        %1433 = vmatprep.subr.bf16.mxu0 0
        %1434 = vmatpush1.bf16.msra.mxu0 0
        %1435 = vmatprep.subr.bf16.mxu0 0
        %1436 = vmatpush1.bf16.msra.mxu0 0
        %1437 = vmatprep.subr.bf16.mxu0 0
        %1438 = vmatpush1.bf16.msra.mxu0 0
        %1439 = vmatprep.subr.bf16.mxu0 0
        %1440 = vmatpush1.bf16.msra.mxu0 0
        %1441 = vmatprep.subr.bf16.mxu0 0
        %1442 = vmatpush1.bf16.msra.mxu0 0
        %1443 = vmatprep.subr.bf16.mxu0 0
        %1444 = vmatpush1.bf16.msra.mxu0 0
        %1445 = vmatprep.subr.bf16.mxu0 0
        %1446 = vmatpush1.bf16.msra.mxu0 0
        %1447 = vmatprep.subr.bf16.mxu0 0
        %1448 = vmatpush1.bf16.msra.mxu0 0
        %1449 = vmatprep.subr.bf16.mxu0 0
        %1450 = vmatpush1.bf16.msra.mxu0 0
        %1451 = vmatprep.subr.bf16.mxu0 0
        %1452 = vmatpush1.bf16.msra.mxu0 0
        %1453 = vmatprep.subr.bf16.mxu0 0
        %1454 = vmatpush1.bf16.msra.mxu0 0
        %1455 = vmatprep.subr.bf16.mxu0 0
        %1456 = vmatpush1.bf16.msra.mxu0 0
        %1457 = vmatprep.subr.bf16.mxu0 0
        %1458 = vmatpush1.bf16.msra.mxu0 0
        %1459 = vmatprep.subr.bf16.mxu0 0
        %1460 = vmatpush1.bf16.msra.mxu0 0
        %1461 = vmatprep.mubr.bf16.mxu0 0
        %1462 = vmatmul.mubr.bf16.gmra.mrb[0].mxu0 %v1427
        %v1463 = vpop.f32.mrb[0].mxu0
        %v1464 = vadd.f32 %v1412, %v1463
        %v1465 = vpop.f32.mrb[0].mxu0
        %v1466 = vpop.f32.mrb[0].mxu0
        %v1467 = vpop.f32.mrb[0].mxu0
        %1468 = vdwg.mxu0
        %v1469 = vmul.f32 %v1464, 0.5
        %v1470 = vmul.f32 %v1464, 0.044715
        %v1471 = vmul.f32 %v1470, %v1464
        %v1472 = vmul.f32 %v1471, %v1464
        %v1473 = vadd.f32 %v1464, %v1472
        %v1474 = vmul.f32 %v1473, 0.7978846
        %v1475 = vtanh.pop %v1474
        %v1476 = vadd.f32 %v1475, 1.0
        %v1477 = vmul.f32 %v1469, %v1476
        %v1478 = vpack.c.bf16 %v1477, %v1477
        %v1479 = vld [vmem:[%s15] sm:$0xf]
        %v1480 = vld [vmem:[%s15 + $0x4] sm:$0xf]
        %v1481 = vld [vmem:[%s15 + $0x8] sm:$0xf]
        %v1482 = vld [vmem:[%s15 + $0xc] sm:$0xf]
        %v1483 = vld [vmem:[%s15 + $0x10] sm:$0xf]
        %v1484 = vld [vmem:[%s15 + $0x14] sm:$0xf]
        %v1485 = vld [vmem:[%s15 + $0x18] sm:$0xf]
        %v1486 = vld [vmem:[%s15 + $0x1c] sm:$0xf]
        %v1487 = vld [vmem:[%s15 + $0x20] sm:$0xf]
        %v1488 = vld [vmem:[%s15 + $0x24] sm:$0xf]
        %v1489 = vld [vmem:[%s15 + $0x28] sm:$0xf]
        %v1490 = vld [vmem:[%s15 + $0x2c] sm:$0xf]
        %v1491 = vld [vmem:[%s15 + $0x30] sm:$0xf]
        %v1492 = vld [vmem:[%s15 + $0x34] sm:$0xf]
        %v1493 = vld [vmem:[%s15 + $0x38] sm:$0xf]
        %v1494 = vld [vmem:[%s15 + $0x3c] sm:$0xf]
        %v1495 = vld [vmem:[%s16] sm:$0x1]
        %v1497 = vlaneseq
        %v1498 = vshrl.u32 %v1497, 7
        %v1499 = vsub.s32 0, %v1498
        %v1500 = vrot.slane %v1495, %v1499
        %v1518 = vunpack.c.l.b16 %v1479
        %v1519 = vunpack.c.l.b16 %v1480
        %v1520 = vunpack.c.l.b16 %v1481
        %v1521 = vunpack.c.l.b16 %v1482
        %v1522 = vunpack.c.l.b16 %v1483
        %v1523 = vunpack.c.l.b16 %v1484
        %v1524 = vunpack.c.l.b16 %v1485
        %v1525 = vunpack.c.l.b16 %v1486
        %v1526 = vunpack.c.l.b16 %v1487
        %v1527 = vunpack.c.l.b16 %v1488
        %v1528 = vunpack.c.l.b16 %v1489
        %v1529 = vunpack.c.l.b16 %v1490
        %v1530 = vunpack.c.l.b16 %v1491
        %v1531 = vunpack.c.l.b16 %v1492
        %v1532 = vunpack.c.l.b16 %v1493
        %v1533 = vunpack.c.l.b16 %v1494
        %v1534 = vpack.c.b16 %v1519, %v1518
        %v1535 = vpack.c.b16 %v1521, %v1520
        %v1536 = vpack.c.b16 %v1523, %v1522
        %v1537 = vpack.c.b16 %v1525, %v1524
        %v1538 = vpack.c.b16 %v1527, %v1526
        %v1539 = vpack.c.b16 %v1529, %v1528
        %v1540 = vpack.c.b16 %v1531, %v1530
        %v1541 = vpack.c.b16 %v1533, %v1532
        %1550 = vmatprep.subr.bf16.mxu0 0
        %1551 = vmatpush1.bf16.msra.mxu0 %v1534
        %1552 = vmatprep.subr.bf16.mxu0 0
        %1553 = vmatpush1.bf16.msra.mxu0 %v1535
        %1554 = vmatprep.subr.bf16.mxu0 0
        %1555 = vmatpush1.bf16.msra.mxu0 %v1536
        %1556 = vmatprep.subr.bf16.mxu0 0
        %1557 = vmatpush1.bf16.msra.mxu0 %v1537
        %1558 = vmatprep.subr.bf16.mxu0 0
        %1559 = vmatpush1.bf16.msra.mxu0 %v1538
        %1560 = vmatprep.subr.bf16.mxu0 0
        %1561 = vmatpush1.bf16.msra.mxu0 %v1539
        %1562 = vmatprep.subr.bf16.mxu0 0
        %1563 = vmatpush1.bf16.msra.mxu0 %v1540
        %1564 = vmatprep.subr.bf16.mxu0 0
        %1565 = vmatpush1.bf16.msra.mxu0 %v1541
        %1566 = vmatprep.subr.bf16.mxu0 0
        %1567 = vmatpush1.bf16.msra.mxu0 0
        %1568 = vmatprep.subr.bf16.mxu0 0
        %1569 = vmatpush1.bf16.msra.mxu0 0
        %1570 = vmatprep.subr.bf16.mxu0 0
        %1571 = vmatpush1.bf16.msra.mxu0 0
        %1572 = vmatprep.subr.bf16.mxu0 0
        %1573 = vmatpush1.bf16.msra.mxu0 0
        %1574 = vmatprep.subr.bf16.mxu0 0
        %1575 = vmatpush1.bf16.msra.mxu0 0
        %1576 = vmatprep.subr.bf16.mxu0 0
        %1577 = vmatpush1.bf16.msra.mxu0 0
        %1578 = vmatprep.subr.bf16.mxu0 0
        %1579 = vmatpush1.bf16.msra.mxu0 0
        %1580 = vmatprep.subr.bf16.mxu0 0
        %1581 = vmatpush1.bf16.msra.mxu0 0
        %1582 = vmatprep.mubr.bf16.mxu0 0
        %1583 = vmatmul.mubr.bf16.gmra.mrb[0].mxu0 %v1478
        %v1584 = vpop.f32.mrb[0].mxu0
        %v1585 = vadd.f32 %v1500, %v1584
        %v1586 = vpop.f32.mrb[0].mxu0
        %v1587 = vpop.f32.mrb[0].mxu0
        %v1588 = vpop.f32.mrb[0].mxu0
        %1589 = vdwg.mxu0
        %v1590 = vadd.f32 %v1372, %v1585
        %1591 = vst.msk [vmem:[%s610] sm:$0xff] %vm632, %v1590
        %s1592 = sand.u32 %s426, 1
        %s1593 = scalar_lea.sflag [#allocation4], %s1592
        %s1594 = sand.u32 %s426, 1
        %s1595 = smul.addr %s1594, 8
        %s1596 = scalar_lea.vmem [#allocation5], %s1595
        %s1597 = sand.u32 %s454, 1
        %s1598 = scalar_lea.sflag [#allocation7], %s1597
        %s1599 = sand.u32 %s454, 1
        %s1600 = smul.addr %s1599, 32
        %s1601 = scalar_lea.vmem [#allocation6], %s1600
        // Predicated region
        $region93: #{tpu_custom_call.1} parent=87 // pred_check
          %p1602 = pneg %p436
        $region94: #{tpu_custom_call.1} parent=87 // pred_check_branch
          %1604 = sbr.rel (%p1602) target = $region96
        $region95: #{tpu_custom_call.1} parent=87 // pred_region
          %s1606 = ssub.s32 128, 128
          %1607 = vsyncadd %s1593, %s1606
          %s1608 = sadd.s32 %s42, %s41
          %s1609 = smul.addr %s1608, 128
          %s1610 = scalar_lea.hbm %s17, %s1609
          %s1612 = sshll.u32 %s1596, 4
          %s1613 = int_to_ptr.vmem [resolvable:$true] %s1612
          %1615 = dma.vmem_to_hbm [thread:$0]  %s1613, 128, %s1610, %s1593
        $region96: #{tpu_custom_call.1} parent=87 // pred_fallthru
          _
        // Predicated region
        $region97: #{tpu_custom_call.1} parent=87 // pred_check
          %p1616 = pneg %p464
        $region98: #{tpu_custom_call.1} parent=87 // pred_check_branch
          %1618 = sbr.rel (%p1616) target = $region100
        $region99: #{tpu_custom_call.1} parent=87 // pred_region
          %s1620 = ssub.s32 512, 512
          %1621 = vsyncadd %s1598, %s1620
          %s1622 = smul.addr %s41, 4
          %s1623 = sadd.s32 %s42, %s1622
          %s1624 = smul.addr %s1623, 128
          %s1625 = scalar_lea.hbm %s18, %s1624
          %s1626 = sshll.u32 %s1601, 4
          %s1627 = int_to_ptr.vmem [resolvable:$true] %s1626
          %1632 = dma.vmem_to_hbm [thread:$0]  %s1627, 512, %s1625, %s1598, 128, 128, 8
        $region100: #{tpu_custom_call.1} parent=87 // pred_fallthru
          _
      $region88: #{tpu_custom_call.1} parent=5 // pred_fallthru
        _
      %p1633 = scmp.le.s32.totalorder 2, %s32
      // Predicated region
      $region101: #{tpu_custom_call.1} parent=5 // pred_check
        %p1634 = pneg %p1633
      $region102: #{tpu_custom_call.1} parent=5 // pred_check_branch
        %1636 = sbr.rel (%p1634) target = $region104
      $region103: #{tpu_custom_call.1} parent=5 // pred_region
        %s1637 = ssub.s32 %s32, 2
        // Predicated region
        $region105: #{tpu_custom_call.1} parent=103 // pred_check
          %p1638 = pneg %p442
        $region106: #{tpu_custom_call.1} parent=103 // pred_check_branch
          %1640 = sbr.rel (%p1638) target = $region108
        $region107: #{tpu_custom_call.1} parent=103 // pred_region
          %s1641 = sand.u32 %s427, 1
          %s1642 = scalar_lea.sflag [#allocation4], %s1641
          %s1643 = sand.u32 %s427, 1
          %s1644 = smul.addr %s1643, 8
          %s1645 = scalar_lea.vmem [#allocation5], %s1644
          %1646 = dma.done %s1642, 128
        $region108: #{tpu_custom_call.1} parent=103 // pred_fallthru
          _
        // Predicated region
        $region109: #{tpu_custom_call.1} parent=103 // pred_check
          %p1647 = pneg %p470
        $region110: #{tpu_custom_call.1} parent=103 // pred_check_branch
          %1649 = sbr.rel (%p1647) target = $region112
        $region111: #{tpu_custom_call.1} parent=103 // pred_region
          %s1650 = sand.u32 %s455, 1
          %s1651 = scalar_lea.sflag [#allocation7], %s1650
          %s1652 = sand.u32 %s455, 1
          %s1653 = smul.addr %s1652, 32
          %s1654 = scalar_lea.vmem [#allocation6], %s1653
          %1655 = dma.done %s1651, 512
        $region112: #{tpu_custom_call.1} parent=103 // pred_fallthru
          _
      $region104: #{tpu_custom_call.1} parent=5 // pred_fallthru
        _
    $region6: #{tpu_custom_call.1} parent=1 // loop_footer
      %s36 = sadd.s32 1, %s32
    $region7: #{tpu_custom_call.1} parent=1 // loop_footer_branch
      %31 = sbr.rel target = $region3
    $region8: #{tpu_custom_call.1} parent=1 // loop_exit
      _
    %1656 = vsyncpa [#allocation3], 1
    %s1657 = scalar_lea.sflag [#allocation3], 1
    %1658 = vsyncpa %s1657, 1
    %1659 = vsyncpa [#allocation4], 1
    %s1660 = scalar_lea.sflag [#allocation4], 1
    %1661 = vsyncpa %s1660, 1
    %1662 = vsyncpa [#allocation7], 1
    %s1663 = scalar_lea.sflag [#allocation7], 1
    %1664 = vsyncpa %s1663, 1

</llo_original>
